<compile_context>
chip_gen: v7x
topology: tpu7x:2x2x1
jax: 0.10.0
libtpu: 0.0.40
codegen_flags: <defaults>
</compile_context>

<pallas_src>
import math
import jax
import jax.numpy as jnp
from jax.experimental import pallas as pl
from jax.experimental.pallas import tpu as pltpu

# ---------------------------------------------------------------------------
# Config consistent with VAE.__init__ / forward
# ---------------------------------------------------------------------------
INPUT_SIZE    = 16
HIDDEN_DIM    = 32
LATENT_DIM    = 16
GRU_LAYERS    = 2
FC_LAYERS     = 2
BIDIRECTIONAL = True
N_GENRES      = 4
BATCH         = 8
SEQ           = 8
ENC_HIDDEN    = 2 * HIDDEN_DIM if BIDIRECTIONAL else HIDDEN_DIM

assert GRU_LAYERS == 2 and FC_LAYERS == 2 and BIDIRECTIONAL, \
    "kernel is specialized to gru_layers=2, fc_layers=2, bidirectional=True"


def fc_dims(in_dim, out_dim, n_layers):
    """Replicates the Linear size arithmetic in VAE.__init__."""
    diff = (in_dim - out_dim) // n_layers
    dims = [in_dim - diff * i for i in range(n_layers)]
    dims.append(out_dim)
    return dims


FC_MULV_DIMS = fc_dims(ENC_HIDDEN, LATENT_DIM, FC_LAYERS)   # [64, 40, 16]
FC_LAT_DIMS  = fc_dims(LATENT_DIM, HIDDEN_DIM, FC_LAYERS)   # [16, 24, 32]
FC_DEC_DIMS  = fc_dims(HIDDEN_DIM, INPUT_SIZE, FC_LAYERS)   # [32, 24, 16]


def _offsets(sizes):
    offs, o = [], 0
    for s in sizes:
        offs.append(o)
        o += s
    return offs, o


# Encoder weight slab (rows, 6H): layer-0 input, layer-0 hidden, layer-1 input, layer-1 hidden
ENC_ROWS = [2 * INPUT_SIZE, 2 * HIDDEN_DIM, 2 * HIDDEN_DIM, 2 * HIDDEN_DIM]
ENC_OFF, ENC_TOTAL = _offsets(ENC_ROWS)                     # [0,32,96,160], 224
# Decoder weight slab (rows, 3H): layer-0 input, layer-0 hidden, layer-1 input, layer-1 hidden
DEC_ROWS = [INPUT_SIZE, HIDDEN_DIM, HIDDEN_DIM, HIDDEN_DIM]
DEC_OFF, DEC_TOTAL = _offsets(DEC_ROWS)                     # [0,16,48,80], 112
# FC weight slab: fused mu|logvar (2 layers), fused fc_latent (2 layers), fc_decoder (2 layers)
FC_SHAPES = [
    (ENC_HIDDEN, 2 * FC_MULV_DIMS[1]),                       # (64, 80)
    (2 * FC_MULV_DIMS[1], 2 * LATENT_DIM),                   # (80, 32) block-diag
    (LATENT_DIM, GRU_LAYERS * FC_LAT_DIMS[1]),               # (16, 48)
    (GRU_LAYERS * FC_LAT_DIMS[1], GRU_LAYERS * HIDDEN_DIM),  # (48, 64) block-diag
    (HIDDEN_DIM, FC_DEC_DIMS[1]),                            # (32, 24)
    (FC_DEC_DIMS[1], INPUT_SIZE),                            # (24, 16)
]
FC_OFF, FC_TOTAL = _offsets([s[0] for s in FC_SHAPES])       # [0,64,144,160,208,240], 264
FC_WIDTH = max(s[1] for s in FC_SHAPES)                      # 80
assert all(o % 8 == 0 for o in ENC_OFF + DEC_OFF + FC_OFF)   # sublane-aligned slices

# Bias slab: one row per bias vector, padded to 6H lanes.
BIAS_WIDTHS = [
    6 * HIDDEN_DIM, 2 * HIDDEN_DIM, 6 * HIDDEN_DIM, 2 * HIDDEN_DIM,   # encoder (wide)
    3 * HIDDEN_DIM, HIDDEN_DIM, 3 * HIDDEN_DIM, HIDDEN_DIM,           # decoder GRU
    2 * FC_MULV_DIMS[1], 2 * LATENT_DIM,                              # fused mu|logvar
    GRU_LAYERS * FC_LAT_DIMS[1], GRU_LAYERS * HIDDEN_DIM,             # fused fc_latent
    FC_DEC_DIMS[1], INPUT_SIZE,                                       # fc_decoder
]
BIAS_SLAB_ROWS = 16
BIAS_SLAB_COLS = 6 * HIDDEN_DIM


# ---------------------------------------------------------------------------
# Kernel
# ---------------------------------------------------------------------------
def vae_kernel(xcat_ref, eps_ref, wenc_ref, wdec_ref, wfc_ref, b_ref,
               out_ref, mu_ref, logvar_ref, genre_ref):
    H = HIDDEN_DIM
    H2, H3, H4 = 2 * H, 3 * H, 4 * H

    def dot(a, b):
        return jnp.dot(a, b, preferred_element_type=jnp.float32)

    def leaky(v):
        return jnp.where(v > 0, v, 0.01 * v)   # LeakyReLU(0.01); fc_dropout == identity

    # ---- parameter views (hoisted once; static slices of VMEM-resident slabs) ----
    enc_w_in0 = wenc_ref[ENC_OFF[0]:ENC_OFF[0] + ENC_ROWS[0], :]
    enc_w_hh0 = wenc_ref[ENC_OFF[1]:ENC_OFF[1] + ENC_ROWS[1], :]
    enc_w_ih1 = wenc_ref[ENC_OFF[2]:ENC_OFF[2] + ENC_ROWS[2], :]
    enc_w_hh1 = wenc_ref[ENC_OFF[3]:ENC_OFF[3] + ENC_ROWS[3], :]

    dec_w_ih0 = wdec_ref[DEC_OFF[0]:DEC_OFF[0] + DEC_ROWS[0], :]
    dec_w_hh0 = wdec_ref[DEC_OFF[1]:DEC_OFF[1] + DEC_ROWS[1], :]
    dec_w_ih1 = wdec_ref[DEC_OFF[2]:DEC_OFF[2] + DEC_ROWS[2], :]
    dec_w_hh1 = wdec_ref[DEC_OFF[3]:DEC_OFF[3] + DEC_ROWS[3], :]

    mulv_w0, mulv_w1, lat_w0, lat_w1, fcd_w0, fcd_w1 = [
        wfc_ref[FC_OFF[i]:FC_OFF[i] + FC_SHAPES[i][0], :FC_SHAPES[i][1]]
        for i in range(len(FC_SHAPES))
    ]

    (enc_b_i0, enc_b_hn0, enc_b_i1, enc_b_hn1,
     dec_b_i0, dec_b_hn0, dec_b_i1, dec_b_hn1,
     mulv_b0, mulv_b1, lat_b0, lat_b1, fcd_b0, fcd_b1) = [
        b_ref[i:i + 1, :BIAS_WIDTHS[i]] for i in range(14)
    ]

    # ---- fused GRU cells (PyTorch GRUCell semantics, r/z biases pre-summed) ----
    def bigru_cell(gi, h, w_hh, b_hn):
        # gi: (B, 6H) input-path gates (bias folded in), gate-interleaved columns
        #     [r_f r_b z_f z_b n_f n_b];  h: (B, 2H) = [h_fwd | h_back].
        gh = dot(h, w_hh)                                   # block-diag -> (B, 6H)
        rz = jax.nn.sigmoid(gi[:, :H4] + gh[:, :H4])        # one sigmoid for r and z
        r, z = rz[:, :H2], rz[:, H2:]
        n = jnp.tanh(gi[:, H4:] + r * (gh[:, H4:] + b_hn))
        return (1.0 - z) * n + z * h

    def gru_cell(x, h, w_ih, w_hh, b_i, b_hn):
        gi = dot(x, w_ih) + b_i                             # (B, 3H)  [r|z|n]
        gh = dot(h, w_hh)                                   # (B, 3H)
        rz = jax.nn.sigmoid(gi[:, :H2] + gh[:, :H2])
        r, z = rz[:, :H], rz[:, H:]
        n = jnp.tanh(gi[:, H2:] + r * (gh[:, H2:] + b_hn))
        return (1.0 - z) * n + z * h

    # ---- bidirectional encoder: hoisted layer-0 input projection (both directions) ----
    x_cat = xcat_ref[...]                                   # (T, B, 2*in)
    proj = dot(x_cat.reshape(SEQ * BATCH, 2 * INPUT_SIZE), enc_w_in0) + enc_b_i0  # (T*B, 6H)

    h0 = jnp.zeros((BATCH, H2), jnp.float32)                # [fwd | back], layer 0
    h1 = jnp.zeros((BATCH, H2), jnp.float32)                # [fwd | back], layer 1
    for t in range(SEQ):                                    # fully unrolled
        gi0 = proj[t * BATCH:(t + 1) * BATCH, :]
        h0 = bigru_cell(gi0, h0, enc_w_hh0, enc_b_hn0)
        h1 = bigru_cell(dot(h0, enc_w_ih1) + enc_b_i1, h1, enc_w_hh1, enc_b_hn1)
    hidden = h1                                             # == cat(h_fwd, h_back), (B, 2H)

    # ---- fused mu / logvar MLP ----
    a = leaky(dot(hidden, mulv_w0) + mulv_b0)               # (B, 80)
    ml = dot(a, mulv_w1) + mulv_b1                          # (B, 2*latent), block-diag layer 1
    mu, logvar = ml[:, :LATENT_DIM], ml[:, LATENT_DIM:]
    mu_ref[...] = mu
    logvar_ref[...] = logvar

    # ---- reparameterize + genre softmax (from z, as in the reference model) ----
    z = mu + jnp.exp(0.5 * logvar) * eps_ref[...]
    zg = z[:, :N_GENRES]
    zg = zg - jnp.max(zg, axis=1, keepdims=True)
    e = jnp.exp(zg)
    genre_ref[...] = e / jnp.sum(e, axis=1, keepdims=True)

    # ---- fused fc_latent MLP -> initial decoder hidden states for both layers ----
    a = leaky(dot(z, lat_w0) + lat_b0)                      # (B, 48)
    hz = dot(a, lat_w1) + lat_b1                            # (B, 2H), block-diag layer 1
    hd0, hd1 = hz[:, :H], hz[:, H:]

    # ---- autoregressive decoder (fully unrolled; stores are off the recurrent path) ----
    note = x_cat[0, :, :INPUT_SIZE]                         # x[:, 0]
    out_ref[0] = note
    for t in range(SEQ - 1):
        hd0 = gru_cell(note, hd0, dec_w_ih0, dec_w_hh0, dec_b_i0, dec_b_hn0)
        hd1 = gru_cell(hd0, hd1, dec_w_ih1, dec_w_hh1, dec_b_i1, dec_b_hn1)
        a = leaky(dot(hd1, fcd_w0) + fcd_b0)
        note = jax.nn.sigmoid(dot(a, fcd_w1) + fcd_b1)
        out_ref[t + 1] = note


# ---------------------------------------------------------------------------
# Wrapper
# ---------------------------------------------------------------------------
def vae_forward(x_btd, eps, packed):
    x_tbd = jnp.transpose(x_btd, (1, 0, 2))                 # (T, B, in)
    x_cat = jnp.concatenate([x_tbd, x_tbd[::-1]], axis=-1)  # (T, B, 2*in): fwd | time-reversed

    vmem = pl.BlockSpec(memory_space=pltpu.MemorySpace.VMEM)
    out_shape = (
        jax.ShapeDtypeStruct((SEQ, BATCH, INPUT_SIZE), jnp.float32),
        jax.ShapeDtypeStruct((BATCH, LATENT_DIM), jnp.float32),
        jax.ShapeDtypeStruct((BATCH, LATENT_DIM), jnp.float32),
        jax.ShapeDtypeStruct((BATCH, N_GENRES), jnp.float32),
    )
    fn = pl.pallas_call(
        vae_kernel,
        out_shape=out_shape,
        in_specs=[vmem] * 6,
        out_specs=(vmem, vmem, vmem, vmem),
    )
    out_tbd, mu, logvar, genre = fn(
        x_cat, eps, packed["w_enc"], packed["w_dec"], packed["w_fc"], packed["biases"])
    return jnp.transpose(out_tbd, (1, 0, 2)), mu, logvar, genre


vae_forward_jit = jax.jit(vae_forward)


# ---------------------------------------------------------------------------
# Parameter init (PyTorch default uniform bounds) + host-side packing
# ---------------------------------------------------------------------------
def init_linear(key, in_dim, out_dim):
    k1, k2 = jax.random.split(key)
    bound = 1.0 / math.sqrt(in_dim)
    w = jax.random.uniform(k1, (out_dim, in_dim), jnp.float32, -bound, bound)
    b = jax.random.uniform(k2, (out_dim,), jnp.float32, -bound, bound)
    return w, b


def init_gru_cell(key, in_dim, hidden):
    ks = jax.random.split(key, 4)
    bound = 1.0 / math.sqrt(hidden)
    w_ih = jax.random.uniform(ks[0], (3 * hidden, in_dim), jnp.float32, -bound, bound)
    w_hh = jax.random.uniform(ks[1], (3 * hidden, hidden), jnp.float32, -bound, bound)
    b_ih = jax.random.uniform(ks[2], (3 * hidden,), jnp.float32, -bound, bound)
    b_hh = jax.random.uniform(ks[3], (3 * hidden,), jnp.float32, -bound, bound)
    return w_ih, w_hh, b_ih, b_hh


def init_raw_params(key):
    keys = iter(jax.random.split(key, 32))

    def gru_stack(in_dim):
        return [init_gru_cell(next(keys), in_dim if l == 0 else HIDDEN_DIM, HIDDEN_DIM)
                for l in range(GRU_LAYERS)]

    def fc_seq(in_dim, out_dim):
        dims = fc_dims(in_dim, out_dim, FC_LAYERS)
        return [init_linear(next(keys), dims[i], dims[i + 1]) for i in range(FC_LAYERS)]

    raw = {}
    raw["encoder"] = gru_stack(INPUT_SIZE)
    raw["back_encoder"] = gru_stack(INPUT_SIZE)
    raw["decoder"] = gru_stack(INPUT_SIZE)
    raw["fc_mu"] = fc_seq(ENC_HIDDEN, LATENT_DIM)
    raw["fc_logvar"] = fc_seq(ENC_HIDDEN, LATENT_DIM)
    lat0 = fc_seq(LATENT_DIM, HIDDEN_DIM)
    raw["fc_latent"] = [lat0 for _ in range(GRU_LAYERS)]     # deepcopy: identical init
    raw["fc_decoder"] = fc_seq(HIDDEN_DIM, INPUT_SIZE)
    return raw


def pack_params(raw):
    """Pack all PyTorch-layout parameters into 4 kernel slabs."""
    H = HIDDEN_DIM

    def gate_split(cell):
        w_ih, w_hh, b_ih, b_hh = cell
        s3 = lambda m: (m[:H], m[H:2 * H], m[2 * H:])
        wir, wiz, win = s3(w_ih)
        whr, whz, whn = s3(w_hh)
        bir, biz, bin_ = s3(b_ih)
        bhr, bhz, bhn = s3(b_hh)
        W_ih = jnp.concatenate([wir.T, wiz.T, win.T], axis=1)         # (in, 3H) [r|z|n]
        W_hh = jnp.concatenate([whr.T, whz.T, whn.T], axis=1)         # (H, 3H)
        b_i = jnp.concatenate([bir + bhr, biz + bhz, bin_])[None, :]  # r/z pre-summed
        b_hn = bhn[None, :]                                           # kept separate (r * (Wh+bhn))
        return W_ih, W_hh, b_i, b_hn

    def bidir_block(Wf, Wb):
        # (in_f,3H) + (in_b,3H) -> (in_f+in_b, 6H), gate-interleaved block-diagonal layout
        in_f = Wf.shape[0]
        out = jnp.zeros((in_f + Wb.shape[0], 6 * H), jnp.float32)
        for g in range(3):
            out = out.at[:in_f, (2 * g) * H:(2 * g + 1) * H].set(Wf[:, g * H:(g + 1) * H])
            out = out.at[in_f:, (2 * g + 1) * H:(2 * g + 2) * H].set(Wb[:, g * H:(g + 1) * H])
        return out

    def interleave_bias(bf, bb):
        # (1,3H) x2 -> (1,6H) with [r_f r_b z_f z_b n_f n_b]
        return jnp.concatenate(
            [jnp.concatenate([bf[:, g * H:(g + 1) * H], bb[:, g * H:(g + 1) * H]], axis=1)
             for g in range(3)], axis=1)

    def block_diag(Wa, Wb):
        out = jnp.zeros((Wa.shape[0] + Wb.shape[0], Wa.shape[1] + Wb.shape[1]), jnp.float32)
        out = out.at[:Wa.shape[0], :Wa.shape[1]].set(Wa)
        out = out.at[Wa.shape[0]:, Wa.shape[1]:].set(Wb)
        return out

    enc_f = [gate_split(c) for c in raw["encoder"]]
    enc_b = [gate_split(c) for c in raw["back_encoder"]]
    dec = [gate_split(c) for c in raw["decoder"]]

    w_enc = jnp.concatenate([
        bidir_block(enc_f[0][0], enc_b[0][0]),    # layer-0 input  (2*in, 6H)
        bidir_block(enc_f[0][1], enc_b[0][1]),    # layer-0 hidden (2H, 6H)
        bidir_block(enc_f[1][0], enc_b[1][0]),    # layer-1 input  (2H, 6H)
        bidir_block(enc_f[1][1], enc_b[1][1]),    # layer-1 hidden (2H, 6H)
    ], axis=0)
    assert w_enc.shape == (ENC_TOTAL, 6 * H)

    w_dec = jnp.concatenate([dec[0][0], dec[0][1], dec[1][0], dec[1][1]], axis=0)
    assert w_dec.shape == (DEC_TOTAL, 3 * H)

    lin = lambda l: (l[0].T, l[1][None, :])
    mu0_w, mu0_b = lin(raw["fc_mu"][0]);      mu1_w, mu1_b = lin(raw["fc_mu"][1])
    lv0_w, lv0_b = lin(raw["fc_logvar"][0]);  lv1_w, lv1_b = lin(raw["fc_logvar"][1])
    la0_w, la0_b = lin(raw["fc_latent"][0][0]); la1_w, la1_b = lin(raw["fc_latent"][0][1])
    lb0_w, lb0_b = lin(raw["fc_latent"][1][0]); lb1_w, lb1_b = lin(raw["fc_latent"][1][1])
    fd0_w, fd0_b = lin(raw["fc_decoder"][0]); fd1_w, fd1_b = lin(raw["fc_decoder"][1])

    fc_blocks = [
        jnp.concatenate([mu0_w, lv0_w], axis=1),   # (64, 80)
        block_diag(mu1_w, lv1_w),                  # (80, 32)
        jnp.concatenate([la0_w, lb0_w], axis=1),   # (16, 48)
        block_diag(la1_w, lb1_w),                  # (48, 64)
        fd0_w,                                     # (32, 24)
        fd1_w,                                     # (24, 16)
    ]
    w_fc = jnp.zeros((FC_TOTAL, FC_WIDTH), jnp.float32)
    for off, blk, shp in zip(FC_OFF, fc_blocks, FC_SHAPES):
        assert blk.shape == shp, (blk.shape, shp)
        w_fc = w_fc.at[off:off + shp[0], :shp[1]].set(blk)

    bias_rows = [
        interleave_bias(enc_f[0][2], enc_b[0][2]),
        jnp.concatenate([enc_f[0][3], enc_b[0][3]], axis=1),
        interleave_bias(enc_f[1][2], enc_b[1][2]),
        jnp.concatenate([enc_f[1][3], enc_b[1][3]], axis=1),
        dec[0][2], dec[0][3], dec[1][2], dec[1][3],
        jnp.concatenate([mu0_b, lv0_b], axis=1),
        jnp.concatenate([mu1_b, lv1_b], axis=1),
        jnp.concatenate([la0_b, lb0_b], axis=1),
        jnp.concatenate([la1_b, lb1_b], axis=1),
        fd0_b, fd1_b,
    ]
    biases = jnp.zeros((BIAS_SLAB_ROWS, BIAS_SLAB_COLS), jnp.float32)
    for i, b in enumerate(bias_rows):
        assert b.shape == (1, BIAS_WIDTHS[i]), (i, b.shape, BIAS_WIDTHS[i])
        biases = biases.at[i, :b.shape[1]].set(b[0])

    return dict(w_enc=w_enc, w_dec=w_dec, w_fc=w_fc, biases=biases)


# ---------------------------------------------------------------------------
if __name__ == "__main__":
    root = jax.random.PRNGKey(0)
    k_x, k_eps, k_p = jax.random.split(root, 3)

    x = jax.random.uniform(k_x, (BATCH, SEQ, INPUT_SIZE), jnp.float32)    # (B, T, D)
    eps = jax.random.normal(k_eps, (BATCH, LATENT_DIM), jnp.float32)      # randn_like(std)
    packed = pack_params(init_raw_params(k_p))

    out, mu, logvar, genre = vae_forward_jit(x, eps, packed)
    jax.block_until_ready((out, mu, logvar, genre))

    assert out.shape == (BATCH, SEQ, INPUT_SIZE)
    assert mu.shape == (BATCH, LATENT_DIM)
    assert logvar.shape == (BATCH, LATENT_DIM)
    assert genre.shape == (BATCH, N_GENRES)
    # structural sanity checks (precision-independent)
    assert bool(jnp.all(jnp.isfinite(out)) and jnp.all(jnp.isfinite(mu))
                and jnp.all(jnp.isfinite(logvar)) and jnp.all(jnp.isfinite(genre)))
    assert bool(jnp.all((out >= 0.0) & (out <= 1.0)))          # x[:,0] in [0,1); rest sigmoid
    assert bool(jnp.allclose(jnp.sum(genre, axis=1), 1.0, atol=1e-5))
    print("KERNEL_OK")
</pallas_src>

<mosaic_0001>
module attributes {stable_mosaic.version = 11 : i64} {
  func.func @vae_kernel(%arg0: memref<8x8x32xf32, #tpu.memory_space<vmem>>, %arg1: memref<8x16xf32, #tpu.memory_space<vmem>>, %arg2: memref<224x192xf32, #tpu.memory_space<vmem>>, %arg3: memref<112x96xf32, #tpu.memory_space<vmem>>, %arg4: memref<264x80xf32, #tpu.memory_space<vmem>>, %arg5: memref<16x192xf32, #tpu.memory_space<vmem>>, %arg6: memref<8x8x16xf32, #tpu.memory_space<vmem>>, %arg7: memref<8x16xf32, #tpu.memory_space<vmem>>, %arg8: memref<8x16xf32, #tpu.memory_space<vmem>>, %arg9: memref<8x4xf32, #tpu.memory_space<vmem>>) attributes {dimension_semantics = [], scalar_prefetch = 0 : i64, scratch_operands = 0 : i64, tpu.core_type = #tpu.core_type<tc>} {
    %c0 = arith.constant 0 : index
    %c0_0 = arith.constant 0 : index
    %0 = vector.load %arg2[%c0, %c0_0] : memref<224x192xf32, #tpu.memory_space<vmem>>, vector<32x192xf32>
    %c32 = arith.constant 32 : index
    %c0_1 = arith.constant 0 : index
    %1 = vector.load %arg2[%c32, %c0_1] : memref<224x192xf32, #tpu.memory_space<vmem>>, vector<64x192xf32>
    %c96 = arith.constant 96 : index
    %c0_2 = arith.constant 0 : index
    %2 = vector.load %arg2[%c96, %c0_2] : memref<224x192xf32, #tpu.memory_space<vmem>>, vector<64x192xf32>
    %c160 = arith.constant 160 : index
    %c0_3 = arith.constant 0 : index
    %3 = vector.load %arg2[%c160, %c0_3] : memref<224x192xf32, #tpu.memory_space<vmem>>, vector<64x192xf32>
    %c0_4 = arith.constant 0 : index
    %c0_5 = arith.constant 0 : index
    %4 = vector.load %arg3[%c0_4, %c0_5] : memref<112x96xf32, #tpu.memory_space<vmem>>, vector<16x96xf32>
    %c16 = arith.constant 16 : index
    %c0_6 = arith.constant 0 : index
    %5 = vector.load %arg3[%c16, %c0_6] : memref<112x96xf32, #tpu.memory_space<vmem>>, vector<32x96xf32>
    %c48 = arith.constant 48 : index
    %c0_7 = arith.constant 0 : index
    %6 = vector.load %arg3[%c48, %c0_7] : memref<112x96xf32, #tpu.memory_space<vmem>>, vector<32x96xf32>
    %c80 = arith.constant 80 : index
    %c0_8 = arith.constant 0 : index
    %7 = vector.load %arg3[%c80, %c0_8] : memref<112x96xf32, #tpu.memory_space<vmem>>, vector<32x96xf32>
    %c0_9 = arith.constant 0 : index
    %c0_10 = arith.constant 0 : index
    %8 = vector.load %arg4[%c0_9, %c0_10] : memref<264x80xf32, #tpu.memory_space<vmem>>, vector<64x80xf32>
    %c64 = arith.constant 64 : index
    %c0_11 = arith.constant 0 : index
    %9 = vector.load %arg4[%c64, %c0_11] : memref<264x80xf32, #tpu.memory_space<vmem>>, vector<80x32xf32>
    %c144 = arith.constant 144 : index
    %c0_12 = arith.constant 0 : index
    %10 = vector.load %arg4[%c144, %c0_12] : memref<264x80xf32, #tpu.memory_space<vmem>>, vector<16x48xf32>
    %c160_13 = arith.constant 160 : index
    %c0_14 = arith.constant 0 : index
    %11 = vector.load %arg4[%c160_13, %c0_14] : memref<264x80xf32, #tpu.memory_space<vmem>>, vector<48x64xf32>
    %c208 = arith.constant 208 : index
    %c0_15 = arith.constant 0 : index
    %12 = vector.load %arg4[%c208, %c0_15] : memref<264x80xf32, #tpu.memory_space<vmem>>, vector<32x24xf32>
    %c240 = arith.constant 240 : index
    %c0_16 = arith.constant 0 : index
    %13 = vector.load %arg4[%c240, %c0_16] : memref<264x80xf32, #tpu.memory_space<vmem>>, vector<24x16xf32>
    %c0_17 = arith.constant 0 : index
    %c0_18 = arith.constant 0 : index
    %14 = vector.load %arg5[%c0_17, %c0_18] : memref<16x192xf32, #tpu.memory_space<vmem>>, vector<1x192xf32>
    %c1 = arith.constant 1 : index
    %c0_19 = arith.constant 0 : index
    %15 = vector.load %arg5[%c1, %c0_19] : memref<16x192xf32, #tpu.memory_space<vmem>>, vector<1x64xf32>
    %c2 = arith.constant 2 : index
    %c0_20 = arith.constant 0 : index
    %16 = vector.load %arg5[%c2, %c0_20] : memref<16x192xf32, #tpu.memory_space<vmem>>, vector<1x192xf32>
    %c3 = arith.constant 3 : index
    %c0_21 = arith.constant 0 : index
    %17 = vector.load %arg5[%c3, %c0_21] : memref<16x192xf32, #tpu.memory_space<vmem>>, vector<1x64xf32>
    %c4 = arith.constant 4 : index
    %c0_22 = arith.constant 0 : index
    %18 = vector.load %arg5[%c4, %c0_22] : memref<16x192xf32, #tpu.memory_space<vmem>>, vector<1x96xf32>
    %c5 = arith.constant 5 : index
    %c0_23 = arith.constant 0 : index
    %19 = vector.load %arg5[%c5, %c0_23] : memref<16x192xf32, #tpu.memory_space<vmem>>, vector<1x32xf32>
    %c6 = arith.constant 6 : index
    %c0_24 = arith.constant 0 : index
    %20 = vector.load %arg5[%c6, %c0_24] : memref<16x192xf32, #tpu.memory_space<vmem>>, vector<1x96xf32>
    %c7 = arith.constant 7 : index
    %c0_25 = arith.constant 0 : index
    %21 = vector.load %arg5[%c7, %c0_25] : memref<16x192xf32, #tpu.memory_space<vmem>>, vector<1x32xf32>
    %c8 = arith.constant 8 : index
    %c0_26 = arith.constant 0 : index
    %22 = vector.load %arg5[%c8, %c0_26] : memref<16x192xf32, #tpu.memory_space<vmem>>, vector<1x80xf32>
    %c9 = arith.constant 9 : index
    %c0_27 = arith.constant 0 : index
    %23 = vector.load %arg5[%c9, %c0_27] : memref<16x192xf32, #tpu.memory_space<vmem>>, vector<1x32xf32>
    %c10 = arith.constant 10 : index
    %c0_28 = arith.constant 0 : index
    %24 = vector.load %arg5[%c10, %c0_28] : memref<16x192xf32, #tpu.memory_space<vmem>>, vector<1x48xf32>
    %c11 = arith.constant 11 : index
    %c0_29 = arith.constant 0 : index
    %25 = vector.load %arg5[%c11, %c0_29] : memref<16x192xf32, #tpu.memory_space<vmem>>, vector<1x64xf32>
    %c12 = arith.constant 12 : index
    %c0_30 = arith.constant 0 : index
    %26 = vector.load %arg5[%c12, %c0_30] : memref<16x192xf32, #tpu.memory_space<vmem>>, vector<1x24xf32>
    %c13 = arith.constant 13 : index
    %c0_31 = arith.constant 0 : index
    %27 = vector.load %arg5[%c13, %c0_31] : memref<16x192xf32, #tpu.memory_space<vmem>>, vector<1x16xf32>
    %c0_32 = arith.constant 0 : index
    %c0_33 = arith.constant 0 : index
    %c0_34 = arith.constant 0 : index
    %28 = vector.load %arg0[%c0_32, %c0_33, %c0_34] : memref<8x8x32xf32, #tpu.memory_space<vmem>>, vector<8x8x32xf32>
    %29 = vector.shape_cast %28 : vector<8x8x32xf32> to vector<64x32xf32>
    %cst = arith.constant dense<0.000000e+00> : vector<64x192xf32>
    %30 = tpu.matmul %29, %0, %cst {dimension_numbers = #tpu.dot_dimension_numbers<[1], [0], [0], [1], [0, 0, 1, 1], [], []>} : vector<64x32xf32>, vector<32x192xf32>, vector<64x192xf32> -> vector<64x192xf32>
    %31 = vector.broadcast %14 : vector<1x192xf32> to vector<64x192xf32>
    %32 = arith.addf %30, %31 : vector<64x192xf32>
    %cst_35 = arith.constant 0.000000e+00 : f32
    %33 = vector.broadcast %cst_35 : f32 to vector<8x64xf32>
    %cst_36 = arith.constant 0.000000e+00 : f32
    %34 = vector.broadcast %cst_36 : f32 to vector<8x64xf32>
    %35 = vector.extract_strided_slice %32 {offsets = [0, 0], sizes = [8, 192], strides = [1, 1]} : vector<64x192xf32> to vector<8x192xf32>
    %cst_37 = arith.constant dense<0.000000e+00> : vector<8x192xf32>
    %36 = tpu.matmul %33, %1, %cst_37 {dimension_numbers = #tpu.dot_dimension_numbers<[1], [0], [0], [1], [0, 0, 1, 1], [], []>} : vector<8x64xf32>, vector<64x192xf32>, vector<8x192xf32> -> vector<8x192xf32>
    %37 = vector.extract_strided_slice %35 {offsets = [0, 0], sizes = [8, 128], strides = [1, 1]} : vector<8x192xf32> to vector<8x128xf32>
    %38 = vector.extract_strided_slice %36 {offsets = [0, 0], sizes = [8, 128], strides = [1, 1]} : vector<8x192xf32> to vector<8x128xf32>
    %39 = arith.addf %37, %38 : vector<8x128xf32>
    %40 = arith.negf %39 : vector<8x128xf32>
    %41 = math.exp %40 : vector<8x128xf32>
    %cst_38 = arith.constant 1.000000e+00 : f32
    %42 = vector.broadcast %cst_38 : f32 to vector<8x128xf32>
    %43 = arith.addf %42, %41 : vector<8x128xf32>
    %44 = arith.divf %42, %43 : vector<8x128xf32>
    %45 = vector.extract_strided_slice %44 {offsets = [0, 0], sizes = [8, 64], strides = [1, 1]} : vector<8x128xf32> to vector<8x64xf32>
    %46 = vector.extract_strided_slice %44 {offsets = [0, 64], sizes = [8, 64], strides = [1, 1]} : vector<8x128xf32> to vector<8x64xf32>
    %47 = vector.extract_strided_slice %35 {offsets = [0, 128], sizes = [8, 64], strides = [1, 1]} : vector<8x192xf32> to vector<8x64xf32>
    %48 = vector.extract_strided_slice %36 {offsets = [0, 128], sizes = [8, 64], strides = [1, 1]} : vector<8x192xf32> to vector<8x64xf32>
    %49 = vector.broadcast %15 : vector<1x64xf32> to vector<8x64xf32>
    %50 = arith.addf %48, %49 : vector<8x64xf32>
    %51 = arith.mulf %45, %50 : vector<8x64xf32>
    %52 = arith.addf %47, %51 : vector<8x64xf32>
    %53 = math.tanh %52 : vector<8x64xf32>
    %cst_39 = arith.constant 1.000000e+00 : f32
    %54 = vector.broadcast %cst_39 : f32 to vector<8x64xf32>
    %55 = arith.subf %54, %46 : vector<8x64xf32>
    %56 = arith.mulf %55, %53 : vector<8x64xf32>
    %57 = arith.mulf %46, %33 : vector<8x64xf32>
    %58 = arith.addf %56, %57 : vector<8x64xf32>
    %cst_40 = arith.constant dense<0.000000e+00> : vector<8x192xf32>
    %59 = tpu.matmul %58, %2, %cst_40 {dimension_numbers = #tpu.dot_dimension_numbers<[1], [0], [0], [1], [0, 0, 1, 1], [], []>} : vector<8x64xf32>, vector<64x192xf32>, vector<8x192xf32> -> vector<8x192xf32>
    %60 = vector.broadcast %16 : vector<1x192xf32> to vector<8x192xf32>
    %61 = arith.addf %59, %60 : vector<8x192xf32>
    %cst_41 = arith.constant dense<0.000000e+00> : vector<8x192xf32>
    %62 = tpu.matmul %34, %3, %cst_41 {dimension_numbers = #tpu.dot_dimension_numbers<[1], [0], [0], [1], [0, 0, 1, 1], [], []>} : vector<8x64xf32>, vector<64x192xf32>, vector<8x192xf32> -> vector<8x192xf32>
    %63 = vector.extract_strided_slice %61 {offsets = [0, 0], sizes = [8, 128], strides = [1, 1]} : vector<8x192xf32> to vector<8x128xf32>
    %64 = vector.extract_strided_slice %62 {offsets = [0, 0], sizes = [8, 128], strides = [1, 1]} : vector<8x192xf32> to vector<8x128xf32>
    %65 = arith.addf %63, %64 : vector<8x128xf32>
    %66 = arith.negf %65 : vector<8x128xf32>
    %67 = math.exp %66 : vector<8x128xf32>
    %cst_42 = arith.constant 1.000000e+00 : f32
    %68 = vector.broadcast %cst_42 : f32 to vector<8x128xf32>
    %69 = arith.addf %68, %67 : vector<8x128xf32>
    %70 = arith.divf %68, %69 : vector<8x128xf32>
    %71 = vector.extract_strided_slice %70 {offsets = [0, 0], sizes = [8, 64], strides = [1, 1]} : vector<8x128xf32> to vector<8x64xf32>
    %72 = vector.extract_strided_slice %70 {offsets = [0, 64], sizes = [8, 64], strides = [1, 1]} : vector<8x128xf32> to vector<8x64xf32>
    %73 = vector.extract_strided_slice %61 {offsets = [0, 128], sizes = [8, 64], strides = [1, 1]} : vector<8x192xf32> to vector<8x64xf32>
    %74 = vector.extract_strided_slice %62 {offsets = [0, 128], sizes = [8, 64], strides = [1, 1]} : vector<8x192xf32> to vector<8x64xf32>
    %75 = vector.broadcast %17 : vector<1x64xf32> to vector<8x64xf32>
    %76 = arith.addf %74, %75 : vector<8x64xf32>
    %77 = arith.mulf %71, %76 : vector<8x64xf32>
    %78 = arith.addf %73, %77 : vector<8x64xf32>
    %79 = math.tanh %78 : vector<8x64xf32>
    %cst_43 = arith.constant 1.000000e+00 : f32
    %80 = vector.broadcast %cst_43 : f32 to vector<8x64xf32>
    %81 = arith.subf %80, %72 : vector<8x64xf32>
    %82 = arith.mulf %81, %79 : vector<8x64xf32>
    %83 = arith.mulf %72, %34 : vector<8x64xf32>
    %84 = arith.addf %82, %83 : vector<8x64xf32>
    %85 = vector.extract_strided_slice %32 {offsets = [8, 0], sizes = [8, 192], strides = [1, 1]} : vector<64x192xf32> to vector<8x192xf32>
    %cst_44 = arith.constant dense<0.000000e+00> : vector<8x192xf32>
    %86 = tpu.matmul %58, %1, %cst_44 {dimension_numbers = #tpu.dot_dimension_numbers<[1], [0], [0], [1], [0, 0, 1, 1], [], []>} : vector<8x64xf32>, vector<64x192xf32>, vector<8x192xf32> -> vector<8x192xf32>
    %87 = vector.extract_strided_slice %85 {offsets = [0, 0], sizes = [8, 128], strides = [1, 1]} : vector<8x192xf32> to vector<8x128xf32>
    %88 = vector.extract_strided_slice %86 {offsets = [0, 0], sizes = [8, 128], strides = [1, 1]} : vector<8x192xf32> to vector<8x128xf32>
    %89 = arith.addf %87, %88 : vector<8x128xf32>
    %90 = arith.negf %89 : vector<8x128xf32>
    %91 = math.exp %90 : vector<8x128xf32>
    %cst_45 = arith.constant 1.000000e+00 : f32
    %92 = vector.broadcast %cst_45 : f32 to vector<8x128xf32>
    %93 = arith.addf %92, %91 : vector<8x128xf32>
    %94 = arith.divf %92, %93 : vector<8x128xf32>
    %95 = vector.extract_strided_slice %94 {offsets = [0, 0], sizes = [8, 64], strides = [1, 1]} : vector<8x128xf32> to vector<8x64xf32>
    %96 = vector.extract_strided_slice %94 {offsets = [0, 64], sizes = [8, 64], strides = [1, 1]} : vector<8x128xf32> to vector<8x64xf32>
    %97 = vector.extract_strided_slice %85 {offsets = [0, 128], sizes = [8, 64], strides = [1, 1]} : vector<8x192xf32> to vector<8x64xf32>
    %98 = vector.extract_strided_slice %86 {offsets = [0, 128], sizes = [8, 64], strides = [1, 1]} : vector<8x192xf32> to vector<8x64xf32>
    %99 = vector.broadcast %15 : vector<1x64xf32> to vector<8x64xf32>
    %100 = arith.addf %98, %99 : vector<8x64xf32>
    %101 = arith.mulf %95, %100 : vector<8x64xf32>
    %102 = arith.addf %97, %101 : vector<8x64xf32>
    %103 = math.tanh %102 : vector<8x64xf32>
    %cst_46 = arith.constant 1.000000e+00 : f32
    %104 = vector.broadcast %cst_46 : f32 to vector<8x64xf32>
    %105 = arith.subf %104, %96 : vector<8x64xf32>
    %106 = arith.mulf %105, %103 : vector<8x64xf32>
    %107 = arith.mulf %96, %58 : vector<8x64xf32>
    %108 = arith.addf %106, %107 : vector<8x64xf32>
    %cst_47 = arith.constant dense<0.000000e+00> : vector<8x192xf32>
    %109 = tpu.matmul %108, %2, %cst_47 {dimension_numbers = #tpu.dot_dimension_numbers<[1], [0], [0], [1], [0, 0, 1, 1], [], []>} : vector<8x64xf32>, vector<64x192xf32>, vector<8x192xf32> -> vector<8x192xf32>
    %110 = vector.broadcast %16 : vector<1x192xf32> to vector<8x192xf32>
    %111 = arith.addf %109, %110 : vector<8x192xf32>
    %cst_48 = arith.constant dense<0.000000e+00> : vector<8x192xf32>
    %112 = tpu.matmul %84, %3, %cst_48 {dimension_numbers = #tpu.dot_dimension_numbers<[1], [0], [0], [1], [0, 0, 1, 1], [], []>} : vector<8x64xf32>, vector<64x192xf32>, vector<8x192xf32> -> vector<8x192xf32>
    %113 = vector.extract_strided_slice %111 {offsets = [0, 0], sizes = [8, 128], strides = [1, 1]} : vector<8x192xf32> to vector<8x128xf32>
    %114 = vector.extract_strided_slice %112 {offsets = [0, 0], sizes = [8, 128], strides = [1, 1]} : vector<8x192xf32> to vector<8x128xf32>
    %115 = arith.addf %113, %114 : vector<8x128xf32>
    %116 = arith.negf %115 : vector<8x128xf32>
    %117 = math.exp %116 : vector<8x128xf32>
    %cst_49 = arith.constant 1.000000e+00 : f32
    %118 = vector.broadcast %cst_49 : f32 to vector<8x128xf32>
    %119 = arith.addf %118, %117 : vector<8x128xf32>
    %120 = arith.divf %118, %119 : vector<8x128xf32>
    %121 = vector.extract_strided_slice %120 {offsets = [0, 0], sizes = [8, 64], strides = [1, 1]} : vector<8x128xf32> to vector<8x64xf32>
    %122 = vector.extract_strided_slice %120 {offsets = [0, 64], sizes = [8, 64], strides = [1, 1]} : vector<8x128xf32> to vector<8x64xf32>
    %123 = vector.extract_strided_slice %111 {offsets = [0, 128], sizes = [8, 64], strides = [1, 1]} : vector<8x192xf32> to vector<8x64xf32>
    %124 = vector.extract_strided_slice %112 {offsets = [0, 128], sizes = [8, 64], strides = [1, 1]} : vector<8x192xf32> to vector<8x64xf32>
    %125 = vector.broadcast %17 : vector<1x64xf32> to vector<8x64xf32>
    %126 = arith.addf %124, %125 : vector<8x64xf32>
    %127 = arith.mulf %121, %126 : vector<8x64xf32>
    %128 = arith.addf %123, %127 : vector<8x64xf32>
    %129 = math.tanh %128 : vector<8x64xf32>
    %cst_50 = arith.constant 1.000000e+00 : f32
    %130 = vector.broadcast %cst_50 : f32 to vector<8x64xf32>
    %131 = arith.subf %130, %122 : vector<8x64xf32>
    %132 = arith.mulf %131, %129 : vector<8x64xf32>
    %133 = arith.mulf %122, %84 : vector<8x64xf32>
    %134 = arith.addf %132, %133 : vector<8x64xf32>
    %135 = vector.extract_strided_slice %32 {offsets = [16, 0], sizes = [8, 192], strides = [1, 1]} : vector<64x192xf32> to vector<8x192xf32>
    %cst_51 = arith.constant dense<0.000000e+00> : vector<8x192xf32>
    %136 = tpu.matmul %108, %1, %cst_51 {dimension_numbers = #tpu.dot_dimension_numbers<[1], [0], [0], [1], [0, 0, 1, 1], [], []>} : vector<8x64xf32>, vector<64x192xf32>, vector<8x192xf32> -> vector<8x192xf32>
    %137 = vector.extract_strided_slice %135 {offsets = [0, 0], sizes = [8, 128], strides = [1, 1]} : vector<8x192xf32> to vector<8x128xf32>
    %138 = vector.extract_strided_slice %136 {offsets = [0, 0], sizes = [8, 128], strides = [1, 1]} : vector<8x192xf32> to vector<8x128xf32>
    %139 = arith.addf %137, %138 : vector<8x128xf32>
    %140 = arith.negf %139 : vector<8x128xf32>
    %141 = math.exp %140 : vector<8x128xf32>
    %cst_52 = arith.constant 1.000000e+00 : f32
    %142 = vector.broadcast %cst_52 : f32 to vector<8x128xf32>
    %143 = arith.addf %142, %141 : vector<8x128xf32>
    %144 = arith.divf %142, %143 : vector<8x128xf32>
    %145 = vector.extract_strided_slice %144 {offsets = [0, 0], sizes = [8, 64], strides = [1, 1]} : vector<8x128xf32> to vector<8x64xf32>
    %146 = vector.extract_strided_slice %144 {offsets = [0, 64], sizes = [8, 64], strides = [1, 1]} : vector<8x128xf32> to vector<8x64xf32>
    %147 = vector.extract_strided_slice %135 {offsets = [0, 128], sizes = [8, 64], strides = [1, 1]} : vector<8x192xf32> to vector<8x64xf32>
    %148 = vector.extract_strided_slice %136 {offsets = [0, 128], sizes = [8, 64], strides = [1, 1]} : vector<8x192xf32> to vector<8x64xf32>
    %149 = vector.broadcast %15 : vector<1x64xf32> to vector<8x64xf32>
    %150 = arith.addf %148, %149 : vector<8x64xf32>
    %151 = arith.mulf %145, %150 : vector<8x64xf32>
    %152 = arith.addf %147, %151 : vector<8x64xf32>
    %153 = math.tanh %152 : vector<8x64xf32>
    %cst_53 = arith.constant 1.000000e+00 : f32
    %154 = vector.broadcast %cst_53 : f32 to vector<8x64xf32>
    %155 = arith.subf %154, %146 : vector<8x64xf32>
    %156 = arith.mulf %155, %153 : vector<8x64xf32>
    %157 = arith.mulf %146, %108 : vector<8x64xf32>
    %158 = arith.addf %156, %157 : vector<8x64xf32>
    %cst_54 = arith.constant dense<0.000000e+00> : vector<8x192xf32>
    %159 = tpu.matmul %158, %2, %cst_54 {dimension_numbers = #tpu.dot_dimension_numbers<[1], [0], [0], [1], [0, 0, 1, 1], [], []>} : vector<8x64xf32>, vector<64x192xf32>, vector<8x192xf32> -> vector<8x192xf32>
    %160 = vector.broadcast %16 : vector<1x192xf32> to vector<8x192xf32>
    %161 = arith.addf %159, %160 : vector<8x192xf32>
    %cst_55 = arith.constant dense<0.000000e+00> : vector<8x192xf32>
    %162 = tpu.matmul %134, %3, %cst_55 {dimension_numbers = #tpu.dot_dimension_numbers<[1], [0], [0], [1], [0, 0, 1, 1], [], []>} : vector<8x64xf32>, vector<64x192xf32>, vector<8x192xf32> -> vector<8x192xf32>
    %163 = vector.extract_strided_slice %161 {offsets = [0, 0], sizes = [8, 128], strides = [1, 1]} : vector<8x192xf32> to vector<8x128xf32>
    %164 = vector.extract_strided_slice %162 {offsets = [0, 0], sizes = [8, 128], strides = [1, 1]} : vector<8x192xf32> to vector<8x128xf32>
    %165 = arith.addf %163, %164 : vector<8x128xf32>
    %166 = arith.negf %165 : vector<8x128xf32>
    %167 = math.exp %166 : vector<8x128xf32>
    %cst_56 = arith.constant 1.000000e+00 : f32
    %168 = vector.broadcast %cst_56 : f32 to vector<8x128xf32>
    %169 = arith.addf %168, %167 : vector<8x128xf32>
    %170 = arith.divf %168, %169 : vector<8x128xf32>
    %171 = vector.extract_strided_slice %170 {offsets = [0, 0], sizes = [8, 64], strides = [1, 1]} : vector<8x128xf32> to vector<8x64xf32>
    %172 = vector.extract_strided_slice %170 {offsets = [0, 64], sizes = [8, 64], strides = [1, 1]} : vector<8x128xf32> to vector<8x64xf32>
    %173 = vector.extract_strided_slice %161 {offsets = [0, 128], sizes = [8, 64], strides = [1, 1]} : vector<8x192xf32> to vector<8x64xf32>
    %174 = vector.extract_strided_slice %162 {offsets = [0, 128], sizes = [8, 64], strides = [1, 1]} : vector<8x192xf32> to vector<8x64xf32>
    %175 = vector.broadcast %17 : vector<1x64xf32> to vector<8x64xf32>
    %176 = arith.addf %174, %175 : vector<8x64xf32>
    %177 = arith.mulf %171, %176 : vector<8x64xf32>
    %178 = arith.addf %173, %177 : vector<8x64xf32>
    %179 = math.tanh %178 : vector<8x64xf32>
    %cst_57 = arith.constant 1.000000e+00 : f32
    %180 = vector.broadcast %cst_57 : f32 to vector<8x64xf32>
    %181 = arith.subf %180, %172 : vector<8x64xf32>
    %182 = arith.mulf %181, %179 : vector<8x64xf32>
    %183 = arith.mulf %172, %134 : vector<8x64xf32>
    %184 = arith.addf %182, %183 : vector<8x64xf32>
    %185 = vector.extract_strided_slice %32 {offsets = [24, 0], sizes = [8, 192], strides = [1, 1]} : vector<64x192xf32> to vector<8x192xf32>
    %cst_58 = arith.constant dense<0.000000e+00> : vector<8x192xf32>
    %186 = tpu.matmul %158, %1, %cst_58 {dimension_numbers = #tpu.dot_dimension_numbers<[1], [0], [0], [1], [0, 0, 1, 1], [], []>} : vector<8x64xf32>, vector<64x192xf32>, vector<8x192xf32> -> vector<8x192xf32>
    %187 = vector.extract_strided_slice %185 {offsets = [0, 0], sizes = [8, 128], strides = [1, 1]} : vector<8x192xf32> to vector<8x128xf32>
    %188 = vector.extract_strided_slice %186 {offsets = [0, 0], sizes = [8, 128], strides = [1, 1]} : vector<8x192xf32> to vector<8x128xf32>
    %189 = arith.addf %187, %188 : vector<8x128xf32>
    %190 = arith.negf %189 : vector<8x128xf32>
    %191 = math.exp %190 : vector<8x128xf32>
    %cst_59 = arith.constant 1.000000e+00 : f32
    %192 = vector.broadcast %cst_59 : f32 to vector<8x128xf32>
    %193 = arith.addf %192, %191 : vector<8x128xf32>
    %194 = arith.divf %192, %193 : vector<8x128xf32>
    %195 = vector.extract_strided_slice %194 {offsets = [0, 0], sizes = [8, 64], strides = [1, 1]} : vector<8x128xf32> to vector<8x64xf32>
    %196 = vector.extract_strided_slice %194 {offsets = [0, 64], sizes = [8, 64], strides = [1, 1]} : vector<8x128xf32> to vector<8x64xf32>
    %197 = vector.extract_strided_slice %185 {offsets = [0, 128], sizes = [8, 64], strides = [1, 1]} : vector<8x192xf32> to vector<8x64xf32>
    %198 = vector.extract_strided_slice %186 {offsets = [0, 128], sizes = [8, 64], strides = [1, 1]} : vector<8x192xf32> to vector<8x64xf32>
    %199 = vector.broadcast %15 : vector<1x64xf32> to vector<8x64xf32>
    %200 = arith.addf %198, %199 : vector<8x64xf32>
    %201 = arith.mulf %195, %200 : vector<8x64xf32>
    %202 = arith.addf %197, %201 : vector<8x64xf32>
    %203 = math.tanh %202 : vector<8x64xf32>
    %cst_60 = arith.constant 1.000000e+00 : f32
    %204 = vector.broadcast %cst_60 : f32 to vector<8x64xf32>
    %205 = arith.subf %204, %196 : vector<8x64xf32>
    %206 = arith.mulf %205, %203 : vector<8x64xf32>
    %207 = arith.mulf %196, %158 : vector<8x64xf32>
    %208 = arith.addf %206, %207 : vector<8x64xf32>
    %cst_61 = arith.constant dense<0.000000e+00> : vector<8x192xf32>
    %209 = tpu.matmul %208, %2, %cst_61 {dimension_numbers = #tpu.dot_dimension_numbers<[1], [0], [0], [1], [0, 0, 1, 1], [], []>} : vector<8x64xf32>, vector<64x192xf32>, vector<8x192xf32> -> vector<8x192xf32>
    %210 = vector.broadcast %16 : vector<1x192xf32> to vector<8x192xf32>
    %211 = arith.addf %209, %210 : vector<8x192xf32>
    %cst_62 = arith.constant dense<0.000000e+00> : vector<8x192xf32>
    %212 = tpu.matmul %184, %3, %cst_62 {dimension_numbers = #tpu.dot_dimension_numbers<[1], [0], [0], [1], [0, 0, 1, 1], [], []>} : vector<8x64xf32>, vector<64x192xf32>, vector<8x192xf32> -> vector<8x192xf32>
    %213 = vector.extract_strided_slice %211 {offsets = [0, 0], sizes = [8, 128], strides = [1, 1]} : vector<8x192xf32> to vector<8x128xf32>
    %214 = vector.extract_strided_slice %212 {offsets = [0, 0], sizes = [8, 128], strides = [1, 1]} : vector<8x192xf32> to vector<8x128xf32>
    %215 = arith.addf %213, %214 : vector<8x128xf32>
    %216 = arith.negf %215 : vector<8x128xf32>
    %217 = math.exp %216 : vector<8x128xf32>
    %cst_63 = arith.constant 1.000000e+00 : f32
    %218 = vector.broadcast %cst_63 : f32 to vector<8x128xf32>
    %219 = arith.addf %218, %217 : vector<8x128xf32>
    %220 = arith.divf %218, %219 : vector<8x128xf32>
    %221 = vector.extract_strided_slice %220 {offsets = [0, 0], sizes = [8, 64], strides = [1, 1]} : vector<8x128xf32> to vector<8x64xf32>
    %222 = vector.extract_strided_slice %220 {offsets = [0, 64], sizes = [8, 64], strides = [1, 1]} : vector<8x128xf32> to vector<8x64xf32>
    %223 = vector.extract_strided_slice %211 {offsets = [0, 128], sizes = [8, 64], strides = [1, 1]} : vector<8x192xf32> to vector<8x64xf32>
    %224 = vector.extract_strided_slice %212 {offsets = [0, 128], sizes = [8, 64], strides = [1, 1]} : vector<8x192xf32> to vector<8x64xf32>
    %225 = vector.broadcast %17 : vector<1x64xf32> to vector<8x64xf32>
    %226 = arith.addf %224, %225 : vector<8x64xf32>
    %227 = arith.mulf %221, %226 : vector<8x64xf32>
    %228 = arith.addf %223, %227 : vector<8x64xf32>
    %229 = math.tanh %228 : vector<8x64xf32>
    %cst_64 = arith.constant 1.000000e+00 : f32
    %230 = vector.broadcast %cst_64 : f32 to vector<8x64xf32>
    %231 = arith.subf %230, %222 : vector<8x64xf32>
    %232 = arith.mulf %231, %229 : vector<8x64xf32>
    %233 = arith.mulf %222, %184 : vector<8x64xf32>
    %234 = arith.addf %232, %233 : vector<8x64xf32>
    %235 = vector.extract_strided_slice %32 {offsets = [32, 0], sizes = [8, 192], strides = [1, 1]} : vector<64x192xf32> to vector<8x192xf32>
    %cst_65 = arith.constant dense<0.000000e+00> : vector<8x192xf32>
    %236 = tpu.matmul %208, %1, %cst_65 {dimension_numbers = #tpu.dot_dimension_numbers<[1], [0], [0], [1], [0, 0, 1, 1], [], []>} : vector<8x64xf32>, vector<64x192xf32>, vector<8x192xf32> -> vector<8x192xf32>
    %237 = vector.extract_strided_slice %235 {offsets = [0, 0], sizes = [8, 128], strides = [1, 1]} : vector<8x192xf32> to vector<8x128xf32>
    %238 = vector.extract_strided_slice %236 {offsets = [0, 0], sizes = [8, 128], strides = [1, 1]} : vector<8x192xf32> to vector<8x128xf32>
    %239 = arith.addf %237, %238 : vector<8x128xf32>
    %240 = arith.negf %239 : vector<8x128xf32>
    %241 = math.exp %240 : vector<8x128xf32>
    %cst_66 = arith.constant 1.000000e+00 : f32
    %242 = vector.broadcast %cst_66 : f32 to vector<8x128xf32>
    %243 = arith.addf %242, %241 : vector<8x128xf32>
    %244 = arith.divf %242, %243 : vector<8x128xf32>
    %245 = vector.extract_strided_slice %244 {offsets = [0, 0], sizes = [8, 64], strides = [1, 1]} : vector<8x128xf32> to vector<8x64xf32>
    %246 = vector.extract_strided_slice %244 {offsets = [0, 64], sizes = [8, 64], strides = [1, 1]} : vector<8x128xf32> to vector<8x64xf32>
    %247 = vector.extract_strided_slice %235 {offsets = [0, 128], sizes = [8, 64], strides = [1, 1]} : vector<8x192xf32> to vector<8x64xf32>
    %248 = vector.extract_strided_slice %236 {offsets = [0, 128], sizes = [8, 64], strides = [1, 1]} : vector<8x192xf32> to vector<8x64xf32>
    %249 = vector.broadcast %15 : vector<1x64xf32> to vector<8x64xf32>
    %250 = arith.addf %248, %249 : vector<8x64xf32>
    %251 = arith.mulf %245, %250 : vector<8x64xf32>
    %252 = arith.addf %247, %251 : vector<8x64xf32>
    %253 = math.tanh %252 : vector<8x64xf32>
    %cst_67 = arith.constant 1.000000e+00 : f32
    %254 = vector.broadcast %cst_67 : f32 to vector<8x64xf32>
    %255 = arith.subf %254, %246 : vector<8x64xf32>
    %256 = arith.mulf %255, %253 : vector<8x64xf32>
    %257 = arith.mulf %246, %208 : vector<8x64xf32>
    %258 = arith.addf %256, %257 : vector<8x64xf32>
    %cst_68 = arith.constant dense<0.000000e+00> : vector<8x192xf32>
    %259 = tpu.matmul %258, %2, %cst_68 {dimension_numbers = #tpu.dot_dimension_numbers<[1], [0], [0], [1], [0, 0, 1, 1], [], []>} : vector<8x64xf32>, vector<64x192xf32>, vector<8x192xf32> -> vector<8x192xf32>
    %260 = vector.broadcast %16 : vector<1x192xf32> to vector<8x192xf32>
    %261 = arith.addf %259, %260 : vector<8x192xf32>
    %cst_69 = arith.constant dense<0.000000e+00> : vector<8x192xf32>
    %262 = tpu.matmul %234, %3, %cst_69 {dimension_numbers = #tpu.dot_dimension_numbers<[1], [0], [0], [1], [0, 0, 1, 1], [], []>} : vector<8x64xf32>, vector<64x192xf32>, vector<8x192xf32> -> vector<8x192xf32>
    %263 = vector.extract_strided_slice %261 {offsets = [0, 0], sizes = [8, 128], strides = [1, 1]} : vector<8x192xf32> to vector<8x128xf32>
    %264 = vector.extract_strided_slice %262 {offsets = [0, 0], sizes = [8, 128], strides = [1, 1]} : vector<8x192xf32> to vector<8x128xf32>
    %265 = arith.addf %263, %264 : vector<8x128xf32>
    %266 = arith.negf %265 : vector<8x128xf32>
    %267 = math.exp %266 : vector<8x128xf32>
    %cst_70 = arith.constant 1.000000e+00 : f32
    %268 = vector.broadcast %cst_70 : f32 to vector<8x128xf32>
    %269 = arith.addf %268, %267 : vector<8x128xf32>
    %270 = arith.divf %268, %269 : vector<8x128xf32>
    %271 = vector.extract_strided_slice %270 {offsets = [0, 0], sizes = [8, 64], strides = [1, 1]} : vector<8x128xf32> to vector<8x64xf32>
    %272 = vector.extract_strided_slice %270 {offsets = [0, 64], sizes = [8, 64], strides = [1, 1]} : vector<8x128xf32> to vector<8x64xf32>
    %273 = vector.extract_strided_slice %261 {offsets = [0, 128], sizes = [8, 64], strides = [1, 1]} : vector<8x192xf32> to vector<8x64xf32>
    %274 = vector.extract_strided_slice %262 {offsets = [0, 128], sizes = [8, 64], strides = [1, 1]} : vector<8x192xf32> to vector<8x64xf32>
    %275 = vector.broadcast %17 : vector<1x64xf32> to vector<8x64xf32>
    %276 = arith.addf %274, %275 : vector<8x64xf32>
    %277 = arith.mulf %271, %276 : vector<8x64xf32>
    %278 = arith.addf %273, %277 : vector<8x64xf32>
    %279 = math.tanh %278 : vector<8x64xf32>
    %cst_71 = arith.constant 1.000000e+00 : f32
    %280 = vector.broadcast %cst_71 : f32 to vector<8x64xf32>
    %281 = arith.subf %280, %272 : vector<8x64xf32>
    %282 = arith.mulf %281, %279 : vector<8x64xf32>
    %283 = arith.mulf %272, %234 : vector<8x64xf32>
    %284 = arith.addf %282, %283 : vector<8x64xf32>
    %285 = vector.extract_strided_slice %32 {offsets = [40, 0], sizes = [8, 192], strides = [1, 1]} : vector<64x192xf32> to vector<8x192xf32>
    %cst_72 = arith.constant dense<0.000000e+00> : vector<8x192xf32>
    %286 = tpu.matmul %258, %1, %cst_72 {dimension_numbers = #tpu.dot_dimension_numbers<[1], [0], [0], [1], [0, 0, 1, 1], [], []>} : vector<8x64xf32>, vector<64x192xf32>, vector<8x192xf32> -> vector<8x192xf32>
    %287 = vector.extract_strided_slice %285 {offsets = [0, 0], sizes = [8, 128], strides = [1, 1]} : vector<8x192xf32> to vector<8x128xf32>
    %288 = vector.extract_strided_slice %286 {offsets = [0, 0], sizes = [8, 128], strides = [1, 1]} : vector<8x192xf32> to vector<8x128xf32>
    %289 = arith.addf %287, %288 : vector<8x128xf32>
    %290 = arith.negf %289 : vector<8x128xf32>
    %291 = math.exp %290 : vector<8x128xf32>
    %cst_73 = arith.constant 1.000000e+00 : f32
    %292 = vector.broadcast %cst_73 : f32 to vector<8x128xf32>
    %293 = arith.addf %292, %291 : vector<8x128xf32>
    %294 = arith.divf %292, %293 : vector<8x128xf32>
    %295 = vector.extract_strided_slice %294 {offsets = [0, 0], sizes = [8, 64], strides = [1, 1]} : vector<8x128xf32> to vector<8x64xf32>
    %296 = vector.extract_strided_slice %294 {offsets = [0, 64], sizes = [8, 64], strides = [1, 1]} : vector<8x128xf32> to vector<8x64xf32>
    %297 = vector.extract_strided_slice %285 {offsets = [0, 128], sizes = [8, 64], strides = [1, 1]} : vector<8x192xf32> to vector<8x64xf32>
    %298 = vector.extract_strided_slice %286 {offsets = [0, 128], sizes = [8, 64], strides = [1, 1]} : vector<8x192xf32> to vector<8x64xf32>
    %299 = vector.broadcast %15 : vector<1x64xf32> to vector<8x64xf32>
    %300 = arith.addf %298, %299 : vector<8x64xf32>
    %301 = arith.mulf %295, %300 : vector<8x64xf32>
    %302 = arith.addf %297, %301 : vector<8x64xf32>
    %303 = math.tanh %302 : vector<8x64xf32>
    %cst_74 = arith.constant 1.000000e+00 : f32
    %304 = vector.broadcast %cst_74 : f32 to vector<8x64xf32>
    %305 = arith.subf %304, %296 : vector<8x64xf32>
    %306 = arith.mulf %305, %303 : vector<8x64xf32>
    %307 = arith.mulf %296, %258 : vector<8x64xf32>
    %308 = arith.addf %306, %307 : vector<8x64xf32>
    %cst_75 = arith.constant dense<0.000000e+00> : vector<8x192xf32>
    %309 = tpu.matmul %308, %2, %cst_75 {dimension_numbers = #tpu.dot_dimension_numbers<[1], [0], [0], [1], [0, 0, 1, 1], [], []>} : vector<8x64xf32>, vector<64x192xf32>, vector<8x192xf32> -> vector<8x192xf32>
    %310 = vector.broadcast %16 : vector<1x192xf32> to vector<8x192xf32>
    %311 = arith.addf %309, %310 : vector<8x192xf32>
    %cst_76 = arith.constant dense<0.000000e+00> : vector<8x192xf32>
    %312 = tpu.matmul %284, %3, %cst_76 {dimension_numbers = #tpu.dot_dimension_numbers<[1], [0], [0], [1], [0, 0, 1, 1], [], []>} : vector<8x64xf32>, vector<64x192xf32>, vector<8x192xf32> -> vector<8x192xf32>
    %313 = vector.extract_strided_slice %311 {offsets = [0, 0], sizes = [8, 128], strides = [1, 1]} : vector<8x192xf32> to vector<8x128xf32>
    %314 = vector.extract_strided_slice %312 {offsets = [0, 0], sizes = [8, 128], strides = [1, 1]} : vector<8x192xf32> to vector<8x128xf32>
    %315 = arith.addf %313, %314 : vector<8x128xf32>
    %316 = arith.negf %315 : vector<8x128xf32>
    %317 = math.exp %316 : vector<8x128xf32>
    %cst_77 = arith.constant 1.000000e+00 : f32
    %318 = vector.broadcast %cst_77 : f32 to vector<8x128xf32>
    %319 = arith.addf %318, %317 : vector<8x128xf32>
    %320 = arith.divf %318, %319 : vector<8x128xf32>
    %321 = vector.extract_strided_slice %320 {offsets = [0, 0], sizes = [8, 64], strides = [1, 1]} : vector<8x128xf32> to vector<8x64xf32>
    %322 = vector.extract_strided_slice %320 {offsets = [0, 64], sizes = [8, 64], strides = [1, 1]} : vector<8x128xf32> to vector<8x64xf32>
    %323 = vector.extract_strided_slice %311 {offsets = [0, 128], sizes = [8, 64], strides = [1, 1]} : vector<8x192xf32> to vector<8x64xf32>
    %324 = vector.extract_strided_slice %312 {offsets = [0, 128], sizes = [8, 64], strides = [1, 1]} : vector<8x192xf32> to vector<8x64xf32>
    %325 = vector.broadcast %17 : vector<1x64xf32> to vector<8x64xf32>
    %326 = arith.addf %324, %325 : vector<8x64xf32>
    %327 = arith.mulf %321, %326 : vector<8x64xf32>
    %328 = arith.addf %323, %327 : vector<8x64xf32>
    %329 = math.tanh %328 : vector<8x64xf32>
    %cst_78 = arith.constant 1.000000e+00 : f32
    %330 = vector.broadcast %cst_78 : f32 to vector<8x64xf32>
    %331 = arith.subf %330, %322 : vector<8x64xf32>
    %332 = arith.mulf %331, %329 : vector<8x64xf32>
    %333 = arith.mulf %322, %284 : vector<8x64xf32>
    %334 = arith.addf %332, %333 : vector<8x64xf32>
    %335 = vector.extract_strided_slice %32 {offsets = [48, 0], sizes = [8, 192], strides = [1, 1]} : vector<64x192xf32> to vector<8x192xf32>
    %cst_79 = arith.constant dense<0.000000e+00> : vector<8x192xf32>
    %336 = tpu.matmul %308, %1, %cst_79 {dimension_numbers = #tpu.dot_dimension_numbers<[1], [0], [0], [1], [0, 0, 1, 1], [], []>} : vector<8x64xf32>, vector<64x192xf32>, vector<8x192xf32> -> vector<8x192xf32>
    %337 = vector.extract_strided_slice %335 {offsets = [0, 0], sizes = [8, 128], strides = [1, 1]} : vector<8x192xf32> to vector<8x128xf32>
    %338 = vector.extract_strided_slice %336 {offsets = [0, 0], sizes = [8, 128], strides = [1, 1]} : vector<8x192xf32> to vector<8x128xf32>
    %339 = arith.addf %337, %338 : vector<8x128xf32>
    %340 = arith.negf %339 : vector<8x128xf32>
    %341 = math.exp %340 : vector<8x128xf32>
    %cst_80 = arith.constant 1.000000e+00 : f32
    %342 = vector.broadcast %cst_80 : f32 to vector<8x128xf32>
    %343 = arith.addf %342, %341 : vector<8x128xf32>
    %344 = arith.divf %342, %343 : vector<8x128xf32>
    %345 = vector.extract_strided_slice %344 {offsets = [0, 0], sizes = [8, 64], strides = [1, 1]} : vector<8x128xf32> to vector<8x64xf32>
    %346 = vector.extract_strided_slice %344 {offsets = [0, 64], sizes = [8, 64], strides = [1, 1]} : vector<8x128xf32> to vector<8x64xf32>
    %347 = vector.extract_strided_slice %335 {offsets = [0, 128], sizes = [8, 64], strides = [1, 1]} : vector<8x192xf32> to vector<8x64xf32>
    %348 = vector.extract_strided_slice %336 {offsets = [0, 128], sizes = [8, 64], strides = [1, 1]} : vector<8x192xf32> to vector<8x64xf32>
    %349 = vector.broadcast %15 : vector<1x64xf32> to vector<8x64xf32>
    %350 = arith.addf %348, %349 : vector<8x64xf32>
    %351 = arith.mulf %345, %350 : vector<8x64xf32>
    %352 = arith.addf %347, %351 : vector<8x64xf32>
    %353 = math.tanh %352 : vector<8x64xf32>
    %cst_81 = arith.constant 1.000000e+00 : f32
    %354 = vector.broadcast %cst_81 : f32 to vector<8x64xf32>
    %355 = arith.subf %354, %346 : vector<8x64xf32>
    %356 = arith.mulf %355, %353 : vector<8x64xf32>
    %357 = arith.mulf %346, %308 : vector<8x64xf32>
    %358 = arith.addf %356, %357 : vector<8x64xf32>
    %cst_82 = arith.constant dense<0.000000e+00> : vector<8x192xf32>
    %359 = tpu.matmul %358, %2, %cst_82 {dimension_numbers = #tpu.dot_dimension_numbers<[1], [0], [0], [1], [0, 0, 1, 1], [], []>} : vector<8x64xf32>, vector<64x192xf32>, vector<8x192xf32> -> vector<8x192xf32>
    %360 = vector.broadcast %16 : vector<1x192xf32> to vector<8x192xf32>
    %361 = arith.addf %359, %360 : vector<8x192xf32>
    %cst_83 = arith.constant dense<0.000000e+00> : vector<8x192xf32>
    %362 = tpu.matmul %334, %3, %cst_83 {dimension_numbers = #tpu.dot_dimension_numbers<[1], [0], [0], [1], [0, 0, 1, 1], [], []>} : vector<8x64xf32>, vector<64x192xf32>, vector<8x192xf32> -> vector<8x192xf32>
    %363 = vector.extract_strided_slice %361 {offsets = [0, 0], sizes = [8, 128], strides = [1, 1]} : vector<8x192xf32> to vector<8x128xf32>
    %364 = vector.extract_strided_slice %362 {offsets = [0, 0], sizes = [8, 128], strides = [1, 1]} : vector<8x192xf32> to vector<8x128xf32>
    %365 = arith.addf %363, %364 : vector<8x128xf32>
    %366 = arith.negf %365 : vector<8x128xf32>
    %367 = math.exp %366 : vector<8x128xf32>
    %cst_84 = arith.constant 1.000000e+00 : f32
    %368 = vector.broadcast %cst_84 : f32 to vector<8x128xf32>
    %369 = arith.addf %368, %367 : vector<8x128xf32>
    %370 = arith.divf %368, %369 : vector<8x128xf32>
    %371 = vector.extract_strided_slice %370 {offsets = [0, 0], sizes = [8, 64], strides = [1, 1]} : vector<8x128xf32> to vector<8x64xf32>
    %372 = vector.extract_strided_slice %370 {offsets = [0, 64], sizes = [8, 64], strides = [1, 1]} : vector<8x128xf32> to vector<8x64xf32>
    %373 = vector.extract_strided_slice %361 {offsets = [0, 128], sizes = [8, 64], strides = [1, 1]} : vector<8x192xf32> to vector<8x64xf32>
    %374 = vector.extract_strided_slice %362 {offsets = [0, 128], sizes = [8, 64], strides = [1, 1]} : vector<8x192xf32> to vector<8x64xf32>
    %375 = vector.broadcast %17 : vector<1x64xf32> to vector<8x64xf32>
    %376 = arith.addf %374, %375 : vector<8x64xf32>
    %377 = arith.mulf %371, %376 : vector<8x64xf32>
    %378 = arith.addf %373, %377 : vector<8x64xf32>
    %379 = math.tanh %378 : vector<8x64xf32>
    %cst_85 = arith.constant 1.000000e+00 : f32
    %380 = vector.broadcast %cst_85 : f32 to vector<8x64xf32>
    %381 = arith.subf %380, %372 : vector<8x64xf32>
    %382 = arith.mulf %381, %379 : vector<8x64xf32>
    %383 = arith.mulf %372, %334 : vector<8x64xf32>
    %384 = arith.addf %382, %383 : vector<8x64xf32>
    %385 = vector.extract_strided_slice %32 {offsets = [56, 0], sizes = [8, 192], strides = [1, 1]} : vector<64x192xf32> to vector<8x192xf32>
    %cst_86 = arith.constant dense<0.000000e+00> : vector<8x192xf32>
    %386 = tpu.matmul %358, %1, %cst_86 {dimension_numbers = #tpu.dot_dimension_numbers<[1], [0], [0], [1], [0, 0, 1, 1], [], []>} : vector<8x64xf32>, vector<64x192xf32>, vector<8x192xf32> -> vector<8x192xf32>
    %387 = vector.extract_strided_slice %385 {offsets = [0, 0], sizes = [8, 128], strides = [1, 1]} : vector<8x192xf32> to vector<8x128xf32>
    %388 = vector.extract_strided_slice %386 {offsets = [0, 0], sizes = [8, 128], strides = [1, 1]} : vector<8x192xf32> to vector<8x128xf32>
    %389 = arith.addf %387, %388 : vector<8x128xf32>
    %390 = arith.negf %389 : vector<8x128xf32>
    %391 = math.exp %390 : vector<8x128xf32>
    %cst_87 = arith.constant 1.000000e+00 : f32
    %392 = vector.broadcast %cst_87 : f32 to vector<8x128xf32>
    %393 = arith.addf %392, %391 : vector<8x128xf32>
    %394 = arith.divf %392, %393 : vector<8x128xf32>
    %395 = vector.extract_strided_slice %394 {offsets = [0, 0], sizes = [8, 64], strides = [1, 1]} : vector<8x128xf32> to vector<8x64xf32>
    %396 = vector.extract_strided_slice %394 {offsets = [0, 64], sizes = [8, 64], strides = [1, 1]} : vector<8x128xf32> to vector<8x64xf32>
    %397 = vector.extract_strided_slice %385 {offsets = [0, 128], sizes = [8, 64], strides = [1, 1]} : vector<8x192xf32> to vector<8x64xf32>
    %398 = vector.extract_strided_slice %386 {offsets = [0, 128], sizes = [8, 64], strides = [1, 1]} : vector<8x192xf32> to vector<8x64xf32>
    %399 = vector.broadcast %15 : vector<1x64xf32> to vector<8x64xf32>
    %400 = arith.addf %398, %399 : vector<8x64xf32>
    %401 = arith.mulf %395, %400 : vector<8x64xf32>
    %402 = arith.addf %397, %401 : vector<8x64xf32>
    %403 = math.tanh %402 : vector<8x64xf32>
    %cst_88 = arith.constant 1.000000e+00 : f32
    %404 = vector.broadcast %cst_88 : f32 to vector<8x64xf32>
    %405 = arith.subf %404, %396 : vector<8x64xf32>
    %406 = arith.mulf %405, %403 : vector<8x64xf32>
    %407 = arith.mulf %396, %358 : vector<8x64xf32>
    %408 = arith.addf %406, %407 : vector<8x64xf32>
    %cst_89 = arith.constant dense<0.000000e+00> : vector<8x192xf32>
    %409 = tpu.matmul %408, %2, %cst_89 {dimension_numbers = #tpu.dot_dimension_numbers<[1], [0], [0], [1], [0, 0, 1, 1], [], []>} : vector<8x64xf32>, vector<64x192xf32>, vector<8x192xf32> -> vector<8x192xf32>
    %410 = vector.broadcast %16 : vector<1x192xf32> to vector<8x192xf32>
    %411 = arith.addf %409, %410 : vector<8x192xf32>
    %cst_90 = arith.constant dense<0.000000e+00> : vector<8x192xf32>
    %412 = tpu.matmul %384, %3, %cst_90 {dimension_numbers = #tpu.dot_dimension_numbers<[1], [0], [0], [1], [0, 0, 1, 1], [], []>} : vector<8x64xf32>, vector<64x192xf32>, vector<8x192xf32> -> vector<8x192xf32>
    %413 = vector.extract_strided_slice %411 {offsets = [0, 0], sizes = [8, 128], strides = [1, 1]} : vector<8x192xf32> to vector<8x128xf32>
    %414 = vector.extract_strided_slice %412 {offsets = [0, 0], sizes = [8, 128], strides = [1, 1]} : vector<8x192xf32> to vector<8x128xf32>
    %415 = arith.addf %413, %414 : vector<8x128xf32>
    %416 = arith.negf %415 : vector<8x128xf32>
    %417 = math.exp %416 : vector<8x128xf32>
    %cst_91 = arith.constant 1.000000e+00 : f32
    %418 = vector.broadcast %cst_91 : f32 to vector<8x128xf32>
    %419 = arith.addf %418, %417 : vector<8x128xf32>
    %420 = arith.divf %418, %419 : vector<8x128xf32>
    %421 = vector.extract_strided_slice %420 {offsets = [0, 0], sizes = [8, 64], strides = [1, 1]} : vector<8x128xf32> to vector<8x64xf32>
    %422 = vector.extract_strided_slice %420 {offsets = [0, 64], sizes = [8, 64], strides = [1, 1]} : vector<8x128xf32> to vector<8x64xf32>
    %423 = vector.extract_strided_slice %411 {offsets = [0, 128], sizes = [8, 64], strides = [1, 1]} : vector<8x192xf32> to vector<8x64xf32>
    %424 = vector.extract_strided_slice %412 {offsets = [0, 128], sizes = [8, 64], strides = [1, 1]} : vector<8x192xf32> to vector<8x64xf32>
    %425 = vector.broadcast %17 : vector<1x64xf32> to vector<8x64xf32>
    %426 = arith.addf %424, %425 : vector<8x64xf32>
    %427 = arith.mulf %421, %426 : vector<8x64xf32>
    %428 = arith.addf %423, %427 : vector<8x64xf32>
    %429 = math.tanh %428 : vector<8x64xf32>
    %cst_92 = arith.constant 1.000000e+00 : f32
    %430 = vector.broadcast %cst_92 : f32 to vector<8x64xf32>
    %431 = arith.subf %430, %422 : vector<8x64xf32>
    %432 = arith.mulf %431, %429 : vector<8x64xf32>
    %433 = arith.mulf %422, %384 : vector<8x64xf32>
    %434 = arith.addf %432, %433 : vector<8x64xf32>
    %cst_93 = arith.constant dense<0.000000e+00> : vector<8x80xf32>
    %435 = tpu.matmul %434, %8, %cst_93 {dimension_numbers = #tpu.dot_dimension_numbers<[1], [0], [0], [1], [0, 0, 1, 1], [], []>} : vector<8x64xf32>, vector<64x80xf32>, vector<8x80xf32> -> vector<8x80xf32>
    %436 = vector.broadcast %22 : vector<1x80xf32> to vector<8x80xf32>
    %437 = arith.addf %435, %436 : vector<8x80xf32>
    %cst_94 = arith.constant 0.000000e+00 : f32
    %438 = vector.broadcast %cst_94 : f32 to vector<8x80xf32>
    %439 = arith.cmpf ogt, %437, %438 : vector<8x80xf32>
    %cst_95 = arith.constant 0.00999999977 : f32
    %440 = vector.broadcast %cst_95 : f32 to vector<8x80xf32>
    %441 = arith.mulf %440, %437 : vector<8x80xf32>
    %442 = arith.select %439, %437, %441 : vector<8x80xi1>, vector<8x80xf32>
    %cst_96 = arith.constant dense<0.000000e+00> : vector<8x32xf32>
    %443 = tpu.matmul %442, %9, %cst_96 {dimension_numbers = #tpu.dot_dimension_numbers<[1], [0], [0], [1], [0, 0, 1, 1], [], []>} : vector<8x80xf32>, vector<80x32xf32>, vector<8x32xf32> -> vector<8x32xf32>
    %444 = vector.broadcast %23 : vector<1x32xf32> to vector<8x32xf32>
    %445 = arith.addf %443, %444 : vector<8x32xf32>
    %446 = vector.extract_strided_slice %445 {offsets = [0, 0], sizes = [8, 16], strides = [1, 1]} : vector<8x32xf32> to vector<8x16xf32>
    %447 = vector.extract_strided_slice %445 {offsets = [0, 16], sizes = [8, 16], strides = [1, 1]} : vector<8x32xf32> to vector<8x16xf32>
    %c0_97 = arith.constant 0 : index
    %c0_98 = arith.constant 0 : index
    %448 = vector.load %arg7[%c0_97, %c0_98] : memref<8x16xf32, #tpu.memory_space<vmem>>, vector<8x16xf32>
    tpu.vector_store %arg7[%c0_97, %c0_98], %446 {strides = array<i32>} : memref<8x16xf32, #tpu.memory_space<vmem>>, vector<8x16xf32>,
    %c0_99 = arith.constant 0 : index
    %c0_100 = arith.constant 0 : index
    %449 = vector.load %arg8[%c0_99, %c0_100] : memref<8x16xf32, #tpu.memory_space<vmem>>, vector<8x16xf32>
    tpu.vector_store %arg8[%c0_99, %c0_100], %447 {strides = array<i32>} : memref<8x16xf32, #tpu.memory_space<vmem>>, vector<8x16xf32>,
    %cst_101 = arith.constant 5.000000e-01 : f32
    %450 = vector.broadcast %cst_101 : f32 to vector<8x16xf32>
    %451 = arith.mulf %450, %447 : vector<8x16xf32>
    %452 = math.exp %451 : vector<8x16xf32>
    %c0_102 = arith.constant 0 : index
    %c0_103 = arith.constant 0 : index
    %453 = vector.load %arg1[%c0_102, %c0_103] : memref<8x16xf32, #tpu.memory_space<vmem>>, vector<8x16xf32>
    %454 = arith.mulf %452, %453 : vector<8x16xf32>
    %455 = arith.addf %446, %454 : vector<8x16xf32>
    %456 = vector.extract_strided_slice %455 {offsets = [0, 0], sizes = [8, 4], strides = [1, 1]} : vector<8x16xf32> to vector<8x4xf32>
    %cst_104 = arith.constant dense<0xFF800000> : vector<8xf32>
    %457 = vector.multi_reduction <maximumf>, %456, %cst_104 [1] : vector<8x4xf32> to vector<8xf32>
    %458 = vector.shape_cast %457 : vector<8xf32> to vector<8x1xf32>
    %459 = vector.broadcast %458 : vector<8x1xf32> to vector<8x4xf32>
    %460 = arith.subf %456, %459 : vector<8x4xf32>
    %461 = math.exp %460 : vector<8x4xf32>
    %cst_105 = arith.constant dense<0.000000e+00> : vector<8xf32>
    %462 = vector.multi_reduction <add>, %461, %cst_105 [1] : vector<8x4xf32> to vector<8xf32>
    %463 = vector.shape_cast %462 : vector<8xf32> to vector<8x1xf32>
    %464 = vector.broadcast %463 : vector<8x1xf32> to vector<8x4xf32>
    %465 = arith.divf %461, %464 : vector<8x4xf32>
    %c0_106 = arith.constant 0 : index
    %c0_107 = arith.constant 0 : index
    %466 = vector.load %arg9[%c0_106, %c0_107] : memref<8x4xf32, #tpu.memory_space<vmem>>, vector<8x4xf32>
    tpu.vector_store %arg9[%c0_106, %c0_107], %465 {strides = array<i32>} : memref<8x4xf32, #tpu.memory_space<vmem>>, vector<8x4xf32>,
    %cst_108 = arith.constant dense<0.000000e+00> : vector<8x48xf32>
    %467 = tpu.matmul %455, %10, %cst_108 {dimension_numbers = #tpu.dot_dimension_numbers<[1], [0], [0], [1], [0, 0, 1, 1], [], []>} : vector<8x16xf32>, vector<16x48xf32>, vector<8x48xf32> -> vector<8x48xf32>
    %468 = vector.broadcast %24 : vector<1x48xf32> to vector<8x48xf32>
    %469 = arith.addf %467, %468 : vector<8x48xf32>
    %cst_109 = arith.constant 0.000000e+00 : f32
    %470 = vector.broadcast %cst_109 : f32 to vector<8x48xf32>
    %471 = arith.cmpf ogt, %469, %470 : vector<8x48xf32>
    %cst_110 = arith.constant 0.00999999977 : f32
    %472 = vector.broadcast %cst_110 : f32 to vector<8x48xf32>
    %473 = arith.mulf %472, %469 : vector<8x48xf32>
    %474 = arith.select %471, %469, %473 : vector<8x48xi1>, vector<8x48xf32>
    %cst_111 = arith.constant dense<0.000000e+00> : vector<8x64xf32>
    %475 = tpu.matmul %474, %11, %cst_111 {dimension_numbers = #tpu.dot_dimension_numbers<[1], [0], [0], [1], [0, 0, 1, 1], [], []>} : vector<8x48xf32>, vector<48x64xf32>, vector<8x64xf32> -> vector<8x64xf32>
    %476 = vector.broadcast %25 : vector<1x64xf32> to vector<8x64xf32>
    %477 = arith.addf %475, %476 : vector<8x64xf32>
    %478 = vector.extract_strided_slice %477 {offsets = [0, 0], sizes = [8, 32], strides = [1, 1]} : vector<8x64xf32> to vector<8x32xf32>
    %479 = vector.extract_strided_slice %477 {offsets = [0, 32], sizes = [8, 32], strides = [1, 1]} : vector<8x64xf32> to vector<8x32xf32>
    %480 = vector.extract_strided_slice %28 {offsets = [0, 0, 0], sizes = [1, 8, 16], strides = [1, 1, 1]} : vector<8x8x32xf32> to vector<1x8x16xf32>
    %481 = vector.shape_cast %480 : vector<1x8x16xf32> to vector<8x16xf32>
    %c0_112 = arith.constant 0 : index
    %c0_113 = arith.constant 0 : index
    %c0_114 = arith.constant 0 : index
    %482 = vector.load %arg6[%c0_112, %c0_113, %c0_114] : memref<8x8x16xf32, #tpu.memory_space<vmem>>, vector<1x8x16xf32>
    %483 = vector.shape_cast %482 : vector<1x8x16xf32> to vector<8x16xf32>
    %484 = vector.shape_cast %481 : vector<8x16xf32> to vector<1x8x16xf32>
    tpu.vector_store %arg6[%c0_112, %c0_113, %c0_114], %484 {strides = array<i32>} : memref<8x8x16xf32, #tpu.memory_space<vmem>>, vector<1x8x16xf32>,
    %cst_115 = arith.constant dense<0.000000e+00> : vector<8x96xf32>
    %485 = tpu.matmul %481, %4, %cst_115 {dimension_numbers = #tpu.dot_dimension_numbers<[1], [0], [0], [1], [0, 0, 1, 1], [], []>} : vector<8x16xf32>, vector<16x96xf32>, vector<8x96xf32> -> vector<8x96xf32>
    %486 = vector.broadcast %18 : vector<1x96xf32> to vector<8x96xf32>
    %487 = arith.addf %485, %486 : vector<8x96xf32>
    %cst_116 = arith.constant dense<0.000000e+00> : vector<8x96xf32>
    %488 = tpu.matmul %478, %5, %cst_116 {dimension_numbers = #tpu.dot_dimension_numbers<[1], [0], [0], [1], [0, 0, 1, 1], [], []>} : vector<8x32xf32>, vector<32x96xf32>, vector<8x96xf32> -> vector<8x96xf32>
    %489 = vector.extract_strided_slice %487 {offsets = [0, 0], sizes = [8, 64], strides = [1, 1]} : vector<8x96xf32> to vector<8x64xf32>
    %490 = vector.extract_strided_slice %488 {offsets = [0, 0], sizes = [8, 64], strides = [1, 1]} : vector<8x96xf32> to vector<8x64xf32>
    %491 = arith.addf %489, %490 : vector<8x64xf32>
    %492 = arith.negf %491 : vector<8x64xf32>
    %493 = math.exp %492 : vector<8x64xf32>
    %cst_117 = arith.constant 1.000000e+00 : f32
    %494 = vector.broadcast %cst_117 : f32 to vector<8x64xf32>
    %495 = arith.addf %494, %493 : vector<8x64xf32>
    %496 = arith.divf %494, %495 : vector<8x64xf32>
    %497 = vector.extract_strided_slice %496 {offsets = [0, 0], sizes = [8, 32], strides = [1, 1]} : vector<8x64xf32> to vector<8x32xf32>
    %498 = vector.extract_strided_slice %496 {offsets = [0, 32], sizes = [8, 32], strides = [1, 1]} : vector<8x64xf32> to vector<8x32xf32>
    %499 = vector.extract_strided_slice %487 {offsets = [0, 64], sizes = [8, 32], strides = [1, 1]} : vector<8x96xf32> to vector<8x32xf32>
    %500 = vector.extract_strided_slice %488 {offsets = [0, 64], sizes = [8, 32], strides = [1, 1]} : vector<8x96xf32> to vector<8x32xf32>
    %501 = vector.broadcast %19 : vector<1x32xf32> to vector<8x32xf32>
    %502 = arith.addf %500, %501 : vector<8x32xf32>
    %503 = arith.mulf %497, %502 : vector<8x32xf32>
    %504 = arith.addf %499, %503 : vector<8x32xf32>
    %505 = math.tanh %504 : vector<8x32xf32>
    %cst_118 = arith.constant 1.000000e+00 : f32
    %506 = vector.broadcast %cst_118 : f32 to vector<8x32xf32>
    %507 = arith.subf %506, %498 : vector<8x32xf32>
    %508 = arith.mulf %507, %505 : vector<8x32xf32>
    %509 = arith.mulf %498, %478 : vector<8x32xf32>
    %510 = arith.addf %508, %509 : vector<8x32xf32>
    %cst_119 = arith.constant dense<0.000000e+00> : vector<8x96xf32>
    %511 = tpu.matmul %510, %6, %cst_119 {dimension_numbers = #tpu.dot_dimension_numbers<[1], [0], [0], [1], [0, 0, 1, 1], [], []>} : vector<8x32xf32>, vector<32x96xf32>, vector<8x96xf32> -> vector<8x96xf32>
    %512 = vector.broadcast %20 : vector<1x96xf32> to vector<8x96xf32>
    %513 = arith.addf %511, %512 : vector<8x96xf32>
    %cst_120 = arith.constant dense<0.000000e+00> : vector<8x96xf32>
    %514 = tpu.matmul %479, %7, %cst_120 {dimension_numbers = #tpu.dot_dimension_numbers<[1], [0], [0], [1], [0, 0, 1, 1], [], []>} : vector<8x32xf32>, vector<32x96xf32>, vector<8x96xf32> -> vector<8x96xf32>
    %515 = vector.extract_strided_slice %513 {offsets = [0, 0], sizes = [8, 64], strides = [1, 1]} : vector<8x96xf32> to vector<8x64xf32>
    %516 = vector.extract_strided_slice %514 {offsets = [0, 0], sizes = [8, 64], strides = [1, 1]} : vector<8x96xf32> to vector<8x64xf32>
    %517 = arith.addf %515, %516 : vector<8x64xf32>
    %518 = arith.negf %517 : vector<8x64xf32>
    %519 = math.exp %518 : vector<8x64xf32>
    %cst_121 = arith.constant 1.000000e+00 : f32
    %520 = vector.broadcast %cst_121 : f32 to vector<8x64xf32>
    %521 = arith.addf %520, %519 : vector<8x64xf32>
    %522 = arith.divf %520, %521 : vector<8x64xf32>
    %523 = vector.extract_strided_slice %522 {offsets = [0, 0], sizes = [8, 32], strides = [1, 1]} : vector<8x64xf32> to vector<8x32xf32>
    %524 = vector.extract_strided_slice %522 {offsets = [0, 32], sizes = [8, 32], strides = [1, 1]} : vector<8x64xf32> to vector<8x32xf32>
    %525 = vector.extract_strided_slice %513 {offsets = [0, 64], sizes = [8, 32], strides = [1, 1]} : vector<8x96xf32> to vector<8x32xf32>
    %526 = vector.extract_strided_slice %514 {offsets = [0, 64], sizes = [8, 32], strides = [1, 1]} : vector<8x96xf32> to vector<8x32xf32>
    %527 = vector.broadcast %21 : vector<1x32xf32> to vector<8x32xf32>
    %528 = arith.addf %526, %527 : vector<8x32xf32>
    %529 = arith.mulf %523, %528 : vector<8x32xf32>
    %530 = arith.addf %525, %529 : vector<8x32xf32>
    %531 = math.tanh %530 : vector<8x32xf32>
    %cst_122 = arith.constant 1.000000e+00 : f32
    %532 = vector.broadcast %cst_122 : f32 to vector<8x32xf32>
    %533 = arith.subf %532, %524 : vector<8x32xf32>
    %534 = arith.mulf %533, %531 : vector<8x32xf32>
    %535 = arith.mulf %524, %479 : vector<8x32xf32>
    %536 = arith.addf %534, %535 : vector<8x32xf32>
    %cst_123 = arith.constant dense<0.000000e+00> : vector<8x24xf32>
    %537 = tpu.matmul %536, %12, %cst_123 {dimension_numbers = #tpu.dot_dimension_numbers<[1], [0], [0], [1], [0, 0, 1, 1], [], []>} : vector<8x32xf32>, vector<32x24xf32>, vector<8x24xf32> -> vector<8x24xf32>
    %538 = vector.broadcast %26 : vector<1x24xf32> to vector<8x24xf32>
    %539 = arith.addf %537, %538 : vector<8x24xf32>
    %cst_124 = arith.constant 0.000000e+00 : f32
    %540 = vector.broadcast %cst_124 : f32 to vector<8x24xf32>
    %541 = arith.cmpf ogt, %539, %540 : vector<8x24xf32>
    %cst_125 = arith.constant 0.00999999977 : f32
    %542 = vector.broadcast %cst_125 : f32 to vector<8x24xf32>
    %543 = arith.mulf %542, %539 : vector<8x24xf32>
    %544 = arith.select %541, %539, %543 : vector<8x24xi1>, vector<8x24xf32>
    %cst_126 = arith.constant dense<0.000000e+00> : vector<8x16xf32>
    %545 = tpu.matmul %544, %13, %cst_126 {dimension_numbers = #tpu.dot_dimension_numbers<[1], [0], [0], [1], [0, 0, 1, 1], [], []>} : vector<8x24xf32>, vector<24x16xf32>, vector<8x16xf32> -> vector<8x16xf32>
    %546 = vector.broadcast %27 : vector<1x16xf32> to vector<8x16xf32>
    %547 = arith.addf %545, %546 : vector<8x16xf32>
    %548 = arith.negf %547 : vector<8x16xf32>
    %549 = math.exp %548 : vector<8x16xf32>
    %cst_127 = arith.constant 1.000000e+00 : f32
    %550 = vector.broadcast %cst_127 : f32 to vector<8x16xf32>
    %551 = arith.addf %550, %549 : vector<8x16xf32>
    %552 = arith.divf %550, %551 : vector<8x16xf32>
    %c1_128 = arith.constant 1 : index
    %c0_129 = arith.constant 0 : index
    %c0_130 = arith.constant 0 : index
    %553 = vector.load %arg6[%c1_128, %c0_129, %c0_130] : memref<8x8x16xf32, #tpu.memory_space<vmem>>, vector<1x8x16xf32>
    %554 = vector.shape_cast %553 : vector<1x8x16xf32> to vector<8x16xf32>
    %555 = vector.shape_cast %552 : vector<8x16xf32> to vector<1x8x16xf32>
    tpu.vector_store %arg6[%c1_128, %c0_129, %c0_130], %555 {strides = array<i32>} : memref<8x8x16xf32, #tpu.memory_space<vmem>>, vector<1x8x16xf32>,
    %cst_131 = arith.constant dense<0.000000e+00> : vector<8x96xf32>
    %556 = tpu.matmul %552, %4, %cst_131 {dimension_numbers = #tpu.dot_dimension_numbers<[1], [0], [0], [1], [0, 0, 1, 1], [], []>} : vector<8x16xf32>, vector<16x96xf32>, vector<8x96xf32> -> vector<8x96xf32>
    %557 = vector.broadcast %18 : vector<1x96xf32> to vector<8x96xf32>
    %558 = arith.addf %556, %557 : vector<8x96xf32>
    %cst_132 = arith.constant dense<0.000000e+00> : vector<8x96xf32>
    %559 = tpu.matmul %510, %5, %cst_132 {dimension_numbers = #tpu.dot_dimension_numbers<[1], [0], [0], [1], [0, 0, 1, 1], [], []>} : vector<8x32xf32>, vector<32x96xf32>, vector<8x96xf32> -> vector<8x96xf32>
    %560 = vector.extract_strided_slice %558 {offsets = [0, 0], sizes = [8, 64], strides = [1, 1]} : vector<8x96xf32> to vector<8x64xf32>
    %561 = vector.extract_strided_slice %559 {offsets = [0, 0], sizes = [8, 64], strides = [1, 1]} : vector<8x96xf32> to vector<8x64xf32>
    %562 = arith.addf %560, %561 : vector<8x64xf32>
    %563 = arith.negf %562 : vector<8x64xf32>
    %564 = math.exp %563 : vector<8x64xf32>
    %cst_133 = arith.constant 1.000000e+00 : f32
    %565 = vector.broadcast %cst_133 : f32 to vector<8x64xf32>
    %566 = arith.addf %565, %564 : vector<8x64xf32>
    %567 = arith.divf %565, %566 : vector<8x64xf32>
    %568 = vector.extract_strided_slice %567 {offsets = [0, 0], sizes = [8, 32], strides = [1, 1]} : vector<8x64xf32> to vector<8x32xf32>
    %569 = vector.extract_strided_slice %567 {offsets = [0, 32], sizes = [8, 32], strides = [1, 1]} : vector<8x64xf32> to vector<8x32xf32>
    %570 = vector.extract_strided_slice %558 {offsets = [0, 64], sizes = [8, 32], strides = [1, 1]} : vector<8x96xf32> to vector<8x32xf32>
    %571 = vector.extract_strided_slice %559 {offsets = [0, 64], sizes = [8, 32], strides = [1, 1]} : vector<8x96xf32> to vector<8x32xf32>
    %572 = vector.broadcast %19 : vector<1x32xf32> to vector<8x32xf32>
    %573 = arith.addf %571, %572 : vector<8x32xf32>
    %574 = arith.mulf %568, %573 : vector<8x32xf32>
    %575 = arith.addf %570, %574 : vector<8x32xf32>
    %576 = math.tanh %575 : vector<8x32xf32>
    %cst_134 = arith.constant 1.000000e+00 : f32
    %577 = vector.broadcast %cst_134 : f32 to vector<8x32xf32>
    %578 = arith.subf %577, %569 : vector<8x32xf32>
    %579 = arith.mulf %578, %576 : vector<8x32xf32>
    %580 = arith.mulf %569, %510 : vector<8x32xf32>
    %581 = arith.addf %579, %580 : vector<8x32xf32>
    %cst_135 = arith.constant dense<0.000000e+00> : vector<8x96xf32>
    %582 = tpu.matmul %581, %6, %cst_135 {dimension_numbers = #tpu.dot_dimension_numbers<[1], [0], [0], [1], [0, 0, 1, 1], [], []>} : vector<8x32xf32>, vector<32x96xf32>, vector<8x96xf32> -> vector<8x96xf32>
    %583 = vector.broadcast %20 : vector<1x96xf32> to vector<8x96xf32>
    %584 = arith.addf %582, %583 : vector<8x96xf32>
    %cst_136 = arith.constant dense<0.000000e+00> : vector<8x96xf32>
    %585 = tpu.matmul %536, %7, %cst_136 {dimension_numbers = #tpu.dot_dimension_numbers<[1], [0], [0], [1], [0, 0, 1, 1], [], []>} : vector<8x32xf32>, vector<32x96xf32>, vector<8x96xf32> -> vector<8x96xf32>
    %586 = vector.extract_strided_slice %584 {offsets = [0, 0], sizes = [8, 64], strides = [1, 1]} : vector<8x96xf32> to vector<8x64xf32>
    %587 = vector.extract_strided_slice %585 {offsets = [0, 0], sizes = [8, 64], strides = [1, 1]} : vector<8x96xf32> to vector<8x64xf32>
    %588 = arith.addf %586, %587 : vector<8x64xf32>
    %589 = arith.negf %588 : vector<8x64xf32>
    %590 = math.exp %589 : vector<8x64xf32>
    %cst_137 = arith.constant 1.000000e+00 : f32
    %591 = vector.broadcast %cst_137 : f32 to vector<8x64xf32>
    %592 = arith.addf %591, %590 : vector<8x64xf32>
    %593 = arith.divf %591, %592 : vector<8x64xf32>
    %594 = vector.extract_strided_slice %593 {offsets = [0, 0], sizes = [8, 32], strides = [1, 1]} : vector<8x64xf32> to vector<8x32xf32>
    %595 = vector.extract_strided_slice %593 {offsets = [0, 32], sizes = [8, 32], strides = [1, 1]} : vector<8x64xf32> to vector<8x32xf32>
    %596 = vector.extract_strided_slice %584 {offsets = [0, 64], sizes = [8, 32], strides = [1, 1]} : vector<8x96xf32> to vector<8x32xf32>
    %597 = vector.extract_strided_slice %585 {offsets = [0, 64], sizes = [8, 32], strides = [1, 1]} : vector<8x96xf32> to vector<8x32xf32>
    %598 = vector.broadcast %21 : vector<1x32xf32> to vector<8x32xf32>
    %599 = arith.addf %597, %598 : vector<8x32xf32>
    %600 = arith.mulf %594, %599 : vector<8x32xf32>
    %601 = arith.addf %596, %600 : vector<8x32xf32>
    %602 = math.tanh %601 : vector<8x32xf32>
    %cst_138 = arith.constant 1.000000e+00 : f32
    %603 = vector.broadcast %cst_138 : f32 to vector<8x32xf32>
    %604 = arith.subf %603, %595 : vector<8x32xf32>
    %605 = arith.mulf %604, %602 : vector<8x32xf32>
    %606 = arith.mulf %595, %536 : vector<8x32xf32>
    %607 = arith.addf %605, %606 : vector<8x32xf32>
    %cst_139 = arith.constant dense<0.000000e+00> : vector<8x24xf32>
    %608 = tpu.matmul %607, %12, %cst_139 {dimension_numbers = #tpu.dot_dimension_numbers<[1], [0], [0], [1], [0, 0, 1, 1], [], []>} : vector<8x32xf32>, vector<32x24xf32>, vector<8x24xf32> -> vector<8x24xf32>
    %609 = vector.broadcast %26 : vector<1x24xf32> to vector<8x24xf32>
    %610 = arith.addf %608, %609 : vector<8x24xf32>
    %cst_140 = arith.constant 0.000000e+00 : f32
    %611 = vector.broadcast %cst_140 : f32 to vector<8x24xf32>
    %612 = arith.cmpf ogt, %610, %611 : vector<8x24xf32>
    %cst_141 = arith.constant 0.00999999977 : f32
    %613 = vector.broadcast %cst_141 : f32 to vector<8x24xf32>
    %614 = arith.mulf %613, %610 : vector<8x24xf32>
    %615 = arith.select %612, %610, %614 : vector<8x24xi1>, vector<8x24xf32>
    %cst_142 = arith.constant dense<0.000000e+00> : vector<8x16xf32>
    %616 = tpu.matmul %615, %13, %cst_142 {dimension_numbers = #tpu.dot_dimension_numbers<[1], [0], [0], [1], [0, 0, 1, 1], [], []>} : vector<8x24xf32>, vector<24x16xf32>, vector<8x16xf32> -> vector<8x16xf32>
    %617 = vector.broadcast %27 : vector<1x16xf32> to vector<8x16xf32>
    %618 = arith.addf %616, %617 : vector<8x16xf32>
    %619 = arith.negf %618 : vector<8x16xf32>
    %620 = math.exp %619 : vector<8x16xf32>
    %cst_143 = arith.constant 1.000000e+00 : f32
    %621 = vector.broadcast %cst_143 : f32 to vector<8x16xf32>
    %622 = arith.addf %621, %620 : vector<8x16xf32>
    %623 = arith.divf %621, %622 : vector<8x16xf32>
    %c2_144 = arith.constant 2 : index
    %c0_145 = arith.constant 0 : index
    %c0_146 = arith.constant 0 : index
    %624 = vector.load %arg6[%c2_144, %c0_145, %c0_146] : memref<8x8x16xf32, #tpu.memory_space<vmem>>, vector<1x8x16xf32>
    %625 = vector.shape_cast %624 : vector<1x8x16xf32> to vector<8x16xf32>
    %626 = vector.shape_cast %623 : vector<8x16xf32> to vector<1x8x16xf32>
    tpu.vector_store %arg6[%c2_144, %c0_145, %c0_146], %626 {strides = array<i32>} : memref<8x8x16xf32, #tpu.memory_space<vmem>>, vector<1x8x16xf32>,
    %cst_147 = arith.constant dense<0.000000e+00> : vector<8x96xf32>
    %627 = tpu.matmul %623, %4, %cst_147 {dimension_numbers = #tpu.dot_dimension_numbers<[1], [0], [0], [1], [0, 0, 1, 1], [], []>} : vector<8x16xf32>, vector<16x96xf32>, vector<8x96xf32> -> vector<8x96xf32>
    %628 = vector.broadcast %18 : vector<1x96xf32> to vector<8x96xf32>
    %629 = arith.addf %627, %628 : vector<8x96xf32>
    %cst_148 = arith.constant dense<0.000000e+00> : vector<8x96xf32>
    %630 = tpu.matmul %581, %5, %cst_148 {dimension_numbers = #tpu.dot_dimension_numbers<[1], [0], [0], [1], [0, 0, 1, 1], [], []>} : vector<8x32xf32>, vector<32x96xf32>, vector<8x96xf32> -> vector<8x96xf32>
    %631 = vector.extract_strided_slice %629 {offsets = [0, 0], sizes = [8, 64], strides = [1, 1]} : vector<8x96xf32> to vector<8x64xf32>
    %632 = vector.extract_strided_slice %630 {offsets = [0, 0], sizes = [8, 64], strides = [1, 1]} : vector<8x96xf32> to vector<8x64xf32>
    %633 = arith.addf %631, %632 : vector<8x64xf32>
    %634 = arith.negf %633 : vector<8x64xf32>
    %635 = math.exp %634 : vector<8x64xf32>
    %cst_149 = arith.constant 1.000000e+00 : f32
    %636 = vector.broadcast %cst_149 : f32 to vector<8x64xf32>
    %637 = arith.addf %636, %635 : vector<8x64xf32>
    %638 = arith.divf %636, %637 : vector<8x64xf32>
    %639 = vector.extract_strided_slice %638 {offsets = [0, 0], sizes = [8, 32], strides = [1, 1]} : vector<8x64xf32> to vector<8x32xf32>
    %640 = vector.extract_strided_slice %638 {offsets = [0, 32], sizes = [8, 32], strides = [1, 1]} : vector<8x64xf32> to vector<8x32xf32>
    %641 = vector.extract_strided_slice %629 {offsets = [0, 64], sizes = [8, 32], strides = [1, 1]} : vector<8x96xf32> to vector<8x32xf32>
    %642 = vector.extract_strided_slice %630 {offsets = [0, 64], sizes = [8, 32], strides = [1, 1]} : vector<8x96xf32> to vector<8x32xf32>
    %643 = vector.broadcast %19 : vector<1x32xf32> to vector<8x32xf32>
    %644 = arith.addf %642, %643 : vector<8x32xf32>
    %645 = arith.mulf %639, %644 : vector<8x32xf32>
    %646 = arith.addf %641, %645 : vector<8x32xf32>
    %647 = math.tanh %646 : vector<8x32xf32>
    %cst_150 = arith.constant 1.000000e+00 : f32
    %648 = vector.broadcast %cst_150 : f32 to vector<8x32xf32>
    %649 = arith.subf %648, %640 : vector<8x32xf32>
    %650 = arith.mulf %649, %647 : vector<8x32xf32>
    %651 = arith.mulf %640, %581 : vector<8x32xf32>
    %652 = arith.addf %650, %651 : vector<8x32xf32>
    %cst_151 = arith.constant dense<0.000000e+00> : vector<8x96xf32>
    %653 = tpu.matmul %652, %6, %cst_151 {dimension_numbers = #tpu.dot_dimension_numbers<[1], [0], [0], [1], [0, 0, 1, 1], [], []>} : vector<8x32xf32>, vector<32x96xf32>, vector<8x96xf32> -> vector<8x96xf32>
    %654 = vector.broadcast %20 : vector<1x96xf32> to vector<8x96xf32>
    %655 = arith.addf %653, %654 : vector<8x96xf32>
    %cst_152 = arith.constant dense<0.000000e+00> : vector<8x96xf32>
    %656 = tpu.matmul %607, %7, %cst_152 {dimension_numbers = #tpu.dot_dimension_numbers<[1], [0], [0], [1], [0, 0, 1, 1], [], []>} : vector<8x32xf32>, vector<32x96xf32>, vector<8x96xf32> -> vector<8x96xf32>
    %657 = vector.extract_strided_slice %655 {offsets = [0, 0], sizes = [8, 64], strides = [1, 1]} : vector<8x96xf32> to vector<8x64xf32>
    %658 = vector.extract_strided_slice %656 {offsets = [0, 0], sizes = [8, 64], strides = [1, 1]} : vector<8x96xf32> to vector<8x64xf32>
    %659 = arith.addf %657, %658 : vector<8x64xf32>
    %660 = arith.negf %659 : vector<8x64xf32>
    %661 = math.exp %660 : vector<8x64xf32>
    %cst_153 = arith.constant 1.000000e+00 : f32
    %662 = vector.broadcast %cst_153 : f32 to vector<8x64xf32>
    %663 = arith.addf %662, %661 : vector<8x64xf32>
    %664 = arith.divf %662, %663 : vector<8x64xf32>
    %665 = vector.extract_strided_slice %664 {offsets = [0, 0], sizes = [8, 32], strides = [1, 1]} : vector<8x64xf32> to vector<8x32xf32>
    %666 = vector.extract_strided_slice %664 {offsets = [0, 32], sizes = [8, 32], strides = [1, 1]} : vector<8x64xf32> to vector<8x32xf32>
    %667 = vector.extract_strided_slice %655 {offsets = [0, 64], sizes = [8, 32], strides = [1, 1]} : vector<8x96xf32> to vector<8x32xf32>
    %668 = vector.extract_strided_slice %656 {offsets = [0, 64], sizes = [8, 32], strides = [1, 1]} : vector<8x96xf32> to vector<8x32xf32>
    %669 = vector.broadcast %21 : vector<1x32xf32> to vector<8x32xf32>
    %670 = arith.addf %668, %669 : vector<8x32xf32>
    %671 = arith.mulf %665, %670 : vector<8x32xf32>
    %672 = arith.addf %667, %671 : vector<8x32xf32>
    %673 = math.tanh %672 : vector<8x32xf32>
    %cst_154 = arith.constant 1.000000e+00 : f32
    %674 = vector.broadcast %cst_154 : f32 to vector<8x32xf32>
    %675 = arith.subf %674, %666 : vector<8x32xf32>
    %676 = arith.mulf %675, %673 : vector<8x32xf32>
    %677 = arith.mulf %666, %607 : vector<8x32xf32>
    %678 = arith.addf %676, %677 : vector<8x32xf32>
    %cst_155 = arith.constant dense<0.000000e+00> : vector<8x24xf32>
    %679 = tpu.matmul %678, %12, %cst_155 {dimension_numbers = #tpu.dot_dimension_numbers<[1], [0], [0], [1], [0, 0, 1, 1], [], []>} : vector<8x32xf32>, vector<32x24xf32>, vector<8x24xf32> -> vector<8x24xf32>
    %680 = vector.broadcast %26 : vector<1x24xf32> to vector<8x24xf32>
    %681 = arith.addf %679, %680 : vector<8x24xf32>
    %cst_156 = arith.constant 0.000000e+00 : f32
    %682 = vector.broadcast %cst_156 : f32 to vector<8x24xf32>
    %683 = arith.cmpf ogt, %681, %682 : vector<8x24xf32>
    %cst_157 = arith.constant 0.00999999977 : f32
    %684 = vector.broadcast %cst_157 : f32 to vector<8x24xf32>
    %685 = arith.mulf %684, %681 : vector<8x24xf32>
    %686 = arith.select %683, %681, %685 : vector<8x24xi1>, vector<8x24xf32>
    %cst_158 = arith.constant dense<0.000000e+00> : vector<8x16xf32>
    %687 = tpu.matmul %686, %13, %cst_158 {dimension_numbers = #tpu.dot_dimension_numbers<[1], [0], [0], [1], [0, 0, 1, 1], [], []>} : vector<8x24xf32>, vector<24x16xf32>, vector<8x16xf32> -> vector<8x16xf32>
    %688 = vector.broadcast %27 : vector<1x16xf32> to vector<8x16xf32>
    %689 = arith.addf %687, %688 : vector<8x16xf32>
    %690 = arith.negf %689 : vector<8x16xf32>
    %691 = math.exp %690 : vector<8x16xf32>
    %cst_159 = arith.constant 1.000000e+00 : f32
    %692 = vector.broadcast %cst_159 : f32 to vector<8x16xf32>
    %693 = arith.addf %692, %691 : vector<8x16xf32>
    %694 = arith.divf %692, %693 : vector<8x16xf32>
    %c3_160 = arith.constant 3 : index
    %c0_161 = arith.constant 0 : index
    %c0_162 = arith.constant 0 : index
    %695 = vector.load %arg6[%c3_160, %c0_161, %c0_162] : memref<8x8x16xf32, #tpu.memory_space<vmem>>, vector<1x8x16xf32>
    %696 = vector.shape_cast %695 : vector<1x8x16xf32> to vector<8x16xf32>
    %697 = vector.shape_cast %694 : vector<8x16xf32> to vector<1x8x16xf32>
    tpu.vector_store %arg6[%c3_160, %c0_161, %c0_162], %697 {strides = array<i32>} : memref<8x8x16xf32, #tpu.memory_space<vmem>>, vector<1x8x16xf32>,
    %cst_163 = arith.constant dense<0.000000e+00> : vector<8x96xf32>
    %698 = tpu.matmul %694, %4, %cst_163 {dimension_numbers = #tpu.dot_dimension_numbers<[1], [0], [0], [1], [0, 0, 1, 1], [], []>} : vector<8x16xf32>, vector<16x96xf32>, vector<8x96xf32> -> vector<8x96xf32>
    %699 = vector.broadcast %18 : vector<1x96xf32> to vector<8x96xf32>
    %700 = arith.addf %698, %699 : vector<8x96xf32>
    %cst_164 = arith.constant dense<0.000000e+00> : vector<8x96xf32>
    %701 = tpu.matmul %652, %5, %cst_164 {dimension_numbers = #tpu.dot_dimension_numbers<[1], [0], [0], [1], [0, 0, 1, 1], [], []>} : vector<8x32xf32>, vector<32x96xf32>, vector<8x96xf32> -> vector<8x96xf32>
    %702 = vector.extract_strided_slice %700 {offsets = [0, 0], sizes = [8, 64], strides = [1, 1]} : vector<8x96xf32> to vector<8x64xf32>
    %703 = vector.extract_strided_slice %701 {offsets = [0, 0], sizes = [8, 64], strides = [1, 1]} : vector<8x96xf32> to vector<8x64xf32>
    %704 = arith.addf %702, %703 : vector<8x64xf32>
    %705 = arith.negf %704 : vector<8x64xf32>
    %706 = math.exp %705 : vector<8x64xf32>
    %cst_165 = arith.constant 1.000000e+00 : f32
    %707 = vector.broadcast %cst_165 : f32 to vector<8x64xf32>
    %708 = arith.addf %707, %706 : vector<8x64xf32>
    %709 = arith.divf %707, %708 : vector<8x64xf32>
    %710 = vector.extract_strided_slice %709 {offsets = [0, 0], sizes = [8, 32], strides = [1, 1]} : vector<8x64xf32> to vector<8x32xf32>
    %711 = vector.extract_strided_slice %709 {offsets = [0, 32], sizes = [8, 32], strides = [1, 1]} : vector<8x64xf32> to vector<8x32xf32>
    %712 = vector.extract_strided_slice %700 {offsets = [0, 64], sizes = [8, 32], strides = [1, 1]} : vector<8x96xf32> to vector<8x32xf32>
    %713 = vector.extract_strided_slice %701 {offsets = [0, 64], sizes = [8, 32], strides = [1, 1]} : vector<8x96xf32> to vector<8x32xf32>
    %714 = vector.broadcast %19 : vector<1x32xf32> to vector<8x32xf32>
    %715 = arith.addf %713, %714 : vector<8x32xf32>
    %716 = arith.mulf %710, %715 : vector<8x32xf32>
    %717 = arith.addf %712, %716 : vector<8x32xf32>
    %718 = math.tanh %717 : vector<8x32xf32>
    %cst_166 = arith.constant 1.000000e+00 : f32
    %719 = vector.broadcast %cst_166 : f32 to vector<8x32xf32>
    %720 = arith.subf %719, %711 : vector<8x32xf32>
    %721 = arith.mulf %720, %718 : vector<8x32xf32>
    %722 = arith.mulf %711, %652 : vector<8x32xf32>
    %723 = arith.addf %721, %722 : vector<8x32xf32>
    %cst_167 = arith.constant dense<0.000000e+00> : vector<8x96xf32>
    %724 = tpu.matmul %723, %6, %cst_167 {dimension_numbers = #tpu.dot_dimension_numbers<[1], [0], [0], [1], [0, 0, 1, 1], [], []>} : vector<8x32xf32>, vector<32x96xf32>, vector<8x96xf32> -> vector<8x96xf32>
    %725 = vector.broadcast %20 : vector<1x96xf32> to vector<8x96xf32>
    %726 = arith.addf %724, %725 : vector<8x96xf32>
    %cst_168 = arith.constant dense<0.000000e+00> : vector<8x96xf32>
    %727 = tpu.matmul %678, %7, %cst_168 {dimension_numbers = #tpu.dot_dimension_numbers<[1], [0], [0], [1], [0, 0, 1, 1], [], []>} : vector<8x32xf32>, vector<32x96xf32>, vector<8x96xf32> -> vector<8x96xf32>
    %728 = vector.extract_strided_slice %726 {offsets = [0, 0], sizes = [8, 64], strides = [1, 1]} : vector<8x96xf32> to vector<8x64xf32>
    %729 = vector.extract_strided_slice %727 {offsets = [0, 0], sizes = [8, 64], strides = [1, 1]} : vector<8x96xf32> to vector<8x64xf32>
    %730 = arith.addf %728, %729 : vector<8x64xf32>
    %731 = arith.negf %730 : vector<8x64xf32>
    %732 = math.exp %731 : vector<8x64xf32>
    %cst_169 = arith.constant 1.000000e+00 : f32
    %733 = vector.broadcast %cst_169 : f32 to vector<8x64xf32>
    %734 = arith.addf %733, %732 : vector<8x64xf32>
    %735 = arith.divf %733, %734 : vector<8x64xf32>
    %736 = vector.extract_strided_slice %735 {offsets = [0, 0], sizes = [8, 32], strides = [1, 1]} : vector<8x64xf32> to vector<8x32xf32>
    %737 = vector.extract_strided_slice %735 {offsets = [0, 32], sizes = [8, 32], strides = [1, 1]} : vector<8x64xf32> to vector<8x32xf32>
    %738 = vector.extract_strided_slice %726 {offsets = [0, 64], sizes = [8, 32], strides = [1, 1]} : vector<8x96xf32> to vector<8x32xf32>
    %739 = vector.extract_strided_slice %727 {offsets = [0, 64], sizes = [8, 32], strides = [1, 1]} : vector<8x96xf32> to vector<8x32xf32>
    %740 = vector.broadcast %21 : vector<1x32xf32> to vector<8x32xf32>
    %741 = arith.addf %739, %740 : vector<8x32xf32>
    %742 = arith.mulf %736, %741 : vector<8x32xf32>
    %743 = arith.addf %738, %742 : vector<8x32xf32>
    %744 = math.tanh %743 : vector<8x32xf32>
    %cst_170 = arith.constant 1.000000e+00 : f32
    %745 = vector.broadcast %cst_170 : f32 to vector<8x32xf32>
    %746 = arith.subf %745, %737 : vector<8x32xf32>
    %747 = arith.mulf %746, %744 : vector<8x32xf32>
    %748 = arith.mulf %737, %678 : vector<8x32xf32>
    %749 = arith.addf %747, %748 : vector<8x32xf32>
    %cst_171 = arith.constant dense<0.000000e+00> : vector<8x24xf32>
    %750 = tpu.matmul %749, %12, %cst_171 {dimension_numbers = #tpu.dot_dimension_numbers<[1], [0], [0], [1], [0, 0, 1, 1], [], []>} : vector<8x32xf32>, vector<32x24xf32>, vector<8x24xf32> -> vector<8x24xf32>
    %751 = vector.broadcast %26 : vector<1x24xf32> to vector<8x24xf32>
    %752 = arith.addf %750, %751 : vector<8x24xf32>
    %cst_172 = arith.constant 0.000000e+00 : f32
    %753 = vector.broadcast %cst_172 : f32 to vector<8x24xf32>
    %754 = arith.cmpf ogt, %752, %753 : vector<8x24xf32>
    %cst_173 = arith.constant 0.00999999977 : f32
    %755 = vector.broadcast %cst_173 : f32 to vector<8x24xf32>
    %756 = arith.mulf %755, %752 : vector<8x24xf32>
    %757 = arith.select %754, %752, %756 : vector<8x24xi1>, vector<8x24xf32>
    %cst_174 = arith.constant dense<0.000000e+00> : vector<8x16xf32>
    %758 = tpu.matmul %757, %13, %cst_174 {dimension_numbers = #tpu.dot_dimension_numbers<[1], [0], [0], [1], [0, 0, 1, 1], [], []>} : vector<8x24xf32>, vector<24x16xf32>, vector<8x16xf32> -> vector<8x16xf32>
    %759 = vector.broadcast %27 : vector<1x16xf32> to vector<8x16xf32>
    %760 = arith.addf %758, %759 : vector<8x16xf32>
    %761 = arith.negf %760 : vector<8x16xf32>
    %762 = math.exp %761 : vector<8x16xf32>
    %cst_175 = arith.constant 1.000000e+00 : f32
    %763 = vector.broadcast %cst_175 : f32 to vector<8x16xf32>
    %764 = arith.addf %763, %762 : vector<8x16xf32>
    %765 = arith.divf %763, %764 : vector<8x16xf32>
    %c4_176 = arith.constant 4 : index
    %c0_177 = arith.constant 0 : index
    %c0_178 = arith.constant 0 : index
    %766 = vector.load %arg6[%c4_176, %c0_177, %c0_178] : memref<8x8x16xf32, #tpu.memory_space<vmem>>, vector<1x8x16xf32>
    %767 = vector.shape_cast %766 : vector<1x8x16xf32> to vector<8x16xf32>
    %768 = vector.shape_cast %765 : vector<8x16xf32> to vector<1x8x16xf32>
    tpu.vector_store %arg6[%c4_176, %c0_177, %c0_178], %768 {strides = array<i32>} : memref<8x8x16xf32, #tpu.memory_space<vmem>>, vector<1x8x16xf32>,
    %cst_179 = arith.constant dense<0.000000e+00> : vector<8x96xf32>
    %769 = tpu.matmul %765, %4, %cst_179 {dimension_numbers = #tpu.dot_dimension_numbers<[1], [0], [0], [1], [0, 0, 1, 1], [], []>} : vector<8x16xf32>, vector<16x96xf32>, vector<8x96xf32> -> vector<8x96xf32>
    %770 = vector.broadcast %18 : vector<1x96xf32> to vector<8x96xf32>
    %771 = arith.addf %769, %770 : vector<8x96xf32>
    %cst_180 = arith.constant dense<0.000000e+00> : vector<8x96xf32>
    %772 = tpu.matmul %723, %5, %cst_180 {dimension_numbers = #tpu.dot_dimension_numbers<[1], [0], [0], [1], [0, 0, 1, 1], [], []>} : vector<8x32xf32>, vector<32x96xf32>, vector<8x96xf32> -> vector<8x96xf32>
    %773 = vector.extract_strided_slice %771 {offsets = [0, 0], sizes = [8, 64], strides = [1, 1]} : vector<8x96xf32> to vector<8x64xf32>
    %774 = vector.extract_strided_slice %772 {offsets = [0, 0], sizes = [8, 64], strides = [1, 1]} : vector<8x96xf32> to vector<8x64xf32>
    %775 = arith.addf %773, %774 : vector<8x64xf32>
    %776 = arith.negf %775 : vector<8x64xf32>
    %777 = math.exp %776 : vector<8x64xf32>
    %cst_181 = arith.constant 1.000000e+00 : f32
    %778 = vector.broadcast %cst_181 : f32 to vector<8x64xf32>
    %779 = arith.addf %778, %777 : vector<8x64xf32>
    %780 = arith.divf %778, %779 : vector<8x64xf32>
    %781 = vector.extract_strided_slice %780 {offsets = [0, 0], sizes = [8, 32], strides = [1, 1]} : vector<8x64xf32> to vector<8x32xf32>
    %782 = vector.extract_strided_slice %780 {offsets = [0, 32], sizes = [8, 32], strides = [1, 1]} : vector<8x64xf32> to vector<8x32xf32>
    %783 = vector.extract_strided_slice %771 {offsets = [0, 64], sizes = [8, 32], strides = [1, 1]} : vector<8x96xf32> to vector<8x32xf32>
    %784 = vector.extract_strided_slice %772 {offsets = [0, 64], sizes = [8, 32], strides = [1, 1]} : vector<8x96xf32> to vector<8x32xf32>
    %785 = vector.broadcast %19 : vector<1x32xf32> to vector<8x32xf32>
    %786 = arith.addf %784, %785 : vector<8x32xf32>
    %787 = arith.mulf %781, %786 : vector<8x32xf32>
    %788 = arith.addf %783, %787 : vector<8x32xf32>
    %789 = math.tanh %788 : vector<8x32xf32>
    %cst_182 = arith.constant 1.000000e+00 : f32
    %790 = vector.broadcast %cst_182 : f32 to vector<8x32xf32>
    %791 = arith.subf %790, %782 : vector<8x32xf32>
    %792 = arith.mulf %791, %789 : vector<8x32xf32>
    %793 = arith.mulf %782, %723 : vector<8x32xf32>
    %794 = arith.addf %792, %793 : vector<8x32xf32>
    %cst_183 = arith.constant dense<0.000000e+00> : vector<8x96xf32>
    %795 = tpu.matmul %794, %6, %cst_183 {dimension_numbers = #tpu.dot_dimension_numbers<[1], [0], [0], [1], [0, 0, 1, 1], [], []>} : vector<8x32xf32>, vector<32x96xf32>, vector<8x96xf32> -> vector<8x96xf32>
    %796 = vector.broadcast %20 : vector<1x96xf32> to vector<8x96xf32>
    %797 = arith.addf %795, %796 : vector<8x96xf32>
    %cst_184 = arith.constant dense<0.000000e+00> : vector<8x96xf32>
    %798 = tpu.matmul %749, %7, %cst_184 {dimension_numbers = #tpu.dot_dimension_numbers<[1], [0], [0], [1], [0, 0, 1, 1], [], []>} : vector<8x32xf32>, vector<32x96xf32>, vector<8x96xf32> -> vector<8x96xf32>
    %799 = vector.extract_strided_slice %797 {offsets = [0, 0], sizes = [8, 64], strides = [1, 1]} : vector<8x96xf32> to vector<8x64xf32>
    %800 = vector.extract_strided_slice %798 {offsets = [0, 0], sizes = [8, 64], strides = [1, 1]} : vector<8x96xf32> to vector<8x64xf32>
    %801 = arith.addf %799, %800 : vector<8x64xf32>
    %802 = arith.negf %801 : vector<8x64xf32>
    %803 = math.exp %802 : vector<8x64xf32>
    %cst_185 = arith.constant 1.000000e+00 : f32
    %804 = vector.broadcast %cst_185 : f32 to vector<8x64xf32>
    %805 = arith.addf %804, %803 : vector<8x64xf32>
    %806 = arith.divf %804, %805 : vector<8x64xf32>
    %807 = vector.extract_strided_slice %806 {offsets = [0, 0], sizes = [8, 32], strides = [1, 1]} : vector<8x64xf32> to vector<8x32xf32>
    %808 = vector.extract_strided_slice %806 {offsets = [0, 32], sizes = [8, 32], strides = [1, 1]} : vector<8x64xf32> to vector<8x32xf32>
    %809 = vector.extract_strided_slice %797 {offsets = [0, 64], sizes = [8, 32], strides = [1, 1]} : vector<8x96xf32> to vector<8x32xf32>
    %810 = vector.extract_strided_slice %798 {offsets = [0, 64], sizes = [8, 32], strides = [1, 1]} : vector<8x96xf32> to vector<8x32xf32>
    %811 = vector.broadcast %21 : vector<1x32xf32> to vector<8x32xf32>
    %812 = arith.addf %810, %811 : vector<8x32xf32>
    %813 = arith.mulf %807, %812 : vector<8x32xf32>
    %814 = arith.addf %809, %813 : vector<8x32xf32>
    %815 = math.tanh %814 : vector<8x32xf32>
    %cst_186 = arith.constant 1.000000e+00 : f32
    %816 = vector.broadcast %cst_186 : f32 to vector<8x32xf32>
    %817 = arith.subf %816, %808 : vector<8x32xf32>
    %818 = arith.mulf %817, %815 : vector<8x32xf32>
    %819 = arith.mulf %808, %749 : vector<8x32xf32>
    %820 = arith.addf %818, %819 : vector<8x32xf32>
    %cst_187 = arith.constant dense<0.000000e+00> : vector<8x24xf32>
    %821 = tpu.matmul %820, %12, %cst_187 {dimension_numbers = #tpu.dot_dimension_numbers<[1], [0], [0], [1], [0, 0, 1, 1], [], []>} : vector<8x32xf32>, vector<32x24xf32>, vector<8x24xf32> -> vector<8x24xf32>
    %822 = vector.broadcast %26 : vector<1x24xf32> to vector<8x24xf32>
    %823 = arith.addf %821, %822 : vector<8x24xf32>
    %cst_188 = arith.constant 0.000000e+00 : f32
    %824 = vector.broadcast %cst_188 : f32 to vector<8x24xf32>
    %825 = arith.cmpf ogt, %823, %824 : vector<8x24xf32>
    %cst_189 = arith.constant 0.00999999977 : f32
    %826 = vector.broadcast %cst_189 : f32 to vector<8x24xf32>
    %827 = arith.mulf %826, %823 : vector<8x24xf32>
    %828 = arith.select %825, %823, %827 : vector<8x24xi1>, vector<8x24xf32>
    %cst_190 = arith.constant dense<0.000000e+00> : vector<8x16xf32>
    %829 = tpu.matmul %828, %13, %cst_190 {dimension_numbers = #tpu.dot_dimension_numbers<[1], [0], [0], [1], [0, 0, 1, 1], [], []>} : vector<8x24xf32>, vector<24x16xf32>, vector<8x16xf32> -> vector<8x16xf32>
    %830 = vector.broadcast %27 : vector<1x16xf32> to vector<8x16xf32>
    %831 = arith.addf %829, %830 : vector<8x16xf32>
    %832 = arith.negf %831 : vector<8x16xf32>
    %833 = math.exp %832 : vector<8x16xf32>
    %cst_191 = arith.constant 1.000000e+00 : f32
    %834 = vector.broadcast %cst_191 : f32 to vector<8x16xf32>
    %835 = arith.addf %834, %833 : vector<8x16xf32>
    %836 = arith.divf %834, %835 : vector<8x16xf32>
    %c5_192 = arith.constant 5 : index
    %c0_193 = arith.constant 0 : index
    %c0_194 = arith.constant 0 : index
    %837 = vector.load %arg6[%c5_192, %c0_193, %c0_194] : memref<8x8x16xf32, #tpu.memory_space<vmem>>, vector<1x8x16xf32>
    %838 = vector.shape_cast %837 : vector<1x8x16xf32> to vector<8x16xf32>
    %839 = vector.shape_cast %836 : vector<8x16xf32> to vector<1x8x16xf32>
    tpu.vector_store %arg6[%c5_192, %c0_193, %c0_194], %839 {strides = array<i32>} : memref<8x8x16xf32, #tpu.memory_space<vmem>>, vector<1x8x16xf32>,
    %cst_195 = arith.constant dense<0.000000e+00> : vector<8x96xf32>
    %840 = tpu.matmul %836, %4, %cst_195 {dimension_numbers = #tpu.dot_dimension_numbers<[1], [0], [0], [1], [0, 0, 1, 1], [], []>} : vector<8x16xf32>, vector<16x96xf32>, vector<8x96xf32> -> vector<8x96xf32>
    %841 = vector.broadcast %18 : vector<1x96xf32> to vector<8x96xf32>
    %842 = arith.addf %840, %841 : vector<8x96xf32>
    %cst_196 = arith.constant dense<0.000000e+00> : vector<8x96xf32>
    %843 = tpu.matmul %794, %5, %cst_196 {dimension_numbers = #tpu.dot_dimension_numbers<[1], [0], [0], [1], [0, 0, 1, 1], [], []>} : vector<8x32xf32>, vector<32x96xf32>, vector<8x96xf32> -> vector<8x96xf32>
    %844 = vector.extract_strided_slice %842 {offsets = [0, 0], sizes = [8, 64], strides = [1, 1]} : vector<8x96xf32> to vector<8x64xf32>
    %845 = vector.extract_strided_slice %843 {offsets = [0, 0], sizes = [8, 64], strides = [1, 1]} : vector<8x96xf32> to vector<8x64xf32>
    %846 = arith.addf %844, %845 : vector<8x64xf32>
    %847 = arith.negf %846 : vector<8x64xf32>
    %848 = math.exp %847 : vector<8x64xf32>
    %cst_197 = arith.constant 1.000000e+00 : f32
    %849 = vector.broadcast %cst_197 : f32 to vector<8x64xf32>
    %850 = arith.addf %849, %848 : vector<8x64xf32>
    %851 = arith.divf %849, %850 : vector<8x64xf32>
    %852 = vector.extract_strided_slice %851 {offsets = [0, 0], sizes = [8, 32], strides = [1, 1]} : vector<8x64xf32> to vector<8x32xf32>
    %853 = vector.extract_strided_slice %851 {offsets = [0, 32], sizes = [8, 32], strides = [1, 1]} : vector<8x64xf32> to vector<8x32xf32>
    %854 = vector.extract_strided_slice %842 {offsets = [0, 64], sizes = [8, 32], strides = [1, 1]} : vector<8x96xf32> to vector<8x32xf32>
    %855 = vector.extract_strided_slice %843 {offsets = [0, 64], sizes = [8, 32], strides = [1, 1]} : vector<8x96xf32> to vector<8x32xf32>
    %856 = vector.broadcast %19 : vector<1x32xf32> to vector<8x32xf32>
    %857 = arith.addf %855, %856 : vector<8x32xf32>
    %858 = arith.mulf %852, %857 : vector<8x32xf32>
    %859 = arith.addf %854, %858 : vector<8x32xf32>
    %860 = math.tanh %859 : vector<8x32xf32>
    %cst_198 = arith.constant 1.000000e+00 : f32
    %861 = vector.broadcast %cst_198 : f32 to vector<8x32xf32>
    %862 = arith.subf %861, %853 : vector<8x32xf32>
    %863 = arith.mulf %862, %860 : vector<8x32xf32>
    %864 = arith.mulf %853, %794 : vector<8x32xf32>
    %865 = arith.addf %863, %864 : vector<8x32xf32>
    %cst_199 = arith.constant dense<0.000000e+00> : vector<8x96xf32>
    %866 = tpu.matmul %865, %6, %cst_199 {dimension_numbers = #tpu.dot_dimension_numbers<[1], [0], [0], [1], [0, 0, 1, 1], [], []>} : vector<8x32xf32>, vector<32x96xf32>, vector<8x96xf32> -> vector<8x96xf32>
    %867 = vector.broadcast %20 : vector<1x96xf32> to vector<8x96xf32>
    %868 = arith.addf %866, %867 : vector<8x96xf32>
    %cst_200 = arith.constant dense<0.000000e+00> : vector<8x96xf32>
    %869 = tpu.matmul %820, %7, %cst_200 {dimension_numbers = #tpu.dot_dimension_numbers<[1], [0], [0], [1], [0, 0, 1, 1], [], []>} : vector<8x32xf32>, vector<32x96xf32>, vector<8x96xf32> -> vector<8x96xf32>
    %870 = vector.extract_strided_slice %868 {offsets = [0, 0], sizes = [8, 64], strides = [1, 1]} : vector<8x96xf32> to vector<8x64xf32>
    %871 = vector.extract_strided_slice %869 {offsets = [0, 0], sizes = [8, 64], strides = [1, 1]} : vector<8x96xf32> to vector<8x64xf32>
    %872 = arith.addf %870, %871 : vector<8x64xf32>
    %873 = arith.negf %872 : vector<8x64xf32>
    %874 = math.exp %873 : vector<8x64xf32>
    %cst_201 = arith.constant 1.000000e+00 : f32
    %875 = vector.broadcast %cst_201 : f32 to vector<8x64xf32>
    %876 = arith.addf %875, %874 : vector<8x64xf32>
    %877 = arith.divf %875, %876 : vector<8x64xf32>
    %878 = vector.extract_strided_slice %877 {offsets = [0, 0], sizes = [8, 32], strides = [1, 1]} : vector<8x64xf32> to vector<8x32xf32>
    %879 = vector.extract_strided_slice %877 {offsets = [0, 32], sizes = [8, 32], strides = [1, 1]} : vector<8x64xf32> to vector<8x32xf32>
    %880 = vector.extract_strided_slice %868 {offsets = [0, 64], sizes = [8, 32], strides = [1, 1]} : vector<8x96xf32> to vector<8x32xf32>
    %881 = vector.extract_strided_slice %869 {offsets = [0, 64], sizes = [8, 32], strides = [1, 1]} : vector<8x96xf32> to vector<8x32xf32>
    %882 = vector.broadcast %21 : vector<1x32xf32> to vector<8x32xf32>
    %883 = arith.addf %881, %882 : vector<8x32xf32>
    %884 = arith.mulf %878, %883 : vector<8x32xf32>
    %885 = arith.addf %880, %884 : vector<8x32xf32>
    %886 = math.tanh %885 : vector<8x32xf32>
    %cst_202 = arith.constant 1.000000e+00 : f32
    %887 = vector.broadcast %cst_202 : f32 to vector<8x32xf32>
    %888 = arith.subf %887, %879 : vector<8x32xf32>
    %889 = arith.mulf %888, %886 : vector<8x32xf32>
    %890 = arith.mulf %879, %820 : vector<8x32xf32>
    %891 = arith.addf %889, %890 : vector<8x32xf32>
    %cst_203 = arith.constant dense<0.000000e+00> : vector<8x24xf32>
    %892 = tpu.matmul %891, %12, %cst_203 {dimension_numbers = #tpu.dot_dimension_numbers<[1], [0], [0], [1], [0, 0, 1, 1], [], []>} : vector<8x32xf32>, vector<32x24xf32>, vector<8x24xf32> -> vector<8x24xf32>
    %893 = vector.broadcast %26 : vector<1x24xf32> to vector<8x24xf32>
    %894 = arith.addf %892, %893 : vector<8x24xf32>
    %cst_204 = arith.constant 0.000000e+00 : f32
    %895 = vector.broadcast %cst_204 : f32 to vector<8x24xf32>
    %896 = arith.cmpf ogt, %894, %895 : vector<8x24xf32>
    %cst_205 = arith.constant 0.00999999977 : f32
    %897 = vector.broadcast %cst_205 : f32 to vector<8x24xf32>
    %898 = arith.mulf %897, %894 : vector<8x24xf32>
    %899 = arith.select %896, %894, %898 : vector<8x24xi1>, vector<8x24xf32>
    %cst_206 = arith.constant dense<0.000000e+00> : vector<8x16xf32>
    %900 = tpu.matmul %899, %13, %cst_206 {dimension_numbers = #tpu.dot_dimension_numbers<[1], [0], [0], [1], [0, 0, 1, 1], [], []>} : vector<8x24xf32>, vector<24x16xf32>, vector<8x16xf32> -> vector<8x16xf32>
    %901 = vector.broadcast %27 : vector<1x16xf32> to vector<8x16xf32>
    %902 = arith.addf %900, %901 : vector<8x16xf32>
    %903 = arith.negf %902 : vector<8x16xf32>
    %904 = math.exp %903 : vector<8x16xf32>
    %cst_207 = arith.constant 1.000000e+00 : f32
    %905 = vector.broadcast %cst_207 : f32 to vector<8x16xf32>
    %906 = arith.addf %905, %904 : vector<8x16xf32>
    %907 = arith.divf %905, %906 : vector<8x16xf32>
    %c6_208 = arith.constant 6 : index
    %c0_209 = arith.constant 0 : index
    %c0_210 = arith.constant 0 : index
    %908 = vector.load %arg6[%c6_208, %c0_209, %c0_210] : memref<8x8x16xf32, #tpu.memory_space<vmem>>, vector<1x8x16xf32>
    %909 = vector.shape_cast %908 : vector<1x8x16xf32> to vector<8x16xf32>
    %910 = vector.shape_cast %907 : vector<8x16xf32> to vector<1x8x16xf32>
    tpu.vector_store %arg6[%c6_208, %c0_209, %c0_210], %910 {strides = array<i32>} : memref<8x8x16xf32, #tpu.memory_space<vmem>>, vector<1x8x16xf32>,
    %cst_211 = arith.constant dense<0.000000e+00> : vector<8x96xf32>
    %911 = tpu.matmul %907, %4, %cst_211 {dimension_numbers = #tpu.dot_dimension_numbers<[1], [0], [0], [1], [0, 0, 1, 1], [], []>} : vector<8x16xf32>, vector<16x96xf32>, vector<8x96xf32> -> vector<8x96xf32>
    %912 = vector.broadcast %18 : vector<1x96xf32> to vector<8x96xf32>
    %913 = arith.addf %911, %912 : vector<8x96xf32>
    %cst_212 = arith.constant dense<0.000000e+00> : vector<8x96xf32>
    %914 = tpu.matmul %865, %5, %cst_212 {dimension_numbers = #tpu.dot_dimension_numbers<[1], [0], [0], [1], [0, 0, 1, 1], [], []>} : vector<8x32xf32>, vector<32x96xf32>, vector<8x96xf32> -> vector<8x96xf32>
    %915 = vector.extract_strided_slice %913 {offsets = [0, 0], sizes = [8, 64], strides = [1, 1]} : vector<8x96xf32> to vector<8x64xf32>
    %916 = vector.extract_strided_slice %914 {offsets = [0, 0], sizes = [8, 64], strides = [1, 1]} : vector<8x96xf32> to vector<8x64xf32>
    %917 = arith.addf %915, %916 : vector<8x64xf32>
    %918 = arith.negf %917 : vector<8x64xf32>
    %919 = math.exp %918 : vector<8x64xf32>
    %cst_213 = arith.constant 1.000000e+00 : f32
    %920 = vector.broadcast %cst_213 : f32 to vector<8x64xf32>
    %921 = arith.addf %920, %919 : vector<8x64xf32>
    %922 = arith.divf %920, %921 : vector<8x64xf32>
    %923 = vector.extract_strided_slice %922 {offsets = [0, 0], sizes = [8, 32], strides = [1, 1]} : vector<8x64xf32> to vector<8x32xf32>
    %924 = vector.extract_strided_slice %922 {offsets = [0, 32], sizes = [8, 32], strides = [1, 1]} : vector<8x64xf32> to vector<8x32xf32>
    %925 = vector.extract_strided_slice %913 {offsets = [0, 64], sizes = [8, 32], strides = [1, 1]} : vector<8x96xf32> to vector<8x32xf32>
    %926 = vector.extract_strided_slice %914 {offsets = [0, 64], sizes = [8, 32], strides = [1, 1]} : vector<8x96xf32> to vector<8x32xf32>
    %927 = vector.broadcast %19 : vector<1x32xf32> to vector<8x32xf32>
    %928 = arith.addf %926, %927 : vector<8x32xf32>
    %929 = arith.mulf %923, %928 : vector<8x32xf32>
    %930 = arith.addf %925, %929 : vector<8x32xf32>
    %931 = math.tanh %930 : vector<8x32xf32>
    %cst_214 = arith.constant 1.000000e+00 : f32
    %932 = vector.broadcast %cst_214 : f32 to vector<8x32xf32>
    %933 = arith.subf %932, %924 : vector<8x32xf32>
    %934 = arith.mulf %933, %931 : vector<8x32xf32>
    %935 = arith.mulf %924, %865 : vector<8x32xf32>
    %936 = arith.addf %934, %935 : vector<8x32xf32>
    %cst_215 = arith.constant dense<0.000000e+00> : vector<8x96xf32>
    %937 = tpu.matmul %936, %6, %cst_215 {dimension_numbers = #tpu.dot_dimension_numbers<[1], [0], [0], [1], [0, 0, 1, 1], [], []>} : vector<8x32xf32>, vector<32x96xf32>, vector<8x96xf32> -> vector<8x96xf32>
    %938 = vector.broadcast %20 : vector<1x96xf32> to vector<8x96xf32>
    %939 = arith.addf %937, %938 : vector<8x96xf32>
    %cst_216 = arith.constant dense<0.000000e+00> : vector<8x96xf32>
    %940 = tpu.matmul %891, %7, %cst_216 {dimension_numbers = #tpu.dot_dimension_numbers<[1], [0], [0], [1], [0, 0, 1, 1], [], []>} : vector<8x32xf32>, vector<32x96xf32>, vector<8x96xf32> -> vector<8x96xf32>
    %941 = vector.extract_strided_slice %939 {offsets = [0, 0], sizes = [8, 64], strides = [1, 1]} : vector<8x96xf32> to vector<8x64xf32>
    %942 = vector.extract_strided_slice %940 {offsets = [0, 0], sizes = [8, 64], strides = [1, 1]} : vector<8x96xf32> to vector<8x64xf32>
    %943 = arith.addf %941, %942 : vector<8x64xf32>
    %944 = arith.negf %943 : vector<8x64xf32>
    %945 = math.exp %944 : vector<8x64xf32>
    %cst_217 = arith.constant 1.000000e+00 : f32
    %946 = vector.broadcast %cst_217 : f32 to vector<8x64xf32>
    %947 = arith.addf %946, %945 : vector<8x64xf32>
    %948 = arith.divf %946, %947 : vector<8x64xf32>
    %949 = vector.extract_strided_slice %948 {offsets = [0, 0], sizes = [8, 32], strides = [1, 1]} : vector<8x64xf32> to vector<8x32xf32>
    %950 = vector.extract_strided_slice %948 {offsets = [0, 32], sizes = [8, 32], strides = [1, 1]} : vector<8x64xf32> to vector<8x32xf32>
    %951 = vector.extract_strided_slice %939 {offsets = [0, 64], sizes = [8, 32], strides = [1, 1]} : vector<8x96xf32> to vector<8x32xf32>
    %952 = vector.extract_strided_slice %940 {offsets = [0, 64], sizes = [8, 32], strides = [1, 1]} : vector<8x96xf32> to vector<8x32xf32>
    %953 = vector.broadcast %21 : vector<1x32xf32> to vector<8x32xf32>
    %954 = arith.addf %952, %953 : vector<8x32xf32>
    %955 = arith.mulf %949, %954 : vector<8x32xf32>
    %956 = arith.addf %951, %955 : vector<8x32xf32>
    %957 = math.tanh %956 : vector<8x32xf32>
    %cst_218 = arith.constant 1.000000e+00 : f32
    %958 = vector.broadcast %cst_218 : f32 to vector<8x32xf32>
    %959 = arith.subf %958, %950 : vector<8x32xf32>
    %960 = arith.mulf %959, %957 : vector<8x32xf32>
    %961 = arith.mulf %950, %891 : vector<8x32xf32>
    %962 = arith.addf %960, %961 : vector<8x32xf32>
    %cst_219 = arith.constant dense<0.000000e+00> : vector<8x24xf32>
    %963 = tpu.matmul %962, %12, %cst_219 {dimension_numbers = #tpu.dot_dimension_numbers<[1], [0], [0], [1], [0, 0, 1, 1], [], []>} : vector<8x32xf32>, vector<32x24xf32>, vector<8x24xf32> -> vector<8x24xf32>
    %964 = vector.broadcast %26 : vector<1x24xf32> to vector<8x24xf32>
    %965 = arith.addf %963, %964 : vector<8x24xf32>
    %cst_220 = arith.constant 0.000000e+00 : f32
    %966 = vector.broadcast %cst_220 : f32 to vector<8x24xf32>
    %967 = arith.cmpf ogt, %965, %966 : vector<8x24xf32>
    %cst_221 = arith.constant 0.00999999977 : f32
    %968 = vector.broadcast %cst_221 : f32 to vector<8x24xf32>
    %969 = arith.mulf %968, %965 : vector<8x24xf32>
    %970 = arith.select %967, %965, %969 : vector<8x24xi1>, vector<8x24xf32>
    %cst_222 = arith.constant dense<0.000000e+00> : vector<8x16xf32>
    %971 = tpu.matmul %970, %13, %cst_222 {dimension_numbers = #tpu.dot_dimension_numbers<[1], [0], [0], [1], [0, 0, 1, 1], [], []>} : vector<8x24xf32>, vector<24x16xf32>, vector<8x16xf32> -> vector<8x16xf32>
    %972 = vector.broadcast %27 : vector<1x16xf32> to vector<8x16xf32>
    %973 = arith.addf %971, %972 : vector<8x16xf32>
    %974 = arith.negf %973 : vector<8x16xf32>
    %975 = math.exp %974 : vector<8x16xf32>
    %cst_223 = arith.constant 1.000000e+00 : f32
    %976 = vector.broadcast %cst_223 : f32 to vector<8x16xf32>
    %977 = arith.addf %976, %975 : vector<8x16xf32>
    %978 = arith.divf %976, %977 : vector<8x16xf32>
    %c7_224 = arith.constant 7 : index
    %c0_225 = arith.constant 0 : index
    %c0_226 = arith.constant 0 : index
    %979 = vector.load %arg6[%c7_224, %c0_225, %c0_226] : memref<8x8x16xf32, #tpu.memory_space<vmem>>, vector<1x8x16xf32>
    %980 = vector.shape_cast %979 : vector<1x8x16xf32> to vector<8x16xf32>
    %981 = vector.shape_cast %978 : vector<8x16xf32> to vector<1x8x16xf32>
    tpu.vector_store %arg6[%c7_224, %c0_225, %c0_226], %981 {strides = array<i32>} : memref<8x8x16xf32, #tpu.memory_space<vmem>>, vector<1x8x16xf32>,
    return
  }
}

</mosaic_0001>

<llo_original>
// kernel: vae_forward.1
$region0: #{vae_forward.1}
  #allocation0 [shape = 'u32[]', space=smem, size = 0x4, offset = 0x4, fixed_abs, tag = 'smem constant byte address 0x4 - core index']
  #allocation1 [shape = 'u32[144,128]{1,0:T(1,128)}', space=vmem, size = 0x12000, scoped, tag = 'internal scratch']
  %s0 = inlined_call_operand.vmem [shape: f32[8,8,32], index: 0, kind: input, shape index: {}]
  %s1 = inlined_call_operand.vmem [shape: f32[8,16], index: 1, kind: input, shape index: {}]
  %s2 = inlined_call_operand.vmem [shape: f32[224,192], index: 2, kind: input, shape index: {}]
  %s3 = inlined_call_operand.vmem [shape: f32[112,96], index: 3, kind: input, shape index: {}]
  %s4 = inlined_call_operand.vmem [shape: f32[264,80], index: 4, kind: input, shape index: {}]
  %s5 = inlined_call_operand.vmem [shape: f32[16,192], index: 5, kind: input, shape index: {}]
  %s6 = inlined_call_operand.vmem [shape: f32[8,8,16], index: 6, kind: output, shape index: {0}]
  %s7 = inlined_call_operand.hbm [shape: f32[8,16], index: 7, kind: output, shape index: {1}]
  %s8 = inlined_call_operand.hbm [shape: f32[8,16], index: 8, kind: output, shape index: {2}]
  %s9 = inlined_call_operand.vmem [shape: f32[8,4], index: 9, kind: output, shape index: {3}]
  %10 = xla_tuple %s6, %s7, %s8, %s9
  %s11 = sld [smem:[#allocation0]]
  $region58: #{vae_forward.1} parent=0
    _
  %s13 = ssub.s32 1, %s11
  %s14 = scalar_select 0, %s13, %s11
  $region1: #{vae_forward.1} parent=0
    #allocation2 [shape = 'u8[4096]{0}', space=vmem, size = 0x1000, scoped, tag = 'output window, operand 1, single buffered']
    #allocation3 [shape = 's32[1]{0}', space=sflag, size = 0x4, scoped, tag = 'scoped memory for vae_forward.1']
    #allocation4 [shape = 'u8[4096]{0}', space=vmem, size = 0x1000, scoped, tag = 'output window, operand 2, single buffered']
    #allocation5 [shape = 's32[1]{0}', space=sflag, size = 0x4, scoped, tag = 'scoped memory for vae_forward.1']
    %15 = vsyncpa [#allocation3], 0
    %16 = vsyncpa [#allocation5], 0
    // Predicated region
    $region2: #{vae_forward.1} parent=1 // pred_check
      _
    $region3: #{vae_forward.1} parent=1 // pred_check_branch
      %18 = sbr.rel (0) target = $region5
    $region4: #{vae_forward.1} parent=1 // pred_region
      _
    $region5: #{vae_forward.1} parent=1 // pred_fallthru
      _
    // Predicated region
    $region6: #{vae_forward.1} parent=1 // pred_check
      _
    $region7: #{vae_forward.1} parent=1 // pred_check_branch
      %20 = sbr.rel (0) target = $region9
    $region8: #{vae_forward.1} parent=1 // pred_region
      _
    $region9: #{vae_forward.1} parent=1 // pred_fallthru
      _
    // Predicated region
    $region10: #{vae_forward.1} parent=1 // pred_check
      _
    $region11: #{vae_forward.1} parent=1 // pred_check_branch
      %22 = sbr.rel (0) target = $region13
    $region12: #{vae_forward.1} parent=1 // pred_region
      _
    $region13: #{vae_forward.1} parent=1 // pred_fallthru
      _
    // Predicated region
    $region14: #{vae_forward.1} parent=1 // pred_check
      _
    $region15: #{vae_forward.1} parent=1 // pred_check_branch
      %24 = sbr.rel (0) target = $region17
    $region16: #{vae_forward.1} parent=1 // pred_region
      _
    $region17: #{vae_forward.1} parent=1 // pred_fallthru
      _
    // Predicated region
    $region18: #{vae_forward.1} parent=1 // pred_check
      _
    $region19: #{vae_forward.1} parent=1 // pred_check_branch
      %26 = sbr.rel (0) target = $region21
    $region20: #{vae_forward.1} parent=1 // pred_region
      _
    $region21: #{vae_forward.1} parent=1 // pred_fallthru
      _
    // Predicated region
    $region22: #{vae_forward.1} parent=1 // pred_check
      _
    $region23: #{vae_forward.1} parent=1 // pred_check_branch
      %28 = sbr.rel (0) target = $region25
    $region24: #{vae_forward.1} parent=1 // pred_region
      _
    $region25: #{vae_forward.1} parent=1 // pred_fallthru
      _
    %v29 = vld [vmem:[%s2] sm:$0xff]
    %v30 = vld [vmem:[%s2 + $0x8] sm:$0xff]
    %v31 = vld [vmem:[%s2 + $0x10] sm:$0xff]
    %v32 = vld [vmem:[%s2 + $0x18] sm:$0xff]
    %v33 = vld [vmem:[%s2 + $0x20] sm:$0xff]
    %v34 = vld [vmem:[%s2 + $0x28] sm:$0xff]
    %v35 = vld [vmem:[%s2 + $0x30] sm:$0xff]
    %v36 = vld [vmem:[%s2 + $0x38] sm:$0xff]
    %v37 = vld [vmem:[%s2 + $0x40] sm:$0xff]
    %v38 = vld [vmem:[%s2 + $0x48] sm:$0xff]
    %v39 = vld [vmem:[%s2 + $0x50] sm:$0xff]
    %v40 = vld [vmem:[%s2 + $0x58] sm:$0xff]
    %v41 = vld [vmem:[%s2 + $0x60] sm:$0xff]
    %v42 = vld [vmem:[%s2 + $0x68] sm:$0xff]
    %v43 = vld [vmem:[%s2 + $0x70] sm:$0xff]
    %v44 = vld [vmem:[%s2 + $0x78] sm:$0xff]
    %v45 = vld [vmem:[%s2 + $0x80] sm:$0xff]
    %v46 = vld [vmem:[%s2 + $0x88] sm:$0xff]
    %v47 = vld [vmem:[%s2 + $0x90] sm:$0xff]
    %v48 = vld [vmem:[%s2 + $0x98] sm:$0xff]
    %v49 = vld [vmem:[%s2 + $0xa0] sm:$0xff]
    %v50 = vld [vmem:[%s2 + $0xa8] sm:$0xff]
    %v51 = vld [vmem:[%s2 + $0xb0] sm:$0xff]
    %v52 = vld [vmem:[%s2 + $0xb8] sm:$0xff]
    %v53 = vld [vmem:[%s2 + $0xc0] sm:$0xff]
    %v54 = vld [vmem:[%s2 + $0xc8] sm:$0xff]
    %v55 = vld [vmem:[%s2 + $0xd0] sm:$0xff]
    %v56 = vld [vmem:[%s2 + $0xd8] sm:$0xff]
    %v57 = vld [vmem:[%s2 + $0xe0] sm:$0xff]
    %v58 = vld [vmem:[%s2 + $0xe8] sm:$0xff]
    %v59 = vld [vmem:[%s2 + $0xf0] sm:$0xff]
    %v60 = vld [vmem:[%s2 + $0xf8] sm:$0xff]
    %v61 = vld [vmem:[%s2 + $0x100] sm:$0xff]
    %v62 = vld [vmem:[%s2 + $0x108] sm:$0xff]
    %v63 = vld [vmem:[%s2 + $0x110] sm:$0xff]
    %v64 = vld [vmem:[%s2 + $0x118] sm:$0xff]
    %v65 = vld [vmem:[%s2 + $0x120] sm:$0xff]
    %v66 = vld [vmem:[%s2 + $0x128] sm:$0xff]
    %v67 = vld [vmem:[%s2 + $0x130] sm:$0xff]
    %v68 = vld [vmem:[%s2 + $0x138] sm:$0xff]
    %v69 = vld [vmem:[%s2 + $0x140] sm:$0xff]
    %v70 = vld [vmem:[%s2 + $0x148] sm:$0xff]
    %v71 = vld [vmem:[%s2 + $0x150] sm:$0xff]
    %v72 = vld [vmem:[%s2 + $0x158] sm:$0xff]
    %v73 = vld [vmem:[%s2 + $0x160] sm:$0xff]
    %v74 = vld [vmem:[%s2 + $0x168] sm:$0xff]
    %v75 = vld [vmem:[%s2 + $0x170] sm:$0xff]
    %v76 = vld [vmem:[%s2 + $0x178] sm:$0xff]
    %v77 = vld [vmem:[%s2 + $0x180] sm:$0xff]
    %v78 = vld [vmem:[%s2 + $0x188] sm:$0xff]
    %v79 = vld [vmem:[%s2 + $0x190] sm:$0xff]
    %v80 = vld [vmem:[%s2 + $0x198] sm:$0xff]
    %v81 = vld [vmem:[%s2 + $0x1a0] sm:$0xff]
    %v82 = vld [vmem:[%s2 + $0x1a8] sm:$0xff]
    %v83 = vld [vmem:[%s2 + $0x1b0] sm:$0xff]
    %v84 = vld [vmem:[%s2 + $0x1b8] sm:$0xff]
    %v85 = vld [vmem:[%s3] sm:$0xff]
    %v86 = vld [vmem:[%s3 + $0x8] sm:$0xff]
    %v87 = vld [vmem:[%s3 + $0x10] sm:$0xff]
    %v88 = vld [vmem:[%s3 + $0x18] sm:$0xff]
    %v89 = vld [vmem:[%s3 + $0x20] sm:$0xff]
    %v90 = vld [vmem:[%s3 + $0x28] sm:$0xff]
    %v91 = vld [vmem:[%s3 + $0x30] sm:$0xff]
    %v92 = vld [vmem:[%s3 + $0x38] sm:$0xff]
    %v93 = vld [vmem:[%s3 + $0x40] sm:$0xff]
    %v94 = vld [vmem:[%s3 + $0x48] sm:$0xff]
    %v95 = vld [vmem:[%s3 + $0x50] sm:$0xff]
    %v96 = vld [vmem:[%s3 + $0x58] sm:$0xff]
    %v97 = vld [vmem:[%s3 + $0x60] sm:$0xff]
    %v98 = vld [vmem:[%s3 + $0x68] sm:$0xff]
    %v99 = vld [vmem:[%s4] sm:$0xff]
    %v100 = vld [vmem:[%s4 + $0x8] sm:$0xff]
    %v101 = vld [vmem:[%s4 + $0x10] sm:$0xff]
    %v102 = vld [vmem:[%s4 + $0x18] sm:$0xff]
    %v103 = vld [vmem:[%s4 + $0x20] sm:$0xff]
    %v104 = vld [vmem:[%s4 + $0x28] sm:$0xff]
    %v105 = vld [vmem:[%s4 + $0x30] sm:$0xff]
    %v106 = vld [vmem:[%s4 + $0x38] sm:$0xff]
    %v107 = vld [vmem:[%s4 + $0x40] sm:$0xff]
    %v108 = vld [vmem:[%s4 + $0x48] sm:$0xff]
    %v109 = vld [vmem:[%s4 + $0x50] sm:$0xff]
    %v110 = vld [vmem:[%s4 + $0x58] sm:$0xff]
    %v111 = vld [vmem:[%s4 + $0x60] sm:$0xff]
    %v112 = vld [vmem:[%s4 + $0x68] sm:$0xff]
    %v113 = vld [vmem:[%s4 + $0x70] sm:$0xff]
    %v114 = vld [vmem:[%s4 + $0x78] sm:$0xff]
    %v115 = vld [vmem:[%s4 + $0x80] sm:$0xff]
    %v116 = vld [vmem:[%s4 + $0x88] sm:$0xff]
    %v117 = vld [vmem:[%s4 + $0x90] sm:$0xff]
    %v118 = vld [vmem:[%s4 + $0x98] sm:$0xff]
    %v119 = vld [vmem:[%s4 + $0xa0] sm:$0xff]
    %v120 = vld [vmem:[%s4 + $0xa8] sm:$0xff]
    %v121 = vld [vmem:[%s4 + $0xb0] sm:$0xff]
    %v122 = vld [vmem:[%s4 + $0xb8] sm:$0xff]
    %v123 = vld [vmem:[%s4 + $0xc0] sm:$0xff]
    %v124 = vld [vmem:[%s4 + $0xc8] sm:$0xff]
    %v125 = vld [vmem:[%s4 + $0xd0] sm:$0xff]
    %v126 = vld [vmem:[%s4 + $0xd8] sm:$0xff]
    %v127 = vld [vmem:[%s4 + $0xe0] sm:$0xff]
    %v128 = vld [vmem:[%s4 + $0xe8] sm:$0xff]
    %v129 = vld [vmem:[%s4 + $0xf0] sm:$0xff]
    %v130 = vld [vmem:[%s4 + $0xf8] sm:$0xff]
    %v131 = vld [vmem:[%s4 + $0x100] sm:$0xff]
    %v132 = vld [vmem:[%s5] ss:$8 sm:$0x3]
    %v133 = vld [vmem:[%s5 + $0x1] ss:$0 sm:$0xff]
    %s134 = scalar_lea.vmem %s5, 2
    %v135 = vld [vmem:[%s134] ss:$8 sm:$0x3]
    %v136 = vld [vmem:[%s5 + $0x3] ss:$0 sm:$0xff]
    %v137 = vld [vmem:[%s5 + $0x4] ss:$0 sm:$0xff]
    %v138 = vld [vmem:[%s5 + $0x5] ss:$0 sm:$0xff]
    %v139 = vld [vmem:[%s5 + $0x6] ss:$0 sm:$0xff]
    %v140 = vld [vmem:[%s5 + $0x7] ss:$0 sm:$0xff]
    %v141 = vld [vmem:[%s5 + $0x10] ss:$0 sm:$0xff]
    %v142 = vld [vmem:[%s5 + $0x11] ss:$0 sm:$0xff]
    %v143 = vld [vmem:[%s5 + $0x12] ss:$0 sm:$0xff]
    %v144 = vld [vmem:[%s5 + $0x13] ss:$0 sm:$0xff]
    %v145 = vld [vmem:[%s5 + $0x14] ss:$0 sm:$0xff]
    %v146 = vld [vmem:[%s5 + $0x15] ss:$0 sm:$0xff]
    %v147 = vld [vmem:[%s0] sm:$0xff]
    %v148 = vld [vmem:[%s0 + $0x8] sm:$0xff]
    %v149 = vld [vmem:[%s0 + $0x10] sm:$0xff]
    %v150 = vld [vmem:[%s0 + $0x18] sm:$0xff]
    %v151 = vld [vmem:[%s0 + $0x20] sm:$0xff]
    %v152 = vld [vmem:[%s0 + $0x28] sm:$0xff]
    %v153 = vld [vmem:[%s0 + $0x30] sm:$0xff]
    %v154 = vld [vmem:[%s0 + $0x38] sm:$0xff]
    %v156 = vlaneseq
    %v157 = vshrl.u32 %v156, 7
    %v158 = vsub.s32 0, %v157
    %v159 = vrot.slane %v132, %v158
    %v160 = vlaneseq
    %v161 = vshrl.u32 %v160, 7
    %v162 = vsub.s32 1, %v161
    %v163 = vrot.slane %v132, %v162
    %vm166 = vcmask 261120
    %v168 = vsel %vm166, %v147, 0
    %v171 = vsel %vm166, %v148, 0
    %v174 = vsel %vm166, %v149, 0
    %v177 = vsel %vm166, %v150, 0
    %v180 = vsel %vm166, %v151, 0
    %v183 = vsel %vm166, %v152, 0
    %v186 = vsel %vm166, %v153, 0
    %v189 = vsel %vm166, %v154, 0
    %191 = vmatprep.subr.mxu0 %v30
    %192 = vmatpush1.msra.mxu0 %v29
    %193 = vmatprep.subr.mxu0 %v32
    %194 = vmatpush1.msra.mxu0 %v31
    %195 = vmatprep.subr.mxu0 %v34
    %196 = vmatpush1.msra.mxu0 %v33
    %197 = vmatprep.subr.mxu0 %v36
    %198 = vmatpush1.msra.mxu0 %v35
    %199 = vmatprep.subr.mxu0 0.0
    %200 = vmatpush1.msra.mxu0 0.0
    %201 = vmatprep.subr.mxu0 0.0
    %202 = vmatpush1.msra.mxu0 0.0
    %203 = vmatprep.subr.mxu0 0.0
    %204 = vmatpush1.msra.mxu0 0.0
    %205 = vmatprep.subr.mxu0 0.0
    %206 = vmatpush1.msra.mxu0 0.0
    %207 = vmatprep.subr.mxu0 0.0
    %208 = vmatpush1.msra.mxu0 0.0
    %209 = vmatprep.subr.mxu0 0.0
    %210 = vmatpush1.msra.mxu0 0.0
    %211 = vmatprep.subr.mxu0 0.0
    %212 = vmatpush1.msra.mxu0 0.0
    %213 = vmatprep.subr.mxu0 0.0
    %214 = vmatpush1.msra.mxu0 0.0
    %215 = vmatprep.subr.mxu0 0.0
    %216 = vmatpush1.msra.mxu0 0.0
    %217 = vmatprep.subr.mxu0 0.0
    %218 = vmatpush1.msra.mxu0 0.0
    %219 = vmatprep.subr.mxu0 0.0
    %220 = vmatpush1.msra.mxu0 0.0
    %221 = vmatprep.subr.mxu0 0.0
    %222 = vmatpush1.msra.mxu0 0.0
    %223 = vmatprep.subr.mxu0 0.0
    %224 = vmatpush1.msra.mxu0 0.0
    %225 = vmatprep.subr.mxu0 0.0
    %226 = vmatpush1.msra.mxu0 0.0
    %227 = vmatprep.subr.mxu0 0.0
    %228 = vmatpush1.msra.mxu0 0.0
    %229 = vmatprep.subr.mxu0 0.0
    %230 = vmatpush1.msra.mxu0 0.0
    %231 = vmatprep.subr.mxu0 0.0
    %232 = vmatpush1.msra.mxu0 0.0
    %233 = vmatprep.subr.mxu0 0.0
    %234 = vmatpush1.msra.mxu0 0.0
    %235 = vmatprep.subr.mxu0 0.0
    %236 = vmatpush1.msra.mxu0 0.0
    %237 = vmatprep.subr.mxu0 0.0
    %238 = vmatpush1.msra.mxu0 0.0
    %239 = vmatprep.subr.mxu0 0.0
    %240 = vmatpush1.msra.mxu0 0.0
    %241 = vmatprep.subr.mxu0 0.0
    %242 = vmatpush1.msra.mxu0 0.0
    %243 = vmatprep.subr.mxu0 0.0
    %244 = vmatpush1.msra.mxu0 0.0
    %245 = vmatprep.subr.mxu0 0.0
    %246 = vmatpush1.msra.mxu0 0.0
    %247 = vmatprep.subr.mxu0 0.0
    %248 = vmatpush1.msra.mxu0 0.0
    %249 = vmatprep.subr.mxu0 0.0
    %250 = vmatpush1.msra.mxu0 0.0
    %251 = vmatprep.subr.mxu0 0.0
    %252 = vmatpush1.msra.mxu0 0.0
    %253 = vmatprep.subr.mxu0 0.0
    %254 = vmatpush1.msra.mxu0 0.0
    %255 = vmatprep.mubr.f32.mxu0 0.0
    %256 = vmatmul.mubr.f32.gmra.mrb[0].mxu0 %v168
    %v257 = vpop.f32.mrb[0].mxu0
    %v258 = vadd.f32 %v159, %v257
    %v259 = vpop.f32.mrb[0].mxu0
    %v260 = vadd.f32 %v163, %v259
    %261 = vmatprep.mubr.f32.mxu0 0.0
    %262 = vmatmul.mubr.f32.gmra.mrb[0].mxu0 %v171
    %v263 = vpop.f32.mrb[0].mxu0
    %v264 = vadd.f32 %v159, %v263
    %v265 = vpop.f32.mrb[0].mxu0
    %v266 = vadd.f32 %v163, %v265
    %267 = vmatprep.mubr.f32.mxu0 0.0
    %268 = vmatmul.mubr.f32.gmra.mrb[0].mxu0 %v174
    %v269 = vpop.f32.mrb[0].mxu0
    %v270 = vadd.f32 %v159, %v269
    %v271 = vpop.f32.mrb[0].mxu0
    %v272 = vadd.f32 %v163, %v271
    %273 = vmatprep.mubr.f32.mxu0 0.0
    %274 = vmatmul.mubr.f32.gmra.mrb[0].mxu0 %v177
    %v275 = vpop.f32.mrb[0].mxu0
    %v276 = vadd.f32 %v159, %v275
    %v277 = vpop.f32.mrb[0].mxu0
    %v278 = vadd.f32 %v163, %v277
    %279 = vmatprep.mubr.f32.mxu0 0.0
    %280 = vmatmul.mubr.f32.gmra.mrb[0].mxu0 %v180
    %v281 = vpop.f32.mrb[0].mxu0
    %v282 = vadd.f32 %v159, %v281
    %v283 = vpop.f32.mrb[0].mxu0
    %v284 = vadd.f32 %v163, %v283
    %285 = vmatprep.mubr.f32.mxu0 0.0
    %286 = vmatmul.mubr.f32.gmra.mrb[0].mxu0 %v183
    %v287 = vpop.f32.mrb[0].mxu0
    %v288 = vadd.f32 %v159, %v287
    %v289 = vpop.f32.mrb[0].mxu0
    %v290 = vadd.f32 %v163, %v289
    %291 = vmatprep.mubr.f32.mxu0 0.0
    %292 = vmatmul.mubr.f32.gmra.mrb[0].mxu0 %v186
    %v293 = vpop.f32.mrb[0].mxu0
    %v294 = vadd.f32 %v159, %v293
    %v295 = vpop.f32.mrb[0].mxu0
    %v296 = vadd.f32 %v163, %v295
    %297 = vmatprep.mubr.f32.mxu0 0.0
    %298 = vmatmul.mubr.f32.gmra.mrb[0].mxu0 %v189
    %v299 = vpop.f32.mrb[0].mxu0
    %v300 = vadd.f32 %v159, %v299
    %v301 = vpop.f32.mrb[0].mxu0
    %v302 = vadd.f32 %v163, %v301
    %303 = vdwg.mxu0
    %vm304 = vcmask 523264
    %v306 = vsel %vm304, 0.0, 0
    %308 = vmatprep.subr.mxu0 %v38
    %309 = vmatpush1.msra.mxu0 %v37
    %310 = vmatprep.subr.mxu0 %v40
    %311 = vmatpush1.msra.mxu0 %v39
    %312 = vmatprep.subr.mxu0 %v42
    %313 = vmatpush1.msra.mxu0 %v41
    %314 = vmatprep.subr.mxu0 %v44
    %315 = vmatpush1.msra.mxu0 %v43
    %316 = vmatprep.subr.mxu0 %v46
    %317 = vmatpush1.msra.mxu0 %v45
    %318 = vmatprep.subr.mxu0 %v48
    %319 = vmatpush1.msra.mxu0 %v47
    %320 = vmatprep.subr.mxu0 %v50
    %321 = vmatpush1.msra.mxu0 %v49
    %322 = vmatprep.subr.mxu0 %v52
    %323 = vmatpush1.msra.mxu0 %v51
    %324 = vmatprep.subr.mxu0 0.0
    %325 = vmatpush1.msra.mxu0 0.0
    %326 = vmatprep.subr.mxu0 0.0
    %327 = vmatpush1.msra.mxu0 0.0
    %328 = vmatprep.subr.mxu0 0.0
    %329 = vmatpush1.msra.mxu0 0.0
    %330 = vmatprep.subr.mxu0 0.0
    %331 = vmatpush1.msra.mxu0 0.0
    %332 = vmatprep.subr.mxu0 0.0
    %333 = vmatpush1.msra.mxu0 0.0
    %334 = vmatprep.subr.mxu0 0.0
    %335 = vmatpush1.msra.mxu0 0.0
    %336 = vmatprep.subr.mxu0 0.0
    %337 = vmatpush1.msra.mxu0 0.0
    %338 = vmatprep.subr.mxu0 0.0
    %339 = vmatpush1.msra.mxu0 0.0
    %340 = vmatprep.subr.mxu0 0.0
    %341 = vmatpush1.msra.mxu0 0.0
    %342 = vmatprep.subr.mxu0 0.0
    %343 = vmatpush1.msra.mxu0 0.0
    %344 = vmatprep.subr.mxu0 0.0
    %345 = vmatpush1.msra.mxu0 0.0
    %346 = vmatprep.subr.mxu0 0.0
    %347 = vmatpush1.msra.mxu0 0.0
    %348 = vmatprep.subr.mxu0 0.0
    %349 = vmatpush1.msra.mxu0 0.0
    %350 = vmatprep.subr.mxu0 0.0
    %351 = vmatpush1.msra.mxu0 0.0
    %352 = vmatprep.subr.mxu0 0.0
    %353 = vmatpush1.msra.mxu0 0.0
    %354 = vmatprep.subr.mxu0 0.0
    %355 = vmatpush1.msra.mxu0 0.0
    %356 = vmatprep.subr.mxu0 0.0
    %357 = vmatpush1.msra.mxu0 0.0
    %358 = vmatprep.subr.mxu0 0.0
    %359 = vmatpush1.msra.mxu0 0.0
    %360 = vmatprep.subr.mxu0 0.0
    %361 = vmatpush1.msra.mxu0 0.0
    %362 = vmatprep.subr.mxu0 0.0
    %363 = vmatpush1.msra.mxu0 0.0
    %364 = vmatprep.subr.mxu0 0.0
    %365 = vmatpush1.msra.mxu0 0.0
    %366 = vmatprep.subr.mxu0 0.0
    %367 = vmatpush1.msra.mxu0 0.0
    %368 = vmatprep.subr.mxu0 0.0
    %369 = vmatpush1.msra.mxu0 0.0
    %370 = vmatprep.subr.mxu0 0.0
    %371 = vmatpush1.msra.mxu0 0.0
    %372 = vmatprep.mubr.f32.mxu0 0.0
    %373 = vmatmul.mubr.f32.gmra.mrb[0].mxu0 %v306
    %v374 = vpop.f32.mrb[0].mxu0
    %v375 = vadd.f32 0.0, %v374
    %v376 = vpop.f32.mrb[0].mxu0
    %v377 = vadd.f32 0.0, %v376
    %378 = vdwg.mxu0
    %v379 = vadd.f32 %v258, %v375
    %v380 = vxor.u32 %v379, 2147483648
    %v381 = vmul.f32 %v380, 1.442695
    %v382 = vpow.pop %v381
    %v383 = vadd.f32 %v382, 1.0
    %v384 = vrcp.pop %v383
    %v385 = vmul.f32 1.0, %v384
    %v386 = vadd.f32 %v377, %v133
    %v387 = vmul.f32 %v385, %v386
    %v388 = vadd.f32 %v260, %v387
    %v389 = vtanh.pop %v388
    %v390 = vsub.f32 1.0, %v385
    %392 = vrot.lane.b32.xlu0 %v389, 64
    %v393 = vpop.permute.xlu0 %392
    %v395 = vmul.f32 %v390, %v393
    %v396 = vmul.f32 %v385, 0.0
    %v397 = vadd.f32 %v395, %v396
    %v399 = vlaneseq
    %v400 = vshrl.u32 %v399, 7
    %v401 = vsub.s32 0, %v400
    %v402 = vrot.slane %v135, %v401
    %v403 = vlaneseq
    %v404 = vshrl.u32 %v403, 7
    %v405 = vsub.s32 1, %v404
    %v406 = vrot.slane %v135, %v405
    %410 = vrot.lane.b32.xlu0 %v397, 64
    %v411 = vpop.permute.xlu0 %410
    %v412 = vsel %vm304, %v411, 0
    %414 = vmatprep.subr.mxu0 %v54
    %415 = vmatpush1.msra.mxu0 %v53
    %416 = vmatprep.subr.mxu0 %v56
    %417 = vmatpush1.msra.mxu0 %v55
    %418 = vmatprep.subr.mxu0 %v58
    %419 = vmatpush1.msra.mxu0 %v57
    %420 = vmatprep.subr.mxu0 %v60
    %421 = vmatpush1.msra.mxu0 %v59
    %422 = vmatprep.subr.mxu0 %v62
    %423 = vmatpush1.msra.mxu0 %v61
    %424 = vmatprep.subr.mxu0 %v64
    %425 = vmatpush1.msra.mxu0 %v63
    %426 = vmatprep.subr.mxu0 %v66
    %427 = vmatpush1.msra.mxu0 %v65
    %428 = vmatprep.subr.mxu0 %v68
    %429 = vmatpush1.msra.mxu0 %v67
    %430 = vmatprep.subr.mxu0 0.0
    %431 = vmatpush1.msra.mxu0 0.0
    %432 = vmatprep.subr.mxu0 0.0
    %433 = vmatpush1.msra.mxu0 0.0
    %434 = vmatprep.subr.mxu0 0.0
    %435 = vmatpush1.msra.mxu0 0.0
    %436 = vmatprep.subr.mxu0 0.0
    %437 = vmatpush1.msra.mxu0 0.0
    %438 = vmatprep.subr.mxu0 0.0
    %439 = vmatpush1.msra.mxu0 0.0
    %440 = vmatprep.subr.mxu0 0.0
    %441 = vmatpush1.msra.mxu0 0.0
    %442 = vmatprep.subr.mxu0 0.0
    %443 = vmatpush1.msra.mxu0 0.0
    %444 = vmatprep.subr.mxu0 0.0
    %445 = vmatpush1.msra.mxu0 0.0
    %446 = vmatprep.subr.mxu0 0.0
    %447 = vmatpush1.msra.mxu0 0.0
    %448 = vmatprep.subr.mxu0 0.0
    %449 = vmatpush1.msra.mxu0 0.0
    %450 = vmatprep.subr.mxu0 0.0
    %451 = vmatpush1.msra.mxu0 0.0
    %452 = vmatprep.subr.mxu0 0.0
    %453 = vmatpush1.msra.mxu0 0.0
    %454 = vmatprep.subr.mxu0 0.0
    %455 = vmatpush1.msra.mxu0 0.0
    %456 = vmatprep.subr.mxu0 0.0
    %457 = vmatpush1.msra.mxu0 0.0
    %458 = vmatprep.subr.mxu0 0.0
    %459 = vmatpush1.msra.mxu0 0.0
    %460 = vmatprep.subr.mxu0 0.0
    %461 = vmatpush1.msra.mxu0 0.0
    %462 = vmatprep.subr.mxu0 0.0
    %463 = vmatpush1.msra.mxu0 0.0
    %464 = vmatprep.subr.mxu0 0.0
    %465 = vmatpush1.msra.mxu0 0.0
    %466 = vmatprep.subr.mxu0 0.0
    %467 = vmatpush1.msra.mxu0 0.0
    %468 = vmatprep.subr.mxu0 0.0
    %469 = vmatpush1.msra.mxu0 0.0
    %470 = vmatprep.subr.mxu0 0.0
    %471 = vmatpush1.msra.mxu0 0.0
    %472 = vmatprep.subr.mxu0 0.0
    %473 = vmatpush1.msra.mxu0 0.0
    %474 = vmatprep.subr.mxu0 0.0
    %475 = vmatpush1.msra.mxu0 0.0
    %476 = vmatprep.subr.mxu0 0.0
    %477 = vmatpush1.msra.mxu0 0.0
    %478 = vmatprep.mubr.f32.mxu0 0.0
    %479 = vmatmul.mubr.f32.gmra.mrb[0].mxu0 %v412
    %v480 = vpop.f32.mrb[0].mxu0
    %v481 = vadd.f32 %v402, %v480
    %v482 = vpop.f32.mrb[0].mxu0
    %v483 = vadd.f32 %v406, %v482
    %484 = vdwg.mxu0
    %485 = vmatprep.subr.mxu0 %v70
    %486 = vmatpush1.msra.mxu0 %v69
    %487 = vmatprep.subr.mxu0 %v72
    %488 = vmatpush1.msra.mxu0 %v71
    %489 = vmatprep.subr.mxu0 %v74
    %490 = vmatpush1.msra.mxu0 %v73
    %491 = vmatprep.subr.mxu0 %v76
    %492 = vmatpush1.msra.mxu0 %v75
    %493 = vmatprep.subr.mxu0 %v78
    %494 = vmatpush1.msra.mxu0 %v77
    %495 = vmatprep.subr.mxu0 %v80
    %496 = vmatpush1.msra.mxu0 %v79
    %497 = vmatprep.subr.mxu0 %v82
    %498 = vmatpush1.msra.mxu0 %v81
    %499 = vmatprep.subr.mxu0 %v84
    %500 = vmatpush1.msra.mxu0 %v83
    %501 = vmatprep.subr.mxu0 0.0
    %502 = vmatpush1.msra.mxu0 0.0
    %503 = vmatprep.subr.mxu0 0.0
    %504 = vmatpush1.msra.mxu0 0.0
    %505 = vmatprep.subr.mxu0 0.0
    %506 = vmatpush1.msra.mxu0 0.0
    %507 = vmatprep.subr.mxu0 0.0
    %508 = vmatpush1.msra.mxu0 0.0
    %509 = vmatprep.subr.mxu0 0.0
    %510 = vmatpush1.msra.mxu0 0.0
    %511 = vmatprep.subr.mxu0 0.0
    %512 = vmatpush1.msra.mxu0 0.0
    %513 = vmatprep.subr.mxu0 0.0
    %514 = vmatpush1.msra.mxu0 0.0
    %515 = vmatprep.subr.mxu0 0.0
    %516 = vmatpush1.msra.mxu0 0.0
    %517 = vmatprep.subr.mxu0 0.0
    %518 = vmatpush1.msra.mxu0 0.0
    %519 = vmatprep.subr.mxu0 0.0
    %520 = vmatpush1.msra.mxu0 0.0
    %521 = vmatprep.subr.mxu0 0.0
    %522 = vmatpush1.msra.mxu0 0.0
    %523 = vmatprep.subr.mxu0 0.0
    %524 = vmatpush1.msra.mxu0 0.0
    %525 = vmatprep.subr.mxu0 0.0
    %526 = vmatpush1.msra.mxu0 0.0
    %527 = vmatprep.subr.mxu0 0.0
    %528 = vmatpush1.msra.mxu0 0.0
    %529 = vmatprep.subr.mxu0 0.0
    %530 = vmatpush1.msra.mxu0 0.0
    %531 = vmatprep.subr.mxu0 0.0
    %532 = vmatpush1.msra.mxu0 0.0
    %533 = vmatprep.subr.mxu0 0.0
    %534 = vmatpush1.msra.mxu0 0.0
    %535 = vmatprep.subr.mxu0 0.0
    %536 = vmatpush1.msra.mxu0 0.0
    %537 = vmatprep.subr.mxu0 0.0
    %538 = vmatpush1.msra.mxu0 0.0
    %539 = vmatprep.subr.mxu0 0.0
    %540 = vmatpush1.msra.mxu0 0.0
    %541 = vmatprep.subr.mxu0 0.0
    %542 = vmatpush1.msra.mxu0 0.0
    %543 = vmatprep.subr.mxu0 0.0
    %544 = vmatpush1.msra.mxu0 0.0
    %545 = vmatprep.subr.mxu0 0.0
    %546 = vmatpush1.msra.mxu0 0.0
    %547 = vmatprep.subr.mxu0 0.0
    %548 = vmatpush1.msra.mxu0 0.0
    %549 = vmatprep.mubr.f32.mxu0 0.0
    %550 = vmatmul.mubr.f32.gmra.mrb[0].mxu0 %v306
    %v551 = vpop.f32.mrb[0].mxu0
    %v552 = vadd.f32 0.0, %v551
    %v553 = vpop.f32.mrb[0].mxu0
    %v554 = vadd.f32 0.0, %v553
    %555 = vdwg.mxu0
    %v556 = vadd.f32 %v481, %v552
    %v557 = vxor.u32 %v556, 2147483648
    %v558 = vmul.f32 %v557, 1.442695
    %v559 = vpow.pop %v558
    %v560 = vadd.f32 %v559, 1.0
    %v561 = vrcp.pop %v560
    %v562 = vmul.f32 1.0, %v561
    %v563 = vadd.f32 %v554, %v136
    %v564 = vmul.f32 %v562, %v563
    %v565 = vadd.f32 %v483, %v564
    %v566 = vtanh.pop %v565
    %v567 = vsub.f32 1.0, %v562
    %569 = vrot.lane.b32.xlu0 %v566, 64
    %v570 = vpop.permute.xlu0 %569
    %v572 = vmul.f32 %v567, %v570
    %v573 = vmul.f32 %v562, 0.0
    %v574 = vadd.f32 %v572, %v573
    %575 = vmatprep.subr.mxu0 %v38
    %576 = vmatpush1.msra.mxu0 %v37
    %577 = vmatprep.subr.mxu0 %v40
    %578 = vmatpush1.msra.mxu0 %v39
    %579 = vmatprep.subr.mxu0 %v42
    %580 = vmatpush1.msra.mxu0 %v41
    %581 = vmatprep.subr.mxu0 %v44
    %582 = vmatpush1.msra.mxu0 %v43
    %583 = vmatprep.subr.mxu0 %v46
    %584 = vmatpush1.msra.mxu0 %v45
    %585 = vmatprep.subr.mxu0 %v48
    %586 = vmatpush1.msra.mxu0 %v47
    %587 = vmatprep.subr.mxu0 %v50
    %588 = vmatpush1.msra.mxu0 %v49
    %589 = vmatprep.subr.mxu0 %v52
    %590 = vmatpush1.msra.mxu0 %v51
    %591 = vmatprep.subr.mxu0 0.0
    %592 = vmatpush1.msra.mxu0 0.0
    %593 = vmatprep.subr.mxu0 0.0
    %594 = vmatpush1.msra.mxu0 0.0
    %595 = vmatprep.subr.mxu0 0.0
    %596 = vmatpush1.msra.mxu0 0.0
    %597 = vmatprep.subr.mxu0 0.0
    %598 = vmatpush1.msra.mxu0 0.0
    %599 = vmatprep.subr.mxu0 0.0
    %600 = vmatpush1.msra.mxu0 0.0
    %601 = vmatprep.subr.mxu0 0.0
    %602 = vmatpush1.msra.mxu0 0.0
    %603 = vmatprep.subr.mxu0 0.0
    %604 = vmatpush1.msra.mxu0 0.0
    %605 = vmatprep.subr.mxu0 0.0
    %606 = vmatpush1.msra.mxu0 0.0
    %607 = vmatprep.subr.mxu0 0.0
    %608 = vmatpush1.msra.mxu0 0.0
    %609 = vmatprep.subr.mxu0 0.0
    %610 = vmatpush1.msra.mxu0 0.0
    %611 = vmatprep.subr.mxu0 0.0
    %612 = vmatpush1.msra.mxu0 0.0
    %613 = vmatprep.subr.mxu0 0.0
    %614 = vmatpush1.msra.mxu0 0.0
    %615 = vmatprep.subr.mxu0 0.0
    %616 = vmatpush1.msra.mxu0 0.0
    %617 = vmatprep.subr.mxu0 0.0
    %618 = vmatpush1.msra.mxu0 0.0
    %619 = vmatprep.subr.mxu0 0.0
    %620 = vmatpush1.msra.mxu0 0.0
    %621 = vmatprep.subr.mxu0 0.0
    %622 = vmatpush1.msra.mxu0 0.0
    %623 = vmatprep.subr.mxu0 0.0
    %624 = vmatpush1.msra.mxu0 0.0
    %625 = vmatprep.subr.mxu0 0.0
    %626 = vmatpush1.msra.mxu0 0.0
    %627 = vmatprep.subr.mxu0 0.0
    %628 = vmatpush1.msra.mxu0 0.0
    %629 = vmatprep.subr.mxu0 0.0
    %630 = vmatpush1.msra.mxu0 0.0
    %631 = vmatprep.subr.mxu0 0.0
    %632 = vmatpush1.msra.mxu0 0.0
    %633 = vmatprep.subr.mxu0 0.0
    %634 = vmatpush1.msra.mxu0 0.0
    %635 = vmatprep.subr.mxu0 0.0
    %636 = vmatpush1.msra.mxu0 0.0
    %637 = vmatprep.subr.mxu0 0.0
    %638 = vmatpush1.msra.mxu0 0.0
    %639 = vmatprep.mubr.f32.mxu0 0.0
    %640 = vmatmul.mubr.f32.gmra.mrb[0].mxu0 %v412
    %v641 = vpop.f32.mrb[0].mxu0
    %v642 = vadd.f32 0.0, %v641
    %v643 = vpop.f32.mrb[0].mxu0
    %v644 = vadd.f32 0.0, %v643
    %645 = vdwg.mxu0
    %v646 = vadd.f32 %v264, %v642
    %v647 = vxor.u32 %v646, 2147483648
    %v648 = vmul.f32 %v647, 1.442695
    %v649 = vpow.pop %v648
    %v650 = vadd.f32 %v649, 1.0
    %v651 = vrcp.pop %v650
    %v652 = vmul.f32 1.0, %v651
    %v653 = vadd.f32 %v644, %v133
    %v654 = vmul.f32 %v652, %v653
    %v655 = vadd.f32 %v266, %v654
    %v656 = vtanh.pop %v655
    %v657 = vsub.f32 1.0, %v652
    %659 = vrot.lane.b32.xlu0 %v656, 64
    %v660 = vpop.permute.xlu0 %659
    %v662 = vmul.f32 %v657, %v660
    %v663 = vmul.f32 %v652, %v397
    %v664 = vadd.f32 %v662, %v663
    %666 = vrot.lane.b32.xlu0 %v664, 64
    %v667 = vpop.permute.xlu0 %666
    %v668 = vsel %vm304, %v667, 0
    %670 = vmatprep.subr.mxu0 %v54
    %671 = vmatpush1.msra.mxu0 %v53
    %672 = vmatprep.subr.mxu0 %v56
    %673 = vmatpush1.msra.mxu0 %v55
    %674 = vmatprep.subr.mxu0 %v58
    %675 = vmatpush1.msra.mxu0 %v57
    %676 = vmatprep.subr.mxu0 %v60
    %677 = vmatpush1.msra.mxu0 %v59
    %678 = vmatprep.subr.mxu0 %v62
    %679 = vmatpush1.msra.mxu0 %v61
    %680 = vmatprep.subr.mxu0 %v64
    %681 = vmatpush1.msra.mxu0 %v63
    %682 = vmatprep.subr.mxu0 %v66
    %683 = vmatpush1.msra.mxu0 %v65
    %684 = vmatprep.subr.mxu0 %v68
    %685 = vmatpush1.msra.mxu0 %v67
    %686 = vmatprep.subr.mxu0 0.0
    %687 = vmatpush1.msra.mxu0 0.0
    %688 = vmatprep.subr.mxu0 0.0
    %689 = vmatpush1.msra.mxu0 0.0
    %690 = vmatprep.subr.mxu0 0.0
    %691 = vmatpush1.msra.mxu0 0.0
    %692 = vmatprep.subr.mxu0 0.0
    %693 = vmatpush1.msra.mxu0 0.0
    %694 = vmatprep.subr.mxu0 0.0
    %695 = vmatpush1.msra.mxu0 0.0
    %696 = vmatprep.subr.mxu0 0.0
    %697 = vmatpush1.msra.mxu0 0.0
    %698 = vmatprep.subr.mxu0 0.0
    %699 = vmatpush1.msra.mxu0 0.0
    %700 = vmatprep.subr.mxu0 0.0
    %701 = vmatpush1.msra.mxu0 0.0
    %702 = vmatprep.subr.mxu0 0.0
    %703 = vmatpush1.msra.mxu0 0.0
    %704 = vmatprep.subr.mxu0 0.0
    %705 = vmatpush1.msra.mxu0 0.0
    %706 = vmatprep.subr.mxu0 0.0
    %707 = vmatpush1.msra.mxu0 0.0
    %708 = vmatprep.subr.mxu0 0.0
    %709 = vmatpush1.msra.mxu0 0.0
    %710 = vmatprep.subr.mxu0 0.0
    %711 = vmatpush1.msra.mxu0 0.0
    %712 = vmatprep.subr.mxu0 0.0
    %713 = vmatpush1.msra.mxu0 0.0
    %714 = vmatprep.subr.mxu0 0.0
    %715 = vmatpush1.msra.mxu0 0.0
    %716 = vmatprep.subr.mxu0 0.0
    %717 = vmatpush1.msra.mxu0 0.0
    %718 = vmatprep.subr.mxu0 0.0
    %719 = vmatpush1.msra.mxu0 0.0
    %720 = vmatprep.subr.mxu0 0.0
    %721 = vmatpush1.msra.mxu0 0.0
    %722 = vmatprep.subr.mxu0 0.0
    %723 = vmatpush1.msra.mxu0 0.0
    %724 = vmatprep.subr.mxu0 0.0
    %725 = vmatpush1.msra.mxu0 0.0
    %726 = vmatprep.subr.mxu0 0.0
    %727 = vmatpush1.msra.mxu0 0.0
    %728 = vmatprep.subr.mxu0 0.0
    %729 = vmatpush1.msra.mxu0 0.0
    %730 = vmatprep.subr.mxu0 0.0
    %731 = vmatpush1.msra.mxu0 0.0
    %732 = vmatprep.subr.mxu0 0.0
    %733 = vmatpush1.msra.mxu0 0.0
    %734 = vmatprep.mubr.f32.mxu0 0.0
    %735 = vmatmul.mubr.f32.gmra.mrb[0].mxu0 %v668
    %v736 = vpop.f32.mrb[0].mxu0
    %v737 = vadd.f32 %v402, %v736
    %v738 = vpop.f32.mrb[0].mxu0
    %v739 = vadd.f32 %v406, %v738
    %740 = vdwg.mxu0
    %742 = vrot.lane.b32.xlu0 %v574, 64
    %v743 = vpop.permute.xlu0 %742
    %v744 = vsel %vm304, %v743, 0
    %746 = vmatprep.subr.mxu0 %v70
    %747 = vmatpush1.msra.mxu0 %v69
    %748 = vmatprep.subr.mxu0 %v72
    %749 = vmatpush1.msra.mxu0 %v71
    %750 = vmatprep.subr.mxu0 %v74
    %751 = vmatpush1.msra.mxu0 %v73
    %752 = vmatprep.subr.mxu0 %v76
    %753 = vmatpush1.msra.mxu0 %v75
    %754 = vmatprep.subr.mxu0 %v78
    %755 = vmatpush1.msra.mxu0 %v77
    %756 = vmatprep.subr.mxu0 %v80
    %757 = vmatpush1.msra.mxu0 %v79
    %758 = vmatprep.subr.mxu0 %v82
    %759 = vmatpush1.msra.mxu0 %v81
    %760 = vmatprep.subr.mxu0 %v84
    %761 = vmatpush1.msra.mxu0 %v83
    %762 = vmatprep.subr.mxu0 0.0
    %763 = vmatpush1.msra.mxu0 0.0
    %764 = vmatprep.subr.mxu0 0.0
    %765 = vmatpush1.msra.mxu0 0.0
    %766 = vmatprep.subr.mxu0 0.0
    %767 = vmatpush1.msra.mxu0 0.0
    %768 = vmatprep.subr.mxu0 0.0
    %769 = vmatpush1.msra.mxu0 0.0
    %770 = vmatprep.subr.mxu0 0.0
    %771 = vmatpush1.msra.mxu0 0.0
    %772 = vmatprep.subr.mxu0 0.0
    %773 = vmatpush1.msra.mxu0 0.0
    %774 = vmatprep.subr.mxu0 0.0
    %775 = vmatpush1.msra.mxu0 0.0
    %776 = vmatprep.subr.mxu0 0.0
    %777 = vmatpush1.msra.mxu0 0.0
    %778 = vmatprep.subr.mxu0 0.0
    %779 = vmatpush1.msra.mxu0 0.0
    %780 = vmatprep.subr.mxu0 0.0
    %781 = vmatpush1.msra.mxu0 0.0
    %782 = vmatprep.subr.mxu0 0.0
    %783 = vmatpush1.msra.mxu0 0.0
    %784 = vmatprep.subr.mxu0 0.0
    %785 = vmatpush1.msra.mxu0 0.0
    %786 = vmatprep.subr.mxu0 0.0
    %787 = vmatpush1.msra.mxu0 0.0
    %788 = vmatprep.subr.mxu0 0.0
    %789 = vmatpush1.msra.mxu0 0.0
    %790 = vmatprep.subr.mxu0 0.0
    %791 = vmatpush1.msra.mxu0 0.0
    %792 = vmatprep.subr.mxu0 0.0
    %793 = vmatpush1.msra.mxu0 0.0
    %794 = vmatprep.subr.mxu0 0.0
    %795 = vmatpush1.msra.mxu0 0.0
    %796 = vmatprep.subr.mxu0 0.0
    %797 = vmatpush1.msra.mxu0 0.0
    %798 = vmatprep.subr.mxu0 0.0
    %799 = vmatpush1.msra.mxu0 0.0
    %800 = vmatprep.subr.mxu0 0.0
    %801 = vmatpush1.msra.mxu0 0.0
    %802 = vmatprep.subr.mxu0 0.0
    %803 = vmatpush1.msra.mxu0 0.0
    %804 = vmatprep.subr.mxu0 0.0
    %805 = vmatpush1.msra.mxu0 0.0
    %806 = vmatprep.subr.mxu0 0.0
    %807 = vmatpush1.msra.mxu0 0.0
    %808 = vmatprep.subr.mxu0 0.0
    %809 = vmatpush1.msra.mxu0 0.0
    %810 = vmatprep.mubr.f32.mxu0 0.0
    %811 = vmatmul.mubr.f32.gmra.mrb[0].mxu0 %v744
    %v812 = vpop.f32.mrb[0].mxu0
    %v813 = vadd.f32 0.0, %v812
    %v814 = vpop.f32.mrb[0].mxu0
    %v815 = vadd.f32 0.0, %v814
    %816 = vdwg.mxu0
    %v817 = vadd.f32 %v737, %v813
    %v818 = vxor.u32 %v817, 2147483648
    %v819 = vmul.f32 %v818, 1.442695
    %v820 = vpow.pop %v819
    %v821 = vadd.f32 %v820, 1.0
    %v822 = vrcp.pop %v821
    %v823 = vmul.f32 1.0, %v822
    %v824 = vadd.f32 %v815, %v136
    %v825 = vmul.f32 %v823, %v824
    %v826 = vadd.f32 %v739, %v825
    %v827 = vtanh.pop %v826
    %v828 = vsub.f32 1.0, %v823
    %830 = vrot.lane.b32.xlu0 %v827, 64
    %v831 = vpop.permute.xlu0 %830
    %v833 = vmul.f32 %v828, %v831
    %v834 = vmul.f32 %v823, %v574
    %v835 = vadd.f32 %v833, %v834
    %836 = vmatprep.subr.mxu0 %v38
    %837 = vmatpush1.msra.mxu0 %v37
    %838 = vmatprep.subr.mxu0 %v40
    %839 = vmatpush1.msra.mxu0 %v39
    %840 = vmatprep.subr.mxu0 %v42
    %841 = vmatpush1.msra.mxu0 %v41
    %842 = vmatprep.subr.mxu0 %v44
    %843 = vmatpush1.msra.mxu0 %v43
    %844 = vmatprep.subr.mxu0 %v46
    %845 = vmatpush1.msra.mxu0 %v45
    %846 = vmatprep.subr.mxu0 %v48
    %847 = vmatpush1.msra.mxu0 %v47
    %848 = vmatprep.subr.mxu0 %v50
    %849 = vmatpush1.msra.mxu0 %v49
    %850 = vmatprep.subr.mxu0 %v52
    %851 = vmatpush1.msra.mxu0 %v51
    %852 = vmatprep.subr.mxu0 0.0
    %853 = vmatpush1.msra.mxu0 0.0
    %854 = vmatprep.subr.mxu0 0.0
    %855 = vmatpush1.msra.mxu0 0.0
    %856 = vmatprep.subr.mxu0 0.0
    %857 = vmatpush1.msra.mxu0 0.0
    %858 = vmatprep.subr.mxu0 0.0
    %859 = vmatpush1.msra.mxu0 0.0
    %860 = vmatprep.subr.mxu0 0.0
    %861 = vmatpush1.msra.mxu0 0.0
    %862 = vmatprep.subr.mxu0 0.0
    %863 = vmatpush1.msra.mxu0 0.0
    %864 = vmatprep.subr.mxu0 0.0
    %865 = vmatpush1.msra.mxu0 0.0
    %866 = vmatprep.subr.mxu0 0.0
    %867 = vmatpush1.msra.mxu0 0.0
    %868 = vmatprep.subr.mxu0 0.0
    %869 = vmatpush1.msra.mxu0 0.0
    %870 = vmatprep.subr.mxu0 0.0
    %871 = vmatpush1.msra.mxu0 0.0
    %872 = vmatprep.subr.mxu0 0.0
    %873 = vmatpush1.msra.mxu0 0.0
    %874 = vmatprep.subr.mxu0 0.0
    %875 = vmatpush1.msra.mxu0 0.0
    %876 = vmatprep.subr.mxu0 0.0
    %877 = vmatpush1.msra.mxu0 0.0
    %878 = vmatprep.subr.mxu0 0.0
    %879 = vmatpush1.msra.mxu0 0.0
    %880 = vmatprep.subr.mxu0 0.0
    %881 = vmatpush1.msra.mxu0 0.0
    %882 = vmatprep.subr.mxu0 0.0
    %883 = vmatpush1.msra.mxu0 0.0
    %884 = vmatprep.subr.mxu0 0.0
    %885 = vmatpush1.msra.mxu0 0.0
    %886 = vmatprep.subr.mxu0 0.0
    %887 = vmatpush1.msra.mxu0 0.0
    %888 = vmatprep.subr.mxu0 0.0
    %889 = vmatpush1.msra.mxu0 0.0
    %890 = vmatprep.subr.mxu0 0.0
    %891 = vmatpush1.msra.mxu0 0.0
    %892 = vmatprep.subr.mxu0 0.0
    %893 = vmatpush1.msra.mxu0 0.0
    %894 = vmatprep.subr.mxu0 0.0
    %895 = vmatpush1.msra.mxu0 0.0
    %896 = vmatprep.subr.mxu0 0.0
    %897 = vmatpush1.msra.mxu0 0.0
    %898 = vmatprep.subr.mxu0 0.0
    %899 = vmatpush1.msra.mxu0 0.0
    %900 = vmatprep.mubr.f32.mxu0 0.0
    %901 = vmatmul.mubr.f32.gmra.mrb[0].mxu0 %v668
    %v902 = vpop.f32.mrb[0].mxu0
    %v903 = vadd.f32 0.0, %v902
    %v904 = vpop.f32.mrb[0].mxu0
    %v905 = vadd.f32 0.0, %v904
    %906 = vdwg.mxu0
    %v907 = vadd.f32 %v270, %v903
    %v908 = vxor.u32 %v907, 2147483648
    %v909 = vmul.f32 %v908, 1.442695
    %v910 = vpow.pop %v909
    %v911 = vadd.f32 %v910, 1.0
    %v912 = vrcp.pop %v911
    %v913 = vmul.f32 1.0, %v912
    %v914 = vadd.f32 %v905, %v133
    %v915 = vmul.f32 %v913, %v914
    %v916 = vadd.f32 %v272, %v915
    %v917 = vtanh.pop %v916
    %v918 = vsub.f32 1.0, %v913
    %920 = vrot.lane.b32.xlu0 %v917, 64
    %v921 = vpop.permute.xlu0 %920
    %v923 = vmul.f32 %v918, %v921
    %v924 = vmul.f32 %v913, %v664
    %v925 = vadd.f32 %v923, %v924
    %927 = vrot.lane.b32.xlu0 %v925, 64
    %v928 = vpop.permute.xlu0 %927
    %v929 = vsel %vm304, %v928, 0
    %931 = vmatprep.subr.mxu0 %v54
    %932 = vmatpush1.msra.mxu0 %v53
    %933 = vmatprep.subr.mxu0 %v56
    %934 = vmatpush1.msra.mxu0 %v55
    %935 = vmatprep.subr.mxu0 %v58
    %936 = vmatpush1.msra.mxu0 %v57
    %937 = vmatprep.subr.mxu0 %v60
    %938 = vmatpush1.msra.mxu0 %v59
    %939 = vmatprep.subr.mxu0 %v62
    %940 = vmatpush1.msra.mxu0 %v61
    %941 = vmatprep.subr.mxu0 %v64
    %942 = vmatpush1.msra.mxu0 %v63
    %943 = vmatprep.subr.mxu0 %v66
    %944 = vmatpush1.msra.mxu0 %v65
    %945 = vmatprep.subr.mxu0 %v68
    %946 = vmatpush1.msra.mxu0 %v67
    %947 = vmatprep.subr.mxu0 0.0
    %948 = vmatpush1.msra.mxu0 0.0
    %949 = vmatprep.subr.mxu0 0.0
    %950 = vmatpush1.msra.mxu0 0.0
    %951 = vmatprep.subr.mxu0 0.0
    %952 = vmatpush1.msra.mxu0 0.0
    %953 = vmatprep.subr.mxu0 0.0
    %954 = vmatpush1.msra.mxu0 0.0
    %955 = vmatprep.subr.mxu0 0.0
    %956 = vmatpush1.msra.mxu0 0.0
    %957 = vmatprep.subr.mxu0 0.0
    %958 = vmatpush1.msra.mxu0 0.0
    %959 = vmatprep.subr.mxu0 0.0
    %960 = vmatpush1.msra.mxu0 0.0
    %961 = vmatprep.subr.mxu0 0.0
    %962 = vmatpush1.msra.mxu0 0.0
    %963 = vmatprep.subr.mxu0 0.0
    %964 = vmatpush1.msra.mxu0 0.0
    %965 = vmatprep.subr.mxu0 0.0
    %966 = vmatpush1.msra.mxu0 0.0
    %967 = vmatprep.subr.mxu0 0.0
    %968 = vmatpush1.msra.mxu0 0.0
    %969 = vmatprep.subr.mxu0 0.0
    %970 = vmatpush1.msra.mxu0 0.0
    %971 = vmatprep.subr.mxu0 0.0
    %972 = vmatpush1.msra.mxu0 0.0
    %973 = vmatprep.subr.mxu0 0.0
    %974 = vmatpush1.msra.mxu0 0.0
    %975 = vmatprep.subr.mxu0 0.0
    %976 = vmatpush1.msra.mxu0 0.0
    %977 = vmatprep.subr.mxu0 0.0
    %978 = vmatpush1.msra.mxu0 0.0
    %979 = vmatprep.subr.mxu0 0.0
    %980 = vmatpush1.msra.mxu0 0.0
    %981 = vmatprep.subr.mxu0 0.0
    %982 = vmatpush1.msra.mxu0 0.0
    %983 = vmatprep.subr.mxu0 0.0
    %984 = vmatpush1.msra.mxu0 0.0
    %985 = vmatprep.subr.mxu0 0.0
    %986 = vmatpush1.msra.mxu0 0.0
    %987 = vmatprep.subr.mxu0 0.0
    %988 = vmatpush1.msra.mxu0 0.0
    %989 = vmatprep.subr.mxu0 0.0
    %990 = vmatpush1.msra.mxu0 0.0
    %991 = vmatprep.subr.mxu0 0.0
    %992 = vmatpush1.msra.mxu0 0.0
    %993 = vmatprep.subr.mxu0 0.0
    %994 = vmatpush1.msra.mxu0 0.0
    %995 = vmatprep.mubr.f32.mxu0 0.0
    %996 = vmatmul.mubr.f32.gmra.mrb[0].mxu0 %v929
    %v997 = vpop.f32.mrb[0].mxu0
    %v998 = vadd.f32 %v402, %v997
    %v999 = vpop.f32.mrb[0].mxu0
    %v1000 = vadd.f32 %v406, %v999
    %1001 = vdwg.mxu0
    %1003 = vrot.lane.b32.xlu0 %v835, 64
    %v1004 = vpop.permute.xlu0 %1003
    %v1005 = vsel %vm304, %v1004, 0
    %1007 = vmatprep.subr.mxu0 %v70
    %1008 = vmatpush1.msra.mxu0 %v69
    %1009 = vmatprep.subr.mxu0 %v72
    %1010 = vmatpush1.msra.mxu0 %v71
    %1011 = vmatprep.subr.mxu0 %v74
    %1012 = vmatpush1.msra.mxu0 %v73
    %1013 = vmatprep.subr.mxu0 %v76
    %1014 = vmatpush1.msra.mxu0 %v75
    %1015 = vmatprep.subr.mxu0 %v78
    %1016 = vmatpush1.msra.mxu0 %v77
    %1017 = vmatprep.subr.mxu0 %v80
    %1018 = vmatpush1.msra.mxu0 %v79
    %1019 = vmatprep.subr.mxu0 %v82
    %1020 = vmatpush1.msra.mxu0 %v81
    %1021 = vmatprep.subr.mxu0 %v84
    %1022 = vmatpush1.msra.mxu0 %v83
    %1023 = vmatprep.subr.mxu0 0.0
    %1024 = vmatpush1.msra.mxu0 0.0
    %1025 = vmatprep.subr.mxu0 0.0
    %1026 = vmatpush1.msra.mxu0 0.0
    %1027 = vmatprep.subr.mxu0 0.0
    %1028 = vmatpush1.msra.mxu0 0.0
    %1029 = vmatprep.subr.mxu0 0.0
    %1030 = vmatpush1.msra.mxu0 0.0
    %1031 = vmatprep.subr.mxu0 0.0
    %1032 = vmatpush1.msra.mxu0 0.0
    %1033 = vmatprep.subr.mxu0 0.0
    %1034 = vmatpush1.msra.mxu0 0.0
    %1035 = vmatprep.subr.mxu0 0.0
    %1036 = vmatpush1.msra.mxu0 0.0
    %1037 = vmatprep.subr.mxu0 0.0
    %1038 = vmatpush1.msra.mxu0 0.0
    %1039 = vmatprep.subr.mxu0 0.0
    %1040 = vmatpush1.msra.mxu0 0.0
    %1041 = vmatprep.subr.mxu0 0.0
    %1042 = vmatpush1.msra.mxu0 0.0
    %1043 = vmatprep.subr.mxu0 0.0
    %1044 = vmatpush1.msra.mxu0 0.0
    %1045 = vmatprep.subr.mxu0 0.0
    %1046 = vmatpush1.msra.mxu0 0.0
    %1047 = vmatprep.subr.mxu0 0.0
    %1048 = vmatpush1.msra.mxu0 0.0
    %1049 = vmatprep.subr.mxu0 0.0
    %1050 = vmatpush1.msra.mxu0 0.0
    %1051 = vmatprep.subr.mxu0 0.0
    %1052 = vmatpush1.msra.mxu0 0.0
    %1053 = vmatprep.subr.mxu0 0.0
    %1054 = vmatpush1.msra.mxu0 0.0
    %1055 = vmatprep.subr.mxu0 0.0
    %1056 = vmatpush1.msra.mxu0 0.0
    %1057 = vmatprep.subr.mxu0 0.0
    %1058 = vmatpush1.msra.mxu0 0.0
    %1059 = vmatprep.subr.mxu0 0.0
    %1060 = vmatpush1.msra.mxu0 0.0
    %1061 = vmatprep.subr.mxu0 0.0
    %1062 = vmatpush1.msra.mxu0 0.0
    %1063 = vmatprep.subr.mxu0 0.0
    %1064 = vmatpush1.msra.mxu0 0.0
    %1065 = vmatprep.subr.mxu0 0.0
    %1066 = vmatpush1.msra.mxu0 0.0
    %1067 = vmatprep.subr.mxu0 0.0
    %1068 = vmatpush1.msra.mxu0 0.0
    %1069 = vmatprep.subr.mxu0 0.0
    %1070 = vmatpush1.msra.mxu0 0.0
    %1071 = vmatprep.mubr.f32.mxu0 0.0
    %1072 = vmatmul.mubr.f32.gmra.mrb[0].mxu0 %v1005
    %v1073 = vpop.f32.mrb[0].mxu0
    %v1074 = vadd.f32 0.0, %v1073
    %v1075 = vpop.f32.mrb[0].mxu0
    %v1076 = vadd.f32 0.0, %v1075
    %1077 = vdwg.mxu0
    %v1078 = vadd.f32 %v998, %v1074
    %v1079 = vxor.u32 %v1078, 2147483648
    %v1080 = vmul.f32 %v1079, 1.442695
    %v1081 = vpow.pop %v1080
    %v1082 = vadd.f32 %v1081, 1.0
    %v1083 = vrcp.pop %v1082
    %v1084 = vmul.f32 1.0, %v1083
    %v1085 = vadd.f32 %v1076, %v136
    %v1086 = vmul.f32 %v1084, %v1085
    %v1087 = vadd.f32 %v1000, %v1086
    %v1088 = vtanh.pop %v1087
    %v1089 = vsub.f32 1.0, %v1084
    %1091 = vrot.lane.b32.xlu0 %v1088, 64
    %v1092 = vpop.permute.xlu0 %1091
    %v1094 = vmul.f32 %v1089, %v1092
    %v1095 = vmul.f32 %v1084, %v835
    %v1096 = vadd.f32 %v1094, %v1095
    %1097 = vmatprep.subr.mxu0 %v38
    %1098 = vmatpush1.msra.mxu0 %v37
    %1099 = vmatprep.subr.mxu0 %v40
    %1100 = vmatpush1.msra.mxu0 %v39
    %1101 = vmatprep.subr.mxu0 %v42
    %1102 = vmatpush1.msra.mxu0 %v41
    %1103 = vmatprep.subr.mxu0 %v44
    %1104 = vmatpush1.msra.mxu0 %v43
    %1105 = vmatprep.subr.mxu0 %v46
    %1106 = vmatpush1.msra.mxu0 %v45
    %1107 = vmatprep.subr.mxu0 %v48
    %1108 = vmatpush1.msra.mxu0 %v47
    %1109 = vmatprep.subr.mxu0 %v50
    %1110 = vmatpush1.msra.mxu0 %v49
    %1111 = vmatprep.subr.mxu0 %v52
    %1112 = vmatpush1.msra.mxu0 %v51
    %1113 = vmatprep.subr.mxu0 0.0
    %1114 = vmatpush1.msra.mxu0 0.0
    %1115 = vmatprep.subr.mxu0 0.0
    %1116 = vmatpush1.msra.mxu0 0.0
    %1117 = vmatprep.subr.mxu0 0.0
    %1118 = vmatpush1.msra.mxu0 0.0
    %1119 = vmatprep.subr.mxu0 0.0
    %1120 = vmatpush1.msra.mxu0 0.0
    %1121 = vmatprep.subr.mxu0 0.0
    %1122 = vmatpush1.msra.mxu0 0.0
    %1123 = vmatprep.subr.mxu0 0.0
    %1124 = vmatpush1.msra.mxu0 0.0
    %1125 = vmatprep.subr.mxu0 0.0
    %1126 = vmatpush1.msra.mxu0 0.0
    %1127 = vmatprep.subr.mxu0 0.0
    %1128 = vmatpush1.msra.mxu0 0.0
    %1129 = vmatprep.subr.mxu0 0.0
    %1130 = vmatpush1.msra.mxu0 0.0
    %1131 = vmatprep.subr.mxu0 0.0
    %1132 = vmatpush1.msra.mxu0 0.0
    %1133 = vmatprep.subr.mxu0 0.0
    %1134 = vmatpush1.msra.mxu0 0.0
    %1135 = vmatprep.subr.mxu0 0.0
    %1136 = vmatpush1.msra.mxu0 0.0
    %1137 = vmatprep.subr.mxu0 0.0
    %1138 = vmatpush1.msra.mxu0 0.0
    %1139 = vmatprep.subr.mxu0 0.0
    %1140 = vmatpush1.msra.mxu0 0.0
    %1141 = vmatprep.subr.mxu0 0.0
    %1142 = vmatpush1.msra.mxu0 0.0
    %1143 = vmatprep.subr.mxu0 0.0
    %1144 = vmatpush1.msra.mxu0 0.0
    %1145 = vmatprep.subr.mxu0 0.0
    %1146 = vmatpush1.msra.mxu0 0.0
    %1147 = vmatprep.subr.mxu0 0.0
    %1148 = vmatpush1.msra.mxu0 0.0
    %1149 = vmatprep.subr.mxu0 0.0
    %1150 = vmatpush1.msra.mxu0 0.0
    %1151 = vmatprep.subr.mxu0 0.0
    %1152 = vmatpush1.msra.mxu0 0.0
    %1153 = vmatprep.subr.mxu0 0.0
    %1154 = vmatpush1.msra.mxu0 0.0
    %1155 = vmatprep.subr.mxu0 0.0
    %1156 = vmatpush1.msra.mxu0 0.0
    %1157 = vmatprep.subr.mxu0 0.0
    %1158 = vmatpush1.msra.mxu0 0.0
    %1159 = vmatprep.subr.mxu0 0.0
    %1160 = vmatpush1.msra.mxu0 0.0
    %1161 = vmatprep.mubr.f32.mxu0 0.0
    %1162 = vmatmul.mubr.f32.gmra.mrb[0].mxu0 %v929
    %v1163 = vpop.f32.mrb[0].mxu0
    %v1164 = vadd.f32 0.0, %v1163
    %v1165 = vpop.f32.mrb[0].mxu0
    %v1166 = vadd.f32 0.0, %v1165
    %1167 = vdwg.mxu0
    %v1168 = vadd.f32 %v276, %v1164
    %v1169 = vxor.u32 %v1168, 2147483648
    %v1170 = vmul.f32 %v1169, 1.442695
    %v1171 = vpow.pop %v1170
    %v1172 = vadd.f32 %v1171, 1.0
    %v1173 = vrcp.pop %v1172
    %v1174 = vmul.f32 1.0, %v1173
    %v1175 = vadd.f32 %v1166, %v133
    %v1176 = vmul.f32 %v1174, %v1175
    %v1177 = vadd.f32 %v278, %v1176
    %v1178 = vtanh.pop %v1177
    %v1179 = vsub.f32 1.0, %v1174
    %1181 = vrot.lane.b32.xlu0 %v1178, 64
    %v1182 = vpop.permute.xlu0 %1181
    %v1184 = vmul.f32 %v1179, %v1182
    %v1185 = vmul.f32 %v1174, %v925
    %v1186 = vadd.f32 %v1184, %v1185
    %1188 = vrot.lane.b32.xlu0 %v1186, 64
    %v1189 = vpop.permute.xlu0 %1188
    %v1190 = vsel %vm304, %v1189, 0
    %1192 = vmatprep.subr.mxu0 %v54
    %1193 = vmatpush1.msra.mxu0 %v53
    %1194 = vmatprep.subr.mxu0 %v56
    %1195 = vmatpush1.msra.mxu0 %v55
    %1196 = vmatprep.subr.mxu0 %v58
    %1197 = vmatpush1.msra.mxu0 %v57
    %1198 = vmatprep.subr.mxu0 %v60
    %1199 = vmatpush1.msra.mxu0 %v59
    %1200 = vmatprep.subr.mxu0 %v62
    %1201 = vmatpush1.msra.mxu0 %v61
    %1202 = vmatprep.subr.mxu0 %v64
    %1203 = vmatpush1.msra.mxu0 %v63
    %1204 = vmatprep.subr.mxu0 %v66
    %1205 = vmatpush1.msra.mxu0 %v65
    %1206 = vmatprep.subr.mxu0 %v68
    %1207 = vmatpush1.msra.mxu0 %v67
    %1208 = vmatprep.subr.mxu0 0.0
    %1209 = vmatpush1.msra.mxu0 0.0
    %1210 = vmatprep.subr.mxu0 0.0
    %1211 = vmatpush1.msra.mxu0 0.0
    %1212 = vmatprep.subr.mxu0 0.0
    %1213 = vmatpush1.msra.mxu0 0.0
    %1214 = vmatprep.subr.mxu0 0.0
    %1215 = vmatpush1.msra.mxu0 0.0
    %1216 = vmatprep.subr.mxu0 0.0
    %1217 = vmatpush1.msra.mxu0 0.0
    %1218 = vmatprep.subr.mxu0 0.0
    %1219 = vmatpush1.msra.mxu0 0.0
    %1220 = vmatprep.subr.mxu0 0.0
    %1221 = vmatpush1.msra.mxu0 0.0
    %1222 = vmatprep.subr.mxu0 0.0
    %1223 = vmatpush1.msra.mxu0 0.0
    %1224 = vmatprep.subr.mxu0 0.0
    %1225 = vmatpush1.msra.mxu0 0.0
    %1226 = vmatprep.subr.mxu0 0.0
    %1227 = vmatpush1.msra.mxu0 0.0
    %1228 = vmatprep.subr.mxu0 0.0
    %1229 = vmatpush1.msra.mxu0 0.0
    %1230 = vmatprep.subr.mxu0 0.0
    %1231 = vmatpush1.msra.mxu0 0.0
    %1232 = vmatprep.subr.mxu0 0.0
    %1233 = vmatpush1.msra.mxu0 0.0
    %1234 = vmatprep.subr.mxu0 0.0
    %1235 = vmatpush1.msra.mxu0 0.0
    %1236 = vmatprep.subr.mxu0 0.0
    %1237 = vmatpush1.msra.mxu0 0.0
    %1238 = vmatprep.subr.mxu0 0.0
    %1239 = vmatpush1.msra.mxu0 0.0
    %1240 = vmatprep.subr.mxu0 0.0
    %1241 = vmatpush1.msra.mxu0 0.0
    %1242 = vmatprep.subr.mxu0 0.0
    %1243 = vmatpush1.msra.mxu0 0.0
    %1244 = vmatprep.subr.mxu0 0.0
    %1245 = vmatpush1.msra.mxu0 0.0
    %1246 = vmatprep.subr.mxu0 0.0
    %1247 = vmatpush1.msra.mxu0 0.0
    %1248 = vmatprep.subr.mxu0 0.0
    %1249 = vmatpush1.msra.mxu0 0.0
    %1250 = vmatprep.subr.mxu0 0.0
    %1251 = vmatpush1.msra.mxu0 0.0
    %1252 = vmatprep.subr.mxu0 0.0
    %1253 = vmatpush1.msra.mxu0 0.0
    %1254 = vmatprep.subr.mxu0 0.0
    %1255 = vmatpush1.msra.mxu0 0.0
    %1256 = vmatprep.mubr.f32.mxu0 0.0
    %1257 = vmatmul.mubr.f32.gmra.mrb[0].mxu0 %v1190
    %v1258 = vpop.f32.mrb[0].mxu0
    %v1259 = vadd.f32 %v402, %v1258
    %v1260 = vpop.f32.mrb[0].mxu0
    %v1261 = vadd.f32 %v406, %v1260
    %1262 = vdwg.mxu0
    %1264 = vrot.lane.b32.xlu0 %v1096, 64
    %v1265 = vpop.permute.xlu0 %1264
    %v1266 = vsel %vm304, %v1265, 0
    %1268 = vmatprep.subr.mxu0 %v70
    %1269 = vmatpush1.msra.mxu0 %v69
    %1270 = vmatprep.subr.mxu0 %v72
    %1271 = vmatpush1.msra.mxu0 %v71
    %1272 = vmatprep.subr.mxu0 %v74
    %1273 = vmatpush1.msra.mxu0 %v73
    %1274 = vmatprep.subr.mxu0 %v76
    %1275 = vmatpush1.msra.mxu0 %v75
    %1276 = vmatprep.subr.mxu0 %v78
    %1277 = vmatpush1.msra.mxu0 %v77
    %1278 = vmatprep.subr.mxu0 %v80
    %1279 = vmatpush1.msra.mxu0 %v79
    %1280 = vmatprep.subr.mxu0 %v82
    %1281 = vmatpush1.msra.mxu0 %v81
    %1282 = vmatprep.subr.mxu0 %v84
    %1283 = vmatpush1.msra.mxu0 %v83
    %1284 = vmatprep.subr.mxu0 0.0
    %1285 = vmatpush1.msra.mxu0 0.0
    %1286 = vmatprep.subr.mxu0 0.0
    %1287 = vmatpush1.msra.mxu0 0.0
    %1288 = vmatprep.subr.mxu0 0.0
    %1289 = vmatpush1.msra.mxu0 0.0
    %1290 = vmatprep.subr.mxu0 0.0
    %1291 = vmatpush1.msra.mxu0 0.0
    %1292 = vmatprep.subr.mxu0 0.0
    %1293 = vmatpush1.msra.mxu0 0.0
    %1294 = vmatprep.subr.mxu0 0.0
    %1295 = vmatpush1.msra.mxu0 0.0
    %1296 = vmatprep.subr.mxu0 0.0
    %1297 = vmatpush1.msra.mxu0 0.0
    %1298 = vmatprep.subr.mxu0 0.0
    %1299 = vmatpush1.msra.mxu0 0.0
    %1300 = vmatprep.subr.mxu0 0.0
    %1301 = vmatpush1.msra.mxu0 0.0
    %1302 = vmatprep.subr.mxu0 0.0
    %1303 = vmatpush1.msra.mxu0 0.0
    %1304 = vmatprep.subr.mxu0 0.0
    %1305 = vmatpush1.msra.mxu0 0.0
    %1306 = vmatprep.subr.mxu0 0.0
    %1307 = vmatpush1.msra.mxu0 0.0
    %1308 = vmatprep.subr.mxu0 0.0
    %1309 = vmatpush1.msra.mxu0 0.0
    %1310 = vmatprep.subr.mxu0 0.0
    %1311 = vmatpush1.msra.mxu0 0.0
    %1312 = vmatprep.subr.mxu0 0.0
    %1313 = vmatpush1.msra.mxu0 0.0
    %1314 = vmatprep.subr.mxu0 0.0
    %1315 = vmatpush1.msra.mxu0 0.0
    %1316 = vmatprep.subr.mxu0 0.0
    %1317 = vmatpush1.msra.mxu0 0.0
    %1318 = vmatprep.subr.mxu0 0.0
    %1319 = vmatpush1.msra.mxu0 0.0
    %1320 = vmatprep.subr.mxu0 0.0
    %1321 = vmatpush1.msra.mxu0 0.0
    %1322 = vmatprep.subr.mxu0 0.0
    %1323 = vmatpush1.msra.mxu0 0.0
    %1324 = vmatprep.subr.mxu0 0.0
    %1325 = vmatpush1.msra.mxu0 0.0
    %1326 = vmatprep.subr.mxu0 0.0
    %1327 = vmatpush1.msra.mxu0 0.0
    %1328 = vmatprep.subr.mxu0 0.0
    %1329 = vmatpush1.msra.mxu0 0.0
    %1330 = vmatprep.subr.mxu0 0.0
    %1331 = vmatpush1.msra.mxu0 0.0
    %1332 = vmatprep.mubr.f32.mxu0 0.0
    %1333 = vmatmul.mubr.f32.gmra.mrb[0].mxu0 %v1266
    %v1334 = vpop.f32.mrb[0].mxu0
    %v1335 = vadd.f32 0.0, %v1334
    %v1336 = vpop.f32.mrb[0].mxu0
    %v1337 = vadd.f32 0.0, %v1336
    %1338 = vdwg.mxu0
    %v1339 = vadd.f32 %v1259, %v1335
    %v1340 = vxor.u32 %v1339, 2147483648
    %v1341 = vmul.f32 %v1340, 1.442695
    %v1342 = vpow.pop %v1341
    %v1343 = vadd.f32 %v1342, 1.0
    %v1344 = vrcp.pop %v1343
    %v1345 = vmul.f32 1.0, %v1344
    %v1346 = vadd.f32 %v1337, %v136
    %v1347 = vmul.f32 %v1345, %v1346
    %v1348 = vadd.f32 %v1261, %v1347
    %v1349 = vtanh.pop %v1348
    %v1350 = vsub.f32 1.0, %v1345
    %1352 = vrot.lane.b32.xlu0 %v1349, 64
    %v1353 = vpop.permute.xlu0 %1352
    %v1355 = vmul.f32 %v1350, %v1353
    %v1356 = vmul.f32 %v1345, %v1096
    %v1357 = vadd.f32 %v1355, %v1356
    %1358 = vmatprep.subr.mxu0 %v38
    %1359 = vmatpush1.msra.mxu0 %v37
    %1360 = vmatprep.subr.mxu0 %v40
    %1361 = vmatpush1.msra.mxu0 %v39
    %1362 = vmatprep.subr.mxu0 %v42
    %1363 = vmatpush1.msra.mxu0 %v41
    %1364 = vmatprep.subr.mxu0 %v44
    %1365 = vmatpush1.msra.mxu0 %v43
    %1366 = vmatprep.subr.mxu0 %v46
    %1367 = vmatpush1.msra.mxu0 %v45
    %1368 = vmatprep.subr.mxu0 %v48
    %1369 = vmatpush1.msra.mxu0 %v47
    %1370 = vmatprep.subr.mxu0 %v50
    %1371 = vmatpush1.msra.mxu0 %v49
    %1372 = vmatprep.subr.mxu0 %v52
    %1373 = vmatpush1.msra.mxu0 %v51
    %1374 = vmatprep.subr.mxu0 0.0
    %1375 = vmatpush1.msra.mxu0 0.0
    %1376 = vmatprep.subr.mxu0 0.0
    %1377 = vmatpush1.msra.mxu0 0.0
    %1378 = vmatprep.subr.mxu0 0.0
    %1379 = vmatpush1.msra.mxu0 0.0
    %1380 = vmatprep.subr.mxu0 0.0
    %1381 = vmatpush1.msra.mxu0 0.0
    %1382 = vmatprep.subr.mxu0 0.0
    %1383 = vmatpush1.msra.mxu0 0.0
    %1384 = vmatprep.subr.mxu0 0.0
    %1385 = vmatpush1.msra.mxu0 0.0
    %1386 = vmatprep.subr.mxu0 0.0
    %1387 = vmatpush1.msra.mxu0 0.0
    %1388 = vmatprep.subr.mxu0 0.0
    %1389 = vmatpush1.msra.mxu0 0.0
    %1390 = vmatprep.subr.mxu0 0.0
    %1391 = vmatpush1.msra.mxu0 0.0
    %1392 = vmatprep.subr.mxu0 0.0
    %1393 = vmatpush1.msra.mxu0 0.0
    %1394 = vmatprep.subr.mxu0 0.0
    %1395 = vmatpush1.msra.mxu0 0.0
    %1396 = vmatprep.subr.mxu0 0.0
    %1397 = vmatpush1.msra.mxu0 0.0
    %1398 = vmatprep.subr.mxu0 0.0
    %1399 = vmatpush1.msra.mxu0 0.0
    %1400 = vmatprep.subr.mxu0 0.0
    %1401 = vmatpush1.msra.mxu0 0.0
    %1402 = vmatprep.subr.mxu0 0.0
    %1403 = vmatpush1.msra.mxu0 0.0
    %1404 = vmatprep.subr.mxu0 0.0
    %1405 = vmatpush1.msra.mxu0 0.0
    %1406 = vmatprep.subr.mxu0 0.0
    %1407 = vmatpush1.msra.mxu0 0.0
    %1408 = vmatprep.subr.mxu0 0.0
    %1409 = vmatpush1.msra.mxu0 0.0
    %1410 = vmatprep.subr.mxu0 0.0
    %1411 = vmatpush1.msra.mxu0 0.0
    %1412 = vmatprep.subr.mxu0 0.0
    %1413 = vmatpush1.msra.mxu0 0.0
    %1414 = vmatprep.subr.mxu0 0.0
    %1415 = vmatpush1.msra.mxu0 0.0
    %1416 = vmatprep.subr.mxu0 0.0
    %1417 = vmatpush1.msra.mxu0 0.0
    %1418 = vmatprep.subr.mxu0 0.0
    %1419 = vmatpush1.msra.mxu0 0.0
    %1420 = vmatprep.subr.mxu0 0.0
    %1421 = vmatpush1.msra.mxu0 0.0
    %1422 = vmatprep.mubr.f32.mxu0 0.0
    %1423 = vmatmul.mubr.f32.gmra.mrb[0].mxu0 %v1190
    %v1424 = vpop.f32.mrb[0].mxu0
    %v1425 = vadd.f32 0.0, %v1424
    %v1426 = vpop.f32.mrb[0].mxu0
    %v1427 = vadd.f32 0.0, %v1426
    %1428 = vdwg.mxu0
    %v1429 = vadd.f32 %v282, %v1425
    %v1430 = vxor.u32 %v1429, 2147483648
    %v1431 = vmul.f32 %v1430, 1.442695
    %v1432 = vpow.pop %v1431
    %v1433 = vadd.f32 %v1432, 1.0
    %v1434 = vrcp.pop %v1433
    %v1435 = vmul.f32 1.0, %v1434
    %v1436 = vadd.f32 %v1427, %v133
    %v1437 = vmul.f32 %v1435, %v1436
    %v1438 = vadd.f32 %v284, %v1437
    %v1439 = vtanh.pop %v1438
    %v1440 = vsub.f32 1.0, %v1435
    %1442 = vrot.lane.b32.xlu0 %v1439, 64
    %v1443 = vpop.permute.xlu0 %1442
    %v1445 = vmul.f32 %v1440, %v1443
    %v1446 = vmul.f32 %v1435, %v1186
    %v1447 = vadd.f32 %v1445, %v1446
    %1449 = vrot.lane.b32.xlu0 %v1447, 64
    %v1450 = vpop.permute.xlu0 %1449
    %v1451 = vsel %vm304, %v1450, 0
    %1453 = vmatprep.subr.mxu0 %v54
    %1454 = vmatpush1.msra.mxu0 %v53
    %1455 = vmatprep.subr.mxu0 %v56
    %1456 = vmatpush1.msra.mxu0 %v55
    %1457 = vmatprep.subr.mxu0 %v58
    %1458 = vmatpush1.msra.mxu0 %v57
    %1459 = vmatprep.subr.mxu0 %v60
    %1460 = vmatpush1.msra.mxu0 %v59
    %1461 = vmatprep.subr.mxu0 %v62
    %1462 = vmatpush1.msra.mxu0 %v61
    %1463 = vmatprep.subr.mxu0 %v64
    %1464 = vmatpush1.msra.mxu0 %v63
    %1465 = vmatprep.subr.mxu0 %v66
    %1466 = vmatpush1.msra.mxu0 %v65
    %1467 = vmatprep.subr.mxu0 %v68
    %1468 = vmatpush1.msra.mxu0 %v67
    %1469 = vmatprep.subr.mxu0 0.0
    %1470 = vmatpush1.msra.mxu0 0.0
    %1471 = vmatprep.subr.mxu0 0.0
    %1472 = vmatpush1.msra.mxu0 0.0
    %1473 = vmatprep.subr.mxu0 0.0
    %1474 = vmatpush1.msra.mxu0 0.0
    %1475 = vmatprep.subr.mxu0 0.0
    %1476 = vmatpush1.msra.mxu0 0.0
    %1477 = vmatprep.subr.mxu0 0.0
    %1478 = vmatpush1.msra.mxu0 0.0
    %1479 = vmatprep.subr.mxu0 0.0
    %1480 = vmatpush1.msra.mxu0 0.0
    %1481 = vmatprep.subr.mxu0 0.0
    %1482 = vmatpush1.msra.mxu0 0.0
    %1483 = vmatprep.subr.mxu0 0.0
    %1484 = vmatpush1.msra.mxu0 0.0
    %1485 = vmatprep.subr.mxu0 0.0
    %1486 = vmatpush1.msra.mxu0 0.0
    %1487 = vmatprep.subr.mxu0 0.0
    %1488 = vmatpush1.msra.mxu0 0.0
    %1489 = vmatprep.subr.mxu0 0.0
    %1490 = vmatpush1.msra.mxu0 0.0
    %1491 = vmatprep.subr.mxu0 0.0
    %1492 = vmatpush1.msra.mxu0 0.0
    %1493 = vmatprep.subr.mxu0 0.0
    %1494 = vmatpush1.msra.mxu0 0.0
    %1495 = vmatprep.subr.mxu0 0.0
    %1496 = vmatpush1.msra.mxu0 0.0
    %1497 = vmatprep.subr.mxu0 0.0
    %1498 = vmatpush1.msra.mxu0 0.0
    %1499 = vmatprep.subr.mxu0 0.0
    %1500 = vmatpush1.msra.mxu0 0.0
    %1501 = vmatprep.subr.mxu0 0.0
    %1502 = vmatpush1.msra.mxu0 0.0
    %1503 = vmatprep.subr.mxu0 0.0
    %1504 = vmatpush1.msra.mxu0 0.0
    %1505 = vmatprep.subr.mxu0 0.0
    %1506 = vmatpush1.msra.mxu0 0.0
    %1507 = vmatprep.subr.mxu0 0.0
    %1508 = vmatpush1.msra.mxu0 0.0
    %1509 = vmatprep.subr.mxu0 0.0
    %1510 = vmatpush1.msra.mxu0 0.0
    %1511 = vmatprep.subr.mxu0 0.0
    %1512 = vmatpush1.msra.mxu0 0.0
    %1513 = vmatprep.subr.mxu0 0.0
    %1514 = vmatpush1.msra.mxu0 0.0
    %1515 = vmatprep.subr.mxu0 0.0
    %1516 = vmatpush1.msra.mxu0 0.0
    %1517 = vmatprep.mubr.f32.mxu0 0.0
    %1518 = vmatmul.mubr.f32.gmra.mrb[0].mxu0 %v1451
    %v1519 = vpop.f32.mrb[0].mxu0
    %v1520 = vadd.f32 %v402, %v1519
    %v1521 = vpop.f32.mrb[0].mxu0
    %v1522 = vadd.f32 %v406, %v1521
    %1523 = vdwg.mxu0
    %1525 = vrot.lane.b32.xlu0 %v1357, 64
    %v1526 = vpop.permute.xlu0 %1525
    %v1527 = vsel %vm304, %v1526, 0
    %1529 = vmatprep.subr.mxu0 %v70
    %1530 = vmatpush1.msra.mxu0 %v69
    %1531 = vmatprep.subr.mxu0 %v72
    %1532 = vmatpush1.msra.mxu0 %v71
    %1533 = vmatprep.subr.mxu0 %v74
    %1534 = vmatpush1.msra.mxu0 %v73
    %1535 = vmatprep.subr.mxu0 %v76
    %1536 = vmatpush1.msra.mxu0 %v75
    %1537 = vmatprep.subr.mxu0 %v78
    %1538 = vmatpush1.msra.mxu0 %v77
    %1539 = vmatprep.subr.mxu0 %v80
    %1540 = vmatpush1.msra.mxu0 %v79
    %1541 = vmatprep.subr.mxu0 %v82
    %1542 = vmatpush1.msra.mxu0 %v81
    %1543 = vmatprep.subr.mxu0 %v84
    %1544 = vmatpush1.msra.mxu0 %v83
    %1545 = vmatprep.subr.mxu0 0.0
    %1546 = vmatpush1.msra.mxu0 0.0
    %1547 = vmatprep.subr.mxu0 0.0
    %1548 = vmatpush1.msra.mxu0 0.0
    %1549 = vmatprep.subr.mxu0 0.0
    %1550 = vmatpush1.msra.mxu0 0.0
    %1551 = vmatprep.subr.mxu0 0.0
    %1552 = vmatpush1.msra.mxu0 0.0
    %1553 = vmatprep.subr.mxu0 0.0
    %1554 = vmatpush1.msra.mxu0 0.0
    %1555 = vmatprep.subr.mxu0 0.0
    %1556 = vmatpush1.msra.mxu0 0.0
    %1557 = vmatprep.subr.mxu0 0.0
    %1558 = vmatpush1.msra.mxu0 0.0
    %1559 = vmatprep.subr.mxu0 0.0
    %1560 = vmatpush1.msra.mxu0 0.0
    %1561 = vmatprep.subr.mxu0 0.0
    %1562 = vmatpush1.msra.mxu0 0.0
    %1563 = vmatprep.subr.mxu0 0.0
    %1564 = vmatpush1.msra.mxu0 0.0
    %1565 = vmatprep.subr.mxu0 0.0
    %1566 = vmatpush1.msra.mxu0 0.0
    %1567 = vmatprep.subr.mxu0 0.0
    %1568 = vmatpush1.msra.mxu0 0.0
    %1569 = vmatprep.subr.mxu0 0.0
    %1570 = vmatpush1.msra.mxu0 0.0
    %1571 = vmatprep.subr.mxu0 0.0
    %1572 = vmatpush1.msra.mxu0 0.0
    %1573 = vmatprep.subr.mxu0 0.0
    %1574 = vmatpush1.msra.mxu0 0.0
    %1575 = vmatprep.subr.mxu0 0.0
    %1576 = vmatpush1.msra.mxu0 0.0
    %1577 = vmatprep.subr.mxu0 0.0
    %1578 = vmatpush1.msra.mxu0 0.0
    %1579 = vmatprep.subr.mxu0 0.0
    %1580 = vmatpush1.msra.mxu0 0.0
    %1581 = vmatprep.subr.mxu0 0.0
    %1582 = vmatpush1.msra.mxu0 0.0
    %1583 = vmatprep.subr.mxu0 0.0
    %1584 = vmatpush1.msra.mxu0 0.0
    %1585 = vmatprep.subr.mxu0 0.0
    %1586 = vmatpush1.msra.mxu0 0.0
    %1587 = vmatprep.subr.mxu0 0.0
    %1588 = vmatpush1.msra.mxu0 0.0
    %1589 = vmatprep.subr.mxu0 0.0
    %1590 = vmatpush1.msra.mxu0 0.0
    %1591 = vmatprep.subr.mxu0 0.0
    %1592 = vmatpush1.msra.mxu0 0.0
    %1593 = vmatprep.mubr.f32.mxu0 0.0
    %1594 = vmatmul.mubr.f32.gmra.mrb[0].mxu0 %v1527
    %v1595 = vpop.f32.mrb[0].mxu0
    %v1596 = vadd.f32 0.0, %v1595
    %v1597 = vpop.f32.mrb[0].mxu0
    %v1598 = vadd.f32 0.0, %v1597
    %1599 = vdwg.mxu0
    %v1600 = vadd.f32 %v1520, %v1596
    %v1601 = vxor.u32 %v1600, 2147483648
    %v1602 = vmul.f32 %v1601, 1.442695
    %v1603 = vpow.pop %v1602
    %v1604 = vadd.f32 %v1603, 1.0
    %v1605 = vrcp.pop %v1604
    %v1606 = vmul.f32 1.0, %v1605
    %v1607 = vadd.f32 %v1598, %v136
    %v1608 = vmul.f32 %v1606, %v1607
    %v1609 = vadd.f32 %v1522, %v1608
    %v1610 = vtanh.pop %v1609
    %v1611 = vsub.f32 1.0, %v1606
    %1613 = vrot.lane.b32.xlu0 %v1610, 64
    %v1614 = vpop.permute.xlu0 %1613
    %v1616 = vmul.f32 %v1611, %v1614
    %v1617 = vmul.f32 %v1606, %v1357
    %v1618 = vadd.f32 %v1616, %v1617
    %1619 = vmatprep.subr.mxu0 %v38
    %1620 = vmatpush1.msra.mxu0 %v37
    %1621 = vmatprep.subr.mxu0 %v40
    %1622 = vmatpush1.msra.mxu0 %v39
    %1623 = vmatprep.subr.mxu0 %v42
    %1624 = vmatpush1.msra.mxu0 %v41
    %1625 = vmatprep.subr.mxu0 %v44
    %1626 = vmatpush1.msra.mxu0 %v43
    %1627 = vmatprep.subr.mxu0 %v46
    %1628 = vmatpush1.msra.mxu0 %v45
    %1629 = vmatprep.subr.mxu0 %v48
    %1630 = vmatpush1.msra.mxu0 %v47
    %1631 = vmatprep.subr.mxu0 %v50
    %1632 = vmatpush1.msra.mxu0 %v49
    %1633 = vmatprep.subr.mxu0 %v52
    %1634 = vmatpush1.msra.mxu0 %v51
    %1635 = vmatprep.subr.mxu0 0.0
    %1636 = vmatpush1.msra.mxu0 0.0
    %1637 = vmatprep.subr.mxu0 0.0
    %1638 = vmatpush1.msra.mxu0 0.0
    %1639 = vmatprep.subr.mxu0 0.0
    %1640 = vmatpush1.msra.mxu0 0.0
    %1641 = vmatprep.subr.mxu0 0.0
    %1642 = vmatpush1.msra.mxu0 0.0
    %1643 = vmatprep.subr.mxu0 0.0
    %1644 = vmatpush1.msra.mxu0 0.0
    %1645 = vmatprep.subr.mxu0 0.0
    %1646 = vmatpush1.msra.mxu0 0.0
    %1647 = vmatprep.subr.mxu0 0.0
    %1648 = vmatpush1.msra.mxu0 0.0
    %1649 = vmatprep.subr.mxu0 0.0
    %1650 = vmatpush1.msra.mxu0 0.0
    %1651 = vmatprep.subr.mxu0 0.0
    %1652 = vmatpush1.msra.mxu0 0.0
    %1653 = vmatprep.subr.mxu0 0.0
    %1654 = vmatpush1.msra.mxu0 0.0
    %1655 = vmatprep.subr.mxu0 0.0
    %1656 = vmatpush1.msra.mxu0 0.0
    %1657 = vmatprep.subr.mxu0 0.0
    %1658 = vmatpush1.msra.mxu0 0.0
    %1659 = vmatprep.subr.mxu0 0.0
    %1660 = vmatpush1.msra.mxu0 0.0
    %1661 = vmatprep.subr.mxu0 0.0
    %1662 = vmatpush1.msra.mxu0 0.0
    %1663 = vmatprep.subr.mxu0 0.0
    %1664 = vmatpush1.msra.mxu0 0.0
    %1665 = vmatprep.subr.mxu0 0.0
    %1666 = vmatpush1.msra.mxu0 0.0
    %1667 = vmatprep.subr.mxu0 0.0
    %1668 = vmatpush1.msra.mxu0 0.0
    %1669 = vmatprep.subr.mxu0 0.0
    %1670 = vmatpush1.msra.mxu0 0.0
    %1671 = vmatprep.subr.mxu0 0.0
    %1672 = vmatpush1.msra.mxu0 0.0
    %1673 = vmatprep.subr.mxu0 0.0
    %1674 = vmatpush1.msra.mxu0 0.0
    %1675 = vmatprep.subr.mxu0 0.0
    %1676 = vmatpush1.msra.mxu0 0.0
    %1677 = vmatprep.subr.mxu0 0.0
    %1678 = vmatpush1.msra.mxu0 0.0
    %1679 = vmatprep.subr.mxu0 0.0
    %1680 = vmatpush1.msra.mxu0 0.0
    %1681 = vmatprep.subr.mxu0 0.0
    %1682 = vmatpush1.msra.mxu0 0.0
    %1683 = vmatprep.mubr.f32.mxu0 0.0
    %1684 = vmatmul.mubr.f32.gmra.mrb[0].mxu0 %v1451
    %v1685 = vpop.f32.mrb[0].mxu0
    %v1686 = vadd.f32 0.0, %v1685
    %v1687 = vpop.f32.mrb[0].mxu0
    %v1688 = vadd.f32 0.0, %v1687
    %1689 = vdwg.mxu0
    %v1690 = vadd.f32 %v288, %v1686
    %v1691 = vxor.u32 %v1690, 2147483648
    %v1692 = vmul.f32 %v1691, 1.442695
    %v1693 = vpow.pop %v1692
    %v1694 = vadd.f32 %v1693, 1.0
    %v1695 = vrcp.pop %v1694
    %v1696 = vmul.f32 1.0, %v1695
    %v1697 = vadd.f32 %v1688, %v133
    %v1698 = vmul.f32 %v1696, %v1697
    %v1699 = vadd.f32 %v290, %v1698
    %v1700 = vtanh.pop %v1699
    %v1701 = vsub.f32 1.0, %v1696
    %1703 = vrot.lane.b32.xlu0 %v1700, 64
    %v1704 = vpop.permute.xlu0 %1703
    %v1706 = vmul.f32 %v1701, %v1704
    %v1707 = vmul.f32 %v1696, %v1447
    %v1708 = vadd.f32 %v1706, %v1707
    %1710 = vrot.lane.b32.xlu0 %v1708, 64
    %v1711 = vpop.permute.xlu0 %1710
    %v1712 = vsel %vm304, %v1711, 0
    %1714 = vmatprep.subr.mxu0 %v54
    %1715 = vmatpush1.msra.mxu0 %v53
    %1716 = vmatprep.subr.mxu0 %v56
    %1717 = vmatpush1.msra.mxu0 %v55
    %1718 = vmatprep.subr.mxu0 %v58
    %1719 = vmatpush1.msra.mxu0 %v57
    %1720 = vmatprep.subr.mxu0 %v60
    %1721 = vmatpush1.msra.mxu0 %v59
    %1722 = vmatprep.subr.mxu0 %v62
    %1723 = vmatpush1.msra.mxu0 %v61
    %1724 = vmatprep.subr.mxu0 %v64
    %1725 = vmatpush1.msra.mxu0 %v63
    %1726 = vmatprep.subr.mxu0 %v66
    %1727 = vmatpush1.msra.mxu0 %v65
    %1728 = vmatprep.subr.mxu0 %v68
    %1729 = vmatpush1.msra.mxu0 %v67
    %1730 = vmatprep.subr.mxu0 0.0
    %1731 = vmatpush1.msra.mxu0 0.0
    %1732 = vmatprep.subr.mxu0 0.0
    %1733 = vmatpush1.msra.mxu0 0.0
    %1734 = vmatprep.subr.mxu0 0.0
    %1735 = vmatpush1.msra.mxu0 0.0
    %1736 = vmatprep.subr.mxu0 0.0
    %1737 = vmatpush1.msra.mxu0 0.0
    %1738 = vmatprep.subr.mxu0 0.0
    %1739 = vmatpush1.msra.mxu0 0.0
    %1740 = vmatprep.subr.mxu0 0.0
    %1741 = vmatpush1.msra.mxu0 0.0
    %1742 = vmatprep.subr.mxu0 0.0
    %1743 = vmatpush1.msra.mxu0 0.0
    %1744 = vmatprep.subr.mxu0 0.0
    %1745 = vmatpush1.msra.mxu0 0.0
    %1746 = vmatprep.subr.mxu0 0.0
    %1747 = vmatpush1.msra.mxu0 0.0
    %1748 = vmatprep.subr.mxu0 0.0
    %1749 = vmatpush1.msra.mxu0 0.0
    %1750 = vmatprep.subr.mxu0 0.0
    %1751 = vmatpush1.msra.mxu0 0.0
    %1752 = vmatprep.subr.mxu0 0.0
    %1753 = vmatpush1.msra.mxu0 0.0
    %1754 = vmatprep.subr.mxu0 0.0
    %1755 = vmatpush1.msra.mxu0 0.0
    %1756 = vmatprep.subr.mxu0 0.0
    %1757 = vmatpush1.msra.mxu0 0.0
    %1758 = vmatprep.subr.mxu0 0.0
    %1759 = vmatpush1.msra.mxu0 0.0
    %1760 = vmatprep.subr.mxu0 0.0
    %1761 = vmatpush1.msra.mxu0 0.0
    %1762 = vmatprep.subr.mxu0 0.0
    %1763 = vmatpush1.msra.mxu0 0.0
    %1764 = vmatprep.subr.mxu0 0.0
    %1765 = vmatpush1.msra.mxu0 0.0
    %1766 = vmatprep.subr.mxu0 0.0
    %1767 = vmatpush1.msra.mxu0 0.0
    %1768 = vmatprep.subr.mxu0 0.0
    %1769 = vmatpush1.msra.mxu0 0.0
    %1770 = vmatprep.subr.mxu0 0.0
    %1771 = vmatpush1.msra.mxu0 0.0
    %1772 = vmatprep.subr.mxu0 0.0
    %1773 = vmatpush1.msra.mxu0 0.0
    %1774 = vmatprep.subr.mxu0 0.0
    %1775 = vmatpush1.msra.mxu0 0.0
    %1776 = vmatprep.subr.mxu0 0.0
    %1777 = vmatpush1.msra.mxu0 0.0
    %1778 = vmatprep.mubr.f32.mxu0 0.0
    %1779 = vmatmul.mubr.f32.gmra.mrb[0].mxu0 %v1712
    %v1780 = vpop.f32.mrb[0].mxu0
    %v1781 = vadd.f32 %v402, %v1780
    %v1782 = vpop.f32.mrb[0].mxu0
    %v1783 = vadd.f32 %v406, %v1782
    %1784 = vdwg.mxu0
    %1786 = vrot.lane.b32.xlu0 %v1618, 64
    %v1787 = vpop.permute.xlu0 %1786
    %v1788 = vsel %vm304, %v1787, 0
    %1790 = vmatprep.subr.mxu0 %v70
    %1791 = vmatpush1.msra.mxu0 %v69
    %1792 = vmatprep.subr.mxu0 %v72
    %1793 = vmatpush1.msra.mxu0 %v71
    %1794 = vmatprep.subr.mxu0 %v74
    %1795 = vmatpush1.msra.mxu0 %v73
    %1796 = vmatprep.subr.mxu0 %v76
    %1797 = vmatpush1.msra.mxu0 %v75
    %1798 = vmatprep.subr.mxu0 %v78
    %1799 = vmatpush1.msra.mxu0 %v77
    %1800 = vmatprep.subr.mxu0 %v80
    %1801 = vmatpush1.msra.mxu0 %v79
    %1802 = vmatprep.subr.mxu0 %v82
    %1803 = vmatpush1.msra.mxu0 %v81
    %1804 = vmatprep.subr.mxu0 %v84
    %1805 = vmatpush1.msra.mxu0 %v83
    %1806 = vmatprep.subr.mxu0 0.0
    %1807 = vmatpush1.msra.mxu0 0.0
    %1808 = vmatprep.subr.mxu0 0.0
    %1809 = vmatpush1.msra.mxu0 0.0
    %1810 = vmatprep.subr.mxu0 0.0
    %1811 = vmatpush1.msra.mxu0 0.0
    %1812 = vmatprep.subr.mxu0 0.0
    %1813 = vmatpush1.msra.mxu0 0.0
    %1814 = vmatprep.subr.mxu0 0.0
    %1815 = vmatpush1.msra.mxu0 0.0
    %1816 = vmatprep.subr.mxu0 0.0
    %1817 = vmatpush1.msra.mxu0 0.0
    %1818 = vmatprep.subr.mxu0 0.0
    %1819 = vmatpush1.msra.mxu0 0.0
    %1820 = vmatprep.subr.mxu0 0.0
    %1821 = vmatpush1.msra.mxu0 0.0
    %1822 = vmatprep.subr.mxu0 0.0
    %1823 = vmatpush1.msra.mxu0 0.0
    %1824 = vmatprep.subr.mxu0 0.0
    %1825 = vmatpush1.msra.mxu0 0.0
    %1826 = vmatprep.subr.mxu0 0.0
    %1827 = vmatpush1.msra.mxu0 0.0
    %1828 = vmatprep.subr.mxu0 0.0
    %1829 = vmatpush1.msra.mxu0 0.0
    %1830 = vmatprep.subr.mxu0 0.0
    %1831 = vmatpush1.msra.mxu0 0.0
    %1832 = vmatprep.subr.mxu0 0.0
    %1833 = vmatpush1.msra.mxu0 0.0
    %1834 = vmatprep.subr.mxu0 0.0
    %1835 = vmatpush1.msra.mxu0 0.0
    %1836 = vmatprep.subr.mxu0 0.0
    %1837 = vmatpush1.msra.mxu0 0.0
    %1838 = vmatprep.subr.mxu0 0.0
    %1839 = vmatpush1.msra.mxu0 0.0
    %1840 = vmatprep.subr.mxu0 0.0
    %1841 = vmatpush1.msra.mxu0 0.0
    %1842 = vmatprep.subr.mxu0 0.0
    %1843 = vmatpush1.msra.mxu0 0.0
    %1844 = vmatprep.subr.mxu0 0.0
    %1845 = vmatpush1.msra.mxu0 0.0
    %1846 = vmatprep.subr.mxu0 0.0
    %1847 = vmatpush1.msra.mxu0 0.0
    %1848 = vmatprep.subr.mxu0 0.0
    %1849 = vmatpush1.msra.mxu0 0.0
    %1850 = vmatprep.subr.mxu0 0.0
    %1851 = vmatpush1.msra.mxu0 0.0
    %1852 = vmatprep.subr.mxu0 0.0
    %1853 = vmatpush1.msra.mxu0 0.0
    %1854 = vmatprep.mubr.f32.mxu0 0.0
    %1855 = vmatmul.mubr.f32.gmra.mrb[0].mxu0 %v1788
    %v1856 = vpop.f32.mrb[0].mxu0
    %v1857 = vadd.f32 0.0, %v1856
    %v1858 = vpop.f32.mrb[0].mxu0
    %v1859 = vadd.f32 0.0, %v1858
    %1860 = vdwg.mxu0
    %v1861 = vadd.f32 %v1781, %v1857
    %v1862 = vxor.u32 %v1861, 2147483648
    %v1863 = vmul.f32 %v1862, 1.442695
    %v1864 = vpow.pop %v1863
    %v1865 = vadd.f32 %v1864, 1.0
    %v1866 = vrcp.pop %v1865
    %v1867 = vmul.f32 1.0, %v1866
    %v1868 = vadd.f32 %v1859, %v136
    %v1869 = vmul.f32 %v1867, %v1868
    %v1870 = vadd.f32 %v1783, %v1869
    %v1871 = vtanh.pop %v1870
    %v1872 = vsub.f32 1.0, %v1867
    %1874 = vrot.lane.b32.xlu0 %v1871, 64
    %v1875 = vpop.permute.xlu0 %1874
    %v1877 = vmul.f32 %v1872, %v1875
    %v1878 = vmul.f32 %v1867, %v1618
    %v1879 = vadd.f32 %v1877, %v1878
    %1880 = vmatprep.subr.mxu0 %v38
    %1881 = vmatpush1.msra.mxu0 %v37
    %1882 = vmatprep.subr.mxu0 %v40
    %1883 = vmatpush1.msra.mxu0 %v39
    %1884 = vmatprep.subr.mxu0 %v42
    %1885 = vmatpush1.msra.mxu0 %v41
    %1886 = vmatprep.subr.mxu0 %v44
    %1887 = vmatpush1.msra.mxu0 %v43
    %1888 = vmatprep.subr.mxu0 %v46
    %1889 = vmatpush1.msra.mxu0 %v45
    %1890 = vmatprep.subr.mxu0 %v48
    %1891 = vmatpush1.msra.mxu0 %v47
    %1892 = vmatprep.subr.mxu0 %v50
    %1893 = vmatpush1.msra.mxu0 %v49
    %1894 = vmatprep.subr.mxu0 %v52
    %1895 = vmatpush1.msra.mxu0 %v51
    %1896 = vmatprep.subr.mxu0 0.0
    %1897 = vmatpush1.msra.mxu0 0.0
    %1898 = vmatprep.subr.mxu0 0.0
    %1899 = vmatpush1.msra.mxu0 0.0
    %1900 = vmatprep.subr.mxu0 0.0
    %1901 = vmatpush1.msra.mxu0 0.0
    %1902 = vmatprep.subr.mxu0 0.0
    %1903 = vmatpush1.msra.mxu0 0.0
    %1904 = vmatprep.subr.mxu0 0.0
    %1905 = vmatpush1.msra.mxu0 0.0
    %1906 = vmatprep.subr.mxu0 0.0
    %1907 = vmatpush1.msra.mxu0 0.0
    %1908 = vmatprep.subr.mxu0 0.0
    %1909 = vmatpush1.msra.mxu0 0.0
    %1910 = vmatprep.subr.mxu0 0.0
    %1911 = vmatpush1.msra.mxu0 0.0
    %1912 = vmatprep.subr.mxu0 0.0
    %1913 = vmatpush1.msra.mxu0 0.0
    %1914 = vmatprep.subr.mxu0 0.0
    %1915 = vmatpush1.msra.mxu0 0.0
    %1916 = vmatprep.subr.mxu0 0.0
    %1917 = vmatpush1.msra.mxu0 0.0
    %1918 = vmatprep.subr.mxu0 0.0
    %1919 = vmatpush1.msra.mxu0 0.0
    %1920 = vmatprep.subr.mxu0 0.0
    %1921 = vmatpush1.msra.mxu0 0.0
    %1922 = vmatprep.subr.mxu0 0.0
    %1923 = vmatpush1.msra.mxu0 0.0
    %1924 = vmatprep.subr.mxu0 0.0
    %1925 = vmatpush1.msra.mxu0 0.0
    %1926 = vmatprep.subr.mxu0 0.0
    %1927 = vmatpush1.msra.mxu0 0.0
    %1928 = vmatprep.subr.mxu0 0.0
    %1929 = vmatpush1.msra.mxu0 0.0
    %1930 = vmatprep.subr.mxu0 0.0
    %1931 = vmatpush1.msra.mxu0 0.0
    %1932 = vmatprep.subr.mxu0 0.0
    %1933 = vmatpush1.msra.mxu0 0.0
    %1934 = vmatprep.subr.mxu0 0.0
    %1935 = vmatpush1.msra.mxu0 0.0
    %1936 = vmatprep.subr.mxu0 0.0
    %1937 = vmatpush1.msra.mxu0 0.0
    %1938 = vmatprep.subr.mxu0 0.0
    %1939 = vmatpush1.msra.mxu0 0.0
    %1940 = vmatprep.subr.mxu0 0.0
    %1941 = vmatpush1.msra.mxu0 0.0
    %1942 = vmatprep.subr.mxu0 0.0
    %1943 = vmatpush1.msra.mxu0 0.0
    %1944 = vmatprep.mubr.f32.mxu0 0.0
    %1945 = vmatmul.mubr.f32.gmra.mrb[0].mxu0 %v1712
    %v1946 = vpop.f32.mrb[0].mxu0
    %v1947 = vadd.f32 0.0, %v1946
    %v1948 = vpop.f32.mrb[0].mxu0
    %v1949 = vadd.f32 0.0, %v1948
    %1950 = vdwg.mxu0
    %v1951 = vadd.f32 %v294, %v1947
    %v1952 = vxor.u32 %v1951, 2147483648
    %v1953 = vmul.f32 %v1952, 1.442695
    %v1954 = vpow.pop %v1953
    %v1955 = vadd.f32 %v1954, 1.0
    %v1956 = vrcp.pop %v1955
    %v1957 = vmul.f32 1.0, %v1956
    %v1958 = vadd.f32 %v1949, %v133
    %v1959 = vmul.f32 %v1957, %v1958
    %v1960 = vadd.f32 %v296, %v1959
    %v1961 = vtanh.pop %v1960
    %v1962 = vsub.f32 1.0, %v1957
    %1964 = vrot.lane.b32.xlu0 %v1961, 64
    %v1965 = vpop.permute.xlu0 %1964
    %v1967 = vmul.f32 %v1962, %v1965
    %v1968 = vmul.f32 %v1957, %v1708
    %v1969 = vadd.f32 %v1967, %v1968
    %1971 = vrot.lane.b32.xlu0 %v1969, 64
    %v1972 = vpop.permute.xlu0 %1971
    %v1973 = vsel %vm304, %v1972, 0
    %1975 = vmatprep.subr.mxu0 %v54
    %1976 = vmatpush1.msra.mxu0 %v53
    %1977 = vmatprep.subr.mxu0 %v56
    %1978 = vmatpush1.msra.mxu0 %v55
    %1979 = vmatprep.subr.mxu0 %v58
    %1980 = vmatpush1.msra.mxu0 %v57
    %1981 = vmatprep.subr.mxu0 %v60
    %1982 = vmatpush1.msra.mxu0 %v59
    %1983 = vmatprep.subr.mxu0 %v62
    %1984 = vmatpush1.msra.mxu0 %v61
    %1985 = vmatprep.subr.mxu0 %v64
    %1986 = vmatpush1.msra.mxu0 %v63
    %1987 = vmatprep.subr.mxu0 %v66
    %1988 = vmatpush1.msra.mxu0 %v65
    %1989 = vmatprep.subr.mxu0 %v68
    %1990 = vmatpush1.msra.mxu0 %v67
    %1991 = vmatprep.subr.mxu0 0.0
    %1992 = vmatpush1.msra.mxu0 0.0
    %1993 = vmatprep.subr.mxu0 0.0
    %1994 = vmatpush1.msra.mxu0 0.0
    %1995 = vmatprep.subr.mxu0 0.0
    %1996 = vmatpush1.msra.mxu0 0.0
    %1997 = vmatprep.subr.mxu0 0.0
    %1998 = vmatpush1.msra.mxu0 0.0
    %1999 = vmatprep.subr.mxu0 0.0
    %2000 = vmatpush1.msra.mxu0 0.0
    %2001 = vmatprep.subr.mxu0 0.0
    %2002 = vmatpush1.msra.mxu0 0.0
    %2003 = vmatprep.subr.mxu0 0.0
    %2004 = vmatpush1.msra.mxu0 0.0
    %2005 = vmatprep.subr.mxu0 0.0
    %2006 = vmatpush1.msra.mxu0 0.0
    %2007 = vmatprep.subr.mxu0 0.0
    %2008 = vmatpush1.msra.mxu0 0.0
    %2009 = vmatprep.subr.mxu0 0.0
    %2010 = vmatpush1.msra.mxu0 0.0
    %2011 = vmatprep.subr.mxu0 0.0
    %2012 = vmatpush1.msra.mxu0 0.0
    %2013 = vmatprep.subr.mxu0 0.0
    %2014 = vmatpush1.msra.mxu0 0.0
    %2015 = vmatprep.subr.mxu0 0.0
    %2016 = vmatpush1.msra.mxu0 0.0
    %2017 = vmatprep.subr.mxu0 0.0
    %2018 = vmatpush1.msra.mxu0 0.0
    %2019 = vmatprep.subr.mxu0 0.0
    %2020 = vmatpush1.msra.mxu0 0.0
    %2021 = vmatprep.subr.mxu0 0.0
    %2022 = vmatpush1.msra.mxu0 0.0
    %2023 = vmatprep.subr.mxu0 0.0
    %2024 = vmatpush1.msra.mxu0 0.0
    %2025 = vmatprep.subr.mxu0 0.0
    %2026 = vmatpush1.msra.mxu0 0.0
    %2027 = vmatprep.subr.mxu0 0.0
    %2028 = vmatpush1.msra.mxu0 0.0
    %2029 = vmatprep.subr.mxu0 0.0
    %2030 = vmatpush1.msra.mxu0 0.0
    %2031 = vmatprep.subr.mxu0 0.0
    %2032 = vmatpush1.msra.mxu0 0.0
    %2033 = vmatprep.subr.mxu0 0.0
    %2034 = vmatpush1.msra.mxu0 0.0
    %2035 = vmatprep.subr.mxu0 0.0
    %2036 = vmatpush1.msra.mxu0 0.0
    %2037 = vmatprep.subr.mxu0 0.0
    %2038 = vmatpush1.msra.mxu0 0.0
    %2039 = vmatprep.mubr.f32.mxu0 0.0
    %2040 = vmatmul.mubr.f32.gmra.mrb[0].mxu0 %v1973
    %v2041 = vpop.f32.mrb[0].mxu0
    %v2042 = vadd.f32 %v402, %v2041
    %v2043 = vpop.f32.mrb[0].mxu0
    %v2044 = vadd.f32 %v406, %v2043
    %2045 = vdwg.mxu0
    %2047 = vrot.lane.b32.xlu0 %v1879, 64
    %v2048 = vpop.permute.xlu0 %2047
    %v2049 = vsel %vm304, %v2048, 0
    %2051 = vmatprep.subr.mxu0 %v70
    %2052 = vmatpush1.msra.mxu0 %v69
    %2053 = vmatprep.subr.mxu0 %v72
    %2054 = vmatpush1.msra.mxu0 %v71
    %2055 = vmatprep.subr.mxu0 %v74
    %2056 = vmatpush1.msra.mxu0 %v73
    %2057 = vmatprep.subr.mxu0 %v76
    %2058 = vmatpush1.msra.mxu0 %v75
    %2059 = vmatprep.subr.mxu0 %v78
    %2060 = vmatpush1.msra.mxu0 %v77
    %2061 = vmatprep.subr.mxu0 %v80
    %2062 = vmatpush1.msra.mxu0 %v79
    %2063 = vmatprep.subr.mxu0 %v82
    %2064 = vmatpush1.msra.mxu0 %v81
    %2065 = vmatprep.subr.mxu0 %v84
    %2066 = vmatpush1.msra.mxu0 %v83
    %2067 = vmatprep.subr.mxu0 0.0
    %2068 = vmatpush1.msra.mxu0 0.0
    %2069 = vmatprep.subr.mxu0 0.0
    %2070 = vmatpush1.msra.mxu0 0.0
    %2071 = vmatprep.subr.mxu0 0.0
    %2072 = vmatpush1.msra.mxu0 0.0
    %2073 = vmatprep.subr.mxu0 0.0
    %2074 = vmatpush1.msra.mxu0 0.0
    %2075 = vmatprep.subr.mxu0 0.0
    %2076 = vmatpush1.msra.mxu0 0.0
    %2077 = vmatprep.subr.mxu0 0.0
    %2078 = vmatpush1.msra.mxu0 0.0
    %2079 = vmatprep.subr.mxu0 0.0
    %2080 = vmatpush1.msra.mxu0 0.0
    %2081 = vmatprep.subr.mxu0 0.0
    %2082 = vmatpush1.msra.mxu0 0.0
    %2083 = vmatprep.subr.mxu0 0.0
    %2084 = vmatpush1.msra.mxu0 0.0
    %2085 = vmatprep.subr.mxu0 0.0
    %2086 = vmatpush1.msra.mxu0 0.0
    %2087 = vmatprep.subr.mxu0 0.0
    %2088 = vmatpush1.msra.mxu0 0.0
    %2089 = vmatprep.subr.mxu0 0.0
    %2090 = vmatpush1.msra.mxu0 0.0
    %2091 = vmatprep.subr.mxu0 0.0
    %2092 = vmatpush1.msra.mxu0 0.0
    %2093 = vmatprep.subr.mxu0 0.0
    %2094 = vmatpush1.msra.mxu0 0.0
    %2095 = vmatprep.subr.mxu0 0.0
    %2096 = vmatpush1.msra.mxu0 0.0
    %2097 = vmatprep.subr.mxu0 0.0
    %2098 = vmatpush1.msra.mxu0 0.0
    %2099 = vmatprep.subr.mxu0 0.0
    %2100 = vmatpush1.msra.mxu0 0.0
    %2101 = vmatprep.subr.mxu0 0.0
    %2102 = vmatpush1.msra.mxu0 0.0
    %2103 = vmatprep.subr.mxu0 0.0
    %2104 = vmatpush1.msra.mxu0 0.0
    %2105 = vmatprep.subr.mxu0 0.0
    %2106 = vmatpush1.msra.mxu0 0.0
    %2107 = vmatprep.subr.mxu0 0.0
    %2108 = vmatpush1.msra.mxu0 0.0
    %2109 = vmatprep.subr.mxu0 0.0
    %2110 = vmatpush1.msra.mxu0 0.0
    %2111 = vmatprep.subr.mxu0 0.0
    %2112 = vmatpush1.msra.mxu0 0.0
    %2113 = vmatprep.subr.mxu0 0.0
    %2114 = vmatpush1.msra.mxu0 0.0
    %2115 = vmatprep.mubr.f32.mxu0 0.0
    %2116 = vmatmul.mubr.f32.gmra.mrb[0].mxu0 %v2049
    %v2117 = vpop.f32.mrb[0].mxu0
    %v2118 = vadd.f32 0.0, %v2117
    %v2119 = vpop.f32.mrb[0].mxu0
    %v2120 = vadd.f32 0.0, %v2119
    %2121 = vdwg.mxu0
    %v2122 = vadd.f32 %v2042, %v2118
    %v2123 = vxor.u32 %v2122, 2147483648
    %v2124 = vmul.f32 %v2123, 1.442695
    %v2125 = vpow.pop %v2124
    %v2126 = vadd.f32 %v2125, 1.0
    %v2127 = vrcp.pop %v2126
    %v2128 = vmul.f32 1.0, %v2127
    %v2129 = vadd.f32 %v2120, %v136
    %v2130 = vmul.f32 %v2128, %v2129
    %v2131 = vadd.f32 %v2044, %v2130
    %v2132 = vtanh.pop %v2131
    %v2133 = vsub.f32 1.0, %v2128
    %2135 = vrot.lane.b32.xlu0 %v2132, 64
    %v2136 = vpop.permute.xlu0 %2135
    %v2138 = vmul.f32 %v2133, %v2136
    %v2139 = vmul.f32 %v2128, %v1879
    %v2140 = vadd.f32 %v2138, %v2139
    %2141 = vmatprep.subr.mxu0 %v38
    %2142 = vmatpush1.msra.mxu0 %v37
    %2143 = vmatprep.subr.mxu0 %v40
    %2144 = vmatpush1.msra.mxu0 %v39
    %2145 = vmatprep.subr.mxu0 %v42
    %2146 = vmatpush1.msra.mxu0 %v41
    %2147 = vmatprep.subr.mxu0 %v44
    %2148 = vmatpush1.msra.mxu0 %v43
    %2149 = vmatprep.subr.mxu0 %v46
    %2150 = vmatpush1.msra.mxu0 %v45
    %2151 = vmatprep.subr.mxu0 %v48
    %2152 = vmatpush1.msra.mxu0 %v47
    %2153 = vmatprep.subr.mxu0 %v50
    %2154 = vmatpush1.msra.mxu0 %v49
    %2155 = vmatprep.subr.mxu0 %v52
    %2156 = vmatpush1.msra.mxu0 %v51
    %2157 = vmatprep.subr.mxu0 0.0
    %2158 = vmatpush1.msra.mxu0 0.0
    %2159 = vmatprep.subr.mxu0 0.0
    %2160 = vmatpush1.msra.mxu0 0.0
    %2161 = vmatprep.subr.mxu0 0.0
    %2162 = vmatpush1.msra.mxu0 0.0
    %2163 = vmatprep.subr.mxu0 0.0
    %2164 = vmatpush1.msra.mxu0 0.0
    %2165 = vmatprep.subr.mxu0 0.0
    %2166 = vmatpush1.msra.mxu0 0.0
    %2167 = vmatprep.subr.mxu0 0.0
    %2168 = vmatpush1.msra.mxu0 0.0
    %2169 = vmatprep.subr.mxu0 0.0
    %2170 = vmatpush1.msra.mxu0 0.0
    %2171 = vmatprep.subr.mxu0 0.0
    %2172 = vmatpush1.msra.mxu0 0.0
    %2173 = vmatprep.subr.mxu0 0.0
    %2174 = vmatpush1.msra.mxu0 0.0
    %2175 = vmatprep.subr.mxu0 0.0
    %2176 = vmatpush1.msra.mxu0 0.0
    %2177 = vmatprep.subr.mxu0 0.0
    %2178 = vmatpush1.msra.mxu0 0.0
    %2179 = vmatprep.subr.mxu0 0.0
    %2180 = vmatpush1.msra.mxu0 0.0
    %2181 = vmatprep.subr.mxu0 0.0
    %2182 = vmatpush1.msra.mxu0 0.0
    %2183 = vmatprep.subr.mxu0 0.0
    %2184 = vmatpush1.msra.mxu0 0.0
    %2185 = vmatprep.subr.mxu0 0.0
    %2186 = vmatpush1.msra.mxu0 0.0
    %2187 = vmatprep.subr.mxu0 0.0
    %2188 = vmatpush1.msra.mxu0 0.0
    %2189 = vmatprep.subr.mxu0 0.0
    %2190 = vmatpush1.msra.mxu0 0.0
    %2191 = vmatprep.subr.mxu0 0.0
    %2192 = vmatpush1.msra.mxu0 0.0
    %2193 = vmatprep.subr.mxu0 0.0
    %2194 = vmatpush1.msra.mxu0 0.0
    %2195 = vmatprep.subr.mxu0 0.0
    %2196 = vmatpush1.msra.mxu0 0.0
    %2197 = vmatprep.subr.mxu0 0.0
    %2198 = vmatpush1.msra.mxu0 0.0
    %2199 = vmatprep.subr.mxu0 0.0
    %2200 = vmatpush1.msra.mxu0 0.0
    %2201 = vmatprep.subr.mxu0 0.0
    %2202 = vmatpush1.msra.mxu0 0.0
    %2203 = vmatprep.subr.mxu0 0.0
    %2204 = vmatpush1.msra.mxu0 0.0
    %2205 = vmatprep.mubr.f32.mxu0 0.0
    %2206 = vmatmul.mubr.f32.gmra.mrb[0].mxu0 %v1973
    %v2207 = vpop.f32.mrb[0].mxu0
    %v2208 = vadd.f32 0.0, %v2207
    %v2209 = vpop.f32.mrb[0].mxu0
    %v2210 = vadd.f32 0.0, %v2209
    %2211 = vdwg.mxu0
    %v2212 = vadd.f32 %v300, %v2208
    %v2213 = vxor.u32 %v2212, 2147483648
    %v2214 = vmul.f32 %v2213, 1.442695
    %v2215 = vpow.pop %v2214
    %v2216 = vadd.f32 %v2215, 1.0
    %v2217 = vrcp.pop %v2216
    %v2218 = vmul.f32 1.0, %v2217
    %v2219 = vadd.f32 %v2210, %v133
    %v2220 = vmul.f32 %v2218, %v2219
    %v2221 = vadd.f32 %v302, %v2220
    %v2222 = vtanh.pop %v2221
    %v2223 = vsub.f32 1.0, %v2218
    %2225 = vrot.lane.b32.xlu0 %v2222, 64
    %v2226 = vpop.permute.xlu0 %2225
    %v2228 = vmul.f32 %v2223, %v2226
    %v2229 = vmul.f32 %v2218, %v1969
    %v2230 = vadd.f32 %v2228, %v2229
    %2232 = vrot.lane.b32.xlu0 %v2230, 64
    %v2233 = vpop.permute.xlu0 %2232
    %v2234 = vsel %vm304, %v2233, 0
    %2236 = vmatprep.subr.mxu0 %v54
    %2237 = vmatpush1.msra.mxu0 %v53
    %2238 = vmatprep.subr.mxu0 %v56
    %2239 = vmatpush1.msra.mxu0 %v55
    %2240 = vmatprep.subr.mxu0 %v58
    %2241 = vmatpush1.msra.mxu0 %v57
    %2242 = vmatprep.subr.mxu0 %v60
    %2243 = vmatpush1.msra.mxu0 %v59
    %2244 = vmatprep.subr.mxu0 %v62
    %2245 = vmatpush1.msra.mxu0 %v61
    %2246 = vmatprep.subr.mxu0 %v64
    %2247 = vmatpush1.msra.mxu0 %v63
    %2248 = vmatprep.subr.mxu0 %v66
    %2249 = vmatpush1.msra.mxu0 %v65
    %2250 = vmatprep.subr.mxu0 %v68
    %2251 = vmatpush1.msra.mxu0 %v67
    %2252 = vmatprep.subr.mxu0 0.0
    %2253 = vmatpush1.msra.mxu0 0.0
    %2254 = vmatprep.subr.mxu0 0.0
    %2255 = vmatpush1.msra.mxu0 0.0
    %2256 = vmatprep.subr.mxu0 0.0
    %2257 = vmatpush1.msra.mxu0 0.0
    %2258 = vmatprep.subr.mxu0 0.0
    %2259 = vmatpush1.msra.mxu0 0.0
    %2260 = vmatprep.subr.mxu0 0.0
    %2261 = vmatpush1.msra.mxu0 0.0
    %2262 = vmatprep.subr.mxu0 0.0
    %2263 = vmatpush1.msra.mxu0 0.0
    %2264 = vmatprep.subr.mxu0 0.0
    %2265 = vmatpush1.msra.mxu0 0.0
    %2266 = vmatprep.subr.mxu0 0.0
    %2267 = vmatpush1.msra.mxu0 0.0
    %2268 = vmatprep.subr.mxu0 0.0
    %2269 = vmatpush1.msra.mxu0 0.0
    %2270 = vmatprep.subr.mxu0 0.0
    %2271 = vmatpush1.msra.mxu0 0.0
    %2272 = vmatprep.subr.mxu0 0.0
    %2273 = vmatpush1.msra.mxu0 0.0
    %2274 = vmatprep.subr.mxu0 0.0
    %2275 = vmatpush1.msra.mxu0 0.0
    %2276 = vmatprep.subr.mxu0 0.0
    %2277 = vmatpush1.msra.mxu0 0.0
    %2278 = vmatprep.subr.mxu0 0.0
    %2279 = vmatpush1.msra.mxu0 0.0
    %2280 = vmatprep.subr.mxu0 0.0
    %2281 = vmatpush1.msra.mxu0 0.0
    %2282 = vmatprep.subr.mxu0 0.0
    %2283 = vmatpush1.msra.mxu0 0.0
    %2284 = vmatprep.subr.mxu0 0.0
    %2285 = vmatpush1.msra.mxu0 0.0
    %2286 = vmatprep.subr.mxu0 0.0
    %2287 = vmatpush1.msra.mxu0 0.0
    %2288 = vmatprep.subr.mxu0 0.0
    %2289 = vmatpush1.msra.mxu0 0.0
    %2290 = vmatprep.subr.mxu0 0.0
    %2291 = vmatpush1.msra.mxu0 0.0
    %2292 = vmatprep.subr.mxu0 0.0
    %2293 = vmatpush1.msra.mxu0 0.0
    %2294 = vmatprep.subr.mxu0 0.0
    %2295 = vmatpush1.msra.mxu0 0.0
    %2296 = vmatprep.subr.mxu0 0.0
    %2297 = vmatpush1.msra.mxu0 0.0
    %2298 = vmatprep.subr.mxu0 0.0
    %2299 = vmatpush1.msra.mxu0 0.0
    %2300 = vmatprep.mubr.f32.mxu0 0.0
    %2301 = vmatmul.mubr.f32.gmra.mrb[0].mxu0 %v2234
    %v2302 = vpop.f32.mrb[0].mxu0
    %v2303 = vadd.f32 %v402, %v2302
    %v2304 = vpop.f32.mrb[0].mxu0
    %v2305 = vadd.f32 %v406, %v2304
    %2306 = vdwg.mxu0
    %2308 = vrot.lane.b32.xlu0 %v2140, 64
    %v2309 = vpop.permute.xlu0 %2308
    %v2310 = vsel %vm304, %v2309, 0
    %2312 = vmatprep.subr.mxu0 %v70
    %2313 = vmatpush1.msra.mxu0 %v69
    %2314 = vmatprep.subr.mxu0 %v72
    %2315 = vmatpush1.msra.mxu0 %v71
    %2316 = vmatprep.subr.mxu0 %v74
    %2317 = vmatpush1.msra.mxu0 %v73
    %2318 = vmatprep.subr.mxu0 %v76
    %2319 = vmatpush1.msra.mxu0 %v75
    %2320 = vmatprep.subr.mxu0 %v78
    %2321 = vmatpush1.msra.mxu0 %v77
    %2322 = vmatprep.subr.mxu0 %v80
    %2323 = vmatpush1.msra.mxu0 %v79
    %2324 = vmatprep.subr.mxu0 %v82
    %2325 = vmatpush1.msra.mxu0 %v81
    %2326 = vmatprep.subr.mxu0 %v84
    %2327 = vmatpush1.msra.mxu0 %v83
    %2328 = vmatprep.subr.mxu0 0.0
    %2329 = vmatpush1.msra.mxu0 0.0
    %2330 = vmatprep.subr.mxu0 0.0
    %2331 = vmatpush1.msra.mxu0 0.0
    %2332 = vmatprep.subr.mxu0 0.0
    %2333 = vmatpush1.msra.mxu0 0.0
    %2334 = vmatprep.subr.mxu0 0.0
    %2335 = vmatpush1.msra.mxu0 0.0
    %2336 = vmatprep.subr.mxu0 0.0
    %2337 = vmatpush1.msra.mxu0 0.0
    %2338 = vmatprep.subr.mxu0 0.0
    %2339 = vmatpush1.msra.mxu0 0.0
    %2340 = vmatprep.subr.mxu0 0.0
    %2341 = vmatpush1.msra.mxu0 0.0
    %2342 = vmatprep.subr.mxu0 0.0
    %2343 = vmatpush1.msra.mxu0 0.0
    %2344 = vmatprep.subr.mxu0 0.0
    %2345 = vmatpush1.msra.mxu0 0.0
    %2346 = vmatprep.subr.mxu0 0.0
    %2347 = vmatpush1.msra.mxu0 0.0
    %2348 = vmatprep.subr.mxu0 0.0
    %2349 = vmatpush1.msra.mxu0 0.0
    %2350 = vmatprep.subr.mxu0 0.0
    %2351 = vmatpush1.msra.mxu0 0.0
    %2352 = vmatprep.subr.mxu0 0.0
    %2353 = vmatpush1.msra.mxu0 0.0
    %2354 = vmatprep.subr.mxu0 0.0
    %2355 = vmatpush1.msra.mxu0 0.0
    %2356 = vmatprep.subr.mxu0 0.0
    %2357 = vmatpush1.msra.mxu0 0.0
    %2358 = vmatprep.subr.mxu0 0.0
    %2359 = vmatpush1.msra.mxu0 0.0
    %2360 = vmatprep.subr.mxu0 0.0
    %2361 = vmatpush1.msra.mxu0 0.0
    %2362 = vmatprep.subr.mxu0 0.0
    %2363 = vmatpush1.msra.mxu0 0.0
    %2364 = vmatprep.subr.mxu0 0.0
    %2365 = vmatpush1.msra.mxu0 0.0
    %2366 = vmatprep.subr.mxu0 0.0
    %2367 = vmatpush1.msra.mxu0 0.0
    %2368 = vmatprep.subr.mxu0 0.0
    %2369 = vmatpush1.msra.mxu0 0.0
    %2370 = vmatprep.subr.mxu0 0.0
    %2371 = vmatpush1.msra.mxu0 0.0
    %2372 = vmatprep.subr.mxu0 0.0
    %2373 = vmatpush1.msra.mxu0 0.0
    %2374 = vmatprep.subr.mxu0 0.0
    %2375 = vmatpush1.msra.mxu0 0.0
    %2376 = vmatprep.mubr.f32.mxu0 0.0
    %2377 = vmatmul.mubr.f32.gmra.mrb[0].mxu0 %v2310
    %v2378 = vpop.f32.mrb[0].mxu0
    %v2379 = vadd.f32 0.0, %v2378
    %v2380 = vpop.f32.mrb[0].mxu0
    %v2381 = vadd.f32 0.0, %v2380
    %2382 = vdwg.mxu0
    %v2383 = vadd.f32 %v2303, %v2379
    %v2384 = vxor.u32 %v2383, 2147483648
    %v2385 = vmul.f32 %v2384, 1.442695
    %v2386 = vpow.pop %v2385
    %v2387 = vadd.f32 %v2386, 1.0
    %v2388 = vrcp.pop %v2387
    %v2389 = vmul.f32 1.0, %v2388
    %v2390 = vadd.f32 %v2381, %v136
    %v2391 = vmul.f32 %v2389, %v2390
    %v2392 = vadd.f32 %v2305, %v2391
    %v2393 = vtanh.pop %v2392
    %v2394 = vsub.f32 1.0, %v2389
    %2396 = vrot.lane.b32.xlu0 %v2393, 64
    %v2397 = vpop.permute.xlu0 %2396
    %v2399 = vmul.f32 %v2394, %v2397
    %v2400 = vmul.f32 %v2389, %v2140
    %v2401 = vadd.f32 %v2399, %v2400
    %2403 = vrot.lane.b32.xlu0 %v2401, 64
    %v2404 = vpop.permute.xlu0 %2403
    %v2405 = vsel %vm304, %v2404, 0
    %2407 = vmatprep.subr.mxu0 0.0
    %2408 = vmatpush1.msra.mxu0 %v99
    %2409 = vmatprep.subr.mxu0 0.0
    %2410 = vmatpush1.msra.mxu0 %v100
    %2411 = vmatprep.subr.mxu0 0.0
    %2412 = vmatpush1.msra.mxu0 %v101
    %2413 = vmatprep.subr.mxu0 0.0
    %2414 = vmatpush1.msra.mxu0 %v102
    %2415 = vmatprep.subr.mxu0 0.0
    %2416 = vmatpush1.msra.mxu0 %v103
    %2417 = vmatprep.subr.mxu0 0.0
    %2418 = vmatpush1.msra.mxu0 %v104
    %2419 = vmatprep.subr.mxu0 0.0
    %2420 = vmatpush1.msra.mxu0 %v105
    %2421 = vmatprep.subr.mxu0 0.0
    %2422 = vmatpush1.msra.mxu0 %v106
    %2423 = vmatprep.subr.mxu0 0.0
    %2424 = vmatpush1.msra.mxu0 0.0
    %2425 = vmatprep.subr.mxu0 0.0
    %2426 = vmatpush1.msra.mxu0 0.0
    %2427 = vmatprep.subr.mxu0 0.0
    %2428 = vmatpush1.msra.mxu0 0.0
    %2429 = vmatprep.subr.mxu0 0.0
    %2430 = vmatpush1.msra.mxu0 0.0
    %2431 = vmatprep.subr.mxu0 0.0
    %2432 = vmatpush1.msra.mxu0 0.0
    %2433 = vmatprep.subr.mxu0 0.0
    %2434 = vmatpush1.msra.mxu0 0.0
    %2435 = vmatprep.subr.mxu0 0.0
    %2436 = vmatpush1.msra.mxu0 0.0
    %2437 = vmatprep.subr.mxu0 0.0
    %2438 = vmatpush1.msra.mxu0 0.0
    %2439 = vmatprep.subr.mxu0 0.0
    %2440 = vmatpush1.msra.mxu0 0.0
    %2441 = vmatprep.subr.mxu0 0.0
    %2442 = vmatpush1.msra.mxu0 0.0
    %2443 = vmatprep.subr.mxu0 0.0
    %2444 = vmatpush1.msra.mxu0 0.0
    %2445 = vmatprep.subr.mxu0 0.0
    %2446 = vmatpush1.msra.mxu0 0.0
    %2447 = vmatprep.subr.mxu0 0.0
    %2448 = vmatpush1.msra.mxu0 0.0
    %2449 = vmatprep.subr.mxu0 0.0
    %2450 = vmatpush1.msra.mxu0 0.0
    %2451 = vmatprep.subr.mxu0 0.0
    %2452 = vmatpush1.msra.mxu0 0.0
    %2453 = vmatprep.subr.mxu0 0.0
    %2454 = vmatpush1.msra.mxu0 0.0
    %2455 = vmatprep.subr.mxu0 0.0
    %2456 = vmatpush1.msra.mxu0 0.0
    %2457 = vmatprep.subr.mxu0 0.0
    %2458 = vmatpush1.msra.mxu0 0.0
    %2459 = vmatprep.subr.mxu0 0.0
    %2460 = vmatpush1.msra.mxu0 0.0
    %2461 = vmatprep.subr.mxu0 0.0
    %2462 = vmatpush1.msra.mxu0 0.0
    %2463 = vmatprep.subr.mxu0 0.0
    %2464 = vmatpush1.msra.mxu0 0.0
    %2465 = vmatprep.subr.mxu0 0.0
    %2466 = vmatpush1.msra.mxu0 0.0
    %2467 = vmatprep.subr.mxu0 0.0
    %2468 = vmatpush1.msra.mxu0 0.0
    %2469 = vmatprep.subr.mxu0 0.0
    %2470 = vmatpush1.msra.mxu0 0.0
    %2471 = vmatprep.mubr.f32.mxu0 0.0
    %2472 = vmatmul.mubr.f32.gmra.mrb[0].mxu0 %v2405
    %v2473 = vpop.f32.mrb[0].mxu0
    %v2474 = vadd.f32 %v141, %v2473
    %v2475 = vpop.f32.mrb[0].mxu0
    %2476 = vdwg.mxu0
    %vm2477 = vcmp.gt.f32.partialorder %v2474, 0.0
    %v2478 = vmul.f32 %v2474, 0.01
    %v2479 = vsel %vm2477, %v2474, %v2478
    %vm2480 = vcmask 654336
    %v2482 = vsel %vm2480, %v2479, 0
    %2484 = vmatprep.subr.mxu0 0.0
    %2485 = vmatpush1.msra.mxu0 %v107
    %2486 = vmatprep.subr.mxu0 0.0
    %2487 = vmatpush1.msra.mxu0 %v108
    %2488 = vmatprep.subr.mxu0 0.0
    %2489 = vmatpush1.msra.mxu0 %v109
    %2490 = vmatprep.subr.mxu0 0.0
    %2491 = vmatpush1.msra.mxu0 %v110
    %2492 = vmatprep.subr.mxu0 0.0
    %2493 = vmatpush1.msra.mxu0 %v111
    %2494 = vmatprep.subr.mxu0 0.0
    %2495 = vmatpush1.msra.mxu0 %v112
    %2496 = vmatprep.subr.mxu0 0.0
    %2497 = vmatpush1.msra.mxu0 %v113
    %2498 = vmatprep.subr.mxu0 0.0
    %2499 = vmatpush1.msra.mxu0 %v114
    %2500 = vmatprep.subr.mxu0 0.0
    %2501 = vmatpush1.msra.mxu0 %v115
    %2502 = vmatprep.subr.mxu0 0.0
    %2503 = vmatpush1.msra.mxu0 %v116
    %2504 = vmatprep.subr.mxu0 0.0
    %2505 = vmatpush1.msra.mxu0 0.0
    %2506 = vmatprep.subr.mxu0 0.0
    %2507 = vmatpush1.msra.mxu0 0.0
    %2508 = vmatprep.subr.mxu0 0.0
    %2509 = vmatpush1.msra.mxu0 0.0
    %2510 = vmatprep.subr.mxu0 0.0
    %2511 = vmatpush1.msra.mxu0 0.0
    %2512 = vmatprep.subr.mxu0 0.0
    %2513 = vmatpush1.msra.mxu0 0.0
    %2514 = vmatprep.subr.mxu0 0.0
    %2515 = vmatpush1.msra.mxu0 0.0
    %2516 = vmatprep.subr.mxu0 0.0
    %2517 = vmatpush1.msra.mxu0 0.0
    %2518 = vmatprep.subr.mxu0 0.0
    %2519 = vmatpush1.msra.mxu0 0.0
    %2520 = vmatprep.subr.mxu0 0.0
    %2521 = vmatpush1.msra.mxu0 0.0
    %2522 = vmatprep.subr.mxu0 0.0
    %2523 = vmatpush1.msra.mxu0 0.0
    %2524 = vmatprep.subr.mxu0 0.0
    %2525 = vmatpush1.msra.mxu0 0.0
    %2526 = vmatprep.subr.mxu0 0.0
    %2527 = vmatpush1.msra.mxu0 0.0
    %2528 = vmatprep.subr.mxu0 0.0
    %2529 = vmatpush1.msra.mxu0 0.0
    %2530 = vmatprep.subr.mxu0 0.0
    %2531 = vmatpush1.msra.mxu0 0.0
    %2532 = vmatprep.subr.mxu0 0.0
    %2533 = vmatpush1.msra.mxu0 0.0
    %2534 = vmatprep.subr.mxu0 0.0
    %2535 = vmatpush1.msra.mxu0 0.0
    %2536 = vmatprep.subr.mxu0 0.0
    %2537 = vmatpush1.msra.mxu0 0.0
    %2538 = vmatprep.subr.mxu0 0.0
    %2539 = vmatpush1.msra.mxu0 0.0
    %2540 = vmatprep.subr.mxu0 0.0
    %2541 = vmatpush1.msra.mxu0 0.0
    %2542 = vmatprep.subr.mxu0 0.0
    %2543 = vmatpush1.msra.mxu0 0.0
    %2544 = vmatprep.subr.mxu0 0.0
    %2545 = vmatpush1.msra.mxu0 0.0
    %2546 = vmatprep.subr.mxu0 0.0
    %2547 = vmatpush1.msra.mxu0 0.0
    %2548 = vmatprep.mubr.f32.mxu0 0.0
    %2549 = vmatmul.mubr.f32.gmra.mrb[0].mxu0 %v2482
    %v2550 = vpop.f32.mrb[0].mxu0
    %v2551 = vadd.f32 %v142, %v2550
    %v2552 = vpop.f32.mrb[0].mxu0
    %2553 = vdwg.mxu0
    %vm2554 = vcmask 130048
    %2555 = vst.msk [vmem:[#allocation2] sm:$0xff] %vm2554, %v2551
    %2557 = vrot.lane.b32.xlu0 %v2551, 112
    %v2558 = vpop.permute.xlu0 %2557
    %2560 = vst.msk [vmem:[#allocation4] sm:$0xff] %vm2554, %v2558
    %v2561 = vmul.f32 %v2551, 0.5
    %v2562 = vmul.f32 %v2561, 1.442695
    %v2563 = vpow.pop %v2562
    %v2564 = vld [vmem:[%s1] sm:$0xff]
    %2566 = vrot.lane.b32.xlu0 %v2564, 16
    %v2567 = vpop.permute.xlu0 %2566
    %v2569 = vmul.f32 %v2563, %v2567
    %2571 = vrot.lane.b32.xlu0 %v2569, 112
    %v2572 = vpop.permute.xlu0 %2571
    %v2574 = vadd.f32 %v2551, %v2572
    %vm2575 = vcmask 31744
    %v2576 = vsel %vm2575, %v2574, -inf
    %2577 = vmax.xlane.f32.xlu0 %v2576
    %v2578 = vpop.xlane.xlu0 %2577
    %v2579 = vsub.f32 %v2574, %v2578
    %v2580 = vmul.f32 %v2579, 1.442695
    %v2581 = vpow.pop %v2580
    %v2582 = vsel %vm2575, %v2581, 0.0
    %2583 = vadd.xlane.f32.xlu0 %v2582
    %v2584 = vpop.xlane.xlu0 %2583
    %v2585 = vrcp.pop %v2584
    %v2586 = vmul.f32 %v2581, %v2585
    %2587 = vst.msk [vmem:[%s9] sm:$0xff] %vm2575, %v2586
    %v2589 = vsel %vm2554, %v2574, 0
    %2591 = vmatprep.subr.mxu0 0.0
    %2592 = vmatpush1.msra.mxu0 %v117
    %2593 = vmatprep.subr.mxu0 0.0
    %2594 = vmatpush1.msra.mxu0 %v118
    %2595 = vmatprep.subr.mxu0 0.0
    %2596 = vmatpush1.msra.mxu0 0.0
    %2597 = vmatprep.subr.mxu0 0.0
    %2598 = vmatpush1.msra.mxu0 0.0
    %2599 = vmatprep.subr.mxu0 0.0
    %2600 = vmatpush1.msra.mxu0 0.0
    %2601 = vmatprep.subr.mxu0 0.0
    %2602 = vmatpush1.msra.mxu0 0.0
    %2603 = vmatprep.subr.mxu0 0.0
    %2604 = vmatpush1.msra.mxu0 0.0
    %2605 = vmatprep.subr.mxu0 0.0
    %2606 = vmatpush1.msra.mxu0 0.0
    %2607 = vmatprep.subr.mxu0 0.0
    %2608 = vmatpush1.msra.mxu0 0.0
    %2609 = vmatprep.subr.mxu0 0.0
    %2610 = vmatpush1.msra.mxu0 0.0
    %2611 = vmatprep.subr.mxu0 0.0
    %2612 = vmatpush1.msra.mxu0 0.0
    %2613 = vmatprep.subr.mxu0 0.0
    %2614 = vmatpush1.msra.mxu0 0.0
    %2615 = vmatprep.subr.mxu0 0.0
    %2616 = vmatpush1.msra.mxu0 0.0
    %2617 = vmatprep.subr.mxu0 0.0
    %2618 = vmatpush1.msra.mxu0 0.0
    %2619 = vmatprep.subr.mxu0 0.0
    %2620 = vmatpush1.msra.mxu0 0.0
    %2621 = vmatprep.subr.mxu0 0.0
    %2622 = vmatpush1.msra.mxu0 0.0
    %2623 = vmatprep.subr.mxu0 0.0
    %2624 = vmatpush1.msra.mxu0 0.0
    %2625 = vmatprep.subr.mxu0 0.0
    %2626 = vmatpush1.msra.mxu0 0.0
    %2627 = vmatprep.subr.mxu0 0.0
    %2628 = vmatpush1.msra.mxu0 0.0
    %2629 = vmatprep.subr.mxu0 0.0
    %2630 = vmatpush1.msra.mxu0 0.0
    %2631 = vmatprep.subr.mxu0 0.0
    %2632 = vmatpush1.msra.mxu0 0.0
    %2633 = vmatprep.subr.mxu0 0.0
    %2634 = vmatpush1.msra.mxu0 0.0
    %2635 = vmatprep.subr.mxu0 0.0
    %2636 = vmatpush1.msra.mxu0 0.0
    %2637 = vmatprep.subr.mxu0 0.0
    %2638 = vmatpush1.msra.mxu0 0.0
    %2639 = vmatprep.subr.mxu0 0.0
    %2640 = vmatpush1.msra.mxu0 0.0
    %2641 = vmatprep.subr.mxu0 0.0
    %2642 = vmatpush1.msra.mxu0 0.0
    %2643 = vmatprep.subr.mxu0 0.0
    %2644 = vmatpush1.msra.mxu0 0.0
    %2645 = vmatprep.subr.mxu0 0.0
    %2646 = vmatpush1.msra.mxu0 0.0
    %2647 = vmatprep.subr.mxu0 0.0
    %2648 = vmatpush1.msra.mxu0 0.0
    %2649 = vmatprep.subr.mxu0 0.0
    %2650 = vmatpush1.msra.mxu0 0.0
    %2651 = vmatprep.subr.mxu0 0.0
    %2652 = vmatpush1.msra.mxu0 0.0
    %2653 = vmatprep.subr.mxu0 0.0
    %2654 = vmatpush1.msra.mxu0 0.0
    %2655 = vmatprep.mubr.f32.mxu0 0.0
    %2656 = vmatmul.mubr.f32.gmra.mrb[0].mxu0 %v2589
    %v2657 = vpop.f32.mrb[0].mxu0
    %v2658 = vadd.f32 %v143, %v2657
    %v2659 = vpop.f32.mrb[0].mxu0
    %2660 = vdwg.mxu0
    %vm2661 = vcmp.gt.f32.partialorder %v2658, 0.0
    %v2662 = vmul.f32 %v2658, 0.01
    %v2663 = vsel %vm2661, %v2658, %v2662
    %vm2664 = vcmask 392192
    %v2666 = vsel %vm2664, %v2663, 0
    %2668 = vmatprep.subr.mxu0 0.0
    %2669 = vmatpush1.msra.mxu0 %v119
    %2670 = vmatprep.subr.mxu0 0.0
    %2671 = vmatpush1.msra.mxu0 %v120
    %2672 = vmatprep.subr.mxu0 0.0
    %2673 = vmatpush1.msra.mxu0 %v121
    %2674 = vmatprep.subr.mxu0 0.0
    %2675 = vmatpush1.msra.mxu0 %v122
    %2676 = vmatprep.subr.mxu0 0.0
    %2677 = vmatpush1.msra.mxu0 %v123
    %2678 = vmatprep.subr.mxu0 0.0
    %2679 = vmatpush1.msra.mxu0 %v124
    %2680 = vmatprep.subr.mxu0 0.0
    %2681 = vmatpush1.msra.mxu0 0.0
    %2682 = vmatprep.subr.mxu0 0.0
    %2683 = vmatpush1.msra.mxu0 0.0
    %2684 = vmatprep.subr.mxu0 0.0
    %2685 = vmatpush1.msra.mxu0 0.0
    %2686 = vmatprep.subr.mxu0 0.0
    %2687 = vmatpush1.msra.mxu0 0.0
    %2688 = vmatprep.subr.mxu0 0.0
    %2689 = vmatpush1.msra.mxu0 0.0
    %2690 = vmatprep.subr.mxu0 0.0
    %2691 = vmatpush1.msra.mxu0 0.0
    %2692 = vmatprep.subr.mxu0 0.0
    %2693 = vmatpush1.msra.mxu0 0.0
    %2694 = vmatprep.subr.mxu0 0.0
    %2695 = vmatpush1.msra.mxu0 0.0
    %2696 = vmatprep.subr.mxu0 0.0
    %2697 = vmatpush1.msra.mxu0 0.0
    %2698 = vmatprep.subr.mxu0 0.0
    %2699 = vmatpush1.msra.mxu0 0.0
    %2700 = vmatprep.subr.mxu0 0.0
    %2701 = vmatpush1.msra.mxu0 0.0
    %2702 = vmatprep.subr.mxu0 0.0
    %2703 = vmatpush1.msra.mxu0 0.0
    %2704 = vmatprep.subr.mxu0 0.0
    %2705 = vmatpush1.msra.mxu0 0.0
    %2706 = vmatprep.subr.mxu0 0.0
    %2707 = vmatpush1.msra.mxu0 0.0
    %2708 = vmatprep.subr.mxu0 0.0
    %2709 = vmatpush1.msra.mxu0 0.0
    %2710 = vmatprep.subr.mxu0 0.0
    %2711 = vmatpush1.msra.mxu0 0.0
    %2712 = vmatprep.subr.mxu0 0.0
    %2713 = vmatpush1.msra.mxu0 0.0
    %2714 = vmatprep.subr.mxu0 0.0
    %2715 = vmatpush1.msra.mxu0 0.0
    %2716 = vmatprep.subr.mxu0 0.0
    %2717 = vmatpush1.msra.mxu0 0.0
    %2718 = vmatprep.subr.mxu0 0.0
    %2719 = vmatpush1.msra.mxu0 0.0
    %2720 = vmatprep.subr.mxu0 0.0
    %2721 = vmatpush1.msra.mxu0 0.0
    %2722 = vmatprep.subr.mxu0 0.0
    %2723 = vmatpush1.msra.mxu0 0.0
    %2724 = vmatprep.subr.mxu0 0.0
    %2725 = vmatpush1.msra.mxu0 0.0
    %2726 = vmatprep.subr.mxu0 0.0
    %2727 = vmatpush1.msra.mxu0 0.0
    %2728 = vmatprep.subr.mxu0 0.0
    %2729 = vmatpush1.msra.mxu0 0.0
    %2730 = vmatprep.subr.mxu0 0.0
    %2731 = vmatpush1.msra.mxu0 0.0
    %2732 = vmatprep.mubr.f32.mxu0 0.0
    %2733 = vmatmul.mubr.f32.gmra.mrb[0].mxu0 %v2666
    %v2734 = vpop.f32.mrb[0].mxu0
    %v2735 = vadd.f32 %v144, %v2734
    %v2736 = vpop.f32.mrb[0].mxu0
    %2737 = vdwg.mxu0
    %2738 = vst.msk [vmem:[%s6] sm:$0xff] %vm2554, %v147
    %v2739 = vsel %vm2554, %v147, 0
    %2741 = vmatprep.subr.mxu0 0.0
    %2742 = vmatpush1.msra.mxu0 %v85
    %2743 = vmatprep.subr.mxu0 0.0
    %2744 = vmatpush1.msra.mxu0 %v86
    %2745 = vmatprep.subr.mxu0 0.0
    %2746 = vmatpush1.msra.mxu0 0.0
    %2747 = vmatprep.subr.mxu0 0.0
    %2748 = vmatpush1.msra.mxu0 0.0
    %2749 = vmatprep.subr.mxu0 0.0
    %2750 = vmatpush1.msra.mxu0 0.0
    %2751 = vmatprep.subr.mxu0 0.0
    %2752 = vmatpush1.msra.mxu0 0.0
    %2753 = vmatprep.subr.mxu0 0.0
    %2754 = vmatpush1.msra.mxu0 0.0
    %2755 = vmatprep.subr.mxu0 0.0
    %2756 = vmatpush1.msra.mxu0 0.0
    %2757 = vmatprep.subr.mxu0 0.0
    %2758 = vmatpush1.msra.mxu0 0.0
    %2759 = vmatprep.subr.mxu0 0.0
    %2760 = vmatpush1.msra.mxu0 0.0
    %2761 = vmatprep.subr.mxu0 0.0
    %2762 = vmatpush1.msra.mxu0 0.0
    %2763 = vmatprep.subr.mxu0 0.0
    %2764 = vmatpush1.msra.mxu0 0.0
    %2765 = vmatprep.subr.mxu0 0.0
    %2766 = vmatpush1.msra.mxu0 0.0
    %2767 = vmatprep.subr.mxu0 0.0
    %2768 = vmatpush1.msra.mxu0 0.0
    %2769 = vmatprep.subr.mxu0 0.0
    %2770 = vmatpush1.msra.mxu0 0.0
    %2771 = vmatprep.subr.mxu0 0.0
    %2772 = vmatpush1.msra.mxu0 0.0
    %2773 = vmatprep.subr.mxu0 0.0
    %2774 = vmatpush1.msra.mxu0 0.0
    %2775 = vmatprep.subr.mxu0 0.0
    %2776 = vmatpush1.msra.mxu0 0.0
    %2777 = vmatprep.subr.mxu0 0.0
    %2778 = vmatpush1.msra.mxu0 0.0
    %2779 = vmatprep.subr.mxu0 0.0
    %2780 = vmatpush1.msra.mxu0 0.0
    %2781 = vmatprep.subr.mxu0 0.0
    %2782 = vmatpush1.msra.mxu0 0.0
    %2783 = vmatprep.subr.mxu0 0.0
    %2784 = vmatpush1.msra.mxu0 0.0
    %2785 = vmatprep.subr.mxu0 0.0
    %2786 = vmatpush1.msra.mxu0 0.0
    %2787 = vmatprep.subr.mxu0 0.0
    %2788 = vmatpush1.msra.mxu0 0.0
    %2789 = vmatprep.subr.mxu0 0.0
    %2790 = vmatpush1.msra.mxu0 0.0
    %2791 = vmatprep.subr.mxu0 0.0
    %2792 = vmatpush1.msra.mxu0 0.0
    %2793 = vmatprep.subr.mxu0 0.0
    %2794 = vmatpush1.msra.mxu0 0.0
    %2795 = vmatprep.subr.mxu0 0.0
    %2796 = vmatpush1.msra.mxu0 0.0
    %2797 = vmatprep.subr.mxu0 0.0
    %2798 = vmatpush1.msra.mxu0 0.0
    %2799 = vmatprep.subr.mxu0 0.0
    %2800 = vmatpush1.msra.mxu0 0.0
    %2801 = vmatprep.subr.mxu0 0.0
    %2802 = vmatpush1.msra.mxu0 0.0
    %2803 = vmatprep.subr.mxu0 0.0
    %2804 = vmatpush1.msra.mxu0 0.0
    %2805 = vmatprep.mubr.f32.mxu0 0.0
    %2806 = vmatmul.mubr.f32.gmra.mrb[0].mxu0 %v2739
    %v2807 = vpop.f32.mrb[0].mxu0
    %v2808 = vadd.f32 %v137, %v2807
    %v2809 = vpop.f32.mrb[0].mxu0
    %2810 = vdwg.mxu0
    %v2812 = vsel %vm166, %v2735, 0
    %2814 = vmatprep.subr.mxu0 0.0
    %2815 = vmatpush1.msra.mxu0 %v87
    %2816 = vmatprep.subr.mxu0 0.0
    %2817 = vmatpush1.msra.mxu0 %v88
    %2818 = vmatprep.subr.mxu0 0.0
    %2819 = vmatpush1.msra.mxu0 %v89
    %2820 = vmatprep.subr.mxu0 0.0
    %2821 = vmatpush1.msra.mxu0 %v90
    %2822 = vmatprep.subr.mxu0 0.0
    %2823 = vmatpush1.msra.mxu0 0.0
    %2824 = vmatprep.subr.mxu0 0.0
    %2825 = vmatpush1.msra.mxu0 0.0
    %2826 = vmatprep.subr.mxu0 0.0
    %2827 = vmatpush1.msra.mxu0 0.0
    %2828 = vmatprep.subr.mxu0 0.0
    %2829 = vmatpush1.msra.mxu0 0.0
    %2830 = vmatprep.subr.mxu0 0.0
    %2831 = vmatpush1.msra.mxu0 0.0
    %2832 = vmatprep.subr.mxu0 0.0
    %2833 = vmatpush1.msra.mxu0 0.0
    %2834 = vmatprep.subr.mxu0 0.0
    %2835 = vmatpush1.msra.mxu0 0.0
    %2836 = vmatprep.subr.mxu0 0.0
    %2837 = vmatpush1.msra.mxu0 0.0
    %2838 = vmatprep.subr.mxu0 0.0
    %2839 = vmatpush1.msra.mxu0 0.0
    %2840 = vmatprep.subr.mxu0 0.0
    %2841 = vmatpush1.msra.mxu0 0.0
    %2842 = vmatprep.subr.mxu0 0.0
    %2843 = vmatpush1.msra.mxu0 0.0
    %2844 = vmatprep.subr.mxu0 0.0
    %2845 = vmatpush1.msra.mxu0 0.0
    %2846 = vmatprep.subr.mxu0 0.0
    %2847 = vmatpush1.msra.mxu0 0.0
    %2848 = vmatprep.subr.mxu0 0.0
    %2849 = vmatpush1.msra.mxu0 0.0
    %2850 = vmatprep.subr.mxu0 0.0
    %2851 = vmatpush1.msra.mxu0 0.0
    %2852 = vmatprep.subr.mxu0 0.0
    %2853 = vmatpush1.msra.mxu0 0.0
    %2854 = vmatprep.subr.mxu0 0.0
    %2855 = vmatpush1.msra.mxu0 0.0
    %2856 = vmatprep.subr.mxu0 0.0
    %2857 = vmatpush1.msra.mxu0 0.0
    %2858 = vmatprep.subr.mxu0 0.0
    %2859 = vmatpush1.msra.mxu0 0.0
    %2860 = vmatprep.subr.mxu0 0.0
    %2861 = vmatpush1.msra.mxu0 0.0
    %2862 = vmatprep.subr.mxu0 0.0
    %2863 = vmatpush1.msra.mxu0 0.0
    %2864 = vmatprep.subr.mxu0 0.0
    %2865 = vmatpush1.msra.mxu0 0.0
    %2866 = vmatprep.subr.mxu0 0.0
    %2867 = vmatpush1.msra.mxu0 0.0
    %2868 = vmatprep.subr.mxu0 0.0
    %2869 = vmatpush1.msra.mxu0 0.0
    %2870 = vmatprep.subr.mxu0 0.0
    %2871 = vmatpush1.msra.mxu0 0.0
    %2872 = vmatprep.subr.mxu0 0.0
    %2873 = vmatpush1.msra.mxu0 0.0
    %2874 = vmatprep.subr.mxu0 0.0
    %2875 = vmatpush1.msra.mxu0 0.0
    %2876 = vmatprep.subr.mxu0 0.0
    %2877 = vmatpush1.msra.mxu0 0.0
    %2878 = vmatprep.mubr.f32.mxu0 0.0
    %2879 = vmatmul.mubr.f32.gmra.mrb[0].mxu0 %v2812
    %v2880 = vpop.f32.mrb[0].mxu0
    %v2881 = vadd.f32 0.0, %v2880
    %v2882 = vpop.f32.mrb[0].mxu0
    %2883 = vdwg.mxu0
    %v2884 = vadd.f32 %v2808, %v2881
    %v2885 = vxor.u32 %v2884, 2147483648
    %v2886 = vmul.f32 %v2885, 1.442695
    %v2887 = vpow.pop %v2886
    %v2888 = vadd.f32 %v2887, 1.0
    %v2889 = vrcp.pop %v2888
    %v2890 = vmul.f32 1.0, %v2889
    %2892 = vrot.lane.b32.xlu0 %v138, 64
    %v2893 = vpop.permute.xlu0 %2892
    %v2895 = vadd.f32 %v2881, %v2893
    %2897 = vrot.lane.b32.xlu0 %v2895, 64
    %v2898 = vpop.permute.xlu0 %2897
    %v2900 = vmul.f32 %v2890, %v2898
    %2902 = vrot.lane.b32.xlu0 %v2900, 64
    %v2903 = vpop.permute.xlu0 %2902
    %v2905 = vadd.f32 %v2808, %v2903
    %v2906 = vtanh.pop %v2905
    %v2907 = vsub.f32 1.0, %v2890
    %2909 = vrot.lane.b32.xlu0 %v2906, 96
    %v2910 = vpop.permute.xlu0 %2909
    %v2912 = vmul.f32 %v2907, %v2910
    %2913 = vrot.lane.b32.xlu0 %v2735, 32
    %v2914 = vpop.permute.xlu0 %2913
    %v2916 = vmul.f32 %v2890, %v2914
    %v2917 = vadd.f32 %v2912, %v2916
    %2919 = vrot.lane.b32.xlu0 %v2917, 96
    %v2920 = vpop.permute.xlu0 %2919
    %v2921 = vsel %vm166, %v2920, 0
    %2923 = vmatprep.subr.mxu0 0.0
    %2924 = vmatpush1.msra.mxu0 %v91
    %2925 = vmatprep.subr.mxu0 0.0
    %2926 = vmatpush1.msra.mxu0 %v92
    %2927 = vmatprep.subr.mxu0 0.0
    %2928 = vmatpush1.msra.mxu0 %v93
    %2929 = vmatprep.subr.mxu0 0.0
    %2930 = vmatpush1.msra.mxu0 %v94
    %2931 = vmatprep.subr.mxu0 0.0
    %2932 = vmatpush1.msra.mxu0 0.0
    %2933 = vmatprep.subr.mxu0 0.0
    %2934 = vmatpush1.msra.mxu0 0.0
    %2935 = vmatprep.subr.mxu0 0.0
    %2936 = vmatpush1.msra.mxu0 0.0
    %2937 = vmatprep.subr.mxu0 0.0
    %2938 = vmatpush1.msra.mxu0 0.0
    %2939 = vmatprep.subr.mxu0 0.0
    %2940 = vmatpush1.msra.mxu0 0.0
    %2941 = vmatprep.subr.mxu0 0.0
    %2942 = vmatpush1.msra.mxu0 0.0
    %2943 = vmatprep.subr.mxu0 0.0
    %2944 = vmatpush1.msra.mxu0 0.0
    %2945 = vmatprep.subr.mxu0 0.0
    %2946 = vmatpush1.msra.mxu0 0.0
    %2947 = vmatprep.subr.mxu0 0.0
    %2948 = vmatpush1.msra.mxu0 0.0
    %2949 = vmatprep.subr.mxu0 0.0
    %2950 = vmatpush1.msra.mxu0 0.0
    %2951 = vmatprep.subr.mxu0 0.0
    %2952 = vmatpush1.msra.mxu0 0.0
    %2953 = vmatprep.subr.mxu0 0.0
    %2954 = vmatpush1.msra.mxu0 0.0
    %2955 = vmatprep.subr.mxu0 0.0
    %2956 = vmatpush1.msra.mxu0 0.0
    %2957 = vmatprep.subr.mxu0 0.0
    %2958 = vmatpush1.msra.mxu0 0.0
    %2959 = vmatprep.subr.mxu0 0.0
    %2960 = vmatpush1.msra.mxu0 0.0
    %2961 = vmatprep.subr.mxu0 0.0
    %2962 = vmatpush1.msra.mxu0 0.0
    %2963 = vmatprep.subr.mxu0 0.0
    %2964 = vmatpush1.msra.mxu0 0.0
    %2965 = vmatprep.subr.mxu0 0.0
    %2966 = vmatpush1.msra.mxu0 0.0
    %2967 = vmatprep.subr.mxu0 0.0
    %2968 = vmatpush1.msra.mxu0 0.0
    %2969 = vmatprep.subr.mxu0 0.0
    %2970 = vmatpush1.msra.mxu0 0.0
    %2971 = vmatprep.subr.mxu0 0.0
    %2972 = vmatpush1.msra.mxu0 0.0
    %2973 = vmatprep.subr.mxu0 0.0
    %2974 = vmatpush1.msra.mxu0 0.0
    %2975 = vmatprep.subr.mxu0 0.0
    %2976 = vmatpush1.msra.mxu0 0.0
    %2977 = vmatprep.subr.mxu0 0.0
    %2978 = vmatpush1.msra.mxu0 0.0
    %2979 = vmatprep.subr.mxu0 0.0
    %2980 = vmatpush1.msra.mxu0 0.0
    %2981 = vmatprep.subr.mxu0 0.0
    %2982 = vmatpush1.msra.mxu0 0.0
    %2983 = vmatprep.subr.mxu0 0.0
    %2984 = vmatpush1.msra.mxu0 0.0
    %2985 = vmatprep.subr.mxu0 0.0
    %2986 = vmatpush1.msra.mxu0 0.0
    %2987 = vmatprep.mubr.f32.mxu0 0.0
    %2988 = vmatmul.mubr.f32.gmra.mrb[0].mxu0 %v2921
    %v2989 = vpop.f32.mrb[0].mxu0
    %v2990 = vadd.f32 %v139, %v2989
    %v2991 = vpop.f32.mrb[0].mxu0
    %2992 = vdwg.mxu0
    %2993 = vrot.lane.b32.xlu0 %v2735, 96
    %v2994 = vpop.permute.xlu0 %2993
    %v2995 = vsel %vm166, %v2994, 0
    %2997 = vmatprep.subr.mxu0 0.0
    %2998 = vmatpush1.msra.mxu0 %v95
    %2999 = vmatprep.subr.mxu0 0.0
    %3000 = vmatpush1.msra.mxu0 %v96
    %3001 = vmatprep.subr.mxu0 0.0
    %3002 = vmatpush1.msra.mxu0 %v97
    %3003 = vmatprep.subr.mxu0 0.0
    %3004 = vmatpush1.msra.mxu0 %v98
    %3005 = vmatprep.subr.mxu0 0.0
    %3006 = vmatpush1.msra.mxu0 0.0
    %3007 = vmatprep.subr.mxu0 0.0
    %3008 = vmatpush1.msra.mxu0 0.0
    %3009 = vmatprep.subr.mxu0 0.0
    %3010 = vmatpush1.msra.mxu0 0.0
    %3011 = vmatprep.subr.mxu0 0.0
    %3012 = vmatpush1.msra.mxu0 0.0
    %3013 = vmatprep.subr.mxu0 0.0
    %3014 = vmatpush1.msra.mxu0 0.0
    %3015 = vmatprep.subr.mxu0 0.0
    %3016 = vmatpush1.msra.mxu0 0.0
    %3017 = vmatprep.subr.mxu0 0.0
    %3018 = vmatpush1.msra.mxu0 0.0
    %3019 = vmatprep.subr.mxu0 0.0
    %3020 = vmatpush1.msra.mxu0 0.0
    %3021 = vmatprep.subr.mxu0 0.0
    %3022 = vmatpush1.msra.mxu0 0.0
    %3023 = vmatprep.subr.mxu0 0.0
    %3024 = vmatpush1.msra.mxu0 0.0
    %3025 = vmatprep.subr.mxu0 0.0
    %3026 = vmatpush1.msra.mxu0 0.0
    %3027 = vmatprep.subr.mxu0 0.0
    %3028 = vmatpush1.msra.mxu0 0.0
    %3029 = vmatprep.subr.mxu0 0.0
    %3030 = vmatpush1.msra.mxu0 0.0
    %3031 = vmatprep.subr.mxu0 0.0
    %3032 = vmatpush1.msra.mxu0 0.0
    %3033 = vmatprep.subr.mxu0 0.0
    %3034 = vmatpush1.msra.mxu0 0.0
    %3035 = vmatprep.subr.mxu0 0.0
    %3036 = vmatpush1.msra.mxu0 0.0
    %3037 = vmatprep.subr.mxu0 0.0
    %3038 = vmatpush1.msra.mxu0 0.0
    %3039 = vmatprep.subr.mxu0 0.0
    %3040 = vmatpush1.msra.mxu0 0.0
    %3041 = vmatprep.subr.mxu0 0.0
    %3042 = vmatpush1.msra.mxu0 0.0
    %3043 = vmatprep.subr.mxu0 0.0
    %3044 = vmatpush1.msra.mxu0 0.0
    %3045 = vmatprep.subr.mxu0 0.0
    %3046 = vmatpush1.msra.mxu0 0.0
    %3047 = vmatprep.subr.mxu0 0.0
    %3048 = vmatpush1.msra.mxu0 0.0
    %3049 = vmatprep.subr.mxu0 0.0
    %3050 = vmatpush1.msra.mxu0 0.0
    %3051 = vmatprep.subr.mxu0 0.0
    %3052 = vmatpush1.msra.mxu0 0.0
    %3053 = vmatprep.subr.mxu0 0.0
    %3054 = vmatpush1.msra.mxu0 0.0
    %3055 = vmatprep.subr.mxu0 0.0
    %3056 = vmatpush1.msra.mxu0 0.0
    %3057 = vmatprep.subr.mxu0 0.0
    %3058 = vmatpush1.msra.mxu0 0.0
    %3059 = vmatprep.subr.mxu0 0.0
    %3060 = vmatpush1.msra.mxu0 0.0
    %3061 = vmatprep.mubr.f32.mxu0 0.0
    %3062 = vmatmul.mubr.f32.gmra.mrb[0].mxu0 %v2995
    %v3063 = vpop.f32.mrb[0].mxu0
    %v3064 = vadd.f32 0.0, %v3063
    %v3065 = vpop.f32.mrb[0].mxu0
    %3066 = vdwg.mxu0
    %v3067 = vadd.f32 %v2990, %v3064
    %v3068 = vxor.u32 %v3067, 2147483648
    %v3069 = vmul.f32 %v3068, 1.442695
    %v3070 = vpow.pop %v3069
    %v3071 = vadd.f32 %v3070, 1.0
    %v3072 = vrcp.pop %v3071
    %v3073 = vmul.f32 1.0, %v3072
    %3075 = vrot.lane.b32.xlu0 %v140, 64
    %v3076 = vpop.permute.xlu0 %3075
    %v3078 = vadd.f32 %v3064, %v3076
    %3080 = vrot.lane.b32.xlu0 %v3078, 64
    %v3081 = vpop.permute.xlu0 %3080
    %v3083 = vmul.f32 %v3073, %v3081
    %3085 = vrot.lane.b32.xlu0 %v3083, 64
    %v3086 = vpop.permute.xlu0 %3085
    %v3088 = vadd.f32 %v2990, %v3086
    %v3089 = vtanh.pop %v3088
    %v3090 = vsub.f32 1.0, %v3073
    %3092 = vrot.lane.b32.xlu0 %v3089, 96
    %v3093 = vpop.permute.xlu0 %3092
    %v3095 = vmul.f32 %v3090, %v3093
    %v3096 = vmul.f32 %v3073, %v2735
    %v3097 = vadd.f32 %v3095, %v3096
    %3099 = vrot.lane.b32.xlu0 %v3097, 96
    %v3100 = vpop.permute.xlu0 %3099
    %v3101 = vsel %vm166, %v3100, 0
    %3103 = vmatprep.subr.mxu0 0.0
    %3104 = vmatpush1.msra.mxu0 %v125
    %3105 = vmatprep.subr.mxu0 0.0
    %3106 = vmatpush1.msra.mxu0 %v126
    %3107 = vmatprep.subr.mxu0 0.0
    %3108 = vmatpush1.msra.mxu0 %v127
    %3109 = vmatprep.subr.mxu0 0.0
    %3110 = vmatpush1.msra.mxu0 %v128
    %3111 = vmatprep.subr.mxu0 0.0
    %3112 = vmatpush1.msra.mxu0 0.0
    %3113 = vmatprep.subr.mxu0 0.0
    %3114 = vmatpush1.msra.mxu0 0.0
    %3115 = vmatprep.subr.mxu0 0.0
    %3116 = vmatpush1.msra.mxu0 0.0
    %3117 = vmatprep.subr.mxu0 0.0
    %3118 = vmatpush1.msra.mxu0 0.0
    %3119 = vmatprep.subr.mxu0 0.0
    %3120 = vmatpush1.msra.mxu0 0.0
    %3121 = vmatprep.subr.mxu0 0.0
    %3122 = vmatpush1.msra.mxu0 0.0
    %3123 = vmatprep.subr.mxu0 0.0
    %3124 = vmatpush1.msra.mxu0 0.0
    %3125 = vmatprep.subr.mxu0 0.0
    %3126 = vmatpush1.msra.mxu0 0.0
    %3127 = vmatprep.subr.mxu0 0.0
    %3128 = vmatpush1.msra.mxu0 0.0
    %3129 = vmatprep.subr.mxu0 0.0
    %3130 = vmatpush1.msra.mxu0 0.0
    %3131 = vmatprep.subr.mxu0 0.0
    %3132 = vmatpush1.msra.mxu0 0.0
    %3133 = vmatprep.subr.mxu0 0.0
    %3134 = vmatpush1.msra.mxu0 0.0
    %3135 = vmatprep.subr.mxu0 0.0
    %3136 = vmatpush1.msra.mxu0 0.0
    %3137 = vmatprep.subr.mxu0 0.0
    %3138 = vmatpush1.msra.mxu0 0.0
    %3139 = vmatprep.subr.mxu0 0.0
    %3140 = vmatpush1.msra.mxu0 0.0
    %3141 = vmatprep.subr.mxu0 0.0
    %3142 = vmatpush1.msra.mxu0 0.0
    %3143 = vmatprep.subr.mxu0 0.0
    %3144 = vmatpush1.msra.mxu0 0.0
    %3145 = vmatprep.subr.mxu0 0.0
    %3146 = vmatpush1.msra.mxu0 0.0
    %3147 = vmatprep.subr.mxu0 0.0
    %3148 = vmatpush1.msra.mxu0 0.0
    %3149 = vmatprep.subr.mxu0 0.0
    %3150 = vmatpush1.msra.mxu0 0.0
    %3151 = vmatprep.subr.mxu0 0.0
    %3152 = vmatpush1.msra.mxu0 0.0
    %3153 = vmatprep.subr.mxu0 0.0
    %3154 = vmatpush1.msra.mxu0 0.0
    %3155 = vmatprep.subr.mxu0 0.0
    %3156 = vmatpush1.msra.mxu0 0.0
    %3157 = vmatprep.subr.mxu0 0.0
    %3158 = vmatpush1.msra.mxu0 0.0
    %3159 = vmatprep.subr.mxu0 0.0
    %3160 = vmatpush1.msra.mxu0 0.0
    %3161 = vmatprep.subr.mxu0 0.0
    %3162 = vmatpush1.msra.mxu0 0.0
    %3163 = vmatprep.subr.mxu0 0.0
    %3164 = vmatpush1.msra.mxu0 0.0
    %3165 = vmatprep.subr.mxu0 0.0
    %3166 = vmatpush1.msra.mxu0 0.0
    %3167 = vmatprep.mubr.f32.mxu0 0.0
    %3168 = vmatmul.mubr.f32.gmra.mrb[0].mxu0 %v3101
    %v3169 = vpop.f32.mrb[0].mxu0
    %v3170 = vadd.f32 %v145, %v3169
    %v3171 = vpop.f32.mrb[0].mxu0
    %3172 = vdwg.mxu0
    %vm3173 = vcmp.gt.f32.partialorder %v3170, 0.0
    %v3174 = vmul.f32 %v3170, 0.01
    %v3175 = vsel %vm3173, %v3170, %v3174
    %vm3176 = vcmask 195584
    %v3178 = vsel %vm3176, %v3175, 0
    %3180 = vmatprep.subr.mxu0 0.0
    %3181 = vmatpush1.msra.mxu0 %v129
    %3182 = vmatprep.subr.mxu0 0.0
    %3183 = vmatpush1.msra.mxu0 %v130
    %3184 = vmatprep.subr.mxu0 0.0
    %3185 = vmatpush1.msra.mxu0 %v131
    %3186 = vmatprep.subr.mxu0 0.0
    %3187 = vmatpush1.msra.mxu0 0.0
    %3188 = vmatprep.subr.mxu0 0.0
    %3189 = vmatpush1.msra.mxu0 0.0
    %3190 = vmatprep.subr.mxu0 0.0
    %3191 = vmatpush1.msra.mxu0 0.0
    %3192 = vmatprep.subr.mxu0 0.0
    %3193 = vmatpush1.msra.mxu0 0.0
    %3194 = vmatprep.subr.mxu0 0.0
    %3195 = vmatpush1.msra.mxu0 0.0
    %3196 = vmatprep.subr.mxu0 0.0
    %3197 = vmatpush1.msra.mxu0 0.0
    %3198 = vmatprep.subr.mxu0 0.0
    %3199 = vmatpush1.msra.mxu0 0.0
    %3200 = vmatprep.subr.mxu0 0.0
    %3201 = vmatpush1.msra.mxu0 0.0
    %3202 = vmatprep.subr.mxu0 0.0
    %3203 = vmatpush1.msra.mxu0 0.0
    %3204 = vmatprep.subr.mxu0 0.0
    %3205 = vmatpush1.msra.mxu0 0.0
    %3206 = vmatprep.subr.mxu0 0.0
    %3207 = vmatpush1.msra.mxu0 0.0
    %3208 = vmatprep.subr.mxu0 0.0
    %3209 = vmatpush1.msra.mxu0 0.0
    %3210 = vmatprep.subr.mxu0 0.0
    %3211 = vmatpush1.msra.mxu0 0.0
    %3212 = vmatprep.subr.mxu0 0.0
    %3213 = vmatpush1.msra.mxu0 0.0
    %3214 = vmatprep.subr.mxu0 0.0
    %3215 = vmatpush1.msra.mxu0 0.0
    %3216 = vmatprep.subr.mxu0 0.0
    %3217 = vmatpush1.msra.mxu0 0.0
    %3218 = vmatprep.subr.mxu0 0.0
    %3219 = vmatpush1.msra.mxu0 0.0
    %3220 = vmatprep.subr.mxu0 0.0
    %3221 = vmatpush1.msra.mxu0 0.0
    %3222 = vmatprep.subr.mxu0 0.0
    %3223 = vmatpush1.msra.mxu0 0.0
    %3224 = vmatprep.subr.mxu0 0.0
    %3225 = vmatpush1.msra.mxu0 0.0
    %3226 = vmatprep.subr.mxu0 0.0
    %3227 = vmatpush1.msra.mxu0 0.0
    %3228 = vmatprep.subr.mxu0 0.0
    %3229 = vmatpush1.msra.mxu0 0.0
    %3230 = vmatprep.subr.mxu0 0.0
    %3231 = vmatpush1.msra.mxu0 0.0
    %3232 = vmatprep.subr.mxu0 0.0
    %3233 = vmatpush1.msra.mxu0 0.0
    %3234 = vmatprep.subr.mxu0 0.0
    %3235 = vmatpush1.msra.mxu0 0.0
    %3236 = vmatprep.subr.mxu0 0.0
    %3237 = vmatpush1.msra.mxu0 0.0
    %3238 = vmatprep.subr.mxu0 0.0
    %3239 = vmatpush1.msra.mxu0 0.0
    %3240 = vmatprep.subr.mxu0 0.0
    %3241 = vmatpush1.msra.mxu0 0.0
    %3242 = vmatprep.subr.mxu0 0.0
    %3243 = vmatpush1.msra.mxu0 0.0
    %3244 = vmatprep.mubr.f32.mxu0 0.0
    %3245 = vmatmul.mubr.f32.gmra.mrb[0].mxu0 %v3178
    %v3246 = vpop.f32.mrb[0].mxu0
    %v3247 = vadd.f32 %v146, %v3246
    %v3248 = vpop.f32.mrb[0].mxu0
    %3249 = vdwg.mxu0
    %v3250 = vxor.u32 %v3247, 2147483648
    %v3251 = vmul.f32 %v3250, 1.442695
    %v3252 = vpow.pop %v3251
    %v3253 = vadd.f32 %v3252, 1.0
    %v3254 = vrcp.pop %v3253
    %v3255 = vmul.f32 1.0, %v3254
    %s3256 = scalar_lea.vmem %s6, 8
    %3257 = vst.msk [vmem:[%s3256] sm:$0xff] %vm2554, %v3255
    %v3259 = vsel %vm2554, %v3255, 0
    %3261 = vmatprep.subr.mxu0 0.0
    %3262 = vmatpush1.msra.mxu0 %v85
    %3263 = vmatprep.subr.mxu0 0.0
    %3264 = vmatpush1.msra.mxu0 %v86
    %3265 = vmatprep.subr.mxu0 0.0
    %3266 = vmatpush1.msra.mxu0 0.0
    %3267 = vmatprep.subr.mxu0 0.0
    %3268 = vmatpush1.msra.mxu0 0.0
    %3269 = vmatprep.subr.mxu0 0.0
    %3270 = vmatpush1.msra.mxu0 0.0
    %3271 = vmatprep.subr.mxu0 0.0
    %3272 = vmatpush1.msra.mxu0 0.0
    %3273 = vmatprep.subr.mxu0 0.0
    %3274 = vmatpush1.msra.mxu0 0.0
    %3275 = vmatprep.subr.mxu0 0.0
    %3276 = vmatpush1.msra.mxu0 0.0
    %3277 = vmatprep.subr.mxu0 0.0
    %3278 = vmatpush1.msra.mxu0 0.0
    %3279 = vmatprep.subr.mxu0 0.0
    %3280 = vmatpush1.msra.mxu0 0.0
    %3281 = vmatprep.subr.mxu0 0.0
    %3282 = vmatpush1.msra.mxu0 0.0
    %3283 = vmatprep.subr.mxu0 0.0
    %3284 = vmatpush1.msra.mxu0 0.0
    %3285 = vmatprep.subr.mxu0 0.0
    %3286 = vmatpush1.msra.mxu0 0.0
    %3287 = vmatprep.subr.mxu0 0.0
    %3288 = vmatpush1.msra.mxu0 0.0
    %3289 = vmatprep.subr.mxu0 0.0
    %3290 = vmatpush1.msra.mxu0 0.0
    %3291 = vmatprep.subr.mxu0 0.0
    %3292 = vmatpush1.msra.mxu0 0.0
    %3293 = vmatprep.subr.mxu0 0.0
    %3294 = vmatpush1.msra.mxu0 0.0
    %3295 = vmatprep.subr.mxu0 0.0
    %3296 = vmatpush1.msra.mxu0 0.0
    %3297 = vmatprep.subr.mxu0 0.0
    %3298 = vmatpush1.msra.mxu0 0.0
    %3299 = vmatprep.subr.mxu0 0.0
    %3300 = vmatpush1.msra.mxu0 0.0
    %3301 = vmatprep.subr.mxu0 0.0
    %3302 = vmatpush1.msra.mxu0 0.0
    %3303 = vmatprep.subr.mxu0 0.0
    %3304 = vmatpush1.msra.mxu0 0.0
    %3305 = vmatprep.subr.mxu0 0.0
    %3306 = vmatpush1.msra.mxu0 0.0
    %3307 = vmatprep.subr.mxu0 0.0
    %3308 = vmatpush1.msra.mxu0 0.0
    %3309 = vmatprep.subr.mxu0 0.0
    %3310 = vmatpush1.msra.mxu0 0.0
    %3311 = vmatprep.subr.mxu0 0.0
    %3312 = vmatpush1.msra.mxu0 0.0
    %3313 = vmatprep.subr.mxu0 0.0
    %3314 = vmatpush1.msra.mxu0 0.0
    %3315 = vmatprep.subr.mxu0 0.0
    %3316 = vmatpush1.msra.mxu0 0.0
    %3317 = vmatprep.subr.mxu0 0.0
    %3318 = vmatpush1.msra.mxu0 0.0
    %3319 = vmatprep.subr.mxu0 0.0
    %3320 = vmatpush1.msra.mxu0 0.0
    %3321 = vmatprep.subr.mxu0 0.0
    %3322 = vmatpush1.msra.mxu0 0.0
    %3323 = vmatprep.subr.mxu0 0.0
    %3324 = vmatpush1.msra.mxu0 0.0
    %3325 = vmatprep.mubr.f32.mxu0 0.0
    %3326 = vmatmul.mubr.f32.gmra.mrb[0].mxu0 %v3259
    %v3327 = vpop.f32.mrb[0].mxu0
    %v3328 = vadd.f32 %v137, %v3327
    %v3329 = vpop.f32.mrb[0].mxu0
    %3330 = vdwg.mxu0
    %3331 = vmatprep.subr.mxu0 0.0
    %3332 = vmatpush1.msra.mxu0 %v87
    %3333 = vmatprep.subr.mxu0 0.0
    %3334 = vmatpush1.msra.mxu0 %v88
    %3335 = vmatprep.subr.mxu0 0.0
    %3336 = vmatpush1.msra.mxu0 %v89
    %3337 = vmatprep.subr.mxu0 0.0
    %3338 = vmatpush1.msra.mxu0 %v90
    %3339 = vmatprep.subr.mxu0 0.0
    %3340 = vmatpush1.msra.mxu0 0.0
    %3341 = vmatprep.subr.mxu0 0.0
    %3342 = vmatpush1.msra.mxu0 0.0
    %3343 = vmatprep.subr.mxu0 0.0
    %3344 = vmatpush1.msra.mxu0 0.0
    %3345 = vmatprep.subr.mxu0 0.0
    %3346 = vmatpush1.msra.mxu0 0.0
    %3347 = vmatprep.subr.mxu0 0.0
    %3348 = vmatpush1.msra.mxu0 0.0
    %3349 = vmatprep.subr.mxu0 0.0
    %3350 = vmatpush1.msra.mxu0 0.0
    %3351 = vmatprep.subr.mxu0 0.0
    %3352 = vmatpush1.msra.mxu0 0.0
    %3353 = vmatprep.subr.mxu0 0.0
    %3354 = vmatpush1.msra.mxu0 0.0
    %3355 = vmatprep.subr.mxu0 0.0
    %3356 = vmatpush1.msra.mxu0 0.0
    %3357 = vmatprep.subr.mxu0 0.0
    %3358 = vmatpush1.msra.mxu0 0.0
    %3359 = vmatprep.subr.mxu0 0.0
    %3360 = vmatpush1.msra.mxu0 0.0
    %3361 = vmatprep.subr.mxu0 0.0
    %3362 = vmatpush1.msra.mxu0 0.0
    %3363 = vmatprep.subr.mxu0 0.0
    %3364 = vmatpush1.msra.mxu0 0.0
    %3365 = vmatprep.subr.mxu0 0.0
    %3366 = vmatpush1.msra.mxu0 0.0
    %3367 = vmatprep.subr.mxu0 0.0
    %3368 = vmatpush1.msra.mxu0 0.0
    %3369 = vmatprep.subr.mxu0 0.0
    %3370 = vmatpush1.msra.mxu0 0.0
    %3371 = vmatprep.subr.mxu0 0.0
    %3372 = vmatpush1.msra.mxu0 0.0
    %3373 = vmatprep.subr.mxu0 0.0
    %3374 = vmatpush1.msra.mxu0 0.0
    %3375 = vmatprep.subr.mxu0 0.0
    %3376 = vmatpush1.msra.mxu0 0.0
    %3377 = vmatprep.subr.mxu0 0.0
    %3378 = vmatpush1.msra.mxu0 0.0
    %3379 = vmatprep.subr.mxu0 0.0
    %3380 = vmatpush1.msra.mxu0 0.0
    %3381 = vmatprep.subr.mxu0 0.0
    %3382 = vmatpush1.msra.mxu0 0.0
    %3383 = vmatprep.subr.mxu0 0.0
    %3384 = vmatpush1.msra.mxu0 0.0
    %3385 = vmatprep.subr.mxu0 0.0
    %3386 = vmatpush1.msra.mxu0 0.0
    %3387 = vmatprep.subr.mxu0 0.0
    %3388 = vmatpush1.msra.mxu0 0.0
    %3389 = vmatprep.subr.mxu0 0.0
    %3390 = vmatpush1.msra.mxu0 0.0
    %3391 = vmatprep.subr.mxu0 0.0
    %3392 = vmatpush1.msra.mxu0 0.0
    %3393 = vmatprep.subr.mxu0 0.0
    %3394 = vmatpush1.msra.mxu0 0.0
    %3395 = vmatprep.mubr.f32.mxu0 0.0
    %3396 = vmatmul.mubr.f32.gmra.mrb[0].mxu0 %v2921
    %v3397 = vpop.f32.mrb[0].mxu0
    %v3398 = vadd.f32 0.0, %v3397
    %v3399 = vpop.f32.mrb[0].mxu0
    %3400 = vdwg.mxu0
    %v3401 = vadd.f32 %v3328, %v3398
    %v3402 = vxor.u32 %v3401, 2147483648
    %v3403 = vmul.f32 %v3402, 1.442695
    %v3404 = vpow.pop %v3403
    %v3405 = vadd.f32 %v3404, 1.0
    %v3406 = vrcp.pop %v3405
    %v3407 = vmul.f32 1.0, %v3406
    %v3408 = vadd.f32 %v3398, %v2893
    %3410 = vrot.lane.b32.xlu0 %v3408, 64
    %v3411 = vpop.permute.xlu0 %3410
    %v3413 = vmul.f32 %v3407, %v3411
    %3415 = vrot.lane.b32.xlu0 %v3413, 64
    %v3416 = vpop.permute.xlu0 %3415
    %v3418 = vadd.f32 %v3328, %v3416
    %v3419 = vtanh.pop %v3418
    %v3420 = vsub.f32 1.0, %v3407
    %3422 = vrot.lane.b32.xlu0 %v3419, 96
    %v3423 = vpop.permute.xlu0 %3422
    %v3425 = vmul.f32 %v3420, %v3423
    %v3426 = vmul.f32 %v3407, %v2917
    %v3427 = vadd.f32 %v3425, %v3426
    %3429 = vrot.lane.b32.xlu0 %v3427, 96
    %v3430 = vpop.permute.xlu0 %3429
    %v3431 = vsel %vm166, %v3430, 0
    %3433 = vmatprep.subr.mxu0 0.0
    %3434 = vmatpush1.msra.mxu0 %v91
    %3435 = vmatprep.subr.mxu0 0.0
    %3436 = vmatpush1.msra.mxu0 %v92
    %3437 = vmatprep.subr.mxu0 0.0
    %3438 = vmatpush1.msra.mxu0 %v93
    %3439 = vmatprep.subr.mxu0 0.0
    %3440 = vmatpush1.msra.mxu0 %v94
    %3441 = vmatprep.subr.mxu0 0.0
    %3442 = vmatpush1.msra.mxu0 0.0
    %3443 = vmatprep.subr.mxu0 0.0
    %3444 = vmatpush1.msra.mxu0 0.0
    %3445 = vmatprep.subr.mxu0 0.0
    %3446 = vmatpush1.msra.mxu0 0.0
    %3447 = vmatprep.subr.mxu0 0.0
    %3448 = vmatpush1.msra.mxu0 0.0
    %3449 = vmatprep.subr.mxu0 0.0
    %3450 = vmatpush1.msra.mxu0 0.0
    %3451 = vmatprep.subr.mxu0 0.0
    %3452 = vmatpush1.msra.mxu0 0.0
    %3453 = vmatprep.subr.mxu0 0.0
    %3454 = vmatpush1.msra.mxu0 0.0
    %3455 = vmatprep.subr.mxu0 0.0
    %3456 = vmatpush1.msra.mxu0 0.0
    %3457 = vmatprep.subr.mxu0 0.0
    %3458 = vmatpush1.msra.mxu0 0.0
    %3459 = vmatprep.subr.mxu0 0.0
    %3460 = vmatpush1.msra.mxu0 0.0
    %3461 = vmatprep.subr.mxu0 0.0
    %3462 = vmatpush1.msra.mxu0 0.0
    %3463 = vmatprep.subr.mxu0 0.0
    %3464 = vmatpush1.msra.mxu0 0.0
    %3465 = vmatprep.subr.mxu0 0.0
    %3466 = vmatpush1.msra.mxu0 0.0
    %3467 = vmatprep.subr.mxu0 0.0
    %3468 = vmatpush1.msra.mxu0 0.0
    %3469 = vmatprep.subr.mxu0 0.0
    %3470 = vmatpush1.msra.mxu0 0.0
    %3471 = vmatprep.subr.mxu0 0.0
    %3472 = vmatpush1.msra.mxu0 0.0
    %3473 = vmatprep.subr.mxu0 0.0
    %3474 = vmatpush1.msra.mxu0 0.0
    %3475 = vmatprep.subr.mxu0 0.0
    %3476 = vmatpush1.msra.mxu0 0.0
    %3477 = vmatprep.subr.mxu0 0.0
    %3478 = vmatpush1.msra.mxu0 0.0
    %3479 = vmatprep.subr.mxu0 0.0
    %3480 = vmatpush1.msra.mxu0 0.0
    %3481 = vmatprep.subr.mxu0 0.0
    %3482 = vmatpush1.msra.mxu0 0.0
    %3483 = vmatprep.subr.mxu0 0.0
    %3484 = vmatpush1.msra.mxu0 0.0
    %3485 = vmatprep.subr.mxu0 0.0
    %3486 = vmatpush1.msra.mxu0 0.0
    %3487 = vmatprep.subr.mxu0 0.0
    %3488 = vmatpush1.msra.mxu0 0.0
    %3489 = vmatprep.subr.mxu0 0.0
    %3490 = vmatpush1.msra.mxu0 0.0
    %3491 = vmatprep.subr.mxu0 0.0
    %3492 = vmatpush1.msra.mxu0 0.0
    %3493 = vmatprep.subr.mxu0 0.0
    %3494 = vmatpush1.msra.mxu0 0.0
    %3495 = vmatprep.subr.mxu0 0.0
    %3496 = vmatpush1.msra.mxu0 0.0
    %3497 = vmatprep.mubr.f32.mxu0 0.0
    %3498 = vmatmul.mubr.f32.gmra.mrb[0].mxu0 %v3431
    %v3499 = vpop.f32.mrb[0].mxu0
    %v3500 = vadd.f32 %v139, %v3499
    %v3501 = vpop.f32.mrb[0].mxu0
    %3502 = vdwg.mxu0
    %3503 = vmatprep.subr.mxu0 0.0
    %3504 = vmatpush1.msra.mxu0 %v95
    %3505 = vmatprep.subr.mxu0 0.0
    %3506 = vmatpush1.msra.mxu0 %v96
    %3507 = vmatprep.subr.mxu0 0.0
    %3508 = vmatpush1.msra.mxu0 %v97
    %3509 = vmatprep.subr.mxu0 0.0
    %3510 = vmatpush1.msra.mxu0 %v98
    %3511 = vmatprep.subr.mxu0 0.0
    %3512 = vmatpush1.msra.mxu0 0.0
    %3513 = vmatprep.subr.mxu0 0.0
    %3514 = vmatpush1.msra.mxu0 0.0
    %3515 = vmatprep.subr.mxu0 0.0
    %3516 = vmatpush1.msra.mxu0 0.0
    %3517 = vmatprep.subr.mxu0 0.0
    %3518 = vmatpush1.msra.mxu0 0.0
    %3519 = vmatprep.subr.mxu0 0.0
    %3520 = vmatpush1.msra.mxu0 0.0
    %3521 = vmatprep.subr.mxu0 0.0
    %3522 = vmatpush1.msra.mxu0 0.0
    %3523 = vmatprep.subr.mxu0 0.0
    %3524 = vmatpush1.msra.mxu0 0.0
    %3525 = vmatprep.subr.mxu0 0.0
    %3526 = vmatpush1.msra.mxu0 0.0
    %3527 = vmatprep.subr.mxu0 0.0
    %3528 = vmatpush1.msra.mxu0 0.0
    %3529 = vmatprep.subr.mxu0 0.0
    %3530 = vmatpush1.msra.mxu0 0.0
    %3531 = vmatprep.subr.mxu0 0.0
    %3532 = vmatpush1.msra.mxu0 0.0
    %3533 = vmatprep.subr.mxu0 0.0
    %3534 = vmatpush1.msra.mxu0 0.0
    %3535 = vmatprep.subr.mxu0 0.0
    %3536 = vmatpush1.msra.mxu0 0.0
    %3537 = vmatprep.subr.mxu0 0.0
    %3538 = vmatpush1.msra.mxu0 0.0
    %3539 = vmatprep.subr.mxu0 0.0
    %3540 = vmatpush1.msra.mxu0 0.0
    %3541 = vmatprep.subr.mxu0 0.0
    %3542 = vmatpush1.msra.mxu0 0.0
    %3543 = vmatprep.subr.mxu0 0.0
    %3544 = vmatpush1.msra.mxu0 0.0
    %3545 = vmatprep.subr.mxu0 0.0
    %3546 = vmatpush1.msra.mxu0 0.0
    %3547 = vmatprep.subr.mxu0 0.0
    %3548 = vmatpush1.msra.mxu0 0.0
    %3549 = vmatprep.subr.mxu0 0.0
    %3550 = vmatpush1.msra.mxu0 0.0
    %3551 = vmatprep.subr.mxu0 0.0
    %3552 = vmatpush1.msra.mxu0 0.0
    %3553 = vmatprep.subr.mxu0 0.0
    %3554 = vmatpush1.msra.mxu0 0.0
    %3555 = vmatprep.subr.mxu0 0.0
    %3556 = vmatpush1.msra.mxu0 0.0
    %3557 = vmatprep.subr.mxu0 0.0
    %3558 = vmatpush1.msra.mxu0 0.0
    %3559 = vmatprep.subr.mxu0 0.0
    %3560 = vmatpush1.msra.mxu0 0.0
    %3561 = vmatprep.subr.mxu0 0.0
    %3562 = vmatpush1.msra.mxu0 0.0
    %3563 = vmatprep.subr.mxu0 0.0
    %3564 = vmatpush1.msra.mxu0 0.0
    %3565 = vmatprep.subr.mxu0 0.0
    %3566 = vmatpush1.msra.mxu0 0.0
    %3567 = vmatprep.mubr.f32.mxu0 0.0
    %3568 = vmatmul.mubr.f32.gmra.mrb[0].mxu0 %v3101
    %v3569 = vpop.f32.mrb[0].mxu0
    %v3570 = vadd.f32 0.0, %v3569
    %v3571 = vpop.f32.mrb[0].mxu0
    %3572 = vdwg.mxu0
    %v3573 = vadd.f32 %v3500, %v3570
    %v3574 = vxor.u32 %v3573, 2147483648
    %v3575 = vmul.f32 %v3574, 1.442695
    %v3576 = vpow.pop %v3575
    %v3577 = vadd.f32 %v3576, 1.0
    %v3578 = vrcp.pop %v3577
    %v3579 = vmul.f32 1.0, %v3578
    %v3580 = vadd.f32 %v3570, %v3076
    %3582 = vrot.lane.b32.xlu0 %v3580, 64
    %v3583 = vpop.permute.xlu0 %3582
    %v3585 = vmul.f32 %v3579, %v3583
    %3587 = vrot.lane.b32.xlu0 %v3585, 64
    %v3588 = vpop.permute.xlu0 %3587
    %v3590 = vadd.f32 %v3500, %v3588
    %v3591 = vtanh.pop %v3590
    %v3592 = vsub.f32 1.0, %v3579
    %3594 = vrot.lane.b32.xlu0 %v3591, 96
    %v3595 = vpop.permute.xlu0 %3594
    %v3597 = vmul.f32 %v3592, %v3595
    %v3598 = vmul.f32 %v3579, %v3097
    %v3599 = vadd.f32 %v3597, %v3598
    %3601 = vrot.lane.b32.xlu0 %v3599, 96
    %v3602 = vpop.permute.xlu0 %3601
    %v3603 = vsel %vm166, %v3602, 0
    %3605 = vmatprep.subr.mxu0 0.0
    %3606 = vmatpush1.msra.mxu0 %v125
    %3607 = vmatprep.subr.mxu0 0.0
    %3608 = vmatpush1.msra.mxu0 %v126
    %3609 = vmatprep.subr.mxu0 0.0
    %3610 = vmatpush1.msra.mxu0 %v127
    %3611 = vmatprep.subr.mxu0 0.0
    %3612 = vmatpush1.msra.mxu0 %v128
    %3613 = vmatprep.subr.mxu0 0.0
    %3614 = vmatpush1.msra.mxu0 0.0
    %3615 = vmatprep.subr.mxu0 0.0
    %3616 = vmatpush1.msra.mxu0 0.0
    %3617 = vmatprep.subr.mxu0 0.0
    %3618 = vmatpush1.msra.mxu0 0.0
    %3619 = vmatprep.subr.mxu0 0.0
    %3620 = vmatpush1.msra.mxu0 0.0
    %3621 = vmatprep.subr.mxu0 0.0
    %3622 = vmatpush1.msra.mxu0 0.0
    %3623 = vmatprep.subr.mxu0 0.0
    %3624 = vmatpush1.msra.mxu0 0.0
    %3625 = vmatprep.subr.mxu0 0.0
    %3626 = vmatpush1.msra.mxu0 0.0
    %3627 = vmatprep.subr.mxu0 0.0
    %3628 = vmatpush1.msra.mxu0 0.0
    %3629 = vmatprep.subr.mxu0 0.0
    %3630 = vmatpush1.msra.mxu0 0.0
    %3631 = vmatprep.subr.mxu0 0.0
    %3632 = vmatpush1.msra.mxu0 0.0
    %3633 = vmatprep.subr.mxu0 0.0
    %3634 = vmatpush1.msra.mxu0 0.0
    %3635 = vmatprep.subr.mxu0 0.0
    %3636 = vmatpush1.msra.mxu0 0.0
    %3637 = vmatprep.subr.mxu0 0.0
    %3638 = vmatpush1.msra.mxu0 0.0
    %3639 = vmatprep.subr.mxu0 0.0
    %3640 = vmatpush1.msra.mxu0 0.0
    %3641 = vmatprep.subr.mxu0 0.0
    %3642 = vmatpush1.msra.mxu0 0.0
    %3643 = vmatprep.subr.mxu0 0.0
    %3644 = vmatpush1.msra.mxu0 0.0
    %3645 = vmatprep.subr.mxu0 0.0
    %3646 = vmatpush1.msra.mxu0 0.0
    %3647 = vmatprep.subr.mxu0 0.0
    %3648 = vmatpush1.msra.mxu0 0.0
    %3649 = vmatprep.subr.mxu0 0.0
    %3650 = vmatpush1.msra.mxu0 0.0
    %3651 = vmatprep.subr.mxu0 0.0
    %3652 = vmatpush1.msra.mxu0 0.0
    %3653 = vmatprep.subr.mxu0 0.0
    %3654 = vmatpush1.msra.mxu0 0.0
    %3655 = vmatprep.subr.mxu0 0.0
    %3656 = vmatpush1.msra.mxu0 0.0
    %3657 = vmatprep.subr.mxu0 0.0
    %3658 = vmatpush1.msra.mxu0 0.0
    %3659 = vmatprep.subr.mxu0 0.0
    %3660 = vmatpush1.msra.mxu0 0.0
    %3661 = vmatprep.subr.mxu0 0.0
    %3662 = vmatpush1.msra.mxu0 0.0
    %3663 = vmatprep.subr.mxu0 0.0
    %3664 = vmatpush1.msra.mxu0 0.0
    %3665 = vmatprep.subr.mxu0 0.0
    %3666 = vmatpush1.msra.mxu0 0.0
    %3667 = vmatprep.subr.mxu0 0.0
    %3668 = vmatpush1.msra.mxu0 0.0
    %3669 = vmatprep.mubr.f32.mxu0 0.0
    %3670 = vmatmul.mubr.f32.gmra.mrb[0].mxu0 %v3603
    %v3671 = vpop.f32.mrb[0].mxu0
    %v3672 = vadd.f32 %v145, %v3671
    %v3673 = vpop.f32.mrb[0].mxu0
    %3674 = vdwg.mxu0
    %vm3675 = vcmp.gt.f32.partialorder %v3672, 0.0
    %v3676 = vmul.f32 %v3672, 0.01
    %v3677 = vsel %vm3675, %v3672, %v3676
    %v3679 = vsel %vm3176, %v3677, 0
    %3681 = vmatprep.subr.mxu0 0.0
    %3682 = vmatpush1.msra.mxu0 %v129
    %3683 = vmatprep.subr.mxu0 0.0
    %3684 = vmatpush1.msra.mxu0 %v130
    %3685 = vmatprep.subr.mxu0 0.0
    %3686 = vmatpush1.msra.mxu0 %v131
    %3687 = vmatprep.subr.mxu0 0.0
    %3688 = vmatpush1.msra.mxu0 0.0
    %3689 = vmatprep.subr.mxu0 0.0
    %3690 = vmatpush1.msra.mxu0 0.0
    %3691 = vmatprep.subr.mxu0 0.0
    %3692 = vmatpush1.msra.mxu0 0.0
    %3693 = vmatprep.subr.mxu0 0.0
    %3694 = vmatpush1.msra.mxu0 0.0
    %3695 = vmatprep.subr.mxu0 0.0
    %3696 = vmatpush1.msra.mxu0 0.0
    %3697 = vmatprep.subr.mxu0 0.0
    %3698 = vmatpush1.msra.mxu0 0.0
    %3699 = vmatprep.subr.mxu0 0.0
    %3700 = vmatpush1.msra.mxu0 0.0
    %3701 = vmatprep.subr.mxu0 0.0
    %3702 = vmatpush1.msra.mxu0 0.0
    %3703 = vmatprep.subr.mxu0 0.0
    %3704 = vmatpush1.msra.mxu0 0.0
    %3705 = vmatprep.subr.mxu0 0.0
    %3706 = vmatpush1.msra.mxu0 0.0
    %3707 = vmatprep.subr.mxu0 0.0
    %3708 = vmatpush1.msra.mxu0 0.0
    %3709 = vmatprep.subr.mxu0 0.0
    %3710 = vmatpush1.msra.mxu0 0.0
    %3711 = vmatprep.subr.mxu0 0.0
    %3712 = vmatpush1.msra.mxu0 0.0
    %3713 = vmatprep.subr.mxu0 0.0
    %3714 = vmatpush1.msra.mxu0 0.0
    %3715 = vmatprep.subr.mxu0 0.0
    %3716 = vmatpush1.msra.mxu0 0.0
    %3717 = vmatprep.subr.mxu0 0.0
    %3718 = vmatpush1.msra.mxu0 0.0
    %3719 = vmatprep.subr.mxu0 0.0
    %3720 = vmatpush1.msra.mxu0 0.0
    %3721 = vmatprep.subr.mxu0 0.0
    %3722 = vmatpush1.msra.mxu0 0.0
    %3723 = vmatprep.subr.mxu0 0.0
    %3724 = vmatpush1.msra.mxu0 0.0
    %3725 = vmatprep.subr.mxu0 0.0
    %3726 = vmatpush1.msra.mxu0 0.0
    %3727 = vmatprep.subr.mxu0 0.0
    %3728 = vmatpush1.msra.mxu0 0.0
    %3729 = vmatprep.subr.mxu0 0.0
    %3730 = vmatpush1.msra.mxu0 0.0
    %3731 = vmatprep.subr.mxu0 0.0
    %3732 = vmatpush1.msra.mxu0 0.0
    %3733 = vmatprep.subr.mxu0 0.0
    %3734 = vmatpush1.msra.mxu0 0.0
    %3735 = vmatprep.subr.mxu0 0.0
    %3736 = vmatpush1.msra.mxu0 0.0
    %3737 = vmatprep.subr.mxu0 0.0
    %3738 = vmatpush1.msra.mxu0 0.0
    %3739 = vmatprep.subr.mxu0 0.0
    %3740 = vmatpush1.msra.mxu0 0.0
    %3741 = vmatprep.subr.mxu0 0.0
    %3742 = vmatpush1.msra.mxu0 0.0
    %3743 = vmatprep.subr.mxu0 0.0
    %3744 = vmatpush1.msra.mxu0 0.0
    %3745 = vmatprep.mubr.f32.mxu0 0.0
    %3746 = vmatmul.mubr.f32.gmra.mrb[0].mxu0 %v3679
    %v3747 = vpop.f32.mrb[0].mxu0
    %v3748 = vadd.f32 %v146, %v3747
    %v3749 = vpop.f32.mrb[0].mxu0
    %3750 = vdwg.mxu0
    %v3751 = vxor.u32 %v3748, 2147483648
    %v3752 = vmul.f32 %v3751, 1.442695
    %v3753 = vpow.pop %v3752
    %v3754 = vadd.f32 %v3753, 1.0
    %v3755 = vrcp.pop %v3754
    %v3756 = vmul.f32 1.0, %v3755
    %s3757 = scalar_lea.vmem %s6, 16
    %3758 = vst.msk [vmem:[%s3757] sm:$0xff] %vm2554, %v3756
    %v3760 = vsel %vm2554, %v3756, 0
    %3762 = vmatprep.subr.mxu0 0.0
    %3763 = vmatpush1.msra.mxu0 %v85
    %3764 = vmatprep.subr.mxu0 0.0
    %3765 = vmatpush1.msra.mxu0 %v86
    %3766 = vmatprep.subr.mxu0 0.0
    %3767 = vmatpush1.msra.mxu0 0.0
    %3768 = vmatprep.subr.mxu0 0.0
    %3769 = vmatpush1.msra.mxu0 0.0
    %3770 = vmatprep.subr.mxu0 0.0
    %3771 = vmatpush1.msra.mxu0 0.0
    %3772 = vmatprep.subr.mxu0 0.0
    %3773 = vmatpush1.msra.mxu0 0.0
    %3774 = vmatprep.subr.mxu0 0.0
    %3775 = vmatpush1.msra.mxu0 0.0
    %3776 = vmatprep.subr.mxu0 0.0
    %3777 = vmatpush1.msra.mxu0 0.0
    %3778 = vmatprep.subr.mxu0 0.0
    %3779 = vmatpush1.msra.mxu0 0.0
    %3780 = vmatprep.subr.mxu0 0.0
    %3781 = vmatpush1.msra.mxu0 0.0
    %3782 = vmatprep.subr.mxu0 0.0
    %3783 = vmatpush1.msra.mxu0 0.0
    %3784 = vmatprep.subr.mxu0 0.0
    %3785 = vmatpush1.msra.mxu0 0.0
    %3786 = vmatprep.subr.mxu0 0.0
    %3787 = vmatpush1.msra.mxu0 0.0
    %3788 = vmatprep.subr.mxu0 0.0
    %3789 = vmatpush1.msra.mxu0 0.0
    %3790 = vmatprep.subr.mxu0 0.0
    %3791 = vmatpush1.msra.mxu0 0.0
    %3792 = vmatprep.subr.mxu0 0.0
    %3793 = vmatpush1.msra.mxu0 0.0
    %3794 = vmatprep.subr.mxu0 0.0
    %3795 = vmatpush1.msra.mxu0 0.0
    %3796 = vmatprep.subr.mxu0 0.0
    %3797 = vmatpush1.msra.mxu0 0.0
    %3798 = vmatprep.subr.mxu0 0.0
    %3799 = vmatpush1.msra.mxu0 0.0
    %3800 = vmatprep.subr.mxu0 0.0
    %3801 = vmatpush1.msra.mxu0 0.0
    %3802 = vmatprep.subr.mxu0 0.0
    %3803 = vmatpush1.msra.mxu0 0.0
    %3804 = vmatprep.subr.mxu0 0.0
    %3805 = vmatpush1.msra.mxu0 0.0
    %3806 = vmatprep.subr.mxu0 0.0
    %3807 = vmatpush1.msra.mxu0 0.0
    %3808 = vmatprep.subr.mxu0 0.0
    %3809 = vmatpush1.msra.mxu0 0.0
    %3810 = vmatprep.subr.mxu0 0.0
    %3811 = vmatpush1.msra.mxu0 0.0
    %3812 = vmatprep.subr.mxu0 0.0
    %3813 = vmatpush1.msra.mxu0 0.0
    %3814 = vmatprep.subr.mxu0 0.0
    %3815 = vmatpush1.msra.mxu0 0.0
    %3816 = vmatprep.subr.mxu0 0.0
    %3817 = vmatpush1.msra.mxu0 0.0
    %3818 = vmatprep.subr.mxu0 0.0
    %3819 = vmatpush1.msra.mxu0 0.0
    %3820 = vmatprep.subr.mxu0 0.0
    %3821 = vmatpush1.msra.mxu0 0.0
    %3822 = vmatprep.subr.mxu0 0.0
    %3823 = vmatpush1.msra.mxu0 0.0
    %3824 = vmatprep.subr.mxu0 0.0
    %3825 = vmatpush1.msra.mxu0 0.0
    %3826 = vmatprep.mubr.f32.mxu0 0.0
    %3827 = vmatmul.mubr.f32.gmra.mrb[0].mxu0 %v3760
    %v3828 = vpop.f32.mrb[0].mxu0
    %v3829 = vadd.f32 %v137, %v3828
    %v3830 = vpop.f32.mrb[0].mxu0
    %3831 = vdwg.mxu0
    %3832 = vmatprep.subr.mxu0 0.0
    %3833 = vmatpush1.msra.mxu0 %v87
    %3834 = vmatprep.subr.mxu0 0.0
    %3835 = vmatpush1.msra.mxu0 %v88
    %3836 = vmatprep.subr.mxu0 0.0
    %3837 = vmatpush1.msra.mxu0 %v89
    %3838 = vmatprep.subr.mxu0 0.0
    %3839 = vmatpush1.msra.mxu0 %v90
    %3840 = vmatprep.subr.mxu0 0.0
    %3841 = vmatpush1.msra.mxu0 0.0
    %3842 = vmatprep.subr.mxu0 0.0
    %3843 = vmatpush1.msra.mxu0 0.0
    %3844 = vmatprep.subr.mxu0 0.0
    %3845 = vmatpush1.msra.mxu0 0.0
    %3846 = vmatprep.subr.mxu0 0.0
    %3847 = vmatpush1.msra.mxu0 0.0
    %3848 = vmatprep.subr.mxu0 0.0
    %3849 = vmatpush1.msra.mxu0 0.0
    %3850 = vmatprep.subr.mxu0 0.0
    %3851 = vmatpush1.msra.mxu0 0.0
    %3852 = vmatprep.subr.mxu0 0.0
    %3853 = vmatpush1.msra.mxu0 0.0
    %3854 = vmatprep.subr.mxu0 0.0
    %3855 = vmatpush1.msra.mxu0 0.0
    %3856 = vmatprep.subr.mxu0 0.0
    %3857 = vmatpush1.msra.mxu0 0.0
    %3858 = vmatprep.subr.mxu0 0.0
    %3859 = vmatpush1.msra.mxu0 0.0
    %3860 = vmatprep.subr.mxu0 0.0
    %3861 = vmatpush1.msra.mxu0 0.0
    %3862 = vmatprep.subr.mxu0 0.0
    %3863 = vmatpush1.msra.mxu0 0.0
    %3864 = vmatprep.subr.mxu0 0.0
    %3865 = vmatpush1.msra.mxu0 0.0
    %3866 = vmatprep.subr.mxu0 0.0
    %3867 = vmatpush1.msra.mxu0 0.0
    %3868 = vmatprep.subr.mxu0 0.0
    %3869 = vmatpush1.msra.mxu0 0.0
    %3870 = vmatprep.subr.mxu0 0.0
    %3871 = vmatpush1.msra.mxu0 0.0
    %3872 = vmatprep.subr.mxu0 0.0
    %3873 = vmatpush1.msra.mxu0 0.0
    %3874 = vmatprep.subr.mxu0 0.0
    %3875 = vmatpush1.msra.mxu0 0.0
    %3876 = vmatprep.subr.mxu0 0.0
    %3877 = vmatpush1.msra.mxu0 0.0
    %3878 = vmatprep.subr.mxu0 0.0
    %3879 = vmatpush1.msra.mxu0 0.0
    %3880 = vmatprep.subr.mxu0 0.0
    %3881 = vmatpush1.msra.mxu0 0.0
    %3882 = vmatprep.subr.mxu0 0.0
    %3883 = vmatpush1.msra.mxu0 0.0
    %3884 = vmatprep.subr.mxu0 0.0
    %3885 = vmatpush1.msra.mxu0 0.0
    %3886 = vmatprep.subr.mxu0 0.0
    %3887 = vmatpush1.msra.mxu0 0.0
    %3888 = vmatprep.subr.mxu0 0.0
    %3889 = vmatpush1.msra.mxu0 0.0
    %3890 = vmatprep.subr.mxu0 0.0
    %3891 = vmatpush1.msra.mxu0 0.0
    %3892 = vmatprep.subr.mxu0 0.0
    %3893 = vmatpush1.msra.mxu0 0.0
    %3894 = vmatprep.subr.mxu0 0.0
    %3895 = vmatpush1.msra.mxu0 0.0
    %3896 = vmatprep.mubr.f32.mxu0 0.0
    %3897 = vmatmul.mubr.f32.gmra.mrb[0].mxu0 %v3431
    %v3898 = vpop.f32.mrb[0].mxu0
    %v3899 = vadd.f32 0.0, %v3898
    %v3900 = vpop.f32.mrb[0].mxu0
    %3901 = vdwg.mxu0
    %v3902 = vadd.f32 %v3829, %v3899
    %v3903 = vxor.u32 %v3902, 2147483648
    %v3904 = vmul.f32 %v3903, 1.442695
    %v3905 = vpow.pop %v3904
    %v3906 = vadd.f32 %v3905, 1.0
    %v3907 = vrcp.pop %v3906
    %v3908 = vmul.f32 1.0, %v3907
    %v3909 = vadd.f32 %v3899, %v2893
    %3911 = vrot.lane.b32.xlu0 %v3909, 64
    %v3912 = vpop.permute.xlu0 %3911
    %v3914 = vmul.f32 %v3908, %v3912
    %3916 = vrot.lane.b32.xlu0 %v3914, 64
    %v3917 = vpop.permute.xlu0 %3916
    %v3919 = vadd.f32 %v3829, %v3917
    %v3920 = vtanh.pop %v3919
    %v3921 = vsub.f32 1.0, %v3908
    %3923 = vrot.lane.b32.xlu0 %v3920, 96
    %v3924 = vpop.permute.xlu0 %3923
    %v3926 = vmul.f32 %v3921, %v3924
    %v3927 = vmul.f32 %v3908, %v3427
    %v3928 = vadd.f32 %v3926, %v3927
    %3930 = vrot.lane.b32.xlu0 %v3928, 96
    %v3931 = vpop.permute.xlu0 %3930
    %v3932 = vsel %vm166, %v3931, 0
    %3934 = vmatprep.subr.mxu0 0.0
    %3935 = vmatpush1.msra.mxu0 %v91
    %3936 = vmatprep.subr.mxu0 0.0
    %3937 = vmatpush1.msra.mxu0 %v92
    %3938 = vmatprep.subr.mxu0 0.0
    %3939 = vmatpush1.msra.mxu0 %v93
    %3940 = vmatprep.subr.mxu0 0.0
    %3941 = vmatpush1.msra.mxu0 %v94
    %3942 = vmatprep.subr.mxu0 0.0
    %3943 = vmatpush1.msra.mxu0 0.0
    %3944 = vmatprep.subr.mxu0 0.0
    %3945 = vmatpush1.msra.mxu0 0.0
    %3946 = vmatprep.subr.mxu0 0.0
    %3947 = vmatpush1.msra.mxu0 0.0
    %3948 = vmatprep.subr.mxu0 0.0
    %3949 = vmatpush1.msra.mxu0 0.0
    %3950 = vmatprep.subr.mxu0 0.0
    %3951 = vmatpush1.msra.mxu0 0.0
    %3952 = vmatprep.subr.mxu0 0.0
    %3953 = vmatpush1.msra.mxu0 0.0
    %3954 = vmatprep.subr.mxu0 0.0
    %3955 = vmatpush1.msra.mxu0 0.0
    %3956 = vmatprep.subr.mxu0 0.0
    %3957 = vmatpush1.msra.mxu0 0.0
    %3958 = vmatprep.subr.mxu0 0.0
    %3959 = vmatpush1.msra.mxu0 0.0
    %3960 = vmatprep.subr.mxu0 0.0
    %3961 = vmatpush1.msra.mxu0 0.0
    %3962 = vmatprep.subr.mxu0 0.0
    %3963 = vmatpush1.msra.mxu0 0.0
    %3964 = vmatprep.subr.mxu0 0.0
    %3965 = vmatpush1.msra.mxu0 0.0
    %3966 = vmatprep.subr.mxu0 0.0
    %3967 = vmatpush1.msra.mxu0 0.0
    %3968 = vmatprep.subr.mxu0 0.0
    %3969 = vmatpush1.msra.mxu0 0.0
    %3970 = vmatprep.subr.mxu0 0.0
    %3971 = vmatpush1.msra.mxu0 0.0
    %3972 = vmatprep.subr.mxu0 0.0
    %3973 = vmatpush1.msra.mxu0 0.0
    %3974 = vmatprep.subr.mxu0 0.0
    %3975 = vmatpush1.msra.mxu0 0.0
    %3976 = vmatprep.subr.mxu0 0.0
    %3977 = vmatpush1.msra.mxu0 0.0
    %3978 = vmatprep.subr.mxu0 0.0
    %3979 = vmatpush1.msra.mxu0 0.0
    %3980 = vmatprep.subr.mxu0 0.0
    %3981 = vmatpush1.msra.mxu0 0.0
    %3982 = vmatprep.subr.mxu0 0.0
    %3983 = vmatpush1.msra.mxu0 0.0
    %3984 = vmatprep.subr.mxu0 0.0
    %3985 = vmatpush1.msra.mxu0 0.0
    %3986 = vmatprep.subr.mxu0 0.0
    %3987 = vmatpush1.msra.mxu0 0.0
    %3988 = vmatprep.subr.mxu0 0.0
    %3989 = vmatpush1.msra.mxu0 0.0
    %3990 = vmatprep.subr.mxu0 0.0
    %3991 = vmatpush1.msra.mxu0 0.0
    %3992 = vmatprep.subr.mxu0 0.0
    %3993 = vmatpush1.msra.mxu0 0.0
    %3994 = vmatprep.subr.mxu0 0.0
    %3995 = vmatpush1.msra.mxu0 0.0
    %3996 = vmatprep.subr.mxu0 0.0
    %3997 = vmatpush1.msra.mxu0 0.0
    %3998 = vmatprep.mubr.f32.mxu0 0.0
    %3999 = vmatmul.mubr.f32.gmra.mrb[0].mxu0 %v3932
    %v4000 = vpop.f32.mrb[0].mxu0
    %v4001 = vadd.f32 %v139, %v4000
    %v4002 = vpop.f32.mrb[0].mxu0
    %4003 = vdwg.mxu0
    %4004 = vmatprep.subr.mxu0 0.0
    %4005 = vmatpush1.msra.mxu0 %v95
    %4006 = vmatprep.subr.mxu0 0.0
    %4007 = vmatpush1.msra.mxu0 %v96
    %4008 = vmatprep.subr.mxu0 0.0
    %4009 = vmatpush1.msra.mxu0 %v97
    %4010 = vmatprep.subr.mxu0 0.0
    %4011 = vmatpush1.msra.mxu0 %v98
    %4012 = vmatprep.subr.mxu0 0.0
    %4013 = vmatpush1.msra.mxu0 0.0
    %4014 = vmatprep.subr.mxu0 0.0
    %4015 = vmatpush1.msra.mxu0 0.0
    %4016 = vmatprep.subr.mxu0 0.0
    %4017 = vmatpush1.msra.mxu0 0.0
    %4018 = vmatprep.subr.mxu0 0.0
    %4019 = vmatpush1.msra.mxu0 0.0
    %4020 = vmatprep.subr.mxu0 0.0
    %4021 = vmatpush1.msra.mxu0 0.0
    %4022 = vmatprep.subr.mxu0 0.0
    %4023 = vmatpush1.msra.mxu0 0.0
    %4024 = vmatprep.subr.mxu0 0.0
    %4025 = vmatpush1.msra.mxu0 0.0
    %4026 = vmatprep.subr.mxu0 0.0
    %4027 = vmatpush1.msra.mxu0 0.0
    %4028 = vmatprep.subr.mxu0 0.0
    %4029 = vmatpush1.msra.mxu0 0.0
    %4030 = vmatprep.subr.mxu0 0.0
    %4031 = vmatpush1.msra.mxu0 0.0
    %4032 = vmatprep.subr.mxu0 0.0
    %4033 = vmatpush1.msra.mxu0 0.0
    %4034 = vmatprep.subr.mxu0 0.0
    %4035 = vmatpush1.msra.mxu0 0.0
    %4036 = vmatprep.subr.mxu0 0.0
    %4037 = vmatpush1.msra.mxu0 0.0
    %4038 = vmatprep.subr.mxu0 0.0
    %4039 = vmatpush1.msra.mxu0 0.0
    %4040 = vmatprep.subr.mxu0 0.0
    %4041 = vmatpush1.msra.mxu0 0.0
    %4042 = vmatprep.subr.mxu0 0.0
    %4043 = vmatpush1.msra.mxu0 0.0
    %4044 = vmatprep.subr.mxu0 0.0
    %4045 = vmatpush1.msra.mxu0 0.0
    %4046 = vmatprep.subr.mxu0 0.0
    %4047 = vmatpush1.msra.mxu0 0.0
    %4048 = vmatprep.subr.mxu0 0.0
    %4049 = vmatpush1.msra.mxu0 0.0
    %4050 = vmatprep.subr.mxu0 0.0
    %4051 = vmatpush1.msra.mxu0 0.0
    %4052 = vmatprep.subr.mxu0 0.0
    %4053 = vmatpush1.msra.mxu0 0.0
    %4054 = vmatprep.subr.mxu0 0.0
    %4055 = vmatpush1.msra.mxu0 0.0
    %4056 = vmatprep.subr.mxu0 0.0
    %4057 = vmatpush1.msra.mxu0 0.0
    %4058 = vmatprep.subr.mxu0 0.0
    %4059 = vmatpush1.msra.mxu0 0.0
    %4060 = vmatprep.subr.mxu0 0.0
    %4061 = vmatpush1.msra.mxu0 0.0
    %4062 = vmatprep.subr.mxu0 0.0
    %4063 = vmatpush1.msra.mxu0 0.0
    %4064 = vmatprep.subr.mxu0 0.0
    %4065 = vmatpush1.msra.mxu0 0.0
    %4066 = vmatprep.subr.mxu0 0.0
    %4067 = vmatpush1.msra.mxu0 0.0
    %4068 = vmatprep.mubr.f32.mxu0 0.0
    %4069 = vmatmul.mubr.f32.gmra.mrb[0].mxu0 %v3603
    %v4070 = vpop.f32.mrb[0].mxu0
    %v4071 = vadd.f32 0.0, %v4070
    %v4072 = vpop.f32.mrb[0].mxu0
    %4073 = vdwg.mxu0
    %v4074 = vadd.f32 %v4001, %v4071
    %v4075 = vxor.u32 %v4074, 2147483648
    %v4076 = vmul.f32 %v4075, 1.442695
    %v4077 = vpow.pop %v4076
    %v4078 = vadd.f32 %v4077, 1.0
    %v4079 = vrcp.pop %v4078
    %v4080 = vmul.f32 1.0, %v4079
    %v4081 = vadd.f32 %v4071, %v3076
    %4083 = vrot.lane.b32.xlu0 %v4081, 64
    %v4084 = vpop.permute.xlu0 %4083
    %v4086 = vmul.f32 %v4080, %v4084
    %4088 = vrot.lane.b32.xlu0 %v4086, 64
    %v4089 = vpop.permute.xlu0 %4088
    %v4091 = vadd.f32 %v4001, %v4089
    %v4092 = vtanh.pop %v4091
    %v4093 = vsub.f32 1.0, %v4080
    %4095 = vrot.lane.b32.xlu0 %v4092, 96
    %v4096 = vpop.permute.xlu0 %4095
    %v4098 = vmul.f32 %v4093, %v4096
    %v4099 = vmul.f32 %v4080, %v3599
    %v4100 = vadd.f32 %v4098, %v4099
    %4102 = vrot.lane.b32.xlu0 %v4100, 96
    %v4103 = vpop.permute.xlu0 %4102
    %v4104 = vsel %vm166, %v4103, 0
    %4106 = vmatprep.subr.mxu0 0.0
    %4107 = vmatpush1.msra.mxu0 %v125
    %4108 = vmatprep.subr.mxu0 0.0
    %4109 = vmatpush1.msra.mxu0 %v126
    %4110 = vmatprep.subr.mxu0 0.0
    %4111 = vmatpush1.msra.mxu0 %v127
    %4112 = vmatprep.subr.mxu0 0.0
    %4113 = vmatpush1.msra.mxu0 %v128
    %4114 = vmatprep.subr.mxu0 0.0
    %4115 = vmatpush1.msra.mxu0 0.0
    %4116 = vmatprep.subr.mxu0 0.0
    %4117 = vmatpush1.msra.mxu0 0.0
    %4118 = vmatprep.subr.mxu0 0.0
    %4119 = vmatpush1.msra.mxu0 0.0
    %4120 = vmatprep.subr.mxu0 0.0
    %4121 = vmatpush1.msra.mxu0 0.0
    %4122 = vmatprep.subr.mxu0 0.0
    %4123 = vmatpush1.msra.mxu0 0.0
    %4124 = vmatprep.subr.mxu0 0.0
    %4125 = vmatpush1.msra.mxu0 0.0
    %4126 = vmatprep.subr.mxu0 0.0
    %4127 = vmatpush1.msra.mxu0 0.0
    %4128 = vmatprep.subr.mxu0 0.0
    %4129 = vmatpush1.msra.mxu0 0.0
    %4130 = vmatprep.subr.mxu0 0.0
    %4131 = vmatpush1.msra.mxu0 0.0
    %4132 = vmatprep.subr.mxu0 0.0
    %4133 = vmatpush1.msra.mxu0 0.0
    %4134 = vmatprep.subr.mxu0 0.0
    %4135 = vmatpush1.msra.mxu0 0.0
    %4136 = vmatprep.subr.mxu0 0.0
    %4137 = vmatpush1.msra.mxu0 0.0
    %4138 = vmatprep.subr.mxu0 0.0
    %4139 = vmatpush1.msra.mxu0 0.0
    %4140 = vmatprep.subr.mxu0 0.0
    %4141 = vmatpush1.msra.mxu0 0.0
    %4142 = vmatprep.subr.mxu0 0.0
    %4143 = vmatpush1.msra.mxu0 0.0
    %4144 = vmatprep.subr.mxu0 0.0
    %4145 = vmatpush1.msra.mxu0 0.0
    %4146 = vmatprep.subr.mxu0 0.0
    %4147 = vmatpush1.msra.mxu0 0.0
    %4148 = vmatprep.subr.mxu0 0.0
    %4149 = vmatpush1.msra.mxu0 0.0
    %4150 = vmatprep.subr.mxu0 0.0
    %4151 = vmatpush1.msra.mxu0 0.0
    %4152 = vmatprep.subr.mxu0 0.0
    %4153 = vmatpush1.msra.mxu0 0.0
    %4154 = vmatprep.subr.mxu0 0.0
    %4155 = vmatpush1.msra.mxu0 0.0
    %4156 = vmatprep.subr.mxu0 0.0
    %4157 = vmatpush1.msra.mxu0 0.0
    %4158 = vmatprep.subr.mxu0 0.0
    %4159 = vmatpush1.msra.mxu0 0.0
    %4160 = vmatprep.subr.mxu0 0.0
    %4161 = vmatpush1.msra.mxu0 0.0
    %4162 = vmatprep.subr.mxu0 0.0
    %4163 = vmatpush1.msra.mxu0 0.0
    %4164 = vmatprep.subr.mxu0 0.0
    %4165 = vmatpush1.msra.mxu0 0.0
    %4166 = vmatprep.subr.mxu0 0.0
    %4167 = vmatpush1.msra.mxu0 0.0
    %4168 = vmatprep.subr.mxu0 0.0
    %4169 = vmatpush1.msra.mxu0 0.0
    %4170 = vmatprep.mubr.f32.mxu0 0.0
    %4171 = vmatmul.mubr.f32.gmra.mrb[0].mxu0 %v4104
    %v4172 = vpop.f32.mrb[0].mxu0
    %v4173 = vadd.f32 %v145, %v4172
    %v4174 = vpop.f32.mrb[0].mxu0
    %4175 = vdwg.mxu0
    %vm4176 = vcmp.gt.f32.partialorder %v4173, 0.0
    %v4177 = vmul.f32 %v4173, 0.01
    %v4178 = vsel %vm4176, %v4173, %v4177
    %v4180 = vsel %vm3176, %v4178, 0
    %4182 = vmatprep.subr.mxu0 0.0
    %4183 = vmatpush1.msra.mxu0 %v129
    %4184 = vmatprep.subr.mxu0 0.0
    %4185 = vmatpush1.msra.mxu0 %v130
    %4186 = vmatprep.subr.mxu0 0.0
    %4187 = vmatpush1.msra.mxu0 %v131
    %4188 = vmatprep.subr.mxu0 0.0
    %4189 = vmatpush1.msra.mxu0 0.0
    %4190 = vmatprep.subr.mxu0 0.0
    %4191 = vmatpush1.msra.mxu0 0.0
    %4192 = vmatprep.subr.mxu0 0.0
    %4193 = vmatpush1.msra.mxu0 0.0
    %4194 = vmatprep.subr.mxu0 0.0
    %4195 = vmatpush1.msra.mxu0 0.0
    %4196 = vmatprep.subr.mxu0 0.0
    %4197 = vmatpush1.msra.mxu0 0.0
    %4198 = vmatprep.subr.mxu0 0.0
    %4199 = vmatpush1.msra.mxu0 0.0
    %4200 = vmatprep.subr.mxu0 0.0
    %4201 = vmatpush1.msra.mxu0 0.0
    %4202 = vmatprep.subr.mxu0 0.0
    %4203 = vmatpush1.msra.mxu0 0.0
    %4204 = vmatprep.subr.mxu0 0.0
    %4205 = vmatpush1.msra.mxu0 0.0
    %4206 = vmatprep.subr.mxu0 0.0
    %4207 = vmatpush1.msra.mxu0 0.0
    %4208 = vmatprep.subr.mxu0 0.0
    %4209 = vmatpush1.msra.mxu0 0.0
    %4210 = vmatprep.subr.mxu0 0.0
    %4211 = vmatpush1.msra.mxu0 0.0
    %4212 = vmatprep.subr.mxu0 0.0
    %4213 = vmatpush1.msra.mxu0 0.0
    %4214 = vmatprep.subr.mxu0 0.0
    %4215 = vmatpush1.msra.mxu0 0.0
    %4216 = vmatprep.subr.mxu0 0.0
    %4217 = vmatpush1.msra.mxu0 0.0
    %4218 = vmatprep.subr.mxu0 0.0
    %4219 = vmatpush1.msra.mxu0 0.0
    %4220 = vmatprep.subr.mxu0 0.0
    %4221 = vmatpush1.msra.mxu0 0.0
    %4222 = vmatprep.subr.mxu0 0.0
    %4223 = vmatpush1.msra.mxu0 0.0
    %4224 = vmatprep.subr.mxu0 0.0
    %4225 = vmatpush1.msra.mxu0 0.0
    %4226 = vmatprep.subr.mxu0 0.0
    %4227 = vmatpush1.msra.mxu0 0.0
    %4228 = vmatprep.subr.mxu0 0.0
    %4229 = vmatpush1.msra.mxu0 0.0
    %4230 = vmatprep.subr.mxu0 0.0
    %4231 = vmatpush1.msra.mxu0 0.0
    %4232 = vmatprep.subr.mxu0 0.0
    %4233 = vmatpush1.msra.mxu0 0.0
    %4234 = vmatprep.subr.mxu0 0.0
    %4235 = vmatpush1.msra.mxu0 0.0
    %4236 = vmatprep.subr.mxu0 0.0
    %4237 = vmatpush1.msra.mxu0 0.0
    %4238 = vmatprep.subr.mxu0 0.0
    %4239 = vmatpush1.msra.mxu0 0.0
    %4240 = vmatprep.subr.mxu0 0.0
    %4241 = vmatpush1.msra.mxu0 0.0
    %4242 = vmatprep.subr.mxu0 0.0
    %4243 = vmatpush1.msra.mxu0 0.0
    %4244 = vmatprep.subr.mxu0 0.0
    %4245 = vmatpush1.msra.mxu0 0.0
    %4246 = vmatprep.mubr.f32.mxu0 0.0
    %4247 = vmatmul.mubr.f32.gmra.mrb[0].mxu0 %v4180
    %v4248 = vpop.f32.mrb[0].mxu0
    %v4249 = vadd.f32 %v146, %v4248
    %v4250 = vpop.f32.mrb[0].mxu0
    %4251 = vdwg.mxu0
    %v4252 = vxor.u32 %v4249, 2147483648
    %v4253 = vmul.f32 %v4252, 1.442695
    %v4254 = vpow.pop %v4253
    %v4255 = vadd.f32 %v4254, 1.0
    %v4256 = vrcp.pop %v4255
    %v4257 = vmul.f32 1.0, %v4256
    %s4258 = scalar_lea.vmem %s6, 24
    %4259 = vst.msk [vmem:[%s4258] sm:$0xff] %vm2554, %v4257
    %v4261 = vsel %vm2554, %v4257, 0
    %4263 = vmatprep.subr.mxu0 0.0
    %4264 = vmatpush1.msra.mxu0 %v85
    %4265 = vmatprep.subr.mxu0 0.0
    %4266 = vmatpush1.msra.mxu0 %v86
    %4267 = vmatprep.subr.mxu0 0.0
    %4268 = vmatpush1.msra.mxu0 0.0
    %4269 = vmatprep.subr.mxu0 0.0
    %4270 = vmatpush1.msra.mxu0 0.0
    %4271 = vmatprep.subr.mxu0 0.0
    %4272 = vmatpush1.msra.mxu0 0.0
    %4273 = vmatprep.subr.mxu0 0.0
    %4274 = vmatpush1.msra.mxu0 0.0
    %4275 = vmatprep.subr.mxu0 0.0
    %4276 = vmatpush1.msra.mxu0 0.0
    %4277 = vmatprep.subr.mxu0 0.0
    %4278 = vmatpush1.msra.mxu0 0.0
    %4279 = vmatprep.subr.mxu0 0.0
    %4280 = vmatpush1.msra.mxu0 0.0
    %4281 = vmatprep.subr.mxu0 0.0
    %4282 = vmatpush1.msra.mxu0 0.0
    %4283 = vmatprep.subr.mxu0 0.0
    %4284 = vmatpush1.msra.mxu0 0.0
    %4285 = vmatprep.subr.mxu0 0.0
    %4286 = vmatpush1.msra.mxu0 0.0
    %4287 = vmatprep.subr.mxu0 0.0
    %4288 = vmatpush1.msra.mxu0 0.0
    %4289 = vmatprep.subr.mxu0 0.0
    %4290 = vmatpush1.msra.mxu0 0.0
    %4291 = vmatprep.subr.mxu0 0.0
    %4292 = vmatpush1.msra.mxu0 0.0
    %4293 = vmatprep.subr.mxu0 0.0
    %4294 = vmatpush1.msra.mxu0 0.0
    %4295 = vmatprep.subr.mxu0 0.0
    %4296 = vmatpush1.msra.mxu0 0.0
    %4297 = vmatprep.subr.mxu0 0.0
    %4298 = vmatpush1.msra.mxu0 0.0
    %4299 = vmatprep.subr.mxu0 0.0
    %4300 = vmatpush1.msra.mxu0 0.0
    %4301 = vmatprep.subr.mxu0 0.0
    %4302 = vmatpush1.msra.mxu0 0.0
    %4303 = vmatprep.subr.mxu0 0.0
    %4304 = vmatpush1.msra.mxu0 0.0
    %4305 = vmatprep.subr.mxu0 0.0
    %4306 = vmatpush1.msra.mxu0 0.0
    %4307 = vmatprep.subr.mxu0 0.0
    %4308 = vmatpush1.msra.mxu0 0.0
    %4309 = vmatprep.subr.mxu0 0.0
    %4310 = vmatpush1.msra.mxu0 0.0
    %4311 = vmatprep.subr.mxu0 0.0
    %4312 = vmatpush1.msra.mxu0 0.0
    %4313 = vmatprep.subr.mxu0 0.0
    %4314 = vmatpush1.msra.mxu0 0.0
    %4315 = vmatprep.subr.mxu0 0.0
    %4316 = vmatpush1.msra.mxu0 0.0
    %4317 = vmatprep.subr.mxu0 0.0
    %4318 = vmatpush1.msra.mxu0 0.0
    %4319 = vmatprep.subr.mxu0 0.0
    %4320 = vmatpush1.msra.mxu0 0.0
    %4321 = vmatprep.subr.mxu0 0.0
    %4322 = vmatpush1.msra.mxu0 0.0
    %4323 = vmatprep.subr.mxu0 0.0
    %4324 = vmatpush1.msra.mxu0 0.0
    %4325 = vmatprep.subr.mxu0 0.0
    %4326 = vmatpush1.msra.mxu0 0.0
    %4327 = vmatprep.mubr.f32.mxu0 0.0
    %4328 = vmatmul.mubr.f32.gmra.mrb[0].mxu0 %v4261
    %v4329 = vpop.f32.mrb[0].mxu0
    %v4330 = vadd.f32 %v137, %v4329
    %v4331 = vpop.f32.mrb[0].mxu0
    %4332 = vdwg.mxu0
    %4333 = vmatprep.subr.mxu0 0.0
    %4334 = vmatpush1.msra.mxu0 %v87
    %4335 = vmatprep.subr.mxu0 0.0
    %4336 = vmatpush1.msra.mxu0 %v88
    %4337 = vmatprep.subr.mxu0 0.0
    %4338 = vmatpush1.msra.mxu0 %v89
    %4339 = vmatprep.subr.mxu0 0.0
    %4340 = vmatpush1.msra.mxu0 %v90
    %4341 = vmatprep.subr.mxu0 0.0
    %4342 = vmatpush1.msra.mxu0 0.0
    %4343 = vmatprep.subr.mxu0 0.0
    %4344 = vmatpush1.msra.mxu0 0.0
    %4345 = vmatprep.subr.mxu0 0.0
    %4346 = vmatpush1.msra.mxu0 0.0
    %4347 = vmatprep.subr.mxu0 0.0
    %4348 = vmatpush1.msra.mxu0 0.0
    %4349 = vmatprep.subr.mxu0 0.0
    %4350 = vmatpush1.msra.mxu0 0.0
    %4351 = vmatprep.subr.mxu0 0.0
    %4352 = vmatpush1.msra.mxu0 0.0
    %4353 = vmatprep.subr.mxu0 0.0
    %4354 = vmatpush1.msra.mxu0 0.0
    %4355 = vmatprep.subr.mxu0 0.0
    %4356 = vmatpush1.msra.mxu0 0.0
    %4357 = vmatprep.subr.mxu0 0.0
    %4358 = vmatpush1.msra.mxu0 0.0
    %4359 = vmatprep.subr.mxu0 0.0
    %4360 = vmatpush1.msra.mxu0 0.0
    %4361 = vmatprep.subr.mxu0 0.0
    %4362 = vmatpush1.msra.mxu0 0.0
    %4363 = vmatprep.subr.mxu0 0.0
    %4364 = vmatpush1.msra.mxu0 0.0
    %4365 = vmatprep.subr.mxu0 0.0
    %4366 = vmatpush1.msra.mxu0 0.0
    %4367 = vmatprep.subr.mxu0 0.0
    %4368 = vmatpush1.msra.mxu0 0.0
    %4369 = vmatprep.subr.mxu0 0.0
    %4370 = vmatpush1.msra.mxu0 0.0
    %4371 = vmatprep.subr.mxu0 0.0
    %4372 = vmatpush1.msra.mxu0 0.0
    %4373 = vmatprep.subr.mxu0 0.0
    %4374 = vmatpush1.msra.mxu0 0.0
    %4375 = vmatprep.subr.mxu0 0.0
    %4376 = vmatpush1.msra.mxu0 0.0
    %4377 = vmatprep.subr.mxu0 0.0
    %4378 = vmatpush1.msra.mxu0 0.0
    %4379 = vmatprep.subr.mxu0 0.0
    %4380 = vmatpush1.msra.mxu0 0.0
    %4381 = vmatprep.subr.mxu0 0.0
    %4382 = vmatpush1.msra.mxu0 0.0
    %4383 = vmatprep.subr.mxu0 0.0
    %4384 = vmatpush1.msra.mxu0 0.0
    %4385 = vmatprep.subr.mxu0 0.0
    %4386 = vmatpush1.msra.mxu0 0.0
    %4387 = vmatprep.subr.mxu0 0.0
    %4388 = vmatpush1.msra.mxu0 0.0
    %4389 = vmatprep.subr.mxu0 0.0
    %4390 = vmatpush1.msra.mxu0 0.0
    %4391 = vmatprep.subr.mxu0 0.0
    %4392 = vmatpush1.msra.mxu0 0.0
    %4393 = vmatprep.subr.mxu0 0.0
    %4394 = vmatpush1.msra.mxu0 0.0
    %4395 = vmatprep.subr.mxu0 0.0
    %4396 = vmatpush1.msra.mxu0 0.0
    %4397 = vmatprep.mubr.f32.mxu0 0.0
    %4398 = vmatmul.mubr.f32.gmra.mrb[0].mxu0 %v3932
    %v4399 = vpop.f32.mrb[0].mxu0
    %v4400 = vadd.f32 0.0, %v4399
    %v4401 = vpop.f32.mrb[0].mxu0
    %4402 = vdwg.mxu0
    %v4403 = vadd.f32 %v4330, %v4400
    %v4404 = vxor.u32 %v4403, 2147483648
    %v4405 = vmul.f32 %v4404, 1.442695
    %v4406 = vpow.pop %v4405
    %v4407 = vadd.f32 %v4406, 1.0
    %v4408 = vrcp.pop %v4407
    %v4409 = vmul.f32 1.0, %v4408
    %v4410 = vadd.f32 %v4400, %v2893
    %4412 = vrot.lane.b32.xlu0 %v4410, 64
    %v4413 = vpop.permute.xlu0 %4412
    %v4415 = vmul.f32 %v4409, %v4413
    %4417 = vrot.lane.b32.xlu0 %v4415, 64
    %v4418 = vpop.permute.xlu0 %4417
    %v4420 = vadd.f32 %v4330, %v4418
    %v4421 = vtanh.pop %v4420
    %v4422 = vsub.f32 1.0, %v4409
    %4424 = vrot.lane.b32.xlu0 %v4421, 96
    %v4425 = vpop.permute.xlu0 %4424
    %v4427 = vmul.f32 %v4422, %v4425
    %v4428 = vmul.f32 %v4409, %v3928
    %v4429 = vadd.f32 %v4427, %v4428
    %4431 = vrot.lane.b32.xlu0 %v4429, 96
    %v4432 = vpop.permute.xlu0 %4431
    %v4433 = vsel %vm166, %v4432, 0
    %4435 = vmatprep.subr.mxu0 0.0
    %4436 = vmatpush1.msra.mxu0 %v91
    %4437 = vmatprep.subr.mxu0 0.0
    %4438 = vmatpush1.msra.mxu0 %v92
    %4439 = vmatprep.subr.mxu0 0.0
    %4440 = vmatpush1.msra.mxu0 %v93
    %4441 = vmatprep.subr.mxu0 0.0
    %4442 = vmatpush1.msra.mxu0 %v94
    %4443 = vmatprep.subr.mxu0 0.0
    %4444 = vmatpush1.msra.mxu0 0.0
    %4445 = vmatprep.subr.mxu0 0.0
    %4446 = vmatpush1.msra.mxu0 0.0
    %4447 = vmatprep.subr.mxu0 0.0
    %4448 = vmatpush1.msra.mxu0 0.0
    %4449 = vmatprep.subr.mxu0 0.0
    %4450 = vmatpush1.msra.mxu0 0.0
    %4451 = vmatprep.subr.mxu0 0.0
    %4452 = vmatpush1.msra.mxu0 0.0
    %4453 = vmatprep.subr.mxu0 0.0
    %4454 = vmatpush1.msra.mxu0 0.0
    %4455 = vmatprep.subr.mxu0 0.0
    %4456 = vmatpush1.msra.mxu0 0.0
    %4457 = vmatprep.subr.mxu0 0.0
    %4458 = vmatpush1.msra.mxu0 0.0
    %4459 = vmatprep.subr.mxu0 0.0
    %4460 = vmatpush1.msra.mxu0 0.0
    %4461 = vmatprep.subr.mxu0 0.0
    %4462 = vmatpush1.msra.mxu0 0.0
    %4463 = vmatprep.subr.mxu0 0.0
    %4464 = vmatpush1.msra.mxu0 0.0
    %4465 = vmatprep.subr.mxu0 0.0
    %4466 = vmatpush1.msra.mxu0 0.0
    %4467 = vmatprep.subr.mxu0 0.0
    %4468 = vmatpush1.msra.mxu0 0.0
    %4469 = vmatprep.subr.mxu0 0.0
    %4470 = vmatpush1.msra.mxu0 0.0
    %4471 = vmatprep.subr.mxu0 0.0
    %4472 = vmatpush1.msra.mxu0 0.0
    %4473 = vmatprep.subr.mxu0 0.0
    %4474 = vmatpush1.msra.mxu0 0.0
    %4475 = vmatprep.subr.mxu0 0.0
    %4476 = vmatpush1.msra.mxu0 0.0
    %4477 = vmatprep.subr.mxu0 0.0
    %4478 = vmatpush1.msra.mxu0 0.0
    %4479 = vmatprep.subr.mxu0 0.0
    %4480 = vmatpush1.msra.mxu0 0.0
    %4481 = vmatprep.subr.mxu0 0.0
    %4482 = vmatpush1.msra.mxu0 0.0
    %4483 = vmatprep.subr.mxu0 0.0
    %4484 = vmatpush1.msra.mxu0 0.0
    %4485 = vmatprep.subr.mxu0 0.0
    %4486 = vmatpush1.msra.mxu0 0.0
    %4487 = vmatprep.subr.mxu0 0.0
    %4488 = vmatpush1.msra.mxu0 0.0
    %4489 = vmatprep.subr.mxu0 0.0
    %4490 = vmatpush1.msra.mxu0 0.0
    %4491 = vmatprep.subr.mxu0 0.0
    %4492 = vmatpush1.msra.mxu0 0.0
    %4493 = vmatprep.subr.mxu0 0.0
    %4494 = vmatpush1.msra.mxu0 0.0
    %4495 = vmatprep.subr.mxu0 0.0
    %4496 = vmatpush1.msra.mxu0 0.0
    %4497 = vmatprep.subr.mxu0 0.0
    %4498 = vmatpush1.msra.mxu0 0.0
    %4499 = vmatprep.mubr.f32.mxu0 0.0
    %4500 = vmatmul.mubr.f32.gmra.mrb[0].mxu0 %v4433
    %v4501 = vpop.f32.mrb[0].mxu0
    %v4502 = vadd.f32 %v139, %v4501
    %v4503 = vpop.f32.mrb[0].mxu0
    %4504 = vdwg.mxu0
    %4505 = vmatprep.subr.mxu0 0.0
    %4506 = vmatpush1.msra.mxu0 %v95
    %4507 = vmatprep.subr.mxu0 0.0
    %4508 = vmatpush1.msra.mxu0 %v96
    %4509 = vmatprep.subr.mxu0 0.0
    %4510 = vmatpush1.msra.mxu0 %v97
    %4511 = vmatprep.subr.mxu0 0.0
    %4512 = vmatpush1.msra.mxu0 %v98
    %4513 = vmatprep.subr.mxu0 0.0
    %4514 = vmatpush1.msra.mxu0 0.0
    %4515 = vmatprep.subr.mxu0 0.0
    %4516 = vmatpush1.msra.mxu0 0.0
    %4517 = vmatprep.subr.mxu0 0.0
    %4518 = vmatpush1.msra.mxu0 0.0
    %4519 = vmatprep.subr.mxu0 0.0
    %4520 = vmatpush1.msra.mxu0 0.0
    %4521 = vmatprep.subr.mxu0 0.0
    %4522 = vmatpush1.msra.mxu0 0.0
    %4523 = vmatprep.subr.mxu0 0.0
    %4524 = vmatpush1.msra.mxu0 0.0
    %4525 = vmatprep.subr.mxu0 0.0
    %4526 = vmatpush1.msra.mxu0 0.0
    %4527 = vmatprep.subr.mxu0 0.0
    %4528 = vmatpush1.msra.mxu0 0.0
    %4529 = vmatprep.subr.mxu0 0.0
    %4530 = vmatpush1.msra.mxu0 0.0
    %4531 = vmatprep.subr.mxu0 0.0
    %4532 = vmatpush1.msra.mxu0 0.0
    %4533 = vmatprep.subr.mxu0 0.0
    %4534 = vmatpush1.msra.mxu0 0.0
    %4535 = vmatprep.subr.mxu0 0.0
    %4536 = vmatpush1.msra.mxu0 0.0
    %4537 = vmatprep.subr.mxu0 0.0
    %4538 = vmatpush1.msra.mxu0 0.0
    %4539 = vmatprep.subr.mxu0 0.0
    %4540 = vmatpush1.msra.mxu0 0.0
    %4541 = vmatprep.subr.mxu0 0.0
    %4542 = vmatpush1.msra.mxu0 0.0
    %4543 = vmatprep.subr.mxu0 0.0
    %4544 = vmatpush1.msra.mxu0 0.0
    %4545 = vmatprep.subr.mxu0 0.0
    %4546 = vmatpush1.msra.mxu0 0.0
    %4547 = vmatprep.subr.mxu0 0.0
    %4548 = vmatpush1.msra.mxu0 0.0
    %4549 = vmatprep.subr.mxu0 0.0
    %4550 = vmatpush1.msra.mxu0 0.0
    %4551 = vmatprep.subr.mxu0 0.0
    %4552 = vmatpush1.msra.mxu0 0.0
    %4553 = vmatprep.subr.mxu0 0.0
    %4554 = vmatpush1.msra.mxu0 0.0
    %4555 = vmatprep.subr.mxu0 0.0
    %4556 = vmatpush1.msra.mxu0 0.0
    %4557 = vmatprep.subr.mxu0 0.0
    %4558 = vmatpush1.msra.mxu0 0.0
    %4559 = vmatprep.subr.mxu0 0.0
    %4560 = vmatpush1.msra.mxu0 0.0
    %4561 = vmatprep.subr.mxu0 0.0
    %4562 = vmatpush1.msra.mxu0 0.0
    %4563 = vmatprep.subr.mxu0 0.0
    %4564 = vmatpush1.msra.mxu0 0.0
    %4565 = vmatprep.subr.mxu0 0.0
    %4566 = vmatpush1.msra.mxu0 0.0
    %4567 = vmatprep.subr.mxu0 0.0
    %4568 = vmatpush1.msra.mxu0 0.0
    %4569 = vmatprep.mubr.f32.mxu0 0.0
    %4570 = vmatmul.mubr.f32.gmra.mrb[0].mxu0 %v4104
    %v4571 = vpop.f32.mrb[0].mxu0
    %v4572 = vadd.f32 0.0, %v4571
    %v4573 = vpop.f32.mrb[0].mxu0
    %4574 = vdwg.mxu0
    %v4575 = vadd.f32 %v4502, %v4572
    %v4576 = vxor.u32 %v4575, 2147483648
    %v4577 = vmul.f32 %v4576, 1.442695
    %v4578 = vpow.pop %v4577
    %v4579 = vadd.f32 %v4578, 1.0
    %v4580 = vrcp.pop %v4579
    %v4581 = vmul.f32 1.0, %v4580
    %v4582 = vadd.f32 %v4572, %v3076
    %4584 = vrot.lane.b32.xlu0 %v4582, 64
    %v4585 = vpop.permute.xlu0 %4584
    %v4587 = vmul.f32 %v4581, %v4585
    %4589 = vrot.lane.b32.xlu0 %v4587, 64
    %v4590 = vpop.permute.xlu0 %4589
    %v4592 = vadd.f32 %v4502, %v4590
    %v4593 = vtanh.pop %v4592
    %v4594 = vsub.f32 1.0, %v4581
    %4596 = vrot.lane.b32.xlu0 %v4593, 96
    %v4597 = vpop.permute.xlu0 %4596
    %v4599 = vmul.f32 %v4594, %v4597
    %v4600 = vmul.f32 %v4581, %v4100
    %v4601 = vadd.f32 %v4599, %v4600
    %4603 = vrot.lane.b32.xlu0 %v4601, 96
    %v4604 = vpop.permute.xlu0 %4603
    %v4605 = vsel %vm166, %v4604, 0
    %4607 = vmatprep.subr.mxu0 0.0
    %4608 = vmatpush1.msra.mxu0 %v125
    %4609 = vmatprep.subr.mxu0 0.0
    %4610 = vmatpush1.msra.mxu0 %v126
    %4611 = vmatprep.subr.mxu0 0.0
    %4612 = vmatpush1.msra.mxu0 %v127
    %4613 = vmatprep.subr.mxu0 0.0
    %4614 = vmatpush1.msra.mxu0 %v128
    %4615 = vmatprep.subr.mxu0 0.0
    %4616 = vmatpush1.msra.mxu0 0.0
    %4617 = vmatprep.subr.mxu0 0.0
    %4618 = vmatpush1.msra.mxu0 0.0
    %4619 = vmatprep.subr.mxu0 0.0
    %4620 = vmatpush1.msra.mxu0 0.0
    %4621 = vmatprep.subr.mxu0 0.0
    %4622 = vmatpush1.msra.mxu0 0.0
    %4623 = vmatprep.subr.mxu0 0.0
    %4624 = vmatpush1.msra.mxu0 0.0
    %4625 = vmatprep.subr.mxu0 0.0
    %4626 = vmatpush1.msra.mxu0 0.0
    %4627 = vmatprep.subr.mxu0 0.0
    %4628 = vmatpush1.msra.mxu0 0.0
    %4629 = vmatprep.subr.mxu0 0.0
    %4630 = vmatpush1.msra.mxu0 0.0
    %4631 = vmatprep.subr.mxu0 0.0
    %4632 = vmatpush1.msra.mxu0 0.0
    %4633 = vmatprep.subr.mxu0 0.0
    %4634 = vmatpush1.msra.mxu0 0.0
    %4635 = vmatprep.subr.mxu0 0.0
    %4636 = vmatpush1.msra.mxu0 0.0
    %4637 = vmatprep.subr.mxu0 0.0
    %4638 = vmatpush1.msra.mxu0 0.0
    %4639 = vmatprep.subr.mxu0 0.0
    %4640 = vmatpush1.msra.mxu0 0.0
    %4641 = vmatprep.subr.mxu0 0.0
    %4642 = vmatpush1.msra.mxu0 0.0
    %4643 = vmatprep.subr.mxu0 0.0
    %4644 = vmatpush1.msra.mxu0 0.0
    %4645 = vmatprep.subr.mxu0 0.0
    %4646 = vmatpush1.msra.mxu0 0.0
    %4647 = vmatprep.subr.mxu0 0.0
    %4648 = vmatpush1.msra.mxu0 0.0
    %4649 = vmatprep.subr.mxu0 0.0
    %4650 = vmatpush1.msra.mxu0 0.0
    %4651 = vmatprep.subr.mxu0 0.0
    %4652 = vmatpush1.msra.mxu0 0.0
    %4653 = vmatprep.subr.mxu0 0.0
    %4654 = vmatpush1.msra.mxu0 0.0
    %4655 = vmatprep.subr.mxu0 0.0
    %4656 = vmatpush1.msra.mxu0 0.0
    %4657 = vmatprep.subr.mxu0 0.0
    %4658 = vmatpush1.msra.mxu0 0.0
    %4659 = vmatprep.subr.mxu0 0.0
    %4660 = vmatpush1.msra.mxu0 0.0
    %4661 = vmatprep.subr.mxu0 0.0
    %4662 = vmatpush1.msra.mxu0 0.0
    %4663 = vmatprep.subr.mxu0 0.0
    %4664 = vmatpush1.msra.mxu0 0.0
    %4665 = vmatprep.subr.mxu0 0.0
    %4666 = vmatpush1.msra.mxu0 0.0
    %4667 = vmatprep.subr.mxu0 0.0
    %4668 = vmatpush1.msra.mxu0 0.0
    %4669 = vmatprep.subr.mxu0 0.0
    %4670 = vmatpush1.msra.mxu0 0.0
    %4671 = vmatprep.mubr.f32.mxu0 0.0
    %4672 = vmatmul.mubr.f32.gmra.mrb[0].mxu0 %v4605
    %v4673 = vpop.f32.mrb[0].mxu0
    %v4674 = vadd.f32 %v145, %v4673
    %v4675 = vpop.f32.mrb[0].mxu0
    %4676 = vdwg.mxu0
    %vm4677 = vcmp.gt.f32.partialorder %v4674, 0.0
    %v4678 = vmul.f32 %v4674, 0.01
    %v4679 = vsel %vm4677, %v4674, %v4678
    %v4681 = vsel %vm3176, %v4679, 0
    %4683 = vmatprep.subr.mxu0 0.0
    %4684 = vmatpush1.msra.mxu0 %v129
    %4685 = vmatprep.subr.mxu0 0.0
    %4686 = vmatpush1.msra.mxu0 %v130
    %4687 = vmatprep.subr.mxu0 0.0
    %4688 = vmatpush1.msra.mxu0 %v131
    %4689 = vmatprep.subr.mxu0 0.0
    %4690 = vmatpush1.msra.mxu0 0.0
    %4691 = vmatprep.subr.mxu0 0.0
    %4692 = vmatpush1.msra.mxu0 0.0
    %4693 = vmatprep.subr.mxu0 0.0
    %4694 = vmatpush1.msra.mxu0 0.0
    %4695 = vmatprep.subr.mxu0 0.0
    %4696 = vmatpush1.msra.mxu0 0.0
    %4697 = vmatprep.subr.mxu0 0.0
    %4698 = vmatpush1.msra.mxu0 0.0
    %4699 = vmatprep.subr.mxu0 0.0
    %4700 = vmatpush1.msra.mxu0 0.0
    %4701 = vmatprep.subr.mxu0 0.0
    %4702 = vmatpush1.msra.mxu0 0.0
    %4703 = vmatprep.subr.mxu0 0.0
    %4704 = vmatpush1.msra.mxu0 0.0
    %4705 = vmatprep.subr.mxu0 0.0
    %4706 = vmatpush1.msra.mxu0 0.0
    %4707 = vmatprep.subr.mxu0 0.0
    %4708 = vmatpush1.msra.mxu0 0.0
    %4709 = vmatprep.subr.mxu0 0.0
    %4710 = vmatpush1.msra.mxu0 0.0
    %4711 = vmatprep.subr.mxu0 0.0
    %4712 = vmatpush1.msra.mxu0 0.0
    %4713 = vmatprep.subr.mxu0 0.0
    %4714 = vmatpush1.msra.mxu0 0.0
    %4715 = vmatprep.subr.mxu0 0.0
    %4716 = vmatpush1.msra.mxu0 0.0
    %4717 = vmatprep.subr.mxu0 0.0
    %4718 = vmatpush1.msra.mxu0 0.0
    %4719 = vmatprep.subr.mxu0 0.0
    %4720 = vmatpush1.msra.mxu0 0.0
    %4721 = vmatprep.subr.mxu0 0.0
    %4722 = vmatpush1.msra.mxu0 0.0
    %4723 = vmatprep.subr.mxu0 0.0
    %4724 = vmatpush1.msra.mxu0 0.0
    %4725 = vmatprep.subr.mxu0 0.0
    %4726 = vmatpush1.msra.mxu0 0.0
    %4727 = vmatprep.subr.mxu0 0.0
    %4728 = vmatpush1.msra.mxu0 0.0
    %4729 = vmatprep.subr.mxu0 0.0
    %4730 = vmatpush1.msra.mxu0 0.0
    %4731 = vmatprep.subr.mxu0 0.0
    %4732 = vmatpush1.msra.mxu0 0.0
    %4733 = vmatprep.subr.mxu0 0.0
    %4734 = vmatpush1.msra.mxu0 0.0
    %4735 = vmatprep.subr.mxu0 0.0
    %4736 = vmatpush1.msra.mxu0 0.0
    %4737 = vmatprep.subr.mxu0 0.0
    %4738 = vmatpush1.msra.mxu0 0.0
    %4739 = vmatprep.subr.mxu0 0.0
    %4740 = vmatpush1.msra.mxu0 0.0
    %4741 = vmatprep.subr.mxu0 0.0
    %4742 = vmatpush1.msra.mxu0 0.0
    %4743 = vmatprep.subr.mxu0 0.0
    %4744 = vmatpush1.msra.mxu0 0.0
    %4745 = vmatprep.subr.mxu0 0.0
    %4746 = vmatpush1.msra.mxu0 0.0
    %4747 = vmatprep.mubr.f32.mxu0 0.0
    %4748 = vmatmul.mubr.f32.gmra.mrb[0].mxu0 %v4681
    %v4749 = vpop.f32.mrb[0].mxu0
    %v4750 = vadd.f32 %v146, %v4749
    %v4751 = vpop.f32.mrb[0].mxu0
    %4752 = vdwg.mxu0
    %v4753 = vxor.u32 %v4750, 2147483648
    %v4754 = vmul.f32 %v4753, 1.442695
    %v4755 = vpow.pop %v4754
    %v4756 = vadd.f32 %v4755, 1.0
    %v4757 = vrcp.pop %v4756
    %v4758 = vmul.f32 1.0, %v4757
    %s4759 = scalar_lea.vmem %s6, 32
    %4760 = vst.msk [vmem:[%s4759] sm:$0xff] %vm2554, %v4758
    %v4762 = vsel %vm2554, %v4758, 0
    %4764 = vmatprep.subr.mxu0 0.0
    %4765 = vmatpush1.msra.mxu0 %v85
    %4766 = vmatprep.subr.mxu0 0.0
    %4767 = vmatpush1.msra.mxu0 %v86
    %4768 = vmatprep.subr.mxu0 0.0
    %4769 = vmatpush1.msra.mxu0 0.0
    %4770 = vmatprep.subr.mxu0 0.0
    %4771 = vmatpush1.msra.mxu0 0.0
    %4772 = vmatprep.subr.mxu0 0.0
    %4773 = vmatpush1.msra.mxu0 0.0
    %4774 = vmatprep.subr.mxu0 0.0
    %4775 = vmatpush1.msra.mxu0 0.0
    %4776 = vmatprep.subr.mxu0 0.0
    %4777 = vmatpush1.msra.mxu0 0.0
    %4778 = vmatprep.subr.mxu0 0.0
    %4779 = vmatpush1.msra.mxu0 0.0
    %4780 = vmatprep.subr.mxu0 0.0
    %4781 = vmatpush1.msra.mxu0 0.0
    %4782 = vmatprep.subr.mxu0 0.0
    %4783 = vmatpush1.msra.mxu0 0.0
    %4784 = vmatprep.subr.mxu0 0.0
    %4785 = vmatpush1.msra.mxu0 0.0
    %4786 = vmatprep.subr.mxu0 0.0
    %4787 = vmatpush1.msra.mxu0 0.0
    %4788 = vmatprep.subr.mxu0 0.0
    %4789 = vmatpush1.msra.mxu0 0.0
    %4790 = vmatprep.subr.mxu0 0.0
    %4791 = vmatpush1.msra.mxu0 0.0
    %4792 = vmatprep.subr.mxu0 0.0
    %4793 = vmatpush1.msra.mxu0 0.0
    %4794 = vmatprep.subr.mxu0 0.0
    %4795 = vmatpush1.msra.mxu0 0.0
    %4796 = vmatprep.subr.mxu0 0.0
    %4797 = vmatpush1.msra.mxu0 0.0
    %4798 = vmatprep.subr.mxu0 0.0
    %4799 = vmatpush1.msra.mxu0 0.0
    %4800 = vmatprep.subr.mxu0 0.0
    %4801 = vmatpush1.msra.mxu0 0.0
    %4802 = vmatprep.subr.mxu0 0.0
    %4803 = vmatpush1.msra.mxu0 0.0
    %4804 = vmatprep.subr.mxu0 0.0
    %4805 = vmatpush1.msra.mxu0 0.0
    %4806 = vmatprep.subr.mxu0 0.0
    %4807 = vmatpush1.msra.mxu0 0.0
    %4808 = vmatprep.subr.mxu0 0.0
    %4809 = vmatpush1.msra.mxu0 0.0
    %4810 = vmatprep.subr.mxu0 0.0
    %4811 = vmatpush1.msra.mxu0 0.0
    %4812 = vmatprep.subr.mxu0 0.0
    %4813 = vmatpush1.msra.mxu0 0.0
    %4814 = vmatprep.subr.mxu0 0.0
    %4815 = vmatpush1.msra.mxu0 0.0
    %4816 = vmatprep.subr.mxu0 0.0
    %4817 = vmatpush1.msra.mxu0 0.0
    %4818 = vmatprep.subr.mxu0 0.0
    %4819 = vmatpush1.msra.mxu0 0.0
    %4820 = vmatprep.subr.mxu0 0.0
    %4821 = vmatpush1.msra.mxu0 0.0
    %4822 = vmatprep.subr.mxu0 0.0
    %4823 = vmatpush1.msra.mxu0 0.0
    %4824 = vmatprep.subr.mxu0 0.0
    %4825 = vmatpush1.msra.mxu0 0.0
    %4826 = vmatprep.subr.mxu0 0.0
    %4827 = vmatpush1.msra.mxu0 0.0
    %4828 = vmatprep.mubr.f32.mxu0 0.0
    %4829 = vmatmul.mubr.f32.gmra.mrb[0].mxu0 %v4762
    %v4830 = vpop.f32.mrb[0].mxu0
    %v4831 = vadd.f32 %v137, %v4830
    %v4832 = vpop.f32.mrb[0].mxu0
    %4833 = vdwg.mxu0
    %4834 = vmatprep.subr.mxu0 0.0
    %4835 = vmatpush1.msra.mxu0 %v87
    %4836 = vmatprep.subr.mxu0 0.0
    %4837 = vmatpush1.msra.mxu0 %v88
    %4838 = vmatprep.subr.mxu0 0.0
    %4839 = vmatpush1.msra.mxu0 %v89
    %4840 = vmatprep.subr.mxu0 0.0
    %4841 = vmatpush1.msra.mxu0 %v90
    %4842 = vmatprep.subr.mxu0 0.0
    %4843 = vmatpush1.msra.mxu0 0.0
    %4844 = vmatprep.subr.mxu0 0.0
    %4845 = vmatpush1.msra.mxu0 0.0
    %4846 = vmatprep.subr.mxu0 0.0
    %4847 = vmatpush1.msra.mxu0 0.0
    %4848 = vmatprep.subr.mxu0 0.0
    %4849 = vmatpush1.msra.mxu0 0.0
    %4850 = vmatprep.subr.mxu0 0.0
    %4851 = vmatpush1.msra.mxu0 0.0
    %4852 = vmatprep.subr.mxu0 0.0
    %4853 = vmatpush1.msra.mxu0 0.0
    %4854 = vmatprep.subr.mxu0 0.0
    %4855 = vmatpush1.msra.mxu0 0.0
    %4856 = vmatprep.subr.mxu0 0.0
    %4857 = vmatpush1.msra.mxu0 0.0
    %4858 = vmatprep.subr.mxu0 0.0
    %4859 = vmatpush1.msra.mxu0 0.0
    %4860 = vmatprep.subr.mxu0 0.0
    %4861 = vmatpush1.msra.mxu0 0.0
    %4862 = vmatprep.subr.mxu0 0.0
    %4863 = vmatpush1.msra.mxu0 0.0
    %4864 = vmatprep.subr.mxu0 0.0
    %4865 = vmatpush1.msra.mxu0 0.0
    %4866 = vmatprep.subr.mxu0 0.0
    %4867 = vmatpush1.msra.mxu0 0.0
    %4868 = vmatprep.subr.mxu0 0.0
    %4869 = vmatpush1.msra.mxu0 0.0
    %4870 = vmatprep.subr.mxu0 0.0
    %4871 = vmatpush1.msra.mxu0 0.0
    %4872 = vmatprep.subr.mxu0 0.0
    %4873 = vmatpush1.msra.mxu0 0.0
    %4874 = vmatprep.subr.mxu0 0.0
    %4875 = vmatpush1.msra.mxu0 0.0
    %4876 = vmatprep.subr.mxu0 0.0
    %4877 = vmatpush1.msra.mxu0 0.0
    %4878 = vmatprep.subr.mxu0 0.0
    %4879 = vmatpush1.msra.mxu0 0.0
    %4880 = vmatprep.subr.mxu0 0.0
    %4881 = vmatpush1.msra.mxu0 0.0
    %4882 = vmatprep.subr.mxu0 0.0
    %4883 = vmatpush1.msra.mxu0 0.0
    %4884 = vmatprep.subr.mxu0 0.0
    %4885 = vmatpush1.msra.mxu0 0.0
    %4886 = vmatprep.subr.mxu0 0.0
    %4887 = vmatpush1.msra.mxu0 0.0
    %4888 = vmatprep.subr.mxu0 0.0
    %4889 = vmatpush1.msra.mxu0 0.0
    %4890 = vmatprep.subr.mxu0 0.0
    %4891 = vmatpush1.msra.mxu0 0.0
    %4892 = vmatprep.subr.mxu0 0.0
    %4893 = vmatpush1.msra.mxu0 0.0
    %4894 = vmatprep.subr.mxu0 0.0
    %4895 = vmatpush1.msra.mxu0 0.0
    %4896 = vmatprep.subr.mxu0 0.0
    %4897 = vmatpush1.msra.mxu0 0.0
    %4898 = vmatprep.mubr.f32.mxu0 0.0
    %4899 = vmatmul.mubr.f32.gmra.mrb[0].mxu0 %v4433
    %v4900 = vpop.f32.mrb[0].mxu0
    %v4901 = vadd.f32 0.0, %v4900
    %v4902 = vpop.f32.mrb[0].mxu0
    %4903 = vdwg.mxu0
    %v4904 = vadd.f32 %v4831, %v4901
    %v4905 = vxor.u32 %v4904, 2147483648
    %v4906 = vmul.f32 %v4905, 1.442695
    %v4907 = vpow.pop %v4906
    %v4908 = vadd.f32 %v4907, 1.0
    %v4909 = vrcp.pop %v4908
    %v4910 = vmul.f32 1.0, %v4909
    %v4911 = vadd.f32 %v4901, %v2893
    %4913 = vrot.lane.b32.xlu0 %v4911, 64
    %v4914 = vpop.permute.xlu0 %4913
    %v4916 = vmul.f32 %v4910, %v4914
    %4918 = vrot.lane.b32.xlu0 %v4916, 64
    %v4919 = vpop.permute.xlu0 %4918
    %v4921 = vadd.f32 %v4831, %v4919
    %v4922 = vtanh.pop %v4921
    %v4923 = vsub.f32 1.0, %v4910
    %4925 = vrot.lane.b32.xlu0 %v4922, 96
    %v4926 = vpop.permute.xlu0 %4925
    %v4928 = vmul.f32 %v4923, %v4926
    %v4929 = vmul.f32 %v4910, %v4429
    %v4930 = vadd.f32 %v4928, %v4929
    %4932 = vrot.lane.b32.xlu0 %v4930, 96
    %v4933 = vpop.permute.xlu0 %4932
    %v4934 = vsel %vm166, %v4933, 0
    %4936 = vmatprep.subr.mxu0 0.0
    %4937 = vmatpush1.msra.mxu0 %v91
    %4938 = vmatprep.subr.mxu0 0.0
    %4939 = vmatpush1.msra.mxu0 %v92
    %4940 = vmatprep.subr.mxu0 0.0
    %4941 = vmatpush1.msra.mxu0 %v93
    %4942 = vmatprep.subr.mxu0 0.0
    %4943 = vmatpush1.msra.mxu0 %v94
    %4944 = vmatprep.subr.mxu0 0.0
    %4945 = vmatpush1.msra.mxu0 0.0
    %4946 = vmatprep.subr.mxu0 0.0
    %4947 = vmatpush1.msra.mxu0 0.0
    %4948 = vmatprep.subr.mxu0 0.0
    %4949 = vmatpush1.msra.mxu0 0.0
    %4950 = vmatprep.subr.mxu0 0.0
    %4951 = vmatpush1.msra.mxu0 0.0
    %4952 = vmatprep.subr.mxu0 0.0
    %4953 = vmatpush1.msra.mxu0 0.0
    %4954 = vmatprep.subr.mxu0 0.0
    %4955 = vmatpush1.msra.mxu0 0.0
    %4956 = vmatprep.subr.mxu0 0.0
    %4957 = vmatpush1.msra.mxu0 0.0
    %4958 = vmatprep.subr.mxu0 0.0
    %4959 = vmatpush1.msra.mxu0 0.0
    %4960 = vmatprep.subr.mxu0 0.0
    %4961 = vmatpush1.msra.mxu0 0.0
    %4962 = vmatprep.subr.mxu0 0.0
    %4963 = vmatpush1.msra.mxu0 0.0
    %4964 = vmatprep.subr.mxu0 0.0
    %4965 = vmatpush1.msra.mxu0 0.0
    %4966 = vmatprep.subr.mxu0 0.0
    %4967 = vmatpush1.msra.mxu0 0.0
    %4968 = vmatprep.subr.mxu0 0.0
    %4969 = vmatpush1.msra.mxu0 0.0
    %4970 = vmatprep.subr.mxu0 0.0
    %4971 = vmatpush1.msra.mxu0 0.0
    %4972 = vmatprep.subr.mxu0 0.0
    %4973 = vmatpush1.msra.mxu0 0.0
    %4974 = vmatprep.subr.mxu0 0.0
    %4975 = vmatpush1.msra.mxu0 0.0
    %4976 = vmatprep.subr.mxu0 0.0
    %4977 = vmatpush1.msra.mxu0 0.0
    %4978 = vmatprep.subr.mxu0 0.0
    %4979 = vmatpush1.msra.mxu0 0.0
    %4980 = vmatprep.subr.mxu0 0.0
    %4981 = vmatpush1.msra.mxu0 0.0
    %4982 = vmatprep.subr.mxu0 0.0
    %4983 = vmatpush1.msra.mxu0 0.0
    %4984 = vmatprep.subr.mxu0 0.0
    %4985 = vmatpush1.msra.mxu0 0.0
    %4986 = vmatprep.subr.mxu0 0.0
    %4987 = vmatpush1.msra.mxu0 0.0
    %4988 = vmatprep.subr.mxu0 0.0
    %4989 = vmatpush1.msra.mxu0 0.0
    %4990 = vmatprep.subr.mxu0 0.0
    %4991 = vmatpush1.msra.mxu0 0.0
    %4992 = vmatprep.subr.mxu0 0.0
    %4993 = vmatpush1.msra.mxu0 0.0
    %4994 = vmatprep.subr.mxu0 0.0
    %4995 = vmatpush1.msra.mxu0 0.0
    %4996 = vmatprep.subr.mxu0 0.0
    %4997 = vmatpush1.msra.mxu0 0.0
    %4998 = vmatprep.subr.mxu0 0.0
    %4999 = vmatpush1.msra.mxu0 0.0
    %5000 = vmatprep.mubr.f32.mxu0 0.0
    %5001 = vmatmul.mubr.f32.gmra.mrb[0].mxu0 %v4934
    %v5002 = vpop.f32.mrb[0].mxu0
    %v5003 = vadd.f32 %v139, %v5002
    %v5004 = vpop.f32.mrb[0].mxu0
    %5005 = vdwg.mxu0
    %5006 = vmatprep.subr.mxu0 0.0
    %5007 = vmatpush1.msra.mxu0 %v95
    %5008 = vmatprep.subr.mxu0 0.0
    %5009 = vmatpush1.msra.mxu0 %v96
    %5010 = vmatprep.subr.mxu0 0.0
    %5011 = vmatpush1.msra.mxu0 %v97
    %5012 = vmatprep.subr.mxu0 0.0
    %5013 = vmatpush1.msra.mxu0 %v98
    %5014 = vmatprep.subr.mxu0 0.0
    %5015 = vmatpush1.msra.mxu0 0.0
    %5016 = vmatprep.subr.mxu0 0.0
    %5017 = vmatpush1.msra.mxu0 0.0
    %5018 = vmatprep.subr.mxu0 0.0
    %5019 = vmatpush1.msra.mxu0 0.0
    %5020 = vmatprep.subr.mxu0 0.0
    %5021 = vmatpush1.msra.mxu0 0.0
    %5022 = vmatprep.subr.mxu0 0.0
    %5023 = vmatpush1.msra.mxu0 0.0
    %5024 = vmatprep.subr.mxu0 0.0
    %5025 = vmatpush1.msra.mxu0 0.0
    %5026 = vmatprep.subr.mxu0 0.0
    %5027 = vmatpush1.msra.mxu0 0.0
    %5028 = vmatprep.subr.mxu0 0.0
    %5029 = vmatpush1.msra.mxu0 0.0
    %5030 = vmatprep.subr.mxu0 0.0
    %5031 = vmatpush1.msra.mxu0 0.0
    %5032 = vmatprep.subr.mxu0 0.0
    %5033 = vmatpush1.msra.mxu0 0.0
    %5034 = vmatprep.subr.mxu0 0.0
    %5035 = vmatpush1.msra.mxu0 0.0
    %5036 = vmatprep.subr.mxu0 0.0
    %5037 = vmatpush1.msra.mxu0 0.0
    %5038 = vmatprep.subr.mxu0 0.0
    %5039 = vmatpush1.msra.mxu0 0.0
    %5040 = vmatprep.subr.mxu0 0.0
    %5041 = vmatpush1.msra.mxu0 0.0
    %5042 = vmatprep.subr.mxu0 0.0
    %5043 = vmatpush1.msra.mxu0 0.0
    %5044 = vmatprep.subr.mxu0 0.0
    %5045 = vmatpush1.msra.mxu0 0.0
    %5046 = vmatprep.subr.mxu0 0.0
    %5047 = vmatpush1.msra.mxu0 0.0
    %5048 = vmatprep.subr.mxu0 0.0
    %5049 = vmatpush1.msra.mxu0 0.0
    %5050 = vmatprep.subr.mxu0 0.0
    %5051 = vmatpush1.msra.mxu0 0.0
    %5052 = vmatprep.subr.mxu0 0.0
    %5053 = vmatpush1.msra.mxu0 0.0
    %5054 = vmatprep.subr.mxu0 0.0
    %5055 = vmatpush1.msra.mxu0 0.0
    %5056 = vmatprep.subr.mxu0 0.0
    %5057 = vmatpush1.msra.mxu0 0.0
    %5058 = vmatprep.subr.mxu0 0.0
    %5059 = vmatpush1.msra.mxu0 0.0
    %5060 = vmatprep.subr.mxu0 0.0
    %5061 = vmatpush1.msra.mxu0 0.0
    %5062 = vmatprep.subr.mxu0 0.0
    %5063 = vmatpush1.msra.mxu0 0.0
    %5064 = vmatprep.subr.mxu0 0.0
    %5065 = vmatpush1.msra.mxu0 0.0
    %5066 = vmatprep.subr.mxu0 0.0
    %5067 = vmatpush1.msra.mxu0 0.0
    %5068 = vmatprep.subr.mxu0 0.0
    %5069 = vmatpush1.msra.mxu0 0.0
    %5070 = vmatprep.mubr.f32.mxu0 0.0
    %5071 = vmatmul.mubr.f32.gmra.mrb[0].mxu0 %v4605
    %v5072 = vpop.f32.mrb[0].mxu0
    %v5073 = vadd.f32 0.0, %v5072
    %v5074 = vpop.f32.mrb[0].mxu0
    %5075 = vdwg.mxu0
    %v5076 = vadd.f32 %v5003, %v5073
    %v5077 = vxor.u32 %v5076, 2147483648
    %v5078 = vmul.f32 %v5077, 1.442695
    %v5079 = vpow.pop %v5078
    %v5080 = vadd.f32 %v5079, 1.0
    %v5081 = vrcp.pop %v5080
    %v5082 = vmul.f32 1.0, %v5081
    %v5083 = vadd.f32 %v5073, %v3076
    %5085 = vrot.lane.b32.xlu0 %v5083, 64
    %v5086 = vpop.permute.xlu0 %5085
    %v5088 = vmul.f32 %v5082, %v5086
    %5090 = vrot.lane.b32.xlu0 %v5088, 64
    %v5091 = vpop.permute.xlu0 %5090
    %v5093 = vadd.f32 %v5003, %v5091
    %v5094 = vtanh.pop %v5093
    %v5095 = vsub.f32 1.0, %v5082
    %5097 = vrot.lane.b32.xlu0 %v5094, 96
    %v5098 = vpop.permute.xlu0 %5097
    %v5100 = vmul.f32 %v5095, %v5098
    %v5101 = vmul.f32 %v5082, %v4601
    %v5102 = vadd.f32 %v5100, %v5101
    %5104 = vrot.lane.b32.xlu0 %v5102, 96
    %v5105 = vpop.permute.xlu0 %5104
    %v5106 = vsel %vm166, %v5105, 0
    %5108 = vmatprep.subr.mxu0 0.0
    %5109 = vmatpush1.msra.mxu0 %v125
    %5110 = vmatprep.subr.mxu0 0.0
    %5111 = vmatpush1.msra.mxu0 %v126
    %5112 = vmatprep.subr.mxu0 0.0
    %5113 = vmatpush1.msra.mxu0 %v127
    %5114 = vmatprep.subr.mxu0 0.0
    %5115 = vmatpush1.msra.mxu0 %v128
    %5116 = vmatprep.subr.mxu0 0.0
    %5117 = vmatpush1.msra.mxu0 0.0
    %5118 = vmatprep.subr.mxu0 0.0
    %5119 = vmatpush1.msra.mxu0 0.0
    %5120 = vmatprep.subr.mxu0 0.0
    %5121 = vmatpush1.msra.mxu0 0.0
    %5122 = vmatprep.subr.mxu0 0.0
    %5123 = vmatpush1.msra.mxu0 0.0
    %5124 = vmatprep.subr.mxu0 0.0
    %5125 = vmatpush1.msra.mxu0 0.0
    %5126 = vmatprep.subr.mxu0 0.0
    %5127 = vmatpush1.msra.mxu0 0.0
    %5128 = vmatprep.subr.mxu0 0.0
    %5129 = vmatpush1.msra.mxu0 0.0
    %5130 = vmatprep.subr.mxu0 0.0
    %5131 = vmatpush1.msra.mxu0 0.0
    %5132 = vmatprep.subr.mxu0 0.0
    %5133 = vmatpush1.msra.mxu0 0.0
    %5134 = vmatprep.subr.mxu0 0.0
    %5135 = vmatpush1.msra.mxu0 0.0
    %5136 = vmatprep.subr.mxu0 0.0
    %5137 = vmatpush1.msra.mxu0 0.0
    %5138 = vmatprep.subr.mxu0 0.0
    %5139 = vmatpush1.msra.mxu0 0.0
    %5140 = vmatprep.subr.mxu0 0.0
    %5141 = vmatpush1.msra.mxu0 0.0
    %5142 = vmatprep.subr.mxu0 0.0
    %5143 = vmatpush1.msra.mxu0 0.0
    %5144 = vmatprep.subr.mxu0 0.0
    %5145 = vmatpush1.msra.mxu0 0.0
    %5146 = vmatprep.subr.mxu0 0.0
    %5147 = vmatpush1.msra.mxu0 0.0
    %5148 = vmatprep.subr.mxu0 0.0
    %5149 = vmatpush1.msra.mxu0 0.0
    %5150 = vmatprep.subr.mxu0 0.0
    %5151 = vmatpush1.msra.mxu0 0.0
    %5152 = vmatprep.subr.mxu0 0.0
    %5153 = vmatpush1.msra.mxu0 0.0
    %5154 = vmatprep.subr.mxu0 0.0
    %5155 = vmatpush1.msra.mxu0 0.0
    %5156 = vmatprep.subr.mxu0 0.0
    %5157 = vmatpush1.msra.mxu0 0.0
    %5158 = vmatprep.subr.mxu0 0.0
    %5159 = vmatpush1.msra.mxu0 0.0
    %5160 = vmatprep.subr.mxu0 0.0
    %5161 = vmatpush1.msra.mxu0 0.0
    %5162 = vmatprep.subr.mxu0 0.0
    %5163 = vmatpush1.msra.mxu0 0.0
    %5164 = vmatprep.subr.mxu0 0.0
    %5165 = vmatpush1.msra.mxu0 0.0
    %5166 = vmatprep.subr.mxu0 0.0
    %5167 = vmatpush1.msra.mxu0 0.0
    %5168 = vmatprep.subr.mxu0 0.0
    %5169 = vmatpush1.msra.mxu0 0.0
    %5170 = vmatprep.subr.mxu0 0.0
    %5171 = vmatpush1.msra.mxu0 0.0
    %5172 = vmatprep.mubr.f32.mxu0 0.0
    %5173 = vmatmul.mubr.f32.gmra.mrb[0].mxu0 %v5106
    %v5174 = vpop.f32.mrb[0].mxu0
    %v5175 = vadd.f32 %v145, %v5174
    %v5176 = vpop.f32.mrb[0].mxu0
    %5177 = vdwg.mxu0
    %vm5178 = vcmp.gt.f32.partialorder %v5175, 0.0
    %v5179 = vmul.f32 %v5175, 0.01
    %v5180 = vsel %vm5178, %v5175, %v5179
    %v5182 = vsel %vm3176, %v5180, 0
    %5184 = vmatprep.subr.mxu0 0.0
    %5185 = vmatpush1.msra.mxu0 %v129
    %5186 = vmatprep.subr.mxu0 0.0
    %5187 = vmatpush1.msra.mxu0 %v130
    %5188 = vmatprep.subr.mxu0 0.0
    %5189 = vmatpush1.msra.mxu0 %v131
    %5190 = vmatprep.subr.mxu0 0.0
    %5191 = vmatpush1.msra.mxu0 0.0
    %5192 = vmatprep.subr.mxu0 0.0
    %5193 = vmatpush1.msra.mxu0 0.0
    %5194 = vmatprep.subr.mxu0 0.0
    %5195 = vmatpush1.msra.mxu0 0.0
    %5196 = vmatprep.subr.mxu0 0.0
    %5197 = vmatpush1.msra.mxu0 0.0
    %5198 = vmatprep.subr.mxu0 0.0
    %5199 = vmatpush1.msra.mxu0 0.0
    %5200 = vmatprep.subr.mxu0 0.0
    %5201 = vmatpush1.msra.mxu0 0.0
    %5202 = vmatprep.subr.mxu0 0.0
    %5203 = vmatpush1.msra.mxu0 0.0
    %5204 = vmatprep.subr.mxu0 0.0
    %5205 = vmatpush1.msra.mxu0 0.0
    %5206 = vmatprep.subr.mxu0 0.0
    %5207 = vmatpush1.msra.mxu0 0.0
    %5208 = vmatprep.subr.mxu0 0.0
    %5209 = vmatpush1.msra.mxu0 0.0
    %5210 = vmatprep.subr.mxu0 0.0
    %5211 = vmatpush1.msra.mxu0 0.0
    %5212 = vmatprep.subr.mxu0 0.0
    %5213 = vmatpush1.msra.mxu0 0.0
    %5214 = vmatprep.subr.mxu0 0.0
    %5215 = vmatpush1.msra.mxu0 0.0
    %5216 = vmatprep.subr.mxu0 0.0
    %5217 = vmatpush1.msra.mxu0 0.0
    %5218 = vmatprep.subr.mxu0 0.0
    %5219 = vmatpush1.msra.mxu0 0.0
    %5220 = vmatprep.subr.mxu0 0.0
    %5221 = vmatpush1.msra.mxu0 0.0
    %5222 = vmatprep.subr.mxu0 0.0
    %5223 = vmatpush1.msra.mxu0 0.0
    %5224 = vmatprep.subr.mxu0 0.0
    %5225 = vmatpush1.msra.mxu0 0.0
    %5226 = vmatprep.subr.mxu0 0.0
    %5227 = vmatpush1.msra.mxu0 0.0
    %5228 = vmatprep.subr.mxu0 0.0
    %5229 = vmatpush1.msra.mxu0 0.0
    %5230 = vmatprep.subr.mxu0 0.0
    %5231 = vmatpush1.msra.mxu0 0.0
    %5232 = vmatprep.subr.mxu0 0.0
    %5233 = vmatpush1.msra.mxu0 0.0
    %5234 = vmatprep.subr.mxu0 0.0
    %5235 = vmatpush1.msra.mxu0 0.0
    %5236 = vmatprep.subr.mxu0 0.0
    %5237 = vmatpush1.msra.mxu0 0.0
    %5238 = vmatprep.subr.mxu0 0.0
    %5239 = vmatpush1.msra.mxu0 0.0
    %5240 = vmatprep.subr.mxu0 0.0
    %5241 = vmatpush1.msra.mxu0 0.0
    %5242 = vmatprep.subr.mxu0 0.0
    %5243 = vmatpush1.msra.mxu0 0.0
    %5244 = vmatprep.subr.mxu0 0.0
    %5245 = vmatpush1.msra.mxu0 0.0
    %5246 = vmatprep.subr.mxu0 0.0
    %5247 = vmatpush1.msra.mxu0 0.0
    %5248 = vmatprep.mubr.f32.mxu0 0.0
    %5249 = vmatmul.mubr.f32.gmra.mrb[0].mxu0 %v5182
    %v5250 = vpop.f32.mrb[0].mxu0
    %v5251 = vadd.f32 %v146, %v5250
    %v5252 = vpop.f32.mrb[0].mxu0
    %5253 = vdwg.mxu0
    %v5254 = vxor.u32 %v5251, 2147483648
    %v5255 = vmul.f32 %v5254, 1.442695
    %v5256 = vpow.pop %v5255
    %v5257 = vadd.f32 %v5256, 1.0
    %v5258 = vrcp.pop %v5257
    %v5259 = vmul.f32 1.0, %v5258
    %s5260 = scalar_lea.vmem %s6, 40
    %5261 = vst.msk [vmem:[%s5260] sm:$0xff] %vm2554, %v5259
    %v5263 = vsel %vm2554, %v5259, 0
    %5265 = vmatprep.subr.mxu0 0.0
    %5266 = vmatpush1.msra.mxu0 %v85
    %5267 = vmatprep.subr.mxu0 0.0
    %5268 = vmatpush1.msra.mxu0 %v86
    %5269 = vmatprep.subr.mxu0 0.0
    %5270 = vmatpush1.msra.mxu0 0.0
    %5271 = vmatprep.subr.mxu0 0.0
    %5272 = vmatpush1.msra.mxu0 0.0
    %5273 = vmatprep.subr.mxu0 0.0
    %5274 = vmatpush1.msra.mxu0 0.0
    %5275 = vmatprep.subr.mxu0 0.0
    %5276 = vmatpush1.msra.mxu0 0.0
    %5277 = vmatprep.subr.mxu0 0.0
    %5278 = vmatpush1.msra.mxu0 0.0
    %5279 = vmatprep.subr.mxu0 0.0
    %5280 = vmatpush1.msra.mxu0 0.0
    %5281 = vmatprep.subr.mxu0 0.0
    %5282 = vmatpush1.msra.mxu0 0.0
    %5283 = vmatprep.subr.mxu0 0.0
    %5284 = vmatpush1.msra.mxu0 0.0
    %5285 = vmatprep.subr.mxu0 0.0
    %5286 = vmatpush1.msra.mxu0 0.0
    %5287 = vmatprep.subr.mxu0 0.0
    %5288 = vmatpush1.msra.mxu0 0.0
    %5289 = vmatprep.subr.mxu0 0.0
    %5290 = vmatpush1.msra.mxu0 0.0
    %5291 = vmatprep.subr.mxu0 0.0
    %5292 = vmatpush1.msra.mxu0 0.0
    %5293 = vmatprep.subr.mxu0 0.0
    %5294 = vmatpush1.msra.mxu0 0.0
    %5295 = vmatprep.subr.mxu0 0.0
    %5296 = vmatpush1.msra.mxu0 0.0
    %5297 = vmatprep.subr.mxu0 0.0
    %5298 = vmatpush1.msra.mxu0 0.0
    %5299 = vmatprep.subr.mxu0 0.0
    %5300 = vmatpush1.msra.mxu0 0.0
    %5301 = vmatprep.subr.mxu0 0.0
    %5302 = vmatpush1.msra.mxu0 0.0
    %5303 = vmatprep.subr.mxu0 0.0
    %5304 = vmatpush1.msra.mxu0 0.0
    %5305 = vmatprep.subr.mxu0 0.0
    %5306 = vmatpush1.msra.mxu0 0.0
    %5307 = vmatprep.subr.mxu0 0.0
    %5308 = vmatpush1.msra.mxu0 0.0
    %5309 = vmatprep.subr.mxu0 0.0
    %5310 = vmatpush1.msra.mxu0 0.0
    %5311 = vmatprep.subr.mxu0 0.0
    %5312 = vmatpush1.msra.mxu0 0.0
    %5313 = vmatprep.subr.mxu0 0.0
    %5314 = vmatpush1.msra.mxu0 0.0
    %5315 = vmatprep.subr.mxu0 0.0
    %5316 = vmatpush1.msra.mxu0 0.0
    %5317 = vmatprep.subr.mxu0 0.0
    %5318 = vmatpush1.msra.mxu0 0.0
    %5319 = vmatprep.subr.mxu0 0.0
    %5320 = vmatpush1.msra.mxu0 0.0
    %5321 = vmatprep.subr.mxu0 0.0
    %5322 = vmatpush1.msra.mxu0 0.0
    %5323 = vmatprep.subr.mxu0 0.0
    %5324 = vmatpush1.msra.mxu0 0.0
    %5325 = vmatprep.subr.mxu0 0.0
    %5326 = vmatpush1.msra.mxu0 0.0
    %5327 = vmatprep.subr.mxu0 0.0
    %5328 = vmatpush1.msra.mxu0 0.0
    %5329 = vmatprep.mubr.f32.mxu0 0.0
    %5330 = vmatmul.mubr.f32.gmra.mrb[0].mxu0 %v5263
    %v5331 = vpop.f32.mrb[0].mxu0
    %v5332 = vadd.f32 %v137, %v5331
    %v5333 = vpop.f32.mrb[0].mxu0
    %5334 = vdwg.mxu0
    %5335 = vmatprep.subr.mxu0 0.0
    %5336 = vmatpush1.msra.mxu0 %v87
    %5337 = vmatprep.subr.mxu0 0.0
    %5338 = vmatpush1.msra.mxu0 %v88
    %5339 = vmatprep.subr.mxu0 0.0
    %5340 = vmatpush1.msra.mxu0 %v89
    %5341 = vmatprep.subr.mxu0 0.0
    %5342 = vmatpush1.msra.mxu0 %v90
    %5343 = vmatprep.subr.mxu0 0.0
    %5344 = vmatpush1.msra.mxu0 0.0
    %5345 = vmatprep.subr.mxu0 0.0
    %5346 = vmatpush1.msra.mxu0 0.0
    %5347 = vmatprep.subr.mxu0 0.0
    %5348 = vmatpush1.msra.mxu0 0.0
    %5349 = vmatprep.subr.mxu0 0.0
    %5350 = vmatpush1.msra.mxu0 0.0
    %5351 = vmatprep.subr.mxu0 0.0
    %5352 = vmatpush1.msra.mxu0 0.0
    %5353 = vmatprep.subr.mxu0 0.0
    %5354 = vmatpush1.msra.mxu0 0.0
    %5355 = vmatprep.subr.mxu0 0.0
    %5356 = vmatpush1.msra.mxu0 0.0
    %5357 = vmatprep.subr.mxu0 0.0
    %5358 = vmatpush1.msra.mxu0 0.0
    %5359 = vmatprep.subr.mxu0 0.0
    %5360 = vmatpush1.msra.mxu0 0.0
    %5361 = vmatprep.subr.mxu0 0.0
    %5362 = vmatpush1.msra.mxu0 0.0
    %5363 = vmatprep.subr.mxu0 0.0
    %5364 = vmatpush1.msra.mxu0 0.0
    %5365 = vmatprep.subr.mxu0 0.0
    %5366 = vmatpush1.msra.mxu0 0.0
    %5367 = vmatprep.subr.mxu0 0.0
    %5368 = vmatpush1.msra.mxu0 0.0
    %5369 = vmatprep.subr.mxu0 0.0
    %5370 = vmatpush1.msra.mxu0 0.0
    %5371 = vmatprep.subr.mxu0 0.0
    %5372 = vmatpush1.msra.mxu0 0.0
    %5373 = vmatprep.subr.mxu0 0.0
    %5374 = vmatpush1.msra.mxu0 0.0
    %5375 = vmatprep.subr.mxu0 0.0
    %5376 = vmatpush1.msra.mxu0 0.0
    %5377 = vmatprep.subr.mxu0 0.0
    %5378 = vmatpush1.msra.mxu0 0.0
    %5379 = vmatprep.subr.mxu0 0.0
    %5380 = vmatpush1.msra.mxu0 0.0
    %5381 = vmatprep.subr.mxu0 0.0
    %5382 = vmatpush1.msra.mxu0 0.0
    %5383 = vmatprep.subr.mxu0 0.0
    %5384 = vmatpush1.msra.mxu0 0.0
    %5385 = vmatprep.subr.mxu0 0.0
    %5386 = vmatpush1.msra.mxu0 0.0
    %5387 = vmatprep.subr.mxu0 0.0
    %5388 = vmatpush1.msra.mxu0 0.0
    %5389 = vmatprep.subr.mxu0 0.0
    %5390 = vmatpush1.msra.mxu0 0.0
    %5391 = vmatprep.subr.mxu0 0.0
    %5392 = vmatpush1.msra.mxu0 0.0
    %5393 = vmatprep.subr.mxu0 0.0
    %5394 = vmatpush1.msra.mxu0 0.0
    %5395 = vmatprep.subr.mxu0 0.0
    %5396 = vmatpush1.msra.mxu0 0.0
    %5397 = vmatprep.subr.mxu0 0.0
    %5398 = vmatpush1.msra.mxu0 0.0
    %5399 = vmatprep.mubr.f32.mxu0 0.0
    %5400 = vmatmul.mubr.f32.gmra.mrb[0].mxu0 %v4934
    %v5401 = vpop.f32.mrb[0].mxu0
    %v5402 = vadd.f32 0.0, %v5401
    %v5403 = vpop.f32.mrb[0].mxu0
    %5404 = vdwg.mxu0
    %v5405 = vadd.f32 %v5332, %v5402
    %v5406 = vxor.u32 %v5405, 2147483648
    %v5407 = vmul.f32 %v5406, 1.442695
    %v5408 = vpow.pop %v5407
    %v5409 = vadd.f32 %v5408, 1.0
    %v5410 = vrcp.pop %v5409
    %v5411 = vmul.f32 1.0, %v5410
    %v5412 = vadd.f32 %v5402, %v2893
    %5414 = vrot.lane.b32.xlu0 %v5412, 64
    %v5415 = vpop.permute.xlu0 %5414
    %v5417 = vmul.f32 %v5411, %v5415
    %5419 = vrot.lane.b32.xlu0 %v5417, 64
    %v5420 = vpop.permute.xlu0 %5419
    %v5422 = vadd.f32 %v5332, %v5420
    %v5423 = vtanh.pop %v5422
    %v5424 = vsub.f32 1.0, %v5411
    %5426 = vrot.lane.b32.xlu0 %v5423, 96
    %v5427 = vpop.permute.xlu0 %5426
    %v5429 = vmul.f32 %v5424, %v5427
    %v5430 = vmul.f32 %v5411, %v4930
    %v5431 = vadd.f32 %v5429, %v5430
    %5433 = vrot.lane.b32.xlu0 %v5431, 96
    %v5434 = vpop.permute.xlu0 %5433
    %v5435 = vsel %vm166, %v5434, 0
    %5437 = vmatprep.subr.mxu0 0.0
    %5438 = vmatpush1.msra.mxu0 %v91
    %5439 = vmatprep.subr.mxu0 0.0
    %5440 = vmatpush1.msra.mxu0 %v92
    %5441 = vmatprep.subr.mxu0 0.0
    %5442 = vmatpush1.msra.mxu0 %v93
    %5443 = vmatprep.subr.mxu0 0.0
    %5444 = vmatpush1.msra.mxu0 %v94
    %5445 = vmatprep.subr.mxu0 0.0
    %5446 = vmatpush1.msra.mxu0 0.0
    %5447 = vmatprep.subr.mxu0 0.0
    %5448 = vmatpush1.msra.mxu0 0.0
    %5449 = vmatprep.subr.mxu0 0.0
    %5450 = vmatpush1.msra.mxu0 0.0
    %5451 = vmatprep.subr.mxu0 0.0
    %5452 = vmatpush1.msra.mxu0 0.0
    %5453 = vmatprep.subr.mxu0 0.0
    %5454 = vmatpush1.msra.mxu0 0.0
    %5455 = vmatprep.subr.mxu0 0.0
    %5456 = vmatpush1.msra.mxu0 0.0
    %5457 = vmatprep.subr.mxu0 0.0
    %5458 = vmatpush1.msra.mxu0 0.0
    %5459 = vmatprep.subr.mxu0 0.0
    %5460 = vmatpush1.msra.mxu0 0.0
    %5461 = vmatprep.subr.mxu0 0.0
    %5462 = vmatpush1.msra.mxu0 0.0
    %5463 = vmatprep.subr.mxu0 0.0
    %5464 = vmatpush1.msra.mxu0 0.0
    %5465 = vmatprep.subr.mxu0 0.0
    %5466 = vmatpush1.msra.mxu0 0.0
    %5467 = vmatprep.subr.mxu0 0.0
    %5468 = vmatpush1.msra.mxu0 0.0
    %5469 = vmatprep.subr.mxu0 0.0
    %5470 = vmatpush1.msra.mxu0 0.0
    %5471 = vmatprep.subr.mxu0 0.0
    %5472 = vmatpush1.msra.mxu0 0.0
    %5473 = vmatprep.subr.mxu0 0.0
    %5474 = vmatpush1.msra.mxu0 0.0
    %5475 = vmatprep.subr.mxu0 0.0
    %5476 = vmatpush1.msra.mxu0 0.0
    %5477 = vmatprep.subr.mxu0 0.0
    %5478 = vmatpush1.msra.mxu0 0.0
    %5479 = vmatprep.subr.mxu0 0.0
    %5480 = vmatpush1.msra.mxu0 0.0
    %5481 = vmatprep.subr.mxu0 0.0
    %5482 = vmatpush1.msra.mxu0 0.0
    %5483 = vmatprep.subr.mxu0 0.0
    %5484 = vmatpush1.msra.mxu0 0.0
    %5485 = vmatprep.subr.mxu0 0.0
    %5486 = vmatpush1.msra.mxu0 0.0
    %5487 = vmatprep.subr.mxu0 0.0
    %5488 = vmatpush1.msra.mxu0 0.0
    %5489 = vmatprep.subr.mxu0 0.0
    %5490 = vmatpush1.msra.mxu0 0.0
    %5491 = vmatprep.subr.mxu0 0.0
    %5492 = vmatpush1.msra.mxu0 0.0
    %5493 = vmatprep.subr.mxu0 0.0
    %5494 = vmatpush1.msra.mxu0 0.0
    %5495 = vmatprep.subr.mxu0 0.0
    %5496 = vmatpush1.msra.mxu0 0.0
    %5497 = vmatprep.subr.mxu0 0.0
    %5498 = vmatpush1.msra.mxu0 0.0
    %5499 = vmatprep.subr.mxu0 0.0
    %5500 = vmatpush1.msra.mxu0 0.0
    %5501 = vmatprep.mubr.f32.mxu0 0.0
    %5502 = vmatmul.mubr.f32.gmra.mrb[0].mxu0 %v5435
    %v5503 = vpop.f32.mrb[0].mxu0
    %v5504 = vadd.f32 %v139, %v5503
    %v5505 = vpop.f32.mrb[0].mxu0
    %5506 = vdwg.mxu0
    %5507 = vmatprep.subr.mxu0 0.0
    %5508 = vmatpush1.msra.mxu0 %v95
    %5509 = vmatprep.subr.mxu0 0.0
    %5510 = vmatpush1.msra.mxu0 %v96
    %5511 = vmatprep.subr.mxu0 0.0
    %5512 = vmatpush1.msra.mxu0 %v97
    %5513 = vmatprep.subr.mxu0 0.0
    %5514 = vmatpush1.msra.mxu0 %v98
    %5515 = vmatprep.subr.mxu0 0.0
    %5516 = vmatpush1.msra.mxu0 0.0
    %5517 = vmatprep.subr.mxu0 0.0
    %5518 = vmatpush1.msra.mxu0 0.0
    %5519 = vmatprep.subr.mxu0 0.0
    %5520 = vmatpush1.msra.mxu0 0.0
    %5521 = vmatprep.subr.mxu0 0.0
    %5522 = vmatpush1.msra.mxu0 0.0
    %5523 = vmatprep.subr.mxu0 0.0
    %5524 = vmatpush1.msra.mxu0 0.0
    %5525 = vmatprep.subr.mxu0 0.0
    %5526 = vmatpush1.msra.mxu0 0.0
    %5527 = vmatprep.subr.mxu0 0.0
    %5528 = vmatpush1.msra.mxu0 0.0
    %5529 = vmatprep.subr.mxu0 0.0
    %5530 = vmatpush1.msra.mxu0 0.0
    %5531 = vmatprep.subr.mxu0 0.0
    %5532 = vmatpush1.msra.mxu0 0.0
    %5533 = vmatprep.subr.mxu0 0.0
    %5534 = vmatpush1.msra.mxu0 0.0
    %5535 = vmatprep.subr.mxu0 0.0
    %5536 = vmatpush1.msra.mxu0 0.0
    %5537 = vmatprep.subr.mxu0 0.0
    %5538 = vmatpush1.msra.mxu0 0.0
    %5539 = vmatprep.subr.mxu0 0.0
    %5540 = vmatpush1.msra.mxu0 0.0
    %5541 = vmatprep.subr.mxu0 0.0
    %5542 = vmatpush1.msra.mxu0 0.0
    %5543 = vmatprep.subr.mxu0 0.0
    %5544 = vmatpush1.msra.mxu0 0.0
    %5545 = vmatprep.subr.mxu0 0.0
    %5546 = vmatpush1.msra.mxu0 0.0
    %5547 = vmatprep.subr.mxu0 0.0
    %5548 = vmatpush1.msra.mxu0 0.0
    %5549 = vmatprep.subr.mxu0 0.0
    %5550 = vmatpush1.msra.mxu0 0.0
    %5551 = vmatprep.subr.mxu0 0.0
    %5552 = vmatpush1.msra.mxu0 0.0
    %5553 = vmatprep.subr.mxu0 0.0
    %5554 = vmatpush1.msra.mxu0 0.0
    %5555 = vmatprep.subr.mxu0 0.0
    %5556 = vmatpush1.msra.mxu0 0.0
    %5557 = vmatprep.subr.mxu0 0.0
    %5558 = vmatpush1.msra.mxu0 0.0
    %5559 = vmatprep.subr.mxu0 0.0
    %5560 = vmatpush1.msra.mxu0 0.0
    %5561 = vmatprep.subr.mxu0 0.0
    %5562 = vmatpush1.msra.mxu0 0.0
    %5563 = vmatprep.subr.mxu0 0.0
    %5564 = vmatpush1.msra.mxu0 0.0
    %5565 = vmatprep.subr.mxu0 0.0
    %5566 = vmatpush1.msra.mxu0 0.0
    %5567 = vmatprep.subr.mxu0 0.0
    %5568 = vmatpush1.msra.mxu0 0.0
    %5569 = vmatprep.subr.mxu0 0.0
    %5570 = vmatpush1.msra.mxu0 0.0
    %5571 = vmatprep.mubr.f32.mxu0 0.0
    %5572 = vmatmul.mubr.f32.gmra.mrb[0].mxu0 %v5106
    %v5573 = vpop.f32.mrb[0].mxu0
    %v5574 = vadd.f32 0.0, %v5573
    %v5575 = vpop.f32.mrb[0].mxu0
    %5576 = vdwg.mxu0
    %v5577 = vadd.f32 %v5504, %v5574
    %v5578 = vxor.u32 %v5577, 2147483648
    %v5579 = vmul.f32 %v5578, 1.442695
    %v5580 = vpow.pop %v5579
    %v5581 = vadd.f32 %v5580, 1.0
    %v5582 = vrcp.pop %v5581
    %v5583 = vmul.f32 1.0, %v5582
    %v5584 = vadd.f32 %v5574, %v3076
    %5586 = vrot.lane.b32.xlu0 %v5584, 64
    %v5587 = vpop.permute.xlu0 %5586
    %v5589 = vmul.f32 %v5583, %v5587
    %5591 = vrot.lane.b32.xlu0 %v5589, 64
    %v5592 = vpop.permute.xlu0 %5591
    %v5594 = vadd.f32 %v5504, %v5592
    %v5595 = vtanh.pop %v5594
    %v5596 = vsub.f32 1.0, %v5583
    %5598 = vrot.lane.b32.xlu0 %v5595, 96
    %v5599 = vpop.permute.xlu0 %5598
    %v5601 = vmul.f32 %v5596, %v5599
    %v5602 = vmul.f32 %v5583, %v5102
    %v5603 = vadd.f32 %v5601, %v5602
    %5605 = vrot.lane.b32.xlu0 %v5603, 96
    %v5606 = vpop.permute.xlu0 %5605
    %v5607 = vsel %vm166, %v5606, 0
    %5609 = vmatprep.subr.mxu0 0.0
    %5610 = vmatpush1.msra.mxu0 %v125
    %5611 = vmatprep.subr.mxu0 0.0
    %5612 = vmatpush1.msra.mxu0 %v126
    %5613 = vmatprep.subr.mxu0 0.0
    %5614 = vmatpush1.msra.mxu0 %v127
    %5615 = vmatprep.subr.mxu0 0.0
    %5616 = vmatpush1.msra.mxu0 %v128
    %5617 = vmatprep.subr.mxu0 0.0
    %5618 = vmatpush1.msra.mxu0 0.0
    %5619 = vmatprep.subr.mxu0 0.0
    %5620 = vmatpush1.msra.mxu0 0.0
    %5621 = vmatprep.subr.mxu0 0.0
    %5622 = vmatpush1.msra.mxu0 0.0
    %5623 = vmatprep.subr.mxu0 0.0
    %5624 = vmatpush1.msra.mxu0 0.0
    %5625 = vmatprep.subr.mxu0 0.0
    %5626 = vmatpush1.msra.mxu0 0.0
    %5627 = vmatprep.subr.mxu0 0.0
    %5628 = vmatpush1.msra.mxu0 0.0
    %5629 = vmatprep.subr.mxu0 0.0
    %5630 = vmatpush1.msra.mxu0 0.0
    %5631 = vmatprep.subr.mxu0 0.0
    %5632 = vmatpush1.msra.mxu0 0.0
    %5633 = vmatprep.subr.mxu0 0.0
    %5634 = vmatpush1.msra.mxu0 0.0
    %5635 = vmatprep.subr.mxu0 0.0
    %5636 = vmatpush1.msra.mxu0 0.0
    %5637 = vmatprep.subr.mxu0 0.0
    %5638 = vmatpush1.msra.mxu0 0.0
    %5639 = vmatprep.subr.mxu0 0.0
    %5640 = vmatpush1.msra.mxu0 0.0
    %5641 = vmatprep.subr.mxu0 0.0
    %5642 = vmatpush1.msra.mxu0 0.0
    %5643 = vmatprep.subr.mxu0 0.0
    %5644 = vmatpush1.msra.mxu0 0.0
    %5645 = vmatprep.subr.mxu0 0.0
    %5646 = vmatpush1.msra.mxu0 0.0
    %5647 = vmatprep.subr.mxu0 0.0
    %5648 = vmatpush1.msra.mxu0 0.0
    %5649 = vmatprep.subr.mxu0 0.0
    %5650 = vmatpush1.msra.mxu0 0.0
    %5651 = vmatprep.subr.mxu0 0.0
    %5652 = vmatpush1.msra.mxu0 0.0
    %5653 = vmatprep.subr.mxu0 0.0
    %5654 = vmatpush1.msra.mxu0 0.0
    %5655 = vmatprep.subr.mxu0 0.0
    %5656 = vmatpush1.msra.mxu0 0.0
    %5657 = vmatprep.subr.mxu0 0.0
    %5658 = vmatpush1.msra.mxu0 0.0
    %5659 = vmatprep.subr.mxu0 0.0
    %5660 = vmatpush1.msra.mxu0 0.0
    %5661 = vmatprep.subr.mxu0 0.0
    %5662 = vmatpush1.msra.mxu0 0.0
    %5663 = vmatprep.subr.mxu0 0.0
    %5664 = vmatpush1.msra.mxu0 0.0
    %5665 = vmatprep.subr.mxu0 0.0
    %5666 = vmatpush1.msra.mxu0 0.0
    %5667 = vmatprep.subr.mxu0 0.0
    %5668 = vmatpush1.msra.mxu0 0.0
    %5669 = vmatprep.subr.mxu0 0.0
    %5670 = vmatpush1.msra.mxu0 0.0
    %5671 = vmatprep.subr.mxu0 0.0
    %5672 = vmatpush1.msra.mxu0 0.0
    %5673 = vmatprep.mubr.f32.mxu0 0.0
    %5674 = vmatmul.mubr.f32.gmra.mrb[0].mxu0 %v5607
    %v5675 = vpop.f32.mrb[0].mxu0
    %v5676 = vadd.f32 %v145, %v5675
    %v5677 = vpop.f32.mrb[0].mxu0
    %5678 = vdwg.mxu0
    %vm5679 = vcmp.gt.f32.partialorder %v5676, 0.0
    %v5680 = vmul.f32 %v5676, 0.01
    %v5681 = vsel %vm5679, %v5676, %v5680
    %v5683 = vsel %vm3176, %v5681, 0
    %5685 = vmatprep.subr.mxu0 0.0
    %5686 = vmatpush1.msra.mxu0 %v129
    %5687 = vmatprep.subr.mxu0 0.0
    %5688 = vmatpush1.msra.mxu0 %v130
    %5689 = vmatprep.subr.mxu0 0.0
    %5690 = vmatpush1.msra.mxu0 %v131
    %5691 = vmatprep.subr.mxu0 0.0
    %5692 = vmatpush1.msra.mxu0 0.0
    %5693 = vmatprep.subr.mxu0 0.0
    %5694 = vmatpush1.msra.mxu0 0.0
    %5695 = vmatprep.subr.mxu0 0.0
    %5696 = vmatpush1.msra.mxu0 0.0
    %5697 = vmatprep.subr.mxu0 0.0
    %5698 = vmatpush1.msra.mxu0 0.0
    %5699 = vmatprep.subr.mxu0 0.0
    %5700 = vmatpush1.msra.mxu0 0.0
    %5701 = vmatprep.subr.mxu0 0.0
    %5702 = vmatpush1.msra.mxu0 0.0
    %5703 = vmatprep.subr.mxu0 0.0
    %5704 = vmatpush1.msra.mxu0 0.0
    %5705 = vmatprep.subr.mxu0 0.0
    %5706 = vmatpush1.msra.mxu0 0.0
    %5707 = vmatprep.subr.mxu0 0.0
    %5708 = vmatpush1.msra.mxu0 0.0
    %5709 = vmatprep.subr.mxu0 0.0
    %5710 = vmatpush1.msra.mxu0 0.0
    %5711 = vmatprep.subr.mxu0 0.0
    %5712 = vmatpush1.msra.mxu0 0.0
    %5713 = vmatprep.subr.mxu0 0.0
    %5714 = vmatpush1.msra.mxu0 0.0
    %5715 = vmatprep.subr.mxu0 0.0
    %5716 = vmatpush1.msra.mxu0 0.0
    %5717 = vmatprep.subr.mxu0 0.0
    %5718 = vmatpush1.msra.mxu0 0.0
    %5719 = vmatprep.subr.mxu0 0.0
    %5720 = vmatpush1.msra.mxu0 0.0
    %5721 = vmatprep.subr.mxu0 0.0
    %5722 = vmatpush1.msra.mxu0 0.0
    %5723 = vmatprep.subr.mxu0 0.0
    %5724 = vmatpush1.msra.mxu0 0.0
    %5725 = vmatprep.subr.mxu0 0.0
    %5726 = vmatpush1.msra.mxu0 0.0
    %5727 = vmatprep.subr.mxu0 0.0
    %5728 = vmatpush1.msra.mxu0 0.0
    %5729 = vmatprep.subr.mxu0 0.0
    %5730 = vmatpush1.msra.mxu0 0.0
    %5731 = vmatprep.subr.mxu0 0.0
    %5732 = vmatpush1.msra.mxu0 0.0
    %5733 = vmatprep.subr.mxu0 0.0
    %5734 = vmatpush1.msra.mxu0 0.0
    %5735 = vmatprep.subr.mxu0 0.0
    %5736 = vmatpush1.msra.mxu0 0.0
    %5737 = vmatprep.subr.mxu0 0.0
    %5738 = vmatpush1.msra.mxu0 0.0
    %5739 = vmatprep.subr.mxu0 0.0
    %5740 = vmatpush1.msra.mxu0 0.0
    %5741 = vmatprep.subr.mxu0 0.0
    %5742 = vmatpush1.msra.mxu0 0.0
    %5743 = vmatprep.subr.mxu0 0.0
    %5744 = vmatpush1.msra.mxu0 0.0
    %5745 = vmatprep.subr.mxu0 0.0
    %5746 = vmatpush1.msra.mxu0 0.0
    %5747 = vmatprep.subr.mxu0 0.0
    %5748 = vmatpush1.msra.mxu0 0.0
    %5749 = vmatprep.mubr.f32.mxu0 0.0
    %5750 = vmatmul.mubr.f32.gmra.mrb[0].mxu0 %v5683
    %v5751 = vpop.f32.mrb[0].mxu0
    %v5752 = vadd.f32 %v146, %v5751
    %v5753 = vpop.f32.mrb[0].mxu0
    %5754 = vdwg.mxu0
    %v5755 = vxor.u32 %v5752, 2147483648
    %v5756 = vmul.f32 %v5755, 1.442695
    %v5757 = vpow.pop %v5756
    %v5758 = vadd.f32 %v5757, 1.0
    %v5759 = vrcp.pop %v5758
    %v5760 = vmul.f32 1.0, %v5759
    %s5761 = scalar_lea.vmem %s6, 48
    %5762 = vst.msk [vmem:[%s5761] sm:$0xff] %vm2554, %v5760
    %v5764 = vsel %vm2554, %v5760, 0
    %5766 = vmatprep.subr.mxu0 0.0
    %5767 = vmatpush1.msra.mxu0 %v85
    %5768 = vmatprep.subr.mxu0 0.0
    %5769 = vmatpush1.msra.mxu0 %v86
    %5770 = vmatprep.subr.mxu0 0.0
    %5771 = vmatpush1.msra.mxu0 0.0
    %5772 = vmatprep.subr.mxu0 0.0
    %5773 = vmatpush1.msra.mxu0 0.0
    %5774 = vmatprep.subr.mxu0 0.0
    %5775 = vmatpush1.msra.mxu0 0.0
    %5776 = vmatprep.subr.mxu0 0.0
    %5777 = vmatpush1.msra.mxu0 0.0
    %5778 = vmatprep.subr.mxu0 0.0
    %5779 = vmatpush1.msra.mxu0 0.0
    %5780 = vmatprep.subr.mxu0 0.0
    %5781 = vmatpush1.msra.mxu0 0.0
    %5782 = vmatprep.subr.mxu0 0.0
    %5783 = vmatpush1.msra.mxu0 0.0
    %5784 = vmatprep.subr.mxu0 0.0
    %5785 = vmatpush1.msra.mxu0 0.0
    %5786 = vmatprep.subr.mxu0 0.0
    %5787 = vmatpush1.msra.mxu0 0.0
    %5788 = vmatprep.subr.mxu0 0.0
    %5789 = vmatpush1.msra.mxu0 0.0
    %5790 = vmatprep.subr.mxu0 0.0
    %5791 = vmatpush1.msra.mxu0 0.0
    %5792 = vmatprep.subr.mxu0 0.0
    %5793 = vmatpush1.msra.mxu0 0.0
    %5794 = vmatprep.subr.mxu0 0.0
    %5795 = vmatpush1.msra.mxu0 0.0
    %5796 = vmatprep.subr.mxu0 0.0
    %5797 = vmatpush1.msra.mxu0 0.0
    %5798 = vmatprep.subr.mxu0 0.0
    %5799 = vmatpush1.msra.mxu0 0.0
    %5800 = vmatprep.subr.mxu0 0.0
    %5801 = vmatpush1.msra.mxu0 0.0
    %5802 = vmatprep.subr.mxu0 0.0
    %5803 = vmatpush1.msra.mxu0 0.0
    %5804 = vmatprep.subr.mxu0 0.0
    %5805 = vmatpush1.msra.mxu0 0.0
    %5806 = vmatprep.subr.mxu0 0.0
    %5807 = vmatpush1.msra.mxu0 0.0
    %5808 = vmatprep.subr.mxu0 0.0
    %5809 = vmatpush1.msra.mxu0 0.0
    %5810 = vmatprep.subr.mxu0 0.0
    %5811 = vmatpush1.msra.mxu0 0.0
    %5812 = vmatprep.subr.mxu0 0.0
    %5813 = vmatpush1.msra.mxu0 0.0
    %5814 = vmatprep.subr.mxu0 0.0
    %5815 = vmatpush1.msra.mxu0 0.0
    %5816 = vmatprep.subr.mxu0 0.0
    %5817 = vmatpush1.msra.mxu0 0.0
    %5818 = vmatprep.subr.mxu0 0.0
    %5819 = vmatpush1.msra.mxu0 0.0
    %5820 = vmatprep.subr.mxu0 0.0
    %5821 = vmatpush1.msra.mxu0 0.0
    %5822 = vmatprep.subr.mxu0 0.0
    %5823 = vmatpush1.msra.mxu0 0.0
    %5824 = vmatprep.subr.mxu0 0.0
    %5825 = vmatpush1.msra.mxu0 0.0
    %5826 = vmatprep.subr.mxu0 0.0
    %5827 = vmatpush1.msra.mxu0 0.0
    %5828 = vmatprep.subr.mxu0 0.0
    %5829 = vmatpush1.msra.mxu0 0.0
    %5830 = vmatprep.mubr.f32.mxu0 0.0
    %5831 = vmatmul.mubr.f32.gmra.mrb[0].mxu0 %v5764
    %v5832 = vpop.f32.mrb[0].mxu0
    %v5833 = vadd.f32 %v137, %v5832
    %v5834 = vpop.f32.mrb[0].mxu0
    %5835 = vdwg.mxu0
    %5836 = vmatprep.subr.mxu0 0.0
    %5837 = vmatpush1.msra.mxu0 %v87
    %5838 = vmatprep.subr.mxu0 0.0
    %5839 = vmatpush1.msra.mxu0 %v88
    %5840 = vmatprep.subr.mxu0 0.0
    %5841 = vmatpush1.msra.mxu0 %v89
    %5842 = vmatprep.subr.mxu0 0.0
    %5843 = vmatpush1.msra.mxu0 %v90
    %5844 = vmatprep.subr.mxu0 0.0
    %5845 = vmatpush1.msra.mxu0 0.0
    %5846 = vmatprep.subr.mxu0 0.0
    %5847 = vmatpush1.msra.mxu0 0.0
    %5848 = vmatprep.subr.mxu0 0.0
    %5849 = vmatpush1.msra.mxu0 0.0
    %5850 = vmatprep.subr.mxu0 0.0
    %5851 = vmatpush1.msra.mxu0 0.0
    %5852 = vmatprep.subr.mxu0 0.0
    %5853 = vmatpush1.msra.mxu0 0.0
    %5854 = vmatprep.subr.mxu0 0.0
    %5855 = vmatpush1.msra.mxu0 0.0
    %5856 = vmatprep.subr.mxu0 0.0
    %5857 = vmatpush1.msra.mxu0 0.0
    %5858 = vmatprep.subr.mxu0 0.0
    %5859 = vmatpush1.msra.mxu0 0.0
    %5860 = vmatprep.subr.mxu0 0.0
    %5861 = vmatpush1.msra.mxu0 0.0
    %5862 = vmatprep.subr.mxu0 0.0
    %5863 = vmatpush1.msra.mxu0 0.0
    %5864 = vmatprep.subr.mxu0 0.0
    %5865 = vmatpush1.msra.mxu0 0.0
    %5866 = vmatprep.subr.mxu0 0.0
    %5867 = vmatpush1.msra.mxu0 0.0
    %5868 = vmatprep.subr.mxu0 0.0
    %5869 = vmatpush1.msra.mxu0 0.0
    %5870 = vmatprep.subr.mxu0 0.0
    %5871 = vmatpush1.msra.mxu0 0.0
    %5872 = vmatprep.subr.mxu0 0.0
    %5873 = vmatpush1.msra.mxu0 0.0
    %5874 = vmatprep.subr.mxu0 0.0
    %5875 = vmatpush1.msra.mxu0 0.0
    %5876 = vmatprep.subr.mxu0 0.0
    %5877 = vmatpush1.msra.mxu0 0.0
    %5878 = vmatprep.subr.mxu0 0.0
    %5879 = vmatpush1.msra.mxu0 0.0
    %5880 = vmatprep.subr.mxu0 0.0
    %5881 = vmatpush1.msra.mxu0 0.0
    %5882 = vmatprep.subr.mxu0 0.0
    %5883 = vmatpush1.msra.mxu0 0.0
    %5884 = vmatprep.subr.mxu0 0.0
    %5885 = vmatpush1.msra.mxu0 0.0
    %5886 = vmatprep.subr.mxu0 0.0
    %5887 = vmatpush1.msra.mxu0 0.0
    %5888 = vmatprep.subr.mxu0 0.0
    %5889 = vmatpush1.msra.mxu0 0.0
    %5890 = vmatprep.subr.mxu0 0.0
    %5891 = vmatpush1.msra.mxu0 0.0
    %5892 = vmatprep.subr.mxu0 0.0
    %5893 = vmatpush1.msra.mxu0 0.0
    %5894 = vmatprep.subr.mxu0 0.0
    %5895 = vmatpush1.msra.mxu0 0.0
    %5896 = vmatprep.subr.mxu0 0.0
    %5897 = vmatpush1.msra.mxu0 0.0
    %5898 = vmatprep.subr.mxu0 0.0
    %5899 = vmatpush1.msra.mxu0 0.0
    %5900 = vmatprep.mubr.f32.mxu0 0.0
    %5901 = vmatmul.mubr.f32.gmra.mrb[0].mxu0 %v5435
    %v5902 = vpop.f32.mrb[0].mxu0
    %v5903 = vadd.f32 0.0, %v5902
    %v5904 = vpop.f32.mrb[0].mxu0
    %5905 = vdwg.mxu0
    %v5906 = vadd.f32 %v5833, %v5903
    %v5907 = vxor.u32 %v5906, 2147483648
    %v5908 = vmul.f32 %v5907, 1.442695
    %v5909 = vpow.pop %v5908
    %v5910 = vadd.f32 %v5909, 1.0
    %v5911 = vrcp.pop %v5910
    %v5912 = vmul.f32 1.0, %v5911
    %v5913 = vadd.f32 %v5903, %v2893
    %5915 = vrot.lane.b32.xlu0 %v5913, 64
    %v5916 = vpop.permute.xlu0 %5915
    %v5918 = vmul.f32 %v5912, %v5916
    %5920 = vrot.lane.b32.xlu0 %v5918, 64
    %v5921 = vpop.permute.xlu0 %5920
    %v5923 = vadd.f32 %v5833, %v5921
    %v5924 = vtanh.pop %v5923
    %v5925 = vsub.f32 1.0, %v5912
    %5927 = vrot.lane.b32.xlu0 %v5924, 96
    %v5928 = vpop.permute.xlu0 %5927
    %v5930 = vmul.f32 %v5925, %v5928
    %v5931 = vmul.f32 %v5912, %v5431
    %v5932 = vadd.f32 %v5930, %v5931
    %5934 = vrot.lane.b32.xlu0 %v5932, 96
    %v5935 = vpop.permute.xlu0 %5934
    %v5936 = vsel %vm166, %v5935, 0
    %5938 = vmatprep.subr.mxu0 0.0
    %5939 = vmatpush1.msra.mxu0 %v91
    %5940 = vmatprep.subr.mxu0 0.0
    %5941 = vmatpush1.msra.mxu0 %v92
    %5942 = vmatprep.subr.mxu0 0.0
    %5943 = vmatpush1.msra.mxu0 %v93
    %5944 = vmatprep.subr.mxu0 0.0
    %5945 = vmatpush1.msra.mxu0 %v94
    %5946 = vmatprep.subr.mxu0 0.0
    %5947 = vmatpush1.msra.mxu0 0.0
    %5948 = vmatprep.subr.mxu0 0.0
    %5949 = vmatpush1.msra.mxu0 0.0
    %5950 = vmatprep.subr.mxu0 0.0
    %5951 = vmatpush1.msra.mxu0 0.0
    %5952 = vmatprep.subr.mxu0 0.0
    %5953 = vmatpush1.msra.mxu0 0.0
    %5954 = vmatprep.subr.mxu0 0.0
    %5955 = vmatpush1.msra.mxu0 0.0
    %5956 = vmatprep.subr.mxu0 0.0
    %5957 = vmatpush1.msra.mxu0 0.0
    %5958 = vmatprep.subr.mxu0 0.0
    %5959 = vmatpush1.msra.mxu0 0.0
    %5960 = vmatprep.subr.mxu0 0.0
    %5961 = vmatpush1.msra.mxu0 0.0
    %5962 = vmatprep.subr.mxu0 0.0
    %5963 = vmatpush1.msra.mxu0 0.0
    %5964 = vmatprep.subr.mxu0 0.0
    %5965 = vmatpush1.msra.mxu0 0.0
    %5966 = vmatprep.subr.mxu0 0.0
    %5967 = vmatpush1.msra.mxu0 0.0
    %5968 = vmatprep.subr.mxu0 0.0
    %5969 = vmatpush1.msra.mxu0 0.0
    %5970 = vmatprep.subr.mxu0 0.0
    %5971 = vmatpush1.msra.mxu0 0.0
    %5972 = vmatprep.subr.mxu0 0.0
    %5973 = vmatpush1.msra.mxu0 0.0
    %5974 = vmatprep.subr.mxu0 0.0
    %5975 = vmatpush1.msra.mxu0 0.0
    %5976 = vmatprep.subr.mxu0 0.0
    %5977 = vmatpush1.msra.mxu0 0.0
    %5978 = vmatprep.subr.mxu0 0.0
    %5979 = vmatpush1.msra.mxu0 0.0
    %5980 = vmatprep.subr.mxu0 0.0
    %5981 = vmatpush1.msra.mxu0 0.0
    %5982 = vmatprep.subr.mxu0 0.0
    %5983 = vmatpush1.msra.mxu0 0.0
    %5984 = vmatprep.subr.mxu0 0.0
    %5985 = vmatpush1.msra.mxu0 0.0
    %5986 = vmatprep.subr.mxu0 0.0
    %5987 = vmatpush1.msra.mxu0 0.0
    %5988 = vmatprep.subr.mxu0 0.0
    %5989 = vmatpush1.msra.mxu0 0.0
    %5990 = vmatprep.subr.mxu0 0.0
    %5991 = vmatpush1.msra.mxu0 0.0
    %5992 = vmatprep.subr.mxu0 0.0
    %5993 = vmatpush1.msra.mxu0 0.0
    %5994 = vmatprep.subr.mxu0 0.0
    %5995 = vmatpush1.msra.mxu0 0.0
    %5996 = vmatprep.subr.mxu0 0.0
    %5997 = vmatpush1.msra.mxu0 0.0
    %5998 = vmatprep.subr.mxu0 0.0
    %5999 = vmatpush1.msra.mxu0 0.0
    %6000 = vmatprep.subr.mxu0 0.0
    %6001 = vmatpush1.msra.mxu0 0.0
    %6002 = vmatprep.mubr.f32.mxu0 0.0
    %6003 = vmatmul.mubr.f32.gmra.mrb[0].mxu0 %v5936
    %v6004 = vpop.f32.mrb[0].mxu0
    %v6005 = vadd.f32 %v139, %v6004
    %v6006 = vpop.f32.mrb[0].mxu0
    %6007 = vdwg.mxu0
    %6008 = vmatprep.subr.mxu0 0.0
    %6009 = vmatpush1.msra.mxu0 %v95
    %6010 = vmatprep.subr.mxu0 0.0
    %6011 = vmatpush1.msra.mxu0 %v96
    %6012 = vmatprep.subr.mxu0 0.0
    %6013 = vmatpush1.msra.mxu0 %v97
    %6014 = vmatprep.subr.mxu0 0.0
    %6015 = vmatpush1.msra.mxu0 %v98
    %6016 = vmatprep.subr.mxu0 0.0
    %6017 = vmatpush1.msra.mxu0 0.0
    %6018 = vmatprep.subr.mxu0 0.0
    %6019 = vmatpush1.msra.mxu0 0.0
    %6020 = vmatprep.subr.mxu0 0.0
    %6021 = vmatpush1.msra.mxu0 0.0
    %6022 = vmatprep.subr.mxu0 0.0
    %6023 = vmatpush1.msra.mxu0 0.0
    %6024 = vmatprep.subr.mxu0 0.0
    %6025 = vmatpush1.msra.mxu0 0.0
    %6026 = vmatprep.subr.mxu0 0.0
    %6027 = vmatpush1.msra.mxu0 0.0
    %6028 = vmatprep.subr.mxu0 0.0
    %6029 = vmatpush1.msra.mxu0 0.0
    %6030 = vmatprep.subr.mxu0 0.0
    %6031 = vmatpush1.msra.mxu0 0.0
    %6032 = vmatprep.subr.mxu0 0.0
    %6033 = vmatpush1.msra.mxu0 0.0
    %6034 = vmatprep.subr.mxu0 0.0
    %6035 = vmatpush1.msra.mxu0 0.0
    %6036 = vmatprep.subr.mxu0 0.0
    %6037 = vmatpush1.msra.mxu0 0.0
    %6038 = vmatprep.subr.mxu0 0.0
    %6039 = vmatpush1.msra.mxu0 0.0
    %6040 = vmatprep.subr.mxu0 0.0
    %6041 = vmatpush1.msra.mxu0 0.0
    %6042 = vmatprep.subr.mxu0 0.0
    %6043 = vmatpush1.msra.mxu0 0.0
    %6044 = vmatprep.subr.mxu0 0.0
    %6045 = vmatpush1.msra.mxu0 0.0
    %6046 = vmatprep.subr.mxu0 0.0
    %6047 = vmatpush1.msra.mxu0 0.0
    %6048 = vmatprep.subr.mxu0 0.0
    %6049 = vmatpush1.msra.mxu0 0.0
    %6050 = vmatprep.subr.mxu0 0.0
    %6051 = vmatpush1.msra.mxu0 0.0
    %6052 = vmatprep.subr.mxu0 0.0
    %6053 = vmatpush1.msra.mxu0 0.0
    %6054 = vmatprep.subr.mxu0 0.0
    %6055 = vmatpush1.msra.mxu0 0.0
    %6056 = vmatprep.subr.mxu0 0.0
    %6057 = vmatpush1.msra.mxu0 0.0
    %6058 = vmatprep.subr.mxu0 0.0
    %6059 = vmatpush1.msra.mxu0 0.0
    %6060 = vmatprep.subr.mxu0 0.0
    %6061 = vmatpush1.msra.mxu0 0.0
    %6062 = vmatprep.subr.mxu0 0.0
    %6063 = vmatpush1.msra.mxu0 0.0
    %6064 = vmatprep.subr.mxu0 0.0
    %6065 = vmatpush1.msra.mxu0 0.0
    %6066 = vmatprep.subr.mxu0 0.0
    %6067 = vmatpush1.msra.mxu0 0.0
    %6068 = vmatprep.subr.mxu0 0.0
    %6069 = vmatpush1.msra.mxu0 0.0
    %6070 = vmatprep.subr.mxu0 0.0
    %6071 = vmatpush1.msra.mxu0 0.0
    %6072 = vmatprep.mubr.f32.mxu0 0.0
    %6073 = vmatmul.mubr.f32.gmra.mrb[0].mxu0 %v5607
    %v6074 = vpop.f32.mrb[0].mxu0
    %v6075 = vadd.f32 0.0, %v6074
    %v6076 = vpop.f32.mrb[0].mxu0
    %6077 = vdwg.mxu0
    %v6078 = vadd.f32 %v6005, %v6075
    %v6079 = vxor.u32 %v6078, 2147483648
    %v6080 = vmul.f32 %v6079, 1.442695
    %v6081 = vpow.pop %v6080
    %v6082 = vadd.f32 %v6081, 1.0
    %v6083 = vrcp.pop %v6082
    %v6084 = vmul.f32 1.0, %v6083
    %v6085 = vadd.f32 %v6075, %v3076
    %6087 = vrot.lane.b32.xlu0 %v6085, 64
    %v6088 = vpop.permute.xlu0 %6087
    %v6090 = vmul.f32 %v6084, %v6088
    %6092 = vrot.lane.b32.xlu0 %v6090, 64
    %v6093 = vpop.permute.xlu0 %6092
    %v6095 = vadd.f32 %v6005, %v6093
    %v6096 = vtanh.pop %v6095
    %v6097 = vsub.f32 1.0, %v6084
    %6099 = vrot.lane.b32.xlu0 %v6096, 96
    %v6100 = vpop.permute.xlu0 %6099
    %v6102 = vmul.f32 %v6097, %v6100
    %v6103 = vmul.f32 %v6084, %v5603
    %v6104 = vadd.f32 %v6102, %v6103
    %6106 = vrot.lane.b32.xlu0 %v6104, 96
    %v6107 = vpop.permute.xlu0 %6106
    %v6108 = vsel %vm166, %v6107, 0
    %6110 = vmatprep.subr.mxu0 0.0
    %6111 = vmatpush1.msra.mxu0 %v125
    %6112 = vmatprep.subr.mxu0 0.0
    %6113 = vmatpush1.msra.mxu0 %v126
    %6114 = vmatprep.subr.mxu0 0.0
    %6115 = vmatpush1.msra.mxu0 %v127
    %6116 = vmatprep.subr.mxu0 0.0
    %6117 = vmatpush1.msra.mxu0 %v128
    %6118 = vmatprep.subr.mxu0 0.0
    %6119 = vmatpush1.msra.mxu0 0.0
    %6120 = vmatprep.subr.mxu0 0.0
    %6121 = vmatpush1.msra.mxu0 0.0
    %6122 = vmatprep.subr.mxu0 0.0
    %6123 = vmatpush1.msra.mxu0 0.0
    %6124 = vmatprep.subr.mxu0 0.0
    %6125 = vmatpush1.msra.mxu0 0.0
    %6126 = vmatprep.subr.mxu0 0.0
    %6127 = vmatpush1.msra.mxu0 0.0
    %6128 = vmatprep.subr.mxu0 0.0
    %6129 = vmatpush1.msra.mxu0 0.0
    %6130 = vmatprep.subr.mxu0 0.0
    %6131 = vmatpush1.msra.mxu0 0.0
    %6132 = vmatprep.subr.mxu0 0.0
    %6133 = vmatpush1.msra.mxu0 0.0
    %6134 = vmatprep.subr.mxu0 0.0
    %6135 = vmatpush1.msra.mxu0 0.0
    %6136 = vmatprep.subr.mxu0 0.0
    %6137 = vmatpush1.msra.mxu0 0.0
    %6138 = vmatprep.subr.mxu0 0.0
    %6139 = vmatpush1.msra.mxu0 0.0
    %6140 = vmatprep.subr.mxu0 0.0
    %6141 = vmatpush1.msra.mxu0 0.0
    %6142 = vmatprep.subr.mxu0 0.0
    %6143 = vmatpush1.msra.mxu0 0.0
    %6144 = vmatprep.subr.mxu0 0.0
    %6145 = vmatpush1.msra.mxu0 0.0
    %6146 = vmatprep.subr.mxu0 0.0
    %6147 = vmatpush1.msra.mxu0 0.0
    %6148 = vmatprep.subr.mxu0 0.0
    %6149 = vmatpush1.msra.mxu0 0.0
    %6150 = vmatprep.subr.mxu0 0.0
    %6151 = vmatpush1.msra.mxu0 0.0
    %6152 = vmatprep.subr.mxu0 0.0
    %6153 = vmatpush1.msra.mxu0 0.0
    %6154 = vmatprep.subr.mxu0 0.0
    %6155 = vmatpush1.msra.mxu0 0.0
    %6156 = vmatprep.subr.mxu0 0.0
    %6157 = vmatpush1.msra.mxu0 0.0
    %6158 = vmatprep.subr.mxu0 0.0
    %6159 = vmatpush1.msra.mxu0 0.0
    %6160 = vmatprep.subr.mxu0 0.0
    %6161 = vmatpush1.msra.mxu0 0.0
    %6162 = vmatprep.subr.mxu0 0.0
    %6163 = vmatpush1.msra.mxu0 0.0
    %6164 = vmatprep.subr.mxu0 0.0
    %6165 = vmatpush1.msra.mxu0 0.0
    %6166 = vmatprep.subr.mxu0 0.0
    %6167 = vmatpush1.msra.mxu0 0.0
    %6168 = vmatprep.subr.mxu0 0.0
    %6169 = vmatpush1.msra.mxu0 0.0
    %6170 = vmatprep.subr.mxu0 0.0
    %6171 = vmatpush1.msra.mxu0 0.0
    %6172 = vmatprep.subr.mxu0 0.0
    %6173 = vmatpush1.msra.mxu0 0.0
    %6174 = vmatprep.mubr.f32.mxu0 0.0
    %6175 = vmatmul.mubr.f32.gmra.mrb[0].mxu0 %v6108
    %v6176 = vpop.f32.mrb[0].mxu0
    %v6177 = vadd.f32 %v145, %v6176
    %v6178 = vpop.f32.mrb[0].mxu0
    %6179 = vdwg.mxu0
    %vm6180 = vcmp.gt.f32.partialorder %v6177, 0.0
    %v6181 = vmul.f32 %v6177, 0.01
    %v6182 = vsel %vm6180, %v6177, %v6181
    %v6184 = vsel %vm3176, %v6182, 0
    %6186 = vmatprep.subr.mxu0 0.0
    %6187 = vmatpush1.msra.mxu0 %v129
    %6188 = vmatprep.subr.mxu0 0.0
    %6189 = vmatpush1.msra.mxu0 %v130
    %6190 = vmatprep.subr.mxu0 0.0
    %6191 = vmatpush1.msra.mxu0 %v131
    %6192 = vmatprep.subr.mxu0 0.0
    %6193 = vmatpush1.msra.mxu0 0.0
    %6194 = vmatprep.subr.mxu0 0.0
    %6195 = vmatpush1.msra.mxu0 0.0
    %6196 = vmatprep.subr.mxu0 0.0
    %6197 = vmatpush1.msra.mxu0 0.0
    %6198 = vmatprep.subr.mxu0 0.0
    %6199 = vmatpush1.msra.mxu0 0.0
    %6200 = vmatprep.subr.mxu0 0.0
    %6201 = vmatpush1.msra.mxu0 0.0
    %6202 = vmatprep.subr.mxu0 0.0
    %6203 = vmatpush1.msra.mxu0 0.0
    %6204 = vmatprep.subr.mxu0 0.0
    %6205 = vmatpush1.msra.mxu0 0.0
    %6206 = vmatprep.subr.mxu0 0.0
    %6207 = vmatpush1.msra.mxu0 0.0
    %6208 = vmatprep.subr.mxu0 0.0
    %6209 = vmatpush1.msra.mxu0 0.0
    %6210 = vmatprep.subr.mxu0 0.0
    %6211 = vmatpush1.msra.mxu0 0.0
    %6212 = vmatprep.subr.mxu0 0.0
    %6213 = vmatpush1.msra.mxu0 0.0
    %6214 = vmatprep.subr.mxu0 0.0
    %6215 = vmatpush1.msra.mxu0 0.0
    %6216 = vmatprep.subr.mxu0 0.0
    %6217 = vmatpush1.msra.mxu0 0.0
    %6218 = vmatprep.subr.mxu0 0.0
    %6219 = vmatpush1.msra.mxu0 0.0
    %6220 = vmatprep.subr.mxu0 0.0
    %6221 = vmatpush1.msra.mxu0 0.0
    %6222 = vmatprep.subr.mxu0 0.0
    %6223 = vmatpush1.msra.mxu0 0.0
    %6224 = vmatprep.subr.mxu0 0.0
    %6225 = vmatpush1.msra.mxu0 0.0
    %6226 = vmatprep.subr.mxu0 0.0
    %6227 = vmatpush1.msra.mxu0 0.0
    %6228 = vmatprep.subr.mxu0 0.0
    %6229 = vmatpush1.msra.mxu0 0.0
    %6230 = vmatprep.subr.mxu0 0.0
    %6231 = vmatpush1.msra.mxu0 0.0
    %6232 = vmatprep.subr.mxu0 0.0
    %6233 = vmatpush1.msra.mxu0 0.0
    %6234 = vmatprep.subr.mxu0 0.0
    %6235 = vmatpush1.msra.mxu0 0.0
    %6236 = vmatprep.subr.mxu0 0.0
    %6237 = vmatpush1.msra.mxu0 0.0
    %6238 = vmatprep.subr.mxu0 0.0
    %6239 = vmatpush1.msra.mxu0 0.0
    %6240 = vmatprep.subr.mxu0 0.0
    %6241 = vmatpush1.msra.mxu0 0.0
    %6242 = vmatprep.subr.mxu0 0.0
    %6243 = vmatpush1.msra.mxu0 0.0
    %6244 = vmatprep.subr.mxu0 0.0
    %6245 = vmatpush1.msra.mxu0 0.0
    %6246 = vmatprep.subr.mxu0 0.0
    %6247 = vmatpush1.msra.mxu0 0.0
    %6248 = vmatprep.subr.mxu0 0.0
    %6249 = vmatpush1.msra.mxu0 0.0
    %6250 = vmatprep.mubr.f32.mxu0 0.0
    %6251 = vmatmul.mubr.f32.gmra.mrb[0].mxu0 %v6184
    %v6252 = vpop.f32.mrb[0].mxu0
    %v6253 = vadd.f32 %v146, %v6252
    %v6254 = vpop.f32.mrb[0].mxu0
    %6255 = vdwg.mxu0
    %v6256 = vxor.u32 %v6253, 2147483648
    %v6257 = vmul.f32 %v6256, 1.442695
    %v6258 = vpow.pop %v6257
    %v6259 = vadd.f32 %v6258, 1.0
    %v6260 = vrcp.pop %v6259
    %v6261 = vmul.f32 1.0, %v6260
    %s6262 = scalar_lea.vmem %s6, 56
    %6263 = vst.msk [vmem:[%s6262] sm:$0xff] %vm2554, %v6261
    // Predicated region
    $region26: #{vae_forward.1} parent=1 // pred_check
      _
    $region27: #{vae_forward.1} parent=1 // pred_check_branch
      %6265 = sbr.rel (0) target = $region29
    $region28: #{vae_forward.1} parent=1 // pred_region
      _
    $region29: #{vae_forward.1} parent=1 // pred_fallthru
      _
    // Predicated region
    $region30: #{vae_forward.1} parent=1 // pred_check
      _
    $region31: #{vae_forward.1} parent=1 // pred_check_branch
      %6267 = sbr.rel (0) target = $region33
    $region32: #{vae_forward.1} parent=1 // pred_region
      %s6269 = ssub.s32 128, 128
      %6270 = vsyncadd [#allocation3], %s6269
      %s6272 = sshll.u32 [#allocation2], 4
      %s6273 = int_to_ptr.vmem [resolvable:$true] %s6272
      %6275 = dma.vmem_to_hbm [thread:$0]  %s6273, 128, %s7, [#allocation3]
    $region33: #{vae_forward.1} parent=1 // pred_fallthru
      _
    // Predicated region
    $region34: #{vae_forward.1} parent=1 // pred_check
      _
    $region35: #{vae_forward.1} parent=1 // pred_check_branch
      %6277 = sbr.rel (0) target = $region37
    $region36: #{vae_forward.1} parent=1 // pred_region
      %s6279 = ssub.s32 128, 128
      %6280 = vsyncadd [#allocation5], %s6279
      %s6282 = sshll.u32 [#allocation4], 4
      %s6283 = int_to_ptr.vmem [resolvable:$true] %s6282
      %6285 = dma.vmem_to_hbm [thread:$0]  %s6283, 128, %s8, [#allocation5]
    $region37: #{vae_forward.1} parent=1 // pred_fallthru
      _
    // Predicated region
    $region38: #{vae_forward.1} parent=1 // pred_check
      _
    $region39: #{vae_forward.1} parent=1 // pred_check_branch
      %6287 = sbr.rel (0) target = $region41
    $region40: #{vae_forward.1} parent=1 // pred_region
      _
    $region41: #{vae_forward.1} parent=1 // pred_fallthru
      _
    // Predicated region
    $region42: #{vae_forward.1} parent=1 // pred_check
      _
    $region43: #{vae_forward.1} parent=1 // pred_check_branch
      %6289 = sbr.rel (0) target = $region45
    $region44: #{vae_forward.1} parent=1 // pred_region
      _
    $region45: #{vae_forward.1} parent=1 // pred_fallthru
      _
    // Predicated region
    $region46: #{vae_forward.1} parent=1 // pred_check
      _
    $region47: #{vae_forward.1} parent=1 // pred_check_branch
      %6291 = sbr.rel (0) target = $region49
    $region48: #{vae_forward.1} parent=1 // pred_region
      %6292 = dma.done [#allocation3], 128
    $region49: #{vae_forward.1} parent=1 // pred_fallthru
      _
    // Predicated region
    $region50: #{vae_forward.1} parent=1 // pred_check
      _
    $region51: #{vae_forward.1} parent=1 // pred_check_branch
      %6294 = sbr.rel (0) target = $region53
    $region52: #{vae_forward.1} parent=1 // pred_region
      %6295 = dma.done [#allocation5], 128
    $region53: #{vae_forward.1} parent=1 // pred_fallthru
      _
    // Predicated region
    $region54: #{vae_forward.1} parent=1 // pred_check
      _
    $region55: #{vae_forward.1} parent=1 // pred_check_branch
      %6297 = sbr.rel (0) target = $region57
    $region56: #{vae_forward.1} parent=1 // pred_region
      _
    $region57: #{vae_forward.1} parent=1 // pred_fallthru
      _
    %6298 = vsyncpa [#allocation3], 1
    %6299 = vsyncpa [#allocation5], 1

</llo_original>
